<compile_context>
chip_gen: v7x
topology: tpu7x:2x2x1
jax: 0.10.0
libtpu: 0.0.40
codegen_flags: <defaults>
</compile_context>

<pallas_src>
import math

import jax
import jax.numpy as jnp
from jax import lax
from jax.experimental import pallas as pl
from jax.experimental.pallas import tpu as pltpu

NEG_INF = -1e9          # python float: kernels must not capture jnp constants
LN_EPS = 1e-5
TAU = 0.5
MAX_TILE = 2048         # scene-row tile upper bound (multiple of 128)


# ----------------------------------------------------------------------------
# helpers
# ----------------------------------------------------------------------------
def _round_up(x, m):
    return ((x + m - 1) // m) * m


_VMEM_LIMIT = [None]


def _vmem_limit_bytes():
    if _VMEM_LIMIT[0] is None:
        try:
            cap = int(pltpu.get_tpu_info().vmem_capacity_bytes)
        except Exception:
            cap = 64 * 1024 * 1024
        # leave 1/4 headroom; never ask for more than 100 MiB
        _VMEM_LIMIT[0] = int(min(cap - cap // 4, 100 * 1024 * 1024))
    return _VMEM_LIMIT[0]


def _cparams(semantics):
    return pltpu.CompilerParams(dimension_semantics=semantics,
                                vmem_limit_bytes=_vmem_limit_bytes())


def _vmem_specs(n):
    return [pl.BlockSpec(memory_space=pltpu.MemorySpace.VMEM) for _ in range(n)]


def _f32(ref):
    return ref[...].astype(jnp.float32)


def _dot(a, b):
    return jnp.dot(a, b, preferred_element_type=jnp.float32)


def _dot_nt(a, b):
    # a (M, K) contracted with b (N, K) -> (M, N)    (a @ b.T)
    return lax.dot_general(a, b, (((1,), (1,)), ((), ())),
                           preferred_element_type=jnp.float32)


def _dot_cn(a, b):
    # a (N, C), b (N, T) -> (C, T)    (a.T @ b), contracting the N axis
    return lax.dot_general(a, b, (((0,), (0,)), ((), ())),
                           preferred_element_type=jnp.float32)


def _ln_rows(x, w, b):
    # LayerNorm over the last axis (row layout, w/b are (1, C))
    mu = jnp.mean(x, axis=-1, keepdims=True)
    var = jnp.mean(jnp.square(x - mu), axis=-1, keepdims=True)
    return (x - mu) * lax.rsqrt(var + LN_EPS) * w + b


def _ln_ch(x, w, b):
    # LayerNorm over axis 0 (channels-first layout, w/b are (C, 1))
    mu = jnp.mean(x, axis=0, keepdims=True)
    var = jnp.mean(jnp.square(x - mu), axis=0, keepdims=True)
    return (x - mu) * lax.rsqrt(var + LN_EPS) * w + b


def _softmax_rows(s):
    p = jnp.exp(s - jnp.max(s, axis=-1, keepdims=True))
    return p * pl.reciprocal(jnp.sum(p, axis=-1, keepdims=True), approx=True)


def _sigmoid(x):
    # EUP exp + EUP approx reciprocal; clamp so bf16 storage stays in [0, 1]
    return jnp.minimum(pl.reciprocal(1.0 + jnp.exp(-x), approx=True), 1.0)


def offset2batch(offset, n_rows):
    idx = jnp.arange(n_rows)
    return jnp.sum(idx[:, None] >= offset[None, :], axis=-1).astype(jnp.int32)


# ----------------------------------------------------------------------------
# clicks prep (tiny, single call): in_proj_clicks + initial mask-head embedding
# ----------------------------------------------------------------------------
def _clicks_prep_kernel(feat_ref, wc, bc, hlnw, hlnb, hw1, hb1, hw2, hb2,
                        emb_o, me_o):
    emb = _dot(feat_ref[...], wc[...]) + bc[...]
    emb_o[...] = emb
    cn = _ln_rows(emb, hlnw[...], hlnb[...])
    h = jnp.maximum(_dot(cn, hw1[...]) + hb1[...], 0.0)
    me_o[...] = _dot(h, hw2[...]) + hb2[...]


def clicks_prep(clicks_feat, params, hp):
    nc = clicks_feat.shape[0]
    c = params['in_proj_clicks_w'].shape[1]
    return pl.pallas_call(
        _clicks_prep_kernel,
        out_shape=(jax.ShapeDtypeStruct((nc, c), jnp.float32),
                   jax.ShapeDtypeStruct((nc, c), jnp.float32)),
        in_specs=_vmem_specs(9),
        out_specs=tuple(_vmem_specs(2)),
    )(clicks_feat, params['in_proj_clicks_w'], params['in_proj_clicks_b'],
      hp['ln_w'], hp['ln_b'], hp['mask_w1'], hp['mask_b1'],
      hp['mask_w2'], hp['mask_b2'])


# ----------------------------------------------------------------------------
# scene prep: in_proj_scene fused with the initial mask head.
# Channels-first bf16 in / out, lane-dense tiles; also accumulates the
# per-click "any(heat >= tau)" flag.
# ----------------------------------------------------------------------------
def _scene_prep_kernel(feat_ref, sb_ref, wpT, bpT, me0, emb_o, heat_o, apply_o):
    t = pl.program_id(0)

    @pl.when(t == 0)
    def _():
        apply_o[...] = jnp.zeros_like(apply_o)

    emb = _dot(wpT[...], _f32(feat_ref)) + bpT[...]            # (C, T)
    emb_o[...] = emb.astype(emb_o.dtype)
    heat = _sigmoid(_dot(me0[...], emb))                       # (Nc, T)
    heat_o[...] = heat.astype(heat_o.dtype)
    valid = sb_ref[...] >= 0                                   # (1, T)
    hit = jnp.where((heat >= TAU) & valid, 1.0, 0.0)
    apply_o[...] = jnp.maximum(apply_o[...],
                               jnp.max(hit, axis=-1, keepdims=True))


def scene_prep(feat_t, sb, wpT, bpT, me0, tile):
    c_in, np_pad = feat_t.shape
    c = wpT.shape[0]
    nc = me0.shape[0]
    stream = lambda i: (0, i)
    const = lambda i: (0, 0)
    return pl.pallas_call(
        _scene_prep_kernel,
        out_shape=(jax.ShapeDtypeStruct((c, np_pad), jnp.bfloat16),
                   jax.ShapeDtypeStruct((nc, np_pad), jnp.bfloat16),
                   jax.ShapeDtypeStruct((nc, 1), jnp.float32)),
        grid=(np_pad // tile,),
        in_specs=[pl.BlockSpec((c_in, tile), stream),
                  pl.BlockSpec((1, tile), stream),
                  pl.BlockSpec(wpT.shape, const),
                  pl.BlockSpec(bpT.shape, const),
                  pl.BlockSpec(me0.shape, const)],
        out_specs=(pl.BlockSpec((c, tile), stream),
                   pl.BlockSpec((nc, tile), stream),
                   pl.BlockSpec((nc, 1), const)),
        compiler_params=_cparams(("arbitrary",)),
    )(feat_t, sb, wpT, bpT, me0)


# ----------------------------------------------------------------------------
# t2i: clicks -> scene masked cross-attention (flash-style online softmax over
# scene tiles).  Prologue: clicks self-attn + norm1 + q projection.  Epilogue:
# out-proj + norm2 + MLP + norm3, cls head, and the click-side k/v/mask-embed
# projections used by i2t.
# ----------------------------------------------------------------------------
def _make_t2i_kernel(use_mask, skip_pe, scale):
    def kernel(*refs):
        if use_mask:
            scene_ref, spe_ref, sb_ref, heat_ref, apply_ref = refs[:5]
            rest = refs[5:]
        else:
            scene_ref, spe_ref, sb_ref = refs[:3]
            heat_ref = apply_ref = None
            rest = refs[3:]
        (ck, cpe, cbc, cbr,
         sa_wq, sa_bq, sa_wk, sa_bk, sa_wv, sa_bv, sa_wo, sa_bo,
         n1w, n1b,
         t_wq, t_bq, t_wkT, t_bkT, t_wvT, t_bvT, t_wo, t_bo,
         n2w, n2b,
         mw1, mb1, mw2, mb2,
         n3w, n3b,
         hlnw, hlnb, hw1, hb1, hw2, hb2,
         cw1, cb1, cw2, cb2,
         i_wk, i_bk, i_wv, i_bv,
         q3_o, cls_o, ki_o, vi_o, me_o,
         q1_sc, q_sc, m_sc, l_sc, acc_sc) = rest

        t = pl.program_id(0)

        @pl.when(t == 0)
        def _():
            # tiny clicks self-attention + norm1, hoisted out of the scene loop
            x = ck[...]
            qk_in = x if skip_pe else x + cpe[...]
            q = _dot(qk_in, sa_wq[...]) + sa_bq[...]
            k = _dot(qk_in, sa_wk[...]) + sa_bk[...]
            v = _dot(x, sa_wv[...]) + sa_bv[...]
            s = _dot_nt(q, k) * scale
            s = jnp.where(cbc[...] == cbr[...], s, NEG_INF)
            p = _softmax_rows(s)
            a = _dot(_dot(p, v), sa_wo[...]) + sa_bo[...]
            res = a if skip_pe else x + a
            q1 = _ln_rows(res, n1w[...], n1b[...])
            q1_sc[...] = q1
            # loop-invariant query projection for the cross attention
            q_sc[...] = _dot(q1 + cpe[...], t_wq[...]) + t_bq[...]
            m_sc[...] = jnp.full_like(m_sc, -1e30)
            l_sc[...] = jnp.zeros_like(l_sc)
            acc_sc[...] = jnp.zeros_like(acc_sc)

        x_t = _f32(scene_ref)                                   # (C, T)
        xpe_t = x_t + _f32(spe_ref)
        kt = _dot(t_wkT[...], xpe_t) + t_bkT[...]               # (C, T)
        vt = _dot(t_wvT[...], x_t) + t_bvT[...]                 # (C, T)
        s = _dot(q_sc[...], kt) * scale                         # (Nc, T)
        ok = cbc[...] == sb_ref[...]
        if use_mask:
            blocked = (heat_ref[...].astype(jnp.float32) < TAU) & \
                      (apply_ref[...] > 0.0)
            ok = ok & jnp.logical_not(blocked)
        s = jnp.where(ok, s, NEG_INF)

        m_prev = m_sc[...]
        m_new = jnp.maximum(m_prev, jnp.max(s, axis=-1, keepdims=True))
        alpha = jnp.exp(m_prev - m_new)
        p = jnp.exp(s - m_new)
        l_sc[...] = alpha * l_sc[...] + jnp.sum(p, axis=-1, keepdims=True)
        acc_sc[...] = alpha * acc_sc[...] + _dot_nt(p, vt)      # (Nc, C)
        m_sc[...] = m_new

        @pl.when(t == pl.num_programs(0) - 1)
        def _():
            attn = acc_sc[...] * pl.reciprocal(l_sc[...], approx=True)
            attn = _dot(attn, t_wo[...]) + t_bo[...]
            q1 = q1_sc[...]
            q2 = _ln_rows(q1 + attn, n2w[...], n2b[...])
            h = jnp.maximum(_dot(q2, mw1[...]) + mb1[...], 0.0)
            q3 = _ln_rows(q2 + _dot(h, mw2[...]) + mb2[...], n3w[...], n3b[...])
            q3_o[...] = q3
            # head: norm_before_head + mask head + cls head
            cn = _ln_rows(q3, hlnw[...], hlnb[...])
            hm = jnp.maximum(_dot(cn, hw1[...]) + hb1[...], 0.0)
            me_o[...] = _dot(hm, hw2[...]) + hb2[...]
            hc = jnp.maximum(_dot(cn, cw1[...]) + cb1[...], 0.0)
            cls_o[...] = _dot(hc, cw2[...]) + cb2[...]
            # click-side projections for the following i2t pass
            ki_o[...] = _dot(q3 + cpe[...], i_wk[...]) + i_bk[...]
            vi_o[...] = _dot(q3, i_wv[...]) + i_bv[...]

    return kernel


def t2i_block(scene_t, spe_t, sb, heat, apply_f, clicks_emb, clicks_pe,
              cbc, cbr, bp, hp, use_mask, skip_pe, tile):
    c, np_pad = scene_t.shape
    nc = clicks_emb.shape[0]
    ncls = hp['cls_w2'].shape[1]
    stream = lambda i: (0, i)
    const = lambda i: (0, 0)

    sa = bp['self_attn']
    ct = bp['cross_t2i']
    ci = bp['cross_i2t']
    const_args = [clicks_emb, clicks_pe, cbc, cbr,
                  sa['wq'], sa['bq'], sa['wk'], sa['bk'],
                  sa['wv'], sa['bv'], sa['wo'], sa['bo'],
                  bp['norm1_w'], bp['norm1_b'],
                  ct['wq'], ct['bq'], ct['wkT'], ct['bkT'],
                  ct['wvT'], ct['bvT'], ct['wo'], ct['bo'],
                  bp['norm2_w'], bp['norm2_b'],
                  bp['mlp_w1'], bp['mlp_b1'], bp['mlp_w2'], bp['mlp_b2'],
                  bp['norm3_w'], bp['norm3_b'],
                  hp['ln_w'], hp['ln_b'],
                  hp['mask_w1'], hp['mask_b1'], hp['mask_w2'], hp['mask_b2'],
                  hp['cls_w1'], hp['cls_b1'], hp['cls_w2'], hp['cls_b2'],
                  ci['wk'], ci['bk'], ci['wv'], ci['bv']]

    in_specs = [pl.BlockSpec((c, tile), stream),
                pl.BlockSpec((c, tile), stream),
                pl.BlockSpec((1, tile), stream)]
    args = [scene_t, spe_t, sb]
    if use_mask:
        in_specs += [pl.BlockSpec((nc, tile), stream),
                     pl.BlockSpec((nc, 1), const)]
        args += [heat, apply_f]
    in_specs += [pl.BlockSpec(a.shape, const) for a in const_args]
    args += const_args

    out_shape = (jax.ShapeDtypeStruct((nc, c), jnp.float32),     # q3
                 jax.ShapeDtypeStruct((nc, ncls), jnp.float32),  # cls logits
                 jax.ShapeDtypeStruct((nc, c), jnp.float32),     # k for i2t
                 jax.ShapeDtypeStruct((nc, c), jnp.float32),     # v for i2t
                 jax.ShapeDtypeStruct((nc, c), jnp.float32))     # mask embed
    out_specs = tuple(pl.BlockSpec(s.shape, const) for s in out_shape)

    return pl.pallas_call(
        _make_t2i_kernel(use_mask, bool(skip_pe), 1.0 / math.sqrt(c)),
        out_shape=out_shape,
        grid=(np_pad // tile,),
        in_specs=in_specs,
        out_specs=out_specs,
        scratch_shapes=[pltpu.VMEM((nc, c), jnp.float32),   # q1
                        pltpu.VMEM((nc, c), jnp.float32),   # q projection
                        pltpu.VMEM((nc, 1), jnp.float32),   # m
                        pltpu.VMEM((nc, 1), jnp.float32),   # l
                        pltpu.VMEM((nc, c), jnp.float32)],  # acc
        compiler_params=_cparams(("arbitrary",)),
    )(*args)


# ----------------------------------------------------------------------------
# i2t: scene -> clicks cross-attention + norm4 fused with the mask head.
# Scene + heatmap emitted channels-first / lane-dense in bf16; the new scene
# aliases the input scene buffer in place.  Also accumulates the per-click
# "any(heat >= tau)" flag used by the next block's attn mask.
# ----------------------------------------------------------------------------
def _make_i2t_kernel(scale):
    def kernel(scene_ref, spe_ref, sb_ref, kc, vc, me, cbc,
               i_wqT, i_bqT, i_woT, i_boT, n4wT, n4bT,
               ns_o, heat_o, apply_o):
        t = pl.program_id(0)

        @pl.when(t == 0)
        def _():
            apply_o[...] = jnp.zeros_like(apply_o)

        x_t = _f32(scene_ref)                                   # (C, T)
        qt = _dot(i_wqT[...], x_t + _f32(spe_ref)) + i_bqT[...]
        s = _dot(kc[...], qt) * scale                           # (Nc, T)
        s = jnp.where(cbc[...] == sb_ref[...], s, NEG_INF)
        # softmax over clicks (axis 0): each scene point attends over clicks
        p = jnp.exp(s - jnp.max(s, axis=0, keepdims=True))
        p = p * pl.reciprocal(jnp.sum(p, axis=0, keepdims=True), approx=True)
        attn_t = _dot_cn(vc[...], p)                            # (C, T)
        a_t = _dot(i_woT[...], attn_t) + i_boT[...]
        ns = _ln_ch(x_t + a_t, n4wT[...], n4bT[...])
        ns_o[...] = ns.astype(ns_o.dtype)
        # fused mask head: heat tile, lane dense
        heat = _sigmoid(_dot(me[...], ns))                      # (Nc, T)
        heat_o[...] = heat.astype(heat_o.dtype)
        valid = sb_ref[...] >= 0
        hit = jnp.where((heat >= TAU) & valid, 1.0, 0.0)
        apply_o[...] = jnp.maximum(apply_o[...],
                                   jnp.max(hit, axis=-1, keepdims=True))

    return kernel


def i2t_block(scene_t, spe_t, sb, k_i, v_i, me, cbc, bp, tile):
    c, np_pad = scene_t.shape
    nc = k_i.shape[0]
    stream = lambda i: (0, i)
    const = lambda i: (0, 0)
    ci = bp['cross_i2t']
    const_args = [k_i, v_i, me, cbc,
                  ci['wqT'], ci['bqT'], ci['woT'], ci['boT'],
                  bp['norm4_wT'], bp['norm4_bT']]
    return pl.pallas_call(
        _make_i2t_kernel(1.0 / math.sqrt(c)),
        out_shape=(jax.ShapeDtypeStruct((c, np_pad), jnp.bfloat16),
                   jax.ShapeDtypeStruct((nc, np_pad), jnp.bfloat16),
                   jax.ShapeDtypeStruct((nc, 1), jnp.float32)),
        grid=(np_pad // tile,),
        in_specs=([pl.BlockSpec((c, tile), stream),
                   pl.BlockSpec((c, tile), stream),
                   pl.BlockSpec((1, tile), stream)]
                  + [pl.BlockSpec(a.shape, const) for a in const_args]),
        out_specs=(pl.BlockSpec((c, tile), stream),
                   pl.BlockSpec((nc, tile), stream),
                   pl.BlockSpec((nc, 1), const)),
        input_output_aliases={0: 0},   # new scene overwrites old scene buffer
        compiler_params=_cparams(("arbitrary",)),
    )(scene_t, spe_t, sb, *const_args)


# ----------------------------------------------------------------------------
# Fourier positional encoding (PositionEmbeddingCoordsSine, 'fourier') — glue
# ----------------------------------------------------------------------------
def fourier_pe(coords, batch_ids, num_batches, gauss_B):
    mins, maxs = [], []
    for b in range(num_batches):
        m = (batch_ids == b)[:, None]
        mins.append(jnp.min(jnp.where(m, coords, jnp.inf), axis=0))
        maxs.append(jnp.max(jnp.where(m, coords, -jnp.inf), axis=0))
    lo = jnp.stack(mins)[batch_ids]
    hi = jnp.stack(maxs)[batch_ids]
    normed = (coords - lo) / jnp.maximum(hi - lo, 1e-6)      # [0, 1] per batch
    proj = (2.0 * math.pi) * (normed @ gauss_B)              # (N, D/2)
    return jnp.concatenate([jnp.sin(proj), jnp.cos(proj)], axis=-1)


# ----------------------------------------------------------------------------
# parameter prep (transposed copies for the channels-first scene layout)
# ----------------------------------------------------------------------------
def _prep_block_params(bp):
    bp = dict(bp)
    ct = dict(bp['cross_t2i'])
    ct['wkT'], ct['bkT'] = ct['wk'].T, ct['bk'].T
    ct['wvT'], ct['bvT'] = ct['wv'].T, ct['bv'].T
    bp['cross_t2i'] = ct
    ci = dict(bp['cross_i2t'])
    ci['wqT'], ci['bqT'] = ci['wq'].T, ci['bq'].T
    ci['woT'], ci['boT'] = ci['wo'].T, ci['bo'].T
    bp['cross_i2t'] = ci
    bp['norm4_wT'], bp['norm4_bT'] = bp['norm4_w'].T, bp['norm4_b'].T
    return bp


# ----------------------------------------------------------------------------
# Full decoder forward
# ----------------------------------------------------------------------------
def agile3d_mask_decoder_forward(params, cfg, scene_feat, discrete_coord,
                                 offset, clicks_index, clicks_batch,
                                 last_masks_heatmap=None):
    # TODO(synk): spconv downsample/pooling, sparse-tensor sort and the
    # host-side coordinate search of get_clicks_index are not ported; click
    # indices are provided directly.
    # TODO(synk): the exact registered transformer_block_cfg is not in the
    # given source; a single-head SAM-style two-way block is used.
    n_points = scene_feat.shape[0]
    n_clicks = clicks_index.shape[0]
    batch_ids = offset2batch(offset, n_points)

    # positional encodings and click gathers (glue, unpadded, row layout)
    scene_pe = fourier_pe(discrete_coord.astype(jnp.float32), batch_ids,
                          offset.shape[0], params['gauss_B'])
    clicks_pe = scene_pe[clicks_index]
    clicks_feat = scene_feat[clicks_index]

    tile = min(MAX_TILE, _round_up(n_points, 128))
    np_pad = _round_up(n_points, tile)
    pad = np_pad - n_points

    # channels-first bf16 scene streams (points on lanes -> dense 128 stores);
    # padded rows get batch id -1 so the int32 batch mask removes them.
    feat_t = jnp.pad(scene_feat, ((0, pad), (0, 0))).T.astype(jnp.bfloat16)
    spe_t = jnp.pad(scene_pe, ((0, pad), (0, 0))).T.astype(jnp.bfloat16)
    sb = jnp.pad(batch_ids, (0, pad), constant_values=-1)[None, :]
    cbc = clicks_batch.astype(jnp.int32)[:, None]
    cbr = clicks_batch.astype(jnp.int32)[None, :]

    hp = params['head']

    # clicks in-proj + initial mask-head embedding (one tiny call)
    clicks_emb, me0 = clicks_prep(clicks_feat, params, hp)

    # scene in-proj fused with the initial mask head (one scene stream)
    # TODO(synk): self.feature_used_for_masks is assigned outside this module
    # in the original code; the projected scene embedding is used instead.
    scene_t, heat, apply_f = scene_prep(
        feat_t, sb, params['in_proj_scene_w'].T, params['in_proj_scene_b'].T,
        me0, tile)

    if last_masks_heatmap is not None:
        # Accept the (N_points, M_clicks) torch layout; new-click rows default
        # to 1.0 (>= tau) so they are never blocked, as in mask_module().
        m_clicks = last_masks_heatmap.shape[1]
        full = jnp.ones((n_clicks, np_pad), jnp.float32)
        full = full.at[:m_clicks, :n_points].set(last_masks_heatmap.T)
        heat = full.astype(jnp.bfloat16)
        valid = (jnp.arange(np_pad) < n_points)[None, :]
        apply_f = jnp.any((full >= TAU) & valid, axis=1,
                          keepdims=True).astype(jnp.float32)

    blocks = [_prep_block_params(bp) for bp in params['blocks']]

    def run_block(bp, scene_t, clicks_emb, heat, apply_f, use_m, skip_pe):
        q3, cls, k_i, v_i, me = t2i_block(
            scene_t, spe_t, sb, heat, apply_f, clicks_emb, clicks_pe,
            cbc, cbr, bp, hp, use_m, skip_pe, tile)
        scene_t, heat, apply_f = i2t_block(
            scene_t, spe_t, sb, k_i, v_i, me, cbc, bp, tile)
        return scene_t, q3, heat, apply_f, cls

    cls_logits = None
    for _ in range(cfg['depth']):
        for j in range(cfg['block_num']):
            use_m = bool(cfg['with_attn_mask'][j])
            scene_t, clicks_emb, heat, apply_f, cls_logits = run_block(
                blocks[j], scene_t, clicks_emb, heat, apply_f, use_m,
                skip_pe=(j == 0))
            if cfg['return_block_id'] == j:
                break
        if cfg['enable_final_block']:
            use_m = bool(cfg['with_attn_mask'][-1])
            scene_t, clicks_emb, heat, apply_f, cls_logits = run_block(
                blocks[-1], scene_t, clicks_emb, heat, apply_f, use_m,
                skip_pe=(cfg['block_num'] > 0))

    # return in the original (N_points, N_clicks) layout, f32
    return heat[:, :n_points].astype(jnp.float32).T, cls_logits


# ----------------------------------------------------------------------------
# deterministic parameter init
# TODO(synk): GenericMLP with more than one hidden layer is not supported.
# ----------------------------------------------------------------------------
def init_params(key, cfg):
    d = cfg['embedding_dim']
    keys = iter(jax.random.split(key, 256))

    def dense(din, dout):
        lim = math.sqrt(6.0 / (din + dout))
        w = jax.random.uniform(next(keys), (din, dout), jnp.float32, -lim, lim)
        return w, jnp.zeros((1, dout), jnp.float32)

    def ln():
        return jnp.ones((1, d), jnp.float32), jnp.zeros((1, d), jnp.float32)

    def attn_params():
        ap = {}
        for n in ('q', 'k', 'v', 'o'):
            ap['w' + n], ap['b' + n] = dense(d, d)
        return ap

    p = {}
    p['in_proj_scene_w'], p['in_proj_scene_b'] = dense(cfg['scene_embedding_dim'], d)
    p['in_proj_clicks_w'], p['in_proj_clicks_b'] = dense(cfg['clicks_embedding_dim'], d)
    p['gauss_B'] = cfg['gauss_scale'] * jax.random.normal(next(keys),
                                                          (3, d // 2), jnp.float32)
    blocks = []
    for _ in range(cfg['block_num'] + int(cfg['enable_final_block'])):
        bp = {'self_attn': attn_params(),
              'cross_t2i': attn_params(),
              'cross_i2t': attn_params()}
        bp['mlp_w1'], bp['mlp_b1'] = dense(d, cfg['mlp_dim'])
        bp['mlp_w2'], bp['mlp_b2'] = dense(cfg['mlp_dim'], d)
        for n in (1, 2, 3, 4):
            bp[f'norm{n}_w'], bp[f'norm{n}_b'] = ln()
        blocks.append(bp)
    p['blocks'] = blocks

    hp = {}
    hp['ln_w'], hp['ln_b'] = ln()
    hp['mask_w1'], hp['mask_b1'] = dense(d, cfg['mask_head_hidden_dims'][0])
    hp['mask_w2'], hp['mask_b2'] = dense(cfg['mask_head_hidden_dims'][0], d)
    hp['cls_w1'], hp['cls_b1'] = dense(d, cfg['cls_head_hidden_dims'][0])
    hp['cls_w2'], hp['cls_b2'] = dense(cfg['cls_head_hidden_dims'][0],
                                       cfg['num_classes'])
    p['head'] = hp
    return p


# ----------------------------------------------------------------------------
if __name__ == "__main__":
    cfg = dict(
        block_num=2, depth=1, enable_final_block=False,
        with_attn_mask=[False, True],
        return_block_id=2,            # training semantics: == block_num
        scene_embedding_dim=32, clicks_embedding_dim=32, embedding_dim=32,
        mlp_dim=64, mask_head_hidden_dims=[32], cls_head_hidden_dims=[32],
        num_classes=8, gauss_scale=1.0,
    )

    key = jax.random.PRNGKey(0)
    kp, kf, kc = jax.random.split(key, 3)
    params = init_params(kp, cfg)

    N_points, N_clicks = 256, 8
    offset = jnp.array([128, 256], jnp.int32)          # batch of 2 scenes
    scene_feat = jax.random.normal(kf, (N_points, cfg['scene_embedding_dim']),
                                   jnp.float32)
    discrete_coord = jax.random.randint(kc, (N_points, 3), 0, 64).astype(jnp.int32)
    clicks_index = jnp.array([3, 17, 40, 77, 130, 150, 200, 250], jnp.int32)
    batch_ids = offset2batch(offset, N_points)
    clicks_batch = batch_ids[clicks_index]

    fwd = jax.jit(lambda p, sf, dc, off, ci, cb: agile3d_mask_decoder_forward(
        p, cfg, sf, dc, off, ci, cb, None))

    masks_heatmap, cls_logits = fwd(params, scene_feat, discrete_coord, offset,
                                    clicks_index, clicks_batch)
    jax.block_until_ready((masks_heatmap, cls_logits))

    assert masks_heatmap.shape == (N_points, N_clicks)
    assert cls_logits.shape == (N_clicks, cfg['num_classes'])
    assert bool(jnp.all(jnp.isfinite(masks_heatmap)))
    assert bool(jnp.all(jnp.isfinite(cls_logits)))
    assert bool(jnp.all((masks_heatmap >= 0.0) & (masks_heatmap <= 1.0)))
    print("KERNEL_OK")
</pallas_src>

<mosaic_0001>
module attributes {stable_mosaic.version = 11 : i64} {
  func.func @_clicks_prep_kernel(%arg0: memref<8x32xf32, #tpu.memory_space<vmem>>, %arg1: memref<32x32xf32, #tpu.memory_space<vmem>>, %arg2: memref<1x32xf32, #tpu.memory_space<vmem>>, %arg3: memref<1x32xf32, #tpu.memory_space<vmem>>, %arg4: memref<1x32xf32, #tpu.memory_space<vmem>>, %arg5: memref<32x32xf32, #tpu.memory_space<vmem>>, %arg6: memref<1x32xf32, #tpu.memory_space<vmem>>, %arg7: memref<32x32xf32, #tpu.memory_space<vmem>>, %arg8: memref<1x32xf32, #tpu.memory_space<vmem>>, %arg9: memref<8x32xf32, #tpu.memory_space<vmem>>, %arg10: memref<8x32xf32, #tpu.memory_space<vmem>>) attributes {dimension_semantics = [], scalar_prefetch = 0 : i64, scratch_operands = 0 : i64, tpu.core_type = #tpu.core_type<tc>} {
    %c0 = arith.constant 0 : index
    %c0_0 = arith.constant 0 : index
    %0 = vector.load %arg0[%c0, %c0_0] : memref<8x32xf32, #tpu.memory_space<vmem>>, vector<8x32xf32>
    %c0_1 = arith.constant 0 : index
    %c0_2 = arith.constant 0 : index
    %1 = vector.load %arg1[%c0_1, %c0_2] : memref<32x32xf32, #tpu.memory_space<vmem>>, vector<32x32xf32>
    %cst = arith.constant dense<0.000000e+00> : vector<8x32xf32>
    %2 = tpu.matmul %0, %1, %cst {dimension_numbers = #tpu.dot_dimension_numbers<[1], [0], [0], [1], [0, 0, 1, 1], [], []>} : vector<8x32xf32>, vector<32x32xf32>, vector<8x32xf32> -> vector<8x32xf32>
    %c0_3 = arith.constant 0 : index
    %c0_4 = arith.constant 0 : index
    %3 = vector.load %arg2[%c0_3, %c0_4] : memref<1x32xf32, #tpu.memory_space<vmem>>, vector<1x32xf32>
    %4 = vector.broadcast %3 : vector<1x32xf32> to vector<8x32xf32>
    %5 = arith.addf %2, %4 : vector<8x32xf32>
    %c0_5 = arith.constant 0 : index
    %c0_6 = arith.constant 0 : index
    %6 = vector.load %arg9[%c0_5, %c0_6] : memref<8x32xf32, #tpu.memory_space<vmem>>, vector<8x32xf32>
    tpu.vector_store %arg9[%c0_5, %c0_6], %5 {strides = array<i32>} : memref<8x32xf32, #tpu.memory_space<vmem>>, vector<8x32xf32>,
    %c0_7 = arith.constant 0 : index
    %c0_8 = arith.constant 0 : index
    %7 = vector.load %arg3[%c0_7, %c0_8] : memref<1x32xf32, #tpu.memory_space<vmem>>, vector<1x32xf32>
    %c0_9 = arith.constant 0 : index
    %c0_10 = arith.constant 0 : index
    %8 = vector.load %arg4[%c0_9, %c0_10] : memref<1x32xf32, #tpu.memory_space<vmem>>, vector<1x32xf32>
    %cst_11 = arith.constant dense<0.000000e+00> : vector<8xf32>
    %9 = vector.multi_reduction <add>, %5, %cst_11 [1] : vector<8x32xf32> to vector<8xf32>
    %10 = vector.shape_cast %9 : vector<8xf32> to vector<8x1xf32>
    %cst_12 = arith.constant 3.200000e+01 : f32
    %11 = vector.broadcast %cst_12 : f32 to vector<8x1xf32>
    %12 = arith.divf %10, %11 : vector<8x1xf32>
    %13 = vector.broadcast %12 : vector<8x1xf32> to vector<8x32xf32>
    %14 = arith.subf %5, %13 : vector<8x32xf32>
    %15 = arith.mulf %14, %14 : vector<8x32xf32>
    %cst_13 = arith.constant dense<0.000000e+00> : vector<8xf32>
    %16 = vector.multi_reduction <add>, %15, %cst_13 [1] : vector<8x32xf32> to vector<8xf32>
    %17 = vector.shape_cast %16 : vector<8xf32> to vector<8x1xf32>
    %cst_14 = arith.constant 3.200000e+01 : f32
    %18 = vector.broadcast %cst_14 : f32 to vector<8x1xf32>
    %19 = arith.divf %17, %18 : vector<8x1xf32>
    %20 = vector.broadcast %12 : vector<8x1xf32> to vector<8x32xf32>
    %21 = arith.subf %5, %20 : vector<8x32xf32>
    %cst_15 = arith.constant 9.99999974E-6 : f32
    %22 = vector.broadcast %cst_15 : f32 to vector<8x1xf32>
    %23 = arith.addf %19, %22 : vector<8x1xf32>
    %24 = math.rsqrt %23 : vector<8x1xf32>
    %25 = vector.broadcast %24 : vector<8x1xf32> to vector<8x32xf32>
    %26 = arith.mulf %21, %25 : vector<8x32xf32>
    %27 = vector.broadcast %7 : vector<1x32xf32> to vector<8x32xf32>
    %28 = arith.mulf %26, %27 : vector<8x32xf32>
    %29 = vector.broadcast %8 : vector<1x32xf32> to vector<8x32xf32>
    %30 = arith.addf %28, %29 : vector<8x32xf32>
    %c0_16 = arith.constant 0 : index
    %c0_17 = arith.constant 0 : index
    %31 = vector.load %arg5[%c0_16, %c0_17] : memref<32x32xf32, #tpu.memory_space<vmem>>, vector<32x32xf32>
    %cst_18 = arith.constant dense<0.000000e+00> : vector<8x32xf32>
    %32 = tpu.matmul %30, %31, %cst_18 {dimension_numbers = #tpu.dot_dimension_numbers<[1], [0], [0], [1], [0, 0, 1, 1], [], []>} : vector<8x32xf32>, vector<32x32xf32>, vector<8x32xf32> -> vector<8x32xf32>
    %c0_19 = arith.constant 0 : index
    %c0_20 = arith.constant 0 : index
    %33 = vector.load %arg6[%c0_19, %c0_20] : memref<1x32xf32, #tpu.memory_space<vmem>>, vector<1x32xf32>
    %34 = vector.broadcast %33 : vector<1x32xf32> to vector<8x32xf32>
    %35 = arith.addf %32, %34 : vector<8x32xf32>
    %cst_21 = arith.constant 0.000000e+00 : f32
    %36 = vector.broadcast %cst_21 : f32 to vector<8x32xf32>
    %37 = arith.maximumf %35, %36 : vector<8x32xf32>
    %c0_22 = arith.constant 0 : index
    %c0_23 = arith.constant 0 : index
    %38 = vector.load %arg7[%c0_22, %c0_23] : memref<32x32xf32, #tpu.memory_space<vmem>>, vector<32x32xf32>
    %cst_24 = arith.constant dense<0.000000e+00> : vector<8x32xf32>
    %39 = tpu.matmul %37, %38, %cst_24 {dimension_numbers = #tpu.dot_dimension_numbers<[1], [0], [0], [1], [0, 0, 1, 1], [], []>} : vector<8x32xf32>, vector<32x32xf32>, vector<8x32xf32> -> vector<8x32xf32>
    %c0_25 = arith.constant 0 : index
    %c0_26 = arith.constant 0 : index
    %40 = vector.load %arg8[%c0_25, %c0_26] : memref<1x32xf32, #tpu.memory_space<vmem>>, vector<1x32xf32>
    %41 = vector.broadcast %40 : vector<1x32xf32> to vector<8x32xf32>
    %42 = arith.addf %39, %41 : vector<8x32xf32>
    %c0_27 = arith.constant 0 : index
    %c0_28 = arith.constant 0 : index
    %43 = vector.load %arg10[%c0_27, %c0_28] : memref<8x32xf32, #tpu.memory_space<vmem>>, vector<8x32xf32>
    tpu.vector_store %arg10[%c0_27, %c0_28], %42 {strides = array<i32>} : memref<8x32xf32, #tpu.memory_space<vmem>>, vector<8x32xf32>,
    return
  }
}

module attributes {stable_mosaic.version = 11 : i64} {
  func.func @_scene_prep_kernel(%arg0: i32, %arg1: memref<32x256xbf16, #tpu.memory_space<vmem>>, %arg2: memref<1x256xi32, #tpu.memory_space<vmem>>, %arg3: memref<32x32xf32, #tpu.memory_space<vmem>>, %arg4: memref<32x1xf32, #tpu.memory_space<vmem>>, %arg5: memref<8x32xf32, #tpu.memory_space<vmem>>, %arg6: memref<32x256xbf16, #tpu.memory_space<vmem>>, %arg7: memref<8x256xbf16, #tpu.memory_space<vmem>>, %arg8: memref<8x1xf32, #tpu.memory_space<vmem>>) attributes {dimension_semantics = [#tpu.dimension_semantics<arbitrary>], iteration_bounds = array<i64: 1>, scalar_prefetch = 0 : i64, scratch_operands = 0 : i64, tpu.core_type = #tpu.core_type<tc>, window_params = [{transform_indices = @transform_0, window_bounds = array<i64: 32, 256>}, {transform_indices = @transform_1, window_bounds = array<i64: 1, 256>}, {pipeline_mode = #tpu.pipeline_mode<synchronous>, transform_indices = @transform_2, window_bounds = array<i64: 32, 32>}, {pipeline_mode = #tpu.pipeline_mode<synchronous>, transform_indices = @transform_3, window_bounds = array<i64: 32, 1>}, {pipeline_mode = #tpu.pipeline_mode<synchronous>, transform_indices = @transform_4, window_bounds = array<i64: 8, 32>}, {transform_indices = @transform_5, window_bounds = array<i64: 32, 256>}, {transform_indices = @transform_6, window_bounds = array<i64: 8, 256>}, {pipeline_mode = #tpu.pipeline_mode<synchronous>, transform_indices = @transform_7, window_bounds = array<i64: 8, 1>}]} {
    %c0_i32 = arith.constant 0 : i32
    %0 = arith.cmpi eq, %arg0, %c0_i32 : i32
    %1 = arith.extui %0 : i1 to i32
    %c0_i32_0 = arith.constant 0 : i32
    %2 = arith.cmpi ne, %1, %c0_i32_0 : i32
    scf.if %2 {
      %cst_27 = arith.constant 0.000000e+00 : f32
      %39 = vector.broadcast %cst_27 : f32 to vector<8x1xf32>
      %c0_28 = arith.constant 0 : index
      %c0_29 = arith.constant 0 : index
      %40 = vector.load %arg8[%c0_28, %c0_29] : memref<8x1xf32, #tpu.memory_space<vmem>>, vector<8x1xf32>
      tpu.vector_store %arg8[%c0_28, %c0_29], %39 {strides = array<i32>} : memref<8x1xf32, #tpu.memory_space<vmem>>, vector<8x1xf32>,
    } else {
    }
    %c0 = arith.constant 0 : index
    %c0_1 = arith.constant 0 : index
    %3 = vector.load %arg3[%c0, %c0_1] : memref<32x32xf32, #tpu.memory_space<vmem>>, vector<32x32xf32>
    %c0_2 = arith.constant 0 : index
    %c0_3 = arith.constant 0 : index
    %4 = vector.load %arg1[%c0_2, %c0_3] : memref<32x256xbf16, #tpu.memory_space<vmem>>, vector<32x256xbf16>
    %5 = arith.extf %4 : vector<32x256xbf16> to vector<32x256xf32>
    %cst = arith.constant dense<0.000000e+00> : vector<32x256xf32>
    %6 = tpu.matmul %3, %5, %cst {dimension_numbers = #tpu.dot_dimension_numbers<[1], [0], [0], [1], [0, 0, 1, 1], [], []>} : vector<32x32xf32>, vector<32x256xf32>, vector<32x256xf32> -> vector<32x256xf32>
    %c0_4 = arith.constant 0 : index
    %c0_5 = arith.constant 0 : index
    %7 = vector.load %arg4[%c0_4, %c0_5] : memref<32x1xf32, #tpu.memory_space<vmem>>, vector<32x1xf32>
    %8 = vector.broadcast %7 : vector<32x1xf32> to vector<32x256xf32>
    %9 = arith.addf %6, %8 : vector<32x256xf32>
    %10 = arith.truncf %9 : vector<32x256xf32> to vector<32x256xbf16>
    %c0_6 = arith.constant 0 : index
    %c0_7 = arith.constant 0 : index
    %11 = vector.load %arg6[%c0_6, %c0_7] : memref<32x256xbf16, #tpu.memory_space<vmem>>, vector<32x256xbf16>
    tpu.vector_store %arg6[%c0_6, %c0_7], %10 {strides = array<i32>} : memref<32x256xbf16, #tpu.memory_space<vmem>>, vector<32x256xbf16>,
    %c0_8 = arith.constant 0 : index
    %c0_9 = arith.constant 0 : index
    %12 = vector.load %arg5[%c0_8, %c0_9] : memref<8x32xf32, #tpu.memory_space<vmem>>, vector<8x32xf32>
    %cst_10 = arith.constant dense<0.000000e+00> : vector<8x256xf32>
    %13 = tpu.matmul %12, %9, %cst_10 {dimension_numbers = #tpu.dot_dimension_numbers<[1], [0], [0], [1], [0, 0, 1, 1], [], []>} : vector<8x32xf32>, vector<32x256xf32>, vector<8x256xf32> -> vector<8x256xf32>
    %cst_11 = arith.constant 0.000000e+00 : f32
    %14 = vector.broadcast %cst_11 : f32 to vector<8x256xf32>
    %15 = arith.subf %14, %13 : vector<8x256xf32>
    %16 = math.exp %15 : vector<8x256xf32>
    %cst_12 = arith.constant 1.000000e+00 : f32
    %17 = vector.broadcast %cst_12 : f32 to vector<8x256xf32>
    %18 = arith.addf %17, %16 : vector<8x256xf32>
    %19 = tpu.reciprocal %18 {approx = true} : vector<8x256xf32> -> vector<8x256xf32>
    %cst_13 = arith.constant 1.000000e+00 : f32
    %20 = vector.broadcast %cst_13 : f32 to vector<8x256xf32>
    %21 = arith.minimumf %19, %20 : vector<8x256xf32>
    %22 = arith.truncf %21 : vector<8x256xf32> to vector<8x256xbf16>
    %c0_14 = arith.constant 0 : index
    %c0_15 = arith.constant 0 : index
    %23 = vector.load %arg7[%c0_14, %c0_15] : memref<8x256xbf16, #tpu.memory_space<vmem>>, vector<8x256xbf16>
    tpu.vector_store %arg7[%c0_14, %c0_15], %22 {strides = array<i32>} : memref<8x256xbf16, #tpu.memory_space<vmem>>, vector<8x256xbf16>,
    %c0_16 = arith.constant 0 : index
    %c0_17 = arith.constant 0 : index
    %24 = vector.load %arg2[%c0_16, %c0_17] : memref<1x256xi32, #tpu.memory_space<vmem>>, vector<1x256xi32>
    %c0_i32_18 = arith.constant 0 : i32
    %25 = vector.broadcast %c0_i32_18 : i32 to vector<1x256xi32>
    %26 = arith.cmpi sge, %24, %25 : vector<1x256xi32>
    %cst_19 = arith.constant 5.000000e-01 : f32
    %27 = vector.broadcast %cst_19 : f32 to vector<8x256xf32>
    %28 = arith.cmpf oge, %21, %27 : vector<8x256xf32>
    %29 = vector.broadcast %26 : vector<1x256xi1> to vector<8x256xi1>
    %30 = arith.andi %28, %29 : vector<8x256xi1>
    %cst_20 = arith.constant 1.000000e+00 : f32
    %cst_21 = arith.constant 0.000000e+00 : f32
    %31 = vector.broadcast %cst_20 : f32 to vector<8x256xf32>
    %32 = vector.broadcast %cst_21 : f32 to vector<8x256xf32>
    %33 = arith.select %30, %31, %32 : vector<8x256xi1>, vector<8x256xf32>
    %c0_22 = arith.constant 0 : index
    %c0_23 = arith.constant 0 : index
    %34 = vector.load %arg8[%c0_22, %c0_23] : memref<8x1xf32, #tpu.memory_space<vmem>>, vector<8x1xf32>
    %cst_24 = arith.constant dense<0xFF800000> : vector<8xf32>
    %35 = vector.multi_reduction <maximumf>, %33, %cst_24 [1] : vector<8x256xf32> to vector<8xf32>
    %36 = vector.shape_cast %35 : vector<8xf32> to vector<8x1xf32>
    %37 = arith.maximumf %34, %36 : vector<8x1xf32>
    %c0_25 = arith.constant 0 : index
    %c0_26 = arith.constant 0 : index
    %38 = vector.load %arg8[%c0_25, %c0_26] : memref<8x1xf32, #tpu.memory_space<vmem>>, vector<8x1xf32>
    tpu.vector_store %arg8[%c0_25, %c0_26], %37 {strides = array<i32>} : memref<8x1xf32, #tpu.memory_space<vmem>>, vector<8x1xf32>,
    return
  }
  func.func @transform_0(%arg0: i32) -> (i32, i32) {
    %c0_i32 = arith.constant 0 : i32
    %c0_i32_0 = arith.constant 0 : i32
    return %c0_i32, %arg0 : i32, i32
  }
  func.func @transform_1(%arg0: i32) -> (i32, i32) {
    %c0_i32 = arith.constant 0 : i32
    %c0_i32_0 = arith.constant 0 : i32
    return %c0_i32, %arg0 : i32, i32
  }
  func.func @transform_2(%arg0: i32) -> (i32, i32) {
    %c0_i32 = arith.constant 0 : i32
    %c0_i32_0 = arith.constant 0 : i32
    %c0_i32_1 = arith.constant 0 : i32
    return %c0_i32, %c0_i32_0 : i32, i32
  }
  func.func @transform_3(%arg0: i32) -> (i32, i32) {
    %c0_i32 = arith.constant 0 : i32
    %c0_i32_0 = arith.constant 0 : i32
    %c0_i32_1 = arith.constant 0 : i32
    return %c0_i32, %c0_i32_0 : i32, i32
  }
  func.func @transform_4(%arg0: i32) -> (i32, i32) {
    %c0_i32 = arith.constant 0 : i32
    %c0_i32_0 = arith.constant 0 : i32
    %c0_i32_1 = arith.constant 0 : i32
    return %c0_i32, %c0_i32_0 : i32, i32
  }
  func.func @transform_5(%arg0: i32) -> (i32, i32) {
    %c0_i32 = arith.constant 0 : i32
    %c0_i32_0 = arith.constant 0 : i32
    return %c0_i32, %arg0 : i32, i32
  }
  func.func @transform_6(%arg0: i32) -> (i32, i32) {
    %c0_i32 = arith.constant 0 : i32
    %c0_i32_0 = arith.constant 0 : i32
    return %c0_i32, %arg0 : i32, i32
  }
  func.func @transform_7(%arg0: i32) -> (i32, i32) {
    %c0_i32 = arith.constant 0 : i32
    %c0_i32_0 = arith.constant 0 : i32
    %c0_i32_1 = arith.constant 0 : i32
    return %c0_i32, %c0_i32_0 : i32, i32
  }
}

module attributes {stable_mosaic.version = 11 : i64} {
  func.func @kernel(%arg0: i32, %arg1: memref<32x256xbf16, #tpu.memory_space<vmem>>, %arg2: memref<32x256xbf16, #tpu.memory_space<vmem>>, %arg3: memref<1x256xi32, #tpu.memory_space<vmem>>, %arg4: memref<8x32xf32, #tpu.memory_space<vmem>>, %arg5: memref<8x32xf32, #tpu.memory_space<vmem>>, %arg6: memref<8x1xi32, #tpu.memory_space<vmem>>, %arg7: memref<1x8xi32, #tpu.memory_space<vmem>>, %arg8: memref<32x32xf32, #tpu.memory_space<vmem>>, %arg9: memref<1x32xf32, #tpu.memory_space<vmem>>, %arg10: memref<32x32xf32, #tpu.memory_space<vmem>>, %arg11: memref<1x32xf32, #tpu.memory_space<vmem>>, %arg12: memref<32x32xf32, #tpu.memory_space<vmem>>, %arg13: memref<1x32xf32, #tpu.memory_space<vmem>>, %arg14: memref<32x32xf32, #tpu.memory_space<vmem>>, %arg15: memref<1x32xf32, #tpu.memory_space<vmem>>, %arg16: memref<1x32xf32, #tpu.memory_space<vmem>>, %arg17: memref<1x32xf32, #tpu.memory_space<vmem>>, %arg18: memref<32x32xf32, #tpu.memory_space<vmem>>, %arg19: memref<1x32xf32, #tpu.memory_space<vmem>>, %arg20: memref<32x32xf32, #tpu.memory_space<vmem>>, %arg21: memref<32x1xf32, #tpu.memory_space<vmem>>, %arg22: memref<32x32xf32, #tpu.memory_space<vmem>>, %arg23: memref<32x1xf32, #tpu.memory_space<vmem>>, %arg24: memref<32x32xf32, #tpu.memory_space<vmem>>, %arg25: memref<1x32xf32, #tpu.memory_space<vmem>>, %arg26: memref<1x32xf32, #tpu.memory_space<vmem>>, %arg27: memref<1x32xf32, #tpu.memory_space<vmem>>, %arg28: memref<32x64xf32, #tpu.memory_space<vmem>>, %arg29: memref<1x64xf32, #tpu.memory_space<vmem>>, %arg30: memref<64x32xf32, #tpu.memory_space<vmem>>, %arg31: memref<1x32xf32, #tpu.memory_space<vmem>>, %arg32: memref<1x32xf32, #tpu.memory_space<vmem>>, %arg33: memref<1x32xf32, #tpu.memory_space<vmem>>, %arg34: memref<1x32xf32, #tpu.memory_space<vmem>>, %arg35: memref<1x32xf32, #tpu.memory_space<vmem>>, %arg36: memref<32x32xf32, #tpu.memory_space<vmem>>, %arg37: memref<1x32xf32, #tpu.memory_space<vmem>>, %arg38: memref<32x32xf32, #tpu.memory_space<vmem>>, %arg39: memref<1x32xf32, #tpu.memory_space<vmem>>, %arg40: memref<32x32xf32, #tpu.memory_space<vmem>>, %arg41: memref<1x32xf32, #tpu.memory_space<vmem>>, %arg42: memref<32x8xf32, #tpu.memory_space<vmem>>, %arg43: memref<1x8xf32, #tpu.memory_space<vmem>>, %arg44: memref<32x32xf32, #tpu.memory_space<vmem>>, %arg45: memref<1x32xf32, #tpu.memory_space<vmem>>, %arg46: memref<32x32xf32, #tpu.memory_space<vmem>>, %arg47: memref<1x32xf32, #tpu.memory_space<vmem>>, %arg48: memref<8x32xf32, #tpu.memory_space<vmem>>, %arg49: memref<8x8xf32, #tpu.memory_space<vmem>>, %arg50: memref<8x32xf32, #tpu.memory_space<vmem>>, %arg51: memref<8x32xf32, #tpu.memory_space<vmem>>, %arg52: memref<8x32xf32, #tpu.memory_space<vmem>>, %arg53: memref<8x32xf32, #tpu.memory_space<vmem>>, %arg54: memref<8x32xf32, #tpu.memory_space<vmem>>, %arg55: memref<8x1xf32, #tpu.memory_space<vmem>>, %arg56: memref<8x1xf32, #tpu.memory_space<vmem>>, %arg57: memref<8x32xf32, #tpu.memory_space<vmem>>) attributes {dimension_semantics = [#tpu.dimension_semantics<arbitrary>], iteration_bounds = array<i64: 1>, scalar_prefetch = 0 : i64, scratch_operands = 5 : i64, tpu.core_type = #tpu.core_type<tc>, window_params = [{transform_indices = @transform_0, window_bounds = array<i64: 32, 256>}, {transform_indices = @transform_1, window_bounds = array<i64: 32, 256>}, {transform_indices = @transform_2, window_bounds = array<i64: 1, 256>}, {pipeline_mode = #tpu.pipeline_mode<synchronous>, transform_indices = @transform_3, window_bounds = array<i64: 8, 32>}, {pipeline_mode = #tpu.pipeline_mode<synchronous>, transform_indices = @transform_4, window_bounds = array<i64: 8, 32>}, {pipeline_mode = #tpu.pipeline_mode<synchronous>, transform_indices = @transform_5, window_bounds = array<i64: 8, 1>}, {pipeline_mode = #tpu.pipeline_mode<synchronous>, transform_indices = @transform_6, window_bounds = array<i64: 1, 8>}, {pipeline_mode = #tpu.pipeline_mode<synchronous>, transform_indices = @transform_7, window_bounds = array<i64: 32, 32>}, {pipeline_mode = #tpu.pipeline_mode<synchronous>, transform_indices = @transform_8, window_bounds = array<i64: 1, 32>}, {pipeline_mode = #tpu.pipeline_mode<synchronous>, transform_indices = @transform_9, window_bounds = array<i64: 32, 32>}, {pipeline_mode = #tpu.pipeline_mode<synchronous>, transform_indices = @transform_10, window_bounds = array<i64: 1, 32>}, {pipeline_mode = #tpu.pipeline_mode<synchronous>, transform_indices = @transform_11, window_bounds = array<i64: 32, 32>}, {pipeline_mode = #tpu.pipeline_mode<synchronous>, transform_indices = @transform_12, window_bounds = array<i64: 1, 32>}, {pipeline_mode = #tpu.pipeline_mode<synchronous>, transform_indices = @transform_13, window_bounds = array<i64: 32, 32>}, {pipeline_mode = #tpu.pipeline_mode<synchronous>, transform_indices = @transform_14, window_bounds = array<i64: 1, 32>}, {pipeline_mode = #tpu.pipeline_mode<synchronous>, transform_indices = @transform_15, window_bounds = array<i64: 1, 32>}, {pipeline_mode = #tpu.pipeline_mode<synchronous>, transform_indices = @transform_16, window_bounds = array<i64: 1, 32>}, {pipeline_mode = #tpu.pipeline_mode<synchronous>, transform_indices = @transform_17, window_bounds = array<i64: 32, 32>}, {pipeline_mode = #tpu.pipeline_mode<synchronous>, transform_indices = @transform_18, window_bounds = array<i64: 1, 32>}, {pipeline_mode = #tpu.pipeline_mode<synchronous>, transform_indices = @transform_19, window_bounds = array<i64: 32, 32>}, {pipeline_mode = #tpu.pipeline_mode<synchronous>, transform_indices = @transform_20, window_bounds = array<i64: 32, 1>}, {pipeline_mode = #tpu.pipeline_mode<synchronous>, transform_indices = @transform_21, window_bounds = array<i64: 32, 32>}, {pipeline_mode = #tpu.pipeline_mode<synchronous>, transform_indices = @transform_22, window_bounds = array<i64: 32, 1>}, {pipeline_mode = #tpu.pipeline_mode<synchronous>, transform_indices = @transform_23, window_bounds = array<i64: 32, 32>}, {pipeline_mode = #tpu.pipeline_mode<synchronous>, transform_indices = @transform_24, window_bounds = array<i64: 1, 32>}, {pipeline_mode = #tpu.pipeline_mode<synchronous>, transform_indices = @transform_25, window_bounds = array<i64: 1, 32>}, {pipeline_mode = #tpu.pipeline_mode<synchronous>, transform_indices = @transform_26, window_bounds = array<i64: 1, 32>}, {pipeline_mode = #tpu.pipeline_mode<synchronous>, transform_indices = @transform_27, window_bounds = array<i64: 32, 64>}, {pipeline_mode = #tpu.pipeline_mode<synchronous>, transform_indices = @transform_28, window_bounds = array<i64: 1, 64>}, {pipeline_mode = #tpu.pipeline_mode<synchronous>, transform_indices = @transform_29, window_bounds = array<i64: 64, 32>}, {pipeline_mode = #tpu.pipeline_mode<synchronous>, transform_indices = @transform_30, window_bounds = array<i64: 1, 32>}, {pipeline_mode = #tpu.pipeline_mode<synchronous>, transform_indices = @transform_31, window_bounds = array<i64: 1, 32>}, {pipeline_mode = #tpu.pipeline_mode<synchronous>, transform_indices = @transform_32, window_bounds = array<i64: 1, 32>}, {pipeline_mode = #tpu.pipeline_mode<synchronous>, transform_indices = @transform_33, window_bounds = array<i64: 1, 32>}, {pipeline_mode = #tpu.pipeline_mode<synchronous>, transform_indices = @transform_34, window_bounds = array<i64: 1, 32>}, {pipeline_mode = #tpu.pipeline_mode<synchronous>, transform_indices = @transform_35, window_bounds = array<i64: 32, 32>}, {pipeline_mode = #tpu.pipeline_mode<synchronous>, transform_indices = @transform_36, window_bounds = array<i64: 1, 32>}, {pipeline_mode = #tpu.pipeline_mode<synchronous>, transform_indices = @transform_37, window_bounds = array<i64: 32, 32>}, {pipeline_mode = #tpu.pipeline_mode<synchronous>, transform_indices = @transform_38, window_bounds = array<i64: 1, 32>}, {pipeline_mode = #tpu.pipeline_mode<synchronous>, transform_indices = @transform_39, window_bounds = array<i64: 32, 32>}, {pipeline_mode = #tpu.pipeline_mode<synchronous>, transform_indices = @transform_40, window_bounds = array<i64: 1, 32>}, {pipeline_mode = #tpu.pipeline_mode<synchronous>, transform_indices = @transform_41, window_bounds = array<i64: 32, 8>}, {pipeline_mode = #tpu.pipeline_mode<synchronous>, transform_indices = @transform_42, window_bounds = array<i64: 1, 8>}, {pipeline_mode = #tpu.pipeline_mode<synchronous>, transform_indices = @transform_43, window_bounds = array<i64: 32, 32>}, {pipeline_mode = #tpu.pipeline_mode<synchronous>, transform_indices = @transform_44, window_bounds = array<i64: 1, 32>}, {pipeline_mode = #tpu.pipeline_mode<synchronous>, transform_indices = @transform_45, window_bounds = array<i64: 32, 32>}, {pipeline_mode = #tpu.pipeline_mode<synchronous>, transform_indices = @transform_46, window_bounds = array<i64: 1, 32>}, {pipeline_mode = #tpu.pipeline_mode<synchronous>, transform_indices = @transform_47, window_bounds = array<i64: 8, 32>}, {pipeline_mode = #tpu.pipeline_mode<synchronous>, transform_indices = @transform_48, window_bounds = array<i64: 8, 8>}, {pipeline_mode = #tpu.pipeline_mode<synchronous>, transform_indices = @transform_49, window_bounds = array<i64: 8, 32>}, {pipeline_mode = #tpu.pipeline_mode<synchronous>, transform_indices = @transform_50, window_bounds = array<i64: 8, 32>}, {pipeline_mode = #tpu.pipeline_mode<synchronous>, transform_indices = @transform_51, window_bounds = array<i64: 8, 32>}]} {
    %c0_i32 = arith.constant 0 : i32
    %0 = arith.cmpi eq, %arg0, %c0_i32 : i32
    %1 = arith.extui %0 : i1 to i32
    %c0_i32_0 = arith.constant 0 : i32
    %2 = arith.cmpi ne, %1, %c0_i32_0 : i32
    scf.if %2 {
      %c0_39 = arith.constant 0 : index
      %c0_40 = arith.constant 0 : index
      %54 = vector.load %arg4[%c0_39, %c0_40] : memref<8x32xf32, #tpu.memory_space<vmem>>, vector<8x32xf32>
      %c0_41 = arith.constant 0 : index
      %c0_42 = arith.constant 0 : index
      %55 = vector.load %arg8[%c0_41, %c0_42] : memref<32x32xf32, #tpu.memory_space<vmem>>, vector<32x32xf32>
      %cst_43 = arith.constant dense<0.000000e+00> : vector<8x32xf32>
      %56 = tpu.matmul %54, %55, %cst_43 {dimension_numbers = #tpu.dot_dimension_numbers<[1], [0], [0], [1], [0, 0, 1, 1], [], []>} : vector<8x32xf32>, vector<32x32xf32>, vector<8x32xf32> -> vector<8x32xf32>
      %c0_44 = arith.constant 0 : index
      %c0_45 = arith.constant 0 : index
      %57 = vector.load %arg9[%c0_44, %c0_45] : memref<1x32xf32, #tpu.memory_space<vmem>>, vector<1x32xf32>
      %58 = vector.broadcast %57 : vector<1x32xf32> to vector<8x32xf32>
      %59 = arith.addf %56, %58 : vector<8x32xf32>
      %c0_46 = arith.constant 0 : index
      %c0_47 = arith.constant 0 : index
      %60 = vector.load %arg10[%c0_46, %c0_47] : memref<32x32xf32, #tpu.memory_space<vmem>>, vector<32x32xf32>
      %cst_48 = arith.constant dense<0.000000e+00> : vector<8x32xf32>
      %61 = tpu.matmul %54, %60, %cst_48 {dimension_numbers = #tpu.dot_dimension_numbers<[1], [0], [0], [1], [0, 0, 1, 1], [], []>} : vector<8x32xf32>, vector<32x32xf32>, vector<8x32xf32> -> vector<8x32xf32>
      %c0_49 = arith.constant 0 : index
      %c0_50 = arith.constant 0 : index
      %62 = vector.load %arg11[%c0_49, %c0_50] : memref<1x32xf32, #tpu.memory_space<vmem>>, vector<1x32xf32>
      %63 = vector.broadcast %62 : vector<1x32xf32> to vector<8x32xf32>
      %64 = arith.addf %61, %63 : vector<8x32xf32>
      %c0_51 = arith.constant 0 : index
      %c0_52 = arith.constant 0 : index
      %65 = vector.load %arg12[%c0_51, %c0_52] : memref<32x32xf32, #tpu.memory_space<vmem>>, vector<32x32xf32>
      %cst_53 = arith.constant dense<0.000000e+00> : vector<8x32xf32>
      %66 = tpu.matmul %54, %65, %cst_53 {dimension_numbers = #tpu.dot_dimension_numbers<[1], [0], [0], [1], [0, 0, 1, 1], [], []>} : vector<8x32xf32>, vector<32x32xf32>, vector<8x32xf32> -> vector<8x32xf32>
      %c0_54 = arith.constant 0 : index
      %c0_55 = arith.constant 0 : index
      %67 = vector.load %arg13[%c0_54, %c0_55] : memref<1x32xf32, #tpu.memory_space<vmem>>, vector<1x32xf32>
      %68 = vector.broadcast %67 : vector<1x32xf32> to vector<8x32xf32>
      %69 = arith.addf %66, %68 : vector<8x32xf32>
      %cst_56 = arith.constant dense<0.000000e+00> : vector<8x8xf32>
      %70 = tpu.matmul %59, %64, %cst_56 {dimension_numbers = #tpu.dot_dimension_numbers<[1], [1], [0], [0], [0, 0, 1, 0], [], []>} : vector<8x32xf32>, vector<8x32xf32>, vector<8x8xf32> -> vector<8x8xf32>
      %cst_57 = arith.constant 0.176776692 : f32
      %71 = vector.broadcast %cst_57 : f32 to vector<8x8xf32>
      %72 = arith.mulf %70, %71 : vector<8x8xf32>
      %c0_58 = arith.constant 0 : index
      %c0_59 = arith.constant 0 : index
      %73 = vector.load %arg6[%c0_58, %c0_59] : memref<8x1xi32, #tpu.memory_space<vmem>>, vector<8x1xi32>
      %c0_60 = arith.constant 0 : index
      %c0_61 = arith.constant 0 : index
      %74 = vector.load %arg7[%c0_60, %c0_61] : memref<1x8xi32, #tpu.memory_space<vmem>>, vector<1x8xi32>
      %75 = vector.broadcast %73 : vector<8x1xi32> to vector<8x8xi32>
      %76 = vector.broadcast %74 : vector<1x8xi32> to vector<8x8xi32>
      %77 = arith.cmpi eq, %75, %76 : vector<8x8xi32>
      %cst_62 = arith.constant -1.000000e+09 : f32
      %78 = vector.broadcast %cst_62 : f32 to vector<8x8xf32>
      %79 = arith.select %77, %72, %78 : vector<8x8xi1>, vector<8x8xf32>
      %cst_63 = arith.constant dense<0xFF800000> : vector<8xf32>
      %80 = vector.multi_reduction <maximumf>, %79, %cst_63 [1] : vector<8x8xf32> to vector<8xf32>
      %81 = vector.shape_cast %80 : vector<8xf32> to vector<8x1xf32>
      %82 = vector.broadcast %81 : vector<8x1xf32> to vector<8x8xf32>
      %83 = arith.subf %79, %82 : vector<8x8xf32>
      %84 = math.exp %83 : vector<8x8xf32>
      %cst_64 = arith.constant dense<0.000000e+00> : vector<8xf32>
      %85 = vector.multi_reduction <add>, %84, %cst_64 [1] : vector<8x8xf32> to vector<8xf32>
      %86 = vector.shape_cast %85 : vector<8xf32> to vector<8x1xf32>
      %87 = tpu.reciprocal %86 {approx = true} : vector<8x1xf32> -> vector<8x1xf32>
      %88 = vector.broadcast %87 : vector<8x1xf32> to vector<8x8xf32>
      %89 = arith.mulf %84, %88 : vector<8x8xf32>
      %cst_65 = arith.constant dense<0.000000e+00> : vector<8x32xf32>
      %90 = tpu.matmul %89, %69, %cst_65 {dimension_numbers = #tpu.dot_dimension_numbers<[1], [0], [0], [1], [0, 0, 1, 1], [], []>} : vector<8x8xf32>, vector<8x32xf32>, vector<8x32xf32> -> vector<8x32xf32>
      %c0_66 = arith.constant 0 : index
      %c0_67 = arith.constant 0 : index
      %91 = vector.load %arg14[%c0_66, %c0_67] : memref<32x32xf32, #tpu.memory_space<vmem>>, vector<32x32xf32>
      %cst_68 = arith.constant dense<0.000000e+00> : vector<8x32xf32>
      %92 = tpu.matmul %90, %91, %cst_68 {dimension_numbers = #tpu.dot_dimension_numbers<[1], [0], [0], [1], [0, 0, 1, 1], [], []>} : vector<8x32xf32>, vector<32x32xf32>, vector<8x32xf32> -> vector<8x32xf32>
      %c0_69 = arith.constant 0 : index
      %c0_70 = arith.constant 0 : index
      %93 = vector.load %arg15[%c0_69, %c0_70] : memref<1x32xf32, #tpu.memory_space<vmem>>, vector<1x32xf32>
      %94 = vector.broadcast %93 : vector<1x32xf32> to vector<8x32xf32>
      %95 = arith.addf %92, %94 : vector<8x32xf32>
      %c0_71 = arith.constant 0 : index
      %c0_72 = arith.constant 0 : index
      %96 = vector.load %arg16[%c0_71, %c0_72] : memref<1x32xf32, #tpu.memory_space<vmem>>, vector<1x32xf32>
      %c0_73 = arith.constant 0 : index
      %c0_74 = arith.constant 0 : index
      %97 = vector.load %arg17[%c0_73, %c0_74] : memref<1x32xf32, #tpu.memory_space<vmem>>, vector<1x32xf32>
      %cst_75 = arith.constant dense<0.000000e+00> : vector<8xf32>
      %98 = vector.multi_reduction <add>, %95, %cst_75 [1] : vector<8x32xf32> to vector<8xf32>
      %99 = vector.shape_cast %98 : vector<8xf32> to vector<8x1xf32>
      %cst_76 = arith.constant 3.200000e+01 : f32
      %100 = vector.broadcast %cst_76 : f32 to vector<8x1xf32>
      %101 = arith.divf %99, %100 : vector<8x1xf32>
      %102 = vector.broadcast %101 : vector<8x1xf32> to vector<8x32xf32>
      %103 = arith.subf %95, %102 : vector<8x32xf32>
      %104 = arith.mulf %103, %103 : vector<8x32xf32>
      %cst_77 = arith.constant dense<0.000000e+00> : vector<8xf32>
      %105 = vector.multi_reduction <add>, %104, %cst_77 [1] : vector<8x32xf32> to vector<8xf32>
      %106 = vector.shape_cast %105 : vector<8xf32> to vector<8x1xf32>
      %cst_78 = arith.constant 3.200000e+01 : f32
      %107 = vector.broadcast %cst_78 : f32 to vector<8x1xf32>
      %108 = arith.divf %106, %107 : vector<8x1xf32>
      %109 = vector.broadcast %101 : vector<8x1xf32> to vector<8x32xf32>
      %110 = arith.subf %95, %109 : vector<8x32xf32>
      %cst_79 = arith.constant 9.99999974E-6 : f32
      %111 = vector.broadcast %cst_79 : f32 to vector<8x1xf32>
      %112 = arith.addf %108, %111 : vector<8x1xf32>
      %113 = math.rsqrt %112 : vector<8x1xf32>
      %114 = vector.broadcast %113 : vector<8x1xf32> to vector<8x32xf32>
      %115 = arith.mulf %110, %114 : vector<8x32xf32>
      %116 = vector.broadcast %96 : vector<1x32xf32> to vector<8x32xf32>
      %117 = arith.mulf %115, %116 : vector<8x32xf32>
      %118 = vector.broadcast %97 : vector<1x32xf32> to vector<8x32xf32>
      %119 = arith.addf %117, %118 : vector<8x32xf32>
      %c0_80 = arith.constant 0 : index
      %c0_81 = arith.constant 0 : index
      %120 = vector.load %arg53[%c0_80, %c0_81] : memref<8x32xf32, #tpu.memory_space<vmem>>, vector<8x32xf32>
      tpu.vector_store %arg53[%c0_80, %c0_81], %119 {strides = array<i32>} : memref<8x32xf32, #tpu.memory_space<vmem>>, vector<8x32xf32>,
      %c0_82 = arith.constant 0 : index
      %c0_83 = arith.constant 0 : index
      %121 = vector.load %arg5[%c0_82, %c0_83] : memref<8x32xf32, #tpu.memory_space<vmem>>, vector<8x32xf32>
      %122 = arith.addf %119, %121 : vector<8x32xf32>
      %c0_84 = arith.constant 0 : index
      %c0_85 = arith.constant 0 : index
      %123 = vector.load %arg18[%c0_84, %c0_85] : memref<32x32xf32, #tpu.memory_space<vmem>>, vector<32x32xf32>
      %cst_86 = arith.constant dense<0.000000e+00> : vector<8x32xf32>
      %124 = tpu.matmul %122, %123, %cst_86 {dimension_numbers = #tpu.dot_dimension_numbers<[1], [0], [0], [1], [0, 0, 1, 1], [], []>} : vector<8x32xf32>, vector<32x32xf32>, vector<8x32xf32> -> vector<8x32xf32>
      %c0_87 = arith.constant 0 : index
      %c0_88 = arith.constant 0 : index
      %125 = vector.load %arg19[%c0_87, %c0_88] : memref<1x32xf32, #tpu.memory_space<vmem>>, vector<1x32xf32>
      %126 = vector.broadcast %125 : vector<1x32xf32> to vector<8x32xf32>
      %127 = arith.addf %124, %126 : vector<8x32xf32>
      %c0_89 = arith.constant 0 : index
      %c0_90 = arith.constant 0 : index
      %128 = vector.load %arg54[%c0_89, %c0_90] : memref<8x32xf32, #tpu.memory_space<vmem>>, vector<8x32xf32>
      tpu.vector_store %arg54[%c0_89, %c0_90], %127 {strides = array<i32>} : memref<8x32xf32, #tpu.memory_space<vmem>>, vector<8x32xf32>,
      %cst_91 = arith.constant -1.000000e+30 : f32
      %129 = vector.broadcast %cst_91 : f32 to vector<8x1xf32>
      %c0_92 = arith.constant 0 : index
      %c0_93 = arith.constant 0 : index
      %130 = vector.load %arg55[%c0_92, %c0_93] : memref<8x1xf32, #tpu.memory_space<vmem>>, vector<8x1xf32>
      tpu.vector_store %arg55[%c0_92, %c0_93], %129 {strides = array<i32>} : memref<8x1xf32, #tpu.memory_space<vmem>>, vector<8x1xf32>,
      %cst_94 = arith.constant 0.000000e+00 : f32
      %131 = vector.broadcast %cst_94 : f32 to vector<8x1xf32>
      %c0_95 = arith.constant 0 : index
      %c0_96 = arith.constant 0 : index
      %132 = vector.load %arg56[%c0_95, %c0_96] : memref<8x1xf32, #tpu.memory_space<vmem>>, vector<8x1xf32>
      tpu.vector_store %arg56[%c0_95, %c0_96], %131 {strides = array<i32>} : memref<8x1xf32, #tpu.memory_space<vmem>>, vector<8x1xf32>,
      %cst_97 = arith.constant 0.000000e+00 : f32
      %133 = vector.broadcast %cst_97 : f32 to vector<8x32xf32>
      %c0_98 = arith.constant 0 : index
      %c0_99 = arith.constant 0 : index
      %134 = vector.load %arg57[%c0_98, %c0_99] : memref<8x32xf32, #tpu.memory_space<vmem>>, vector<8x32xf32>
      tpu.vector_store %arg57[%c0_98, %c0_99], %133 {strides = array<i32>} : memref<8x32xf32, #tpu.memory_space<vmem>>, vector<8x32xf32>,
    } else {
    }
    %c0 = arith.constant 0 : index
    %c0_1 = arith.constant 0 : index
    %3 = vector.load %arg1[%c0, %c0_1] : memref<32x256xbf16, #tpu.memory_space<vmem>>, vector<32x256xbf16>
    %4 = arith.extf %3 : vector<32x256xbf16> to vector<32x256xf32>
    %c0_2 = arith.constant 0 : index
    %c0_3 = arith.constant 0 : index
    %5 = vector.load %arg2[%c0_2, %c0_3] : memref<32x256xbf16, #tpu.memory_space<vmem>>, vector<32x256xbf16>
    %6 = arith.extf %5 : vector<32x256xbf16> to vector<32x256xf32>
    %7 = arith.addf %4, %6 : vector<32x256xf32>
    %c0_4 = arith.constant 0 : index
    %c0_5 = arith.constant 0 : index
    %8 = vector.load %arg20[%c0_4, %c0_5] : memref<32x32xf32, #tpu.memory_space<vmem>>, vector<32x32xf32>
    %cst = arith.constant dense<0.000000e+00> : vector<32x256xf32>
    %9 = tpu.matmul %8, %7, %cst {dimension_numbers = #tpu.dot_dimension_numbers<[1], [0], [0], [1], [0, 0, 1, 1], [], []>} : vector<32x32xf32>, vector<32x256xf32>, vector<32x256xf32> -> vector<32x256xf32>
    %c0_6 = arith.constant 0 : index
    %c0_7 = arith.constant 0 : index
    %10 = vector.load %arg21[%c0_6, %c0_7] : memref<32x1xf32, #tpu.memory_space<vmem>>, vector<32x1xf32>
    %11 = vector.broadcast %10 : vector<32x1xf32> to vector<32x256xf32>
    %12 = arith.addf %9, %11 : vector<32x256xf32>
    %c0_8 = arith.constant 0 : index
    %c0_9 = arith.constant 0 : index
    %13 = vector.load %arg22[%c0_8, %c0_9] : memref<32x32xf32, #tpu.memory_space<vmem>>, vector<32x32xf32>
    %cst_10 = arith.constant dense<0.000000e+00> : vector<32x256xf32>
    %14 = tpu.matmul %13, %4, %cst_10 {dimension_numbers = #tpu.dot_dimension_numbers<[1], [0], [0], [1], [0, 0, 1, 1], [], []>} : vector<32x32xf32>, vector<32x256xf32>, vector<32x256xf32> -> vector<32x256xf32>
    %c0_11 = arith.constant 0 : index
    %c0_12 = arith.constant 0 : index
    %15 = vector.load %arg23[%c0_11, %c0_12] : memref<32x1xf32, #tpu.memory_space<vmem>>, vector<32x1xf32>
    %16 = vector.broadcast %15 : vector<32x1xf32> to vector<32x256xf32>
    %17 = arith.addf %14, %16 : vector<32x256xf32>
    %c0_13 = arith.constant 0 : index
    %c0_14 = arith.constant 0 : index
    %18 = vector.load %arg54[%c0_13, %c0_14] : memref<8x32xf32, #tpu.memory_space<vmem>>, vector<8x32xf32>
    %cst_15 = arith.constant dense<0.000000e+00> : vector<8x256xf32>
    %19 = tpu.matmul %18, %12, %cst_15 {dimension_numbers = #tpu.dot_dimension_numbers<[1], [0], [0], [1], [0, 0, 1, 1], [], []>} : vector<8x32xf32>, vector<32x256xf32>, vector<8x256xf32> -> vector<8x256xf32>
    %cst_16 = arith.constant 0.176776692 : f32
    %20 = vector.broadcast %cst_16 : f32 to vector<8x256xf32>
    %21 = arith.mulf %19, %20 : vector<8x256xf32>
    %c0_17 = arith.constant 0 : index
    %c0_18 = arith.constant 0 : index
    %22 = vector.load %arg6[%c0_17, %c0_18] : memref<8x1xi32, #tpu.memory_space<vmem>>, vector<8x1xi32>
    %c0_19 = arith.constant 0 : index
    %c0_20 = arith.constant 0 : index
    %23 = vector.load %arg3[%c0_19, %c0_20] : memref<1x256xi32, #tpu.memory_space<vmem>>, vector<1x256xi32>
    %24 = vector.broadcast %22 : vector<8x1xi32> to vector<8x256xi32>
    %25 = vector.broadcast %23 : vector<1x256xi32> to vector<8x256xi32>
    %26 = arith.cmpi eq, %24, %25 : vector<8x256xi32>
    %cst_21 = arith.constant -1.000000e+09 : f32
    %27 = vector.broadcast %cst_21 : f32 to vector<8x256xf32>
    %28 = arith.select %26, %21, %27 : vector<8x256xi1>, vector<8x256xf32>
    %c0_22 = arith.constant 0 : index
    %c0_23 = arith.constant 0 : index
    %29 = vector.load %arg55[%c0_22, %c0_23] : memref<8x1xf32, #tpu.memory_space<vmem>>, vector<8x1xf32>
    %cst_24 = arith.constant dense<0xFF800000> : vector<8xf32>
    %30 = vector.multi_reduction <maximumf>, %28, %cst_24 [1] : vector<8x256xf32> to vector<8xf32>
    %31 = vector.shape_cast %30 : vector<8xf32> to vector<8x1xf32>
    %32 = arith.maximumf %29, %31 : vector<8x1xf32>
    %33 = arith.subf %29, %32 : vector<8x1xf32>
    %34 = math.exp %33 : vector<8x1xf32>
    %35 = vector.broadcast %32 : vector<8x1xf32> to vector<8x256xf32>
    %36 = arith.subf %28, %35 : vector<8x256xf32>
    %37 = math.exp %36 : vector<8x256xf32>
    %c0_25 = arith.constant 0 : index
    %c0_26 = arith.constant 0 : index
    %38 = vector.load %arg56[%c0_25, %c0_26] : memref<8x1xf32, #tpu.memory_space<vmem>>, vector<8x1xf32>
    %39 = arith.mulf %34, %38 : vector<8x1xf32>
    %cst_27 = arith.constant dense<0.000000e+00> : vector<8xf32>
    %40 = vector.multi_reduction <add>, %37, %cst_27 [1] : vector<8x256xf32> to vector<8xf32>
    %41 = vector.shape_cast %40 : vector<8xf32> to vector<8x1xf32>
    %42 = arith.addf %39, %41 : vector<8x1xf32>
    %c0_28 = arith.constant 0 : index
    %c0_29 = arith.constant 0 : index
    %43 = vector.load %arg56[%c0_28, %c0_29] : memref<8x1xf32, #tpu.memory_space<vmem>>, vector<8x1xf32>
    tpu.vector_store %arg56[%c0_28, %c0_29], %42 {strides = array<i32>} : memref<8x1xf32, #tpu.memory_space<vmem>>, vector<8x1xf32>,
    %c0_30 = arith.constant 0 : index
    %c0_31 = arith.constant 0 : index
    %44 = vector.load %arg57[%c0_30, %c0_31] : memref<8x32xf32, #tpu.memory_space<vmem>>, vector<8x32xf32>
    %45 = vector.broadcast %34 : vector<8x1xf32> to vector<8x32xf32>
    %46 = arith.mulf %45, %44 : vector<8x32xf32>
    %cst_32 = arith.constant dense<0.000000e+00> : vector<8x32xf32>
    %47 = tpu.matmul %37, %17, %cst_32 {dimension_numbers = #tpu.dot_dimension_numbers<[1], [1], [0], [0], [0, 0, 1, 0], [], []>} : vector<8x256xf32>, vector<32x256xf32>, vector<8x32xf32> -> vector<8x32xf32>
    %48 = arith.addf %46, %47 : vector<8x32xf32>
    %c0_33 = arith.constant 0 : index
    %c0_34 = arith.constant 0 : index
    %49 = vector.load %arg57[%c0_33, %c0_34] : memref<8x32xf32, #tpu.memory_space<vmem>>, vector<8x32xf32>
    tpu.vector_store %arg57[%c0_33, %c0_34], %48 {strides = array<i32>} : memref<8x32xf32, #tpu.memory_space<vmem>>, vector<8x32xf32>,
    %c0_35 = arith.constant 0 : index
    %c0_36 = arith.constant 0 : index
    %50 = vector.load %arg55[%c0_35, %c0_36] : memref<8x1xf32, #tpu.memory_space<vmem>>, vector<8x1xf32>
    tpu.vector_store %arg55[%c0_35, %c0_36], %32 {strides = array<i32>} : memref<8x1xf32, #tpu.memory_space<vmem>>, vector<8x1xf32>,
    %c0_i32_37 = arith.constant 0 : i32
    %51 = arith.cmpi eq, %arg0, %c0_i32_37 : i32
    %52 = arith.extui %51 : i1 to i32
    %c0_i32_38 = arith.constant 0 : i32
    %53 = arith.cmpi ne, %52, %c0_i32_38 : i32
    scf.if %53 {
      %c0_39 = arith.constant 0 : index
      %c0_40 = arith.constant 0 : index
      %54 = vector.load %arg57[%c0_39, %c0_40] : memref<8x32xf32, #tpu.memory_space<vmem>>, vector<8x32xf32>
      %c0_41 = arith.constant 0 : index
      %c0_42 = arith.constant 0 : index
      %55 = vector.load %arg56[%c0_41, %c0_42] : memref<8x1xf32, #tpu.memory_space<vmem>>, vector<8x1xf32>
      %56 = tpu.reciprocal %55 {approx = true} : vector<8x1xf32> -> vector<8x1xf32>
      %57 = vector.broadcast %56 : vector<8x1xf32> to vector<8x32xf32>
      %58 = arith.mulf %54, %57 : vector<8x32xf32>
      %c0_43 = arith.constant 0 : index
      %c0_44 = arith.constant 0 : index
      %59 = vector.load %arg24[%c0_43, %c0_44] : memref<32x32xf32, #tpu.memory_space<vmem>>, vector<32x32xf32>
      %cst_45 = arith.constant dense<0.000000e+00> : vector<8x32xf32>
      %60 = tpu.matmul %58, %59, %cst_45 {dimension_numbers = #tpu.dot_dimension_numbers<[1], [0], [0], [1], [0, 0, 1, 1], [], []>} : vector<8x32xf32>, vector<32x32xf32>, vector<8x32xf32> -> vector<8x32xf32>
      %c0_46 = arith.constant 0 : index
      %c0_47 = arith.constant 0 : index
      %61 = vector.load %arg25[%c0_46, %c0_47] : memref<1x32xf32, #tpu.memory_space<vmem>>, vector<1x32xf32>
      %62 = vector.broadcast %61 : vector<1x32xf32> to vector<8x32xf32>
      %63 = arith.addf %60, %62 : vector<8x32xf32>
      %c0_48 = arith.constant 0 : index
      %c0_49 = arith.constant 0 : index
      %64 = vector.load %arg53[%c0_48, %c0_49] : memref<8x32xf32, #tpu.memory_space<vmem>>, vector<8x32xf32>
      %65 = arith.addf %64, %63 : vector<8x32xf32>
      %c0_50 = arith.constant 0 : index
      %c0_51 = arith.constant 0 : index
      %66 = vector.load %arg26[%c0_50, %c0_51] : memref<1x32xf32, #tpu.memory_space<vmem>>, vector<1x32xf32>
      %c0_52 = arith.constant 0 : index
      %c0_53 = arith.constant 0 : index
      %67 = vector.load %arg27[%c0_52, %c0_53] : memref<1x32xf32, #tpu.memory_space<vmem>>, vector<1x32xf32>
      %cst_54 = arith.constant dense<0.000000e+00> : vector<8xf32>
      %68 = vector.multi_reduction <add>, %65, %cst_54 [1] : vector<8x32xf32> to vector<8xf32>
      %69 = vector.shape_cast %68 : vector<8xf32> to vector<8x1xf32>
      %cst_55 = arith.constant 3.200000e+01 : f32
      %70 = vector.broadcast %cst_55 : f32 to vector<8x1xf32>
      %71 = arith.divf %69, %70 : vector<8x1xf32>
      %72 = vector.broadcast %71 : vector<8x1xf32> to vector<8x32xf32>
      %73 = arith.subf %65, %72 : vector<8x32xf32>
      %74 = arith.mulf %73, %73 : vector<8x32xf32>
      %cst_56 = arith.constant dense<0.000000e+00> : vector<8xf32>
      %75 = vector.multi_reduction <add>, %74, %cst_56 [1] : vector<8x32xf32> to vector<8xf32>
      %76 = vector.shape_cast %75 : vector<8xf32> to vector<8x1xf32>
      %cst_57 = arith.constant 3.200000e+01 : f32
      %77 = vector.broadcast %cst_57 : f32 to vector<8x1xf32>
      %78 = arith.divf %76, %77 : vector<8x1xf32>
      %79 = vector.broadcast %71 : vector<8x1xf32> to vector<8x32xf32>
      %80 = arith.subf %65, %79 : vector<8x32xf32>
      %cst_58 = arith.constant 9.99999974E-6 : f32
      %81 = vector.broadcast %cst_58 : f32 to vector<8x1xf32>
      %82 = arith.addf %78, %81 : vector<8x1xf32>
      %83 = math.rsqrt %82 : vector<8x1xf32>
      %84 = vector.broadcast %83 : vector<8x1xf32> to vector<8x32xf32>
      %85 = arith.mulf %80, %84 : vector<8x32xf32>
      %86 = vector.broadcast %66 : vector<1x32xf32> to vector<8x32xf32>
      %87 = arith.mulf %85, %86 : vector<8x32xf32>
      %88 = vector.broadcast %67 : vector<1x32xf32> to vector<8x32xf32>
      %89 = arith.addf %87, %88 : vector<8x32xf32>
      %c0_59 = arith.constant 0 : index
      %c0_60 = arith.constant 0 : index
      %90 = vector.load %arg28[%c0_59, %c0_60] : memref<32x64xf32, #tpu.memory_space<vmem>>, vector<32x64xf32>
      %cst_61 = arith.constant dense<0.000000e+00> : vector<8x64xf32>
      %91 = tpu.matmul %89, %90, %cst_61 {dimension_numbers = #tpu.dot_dimension_numbers<[1], [0], [0], [1], [0, 0, 1, 1], [], []>} : vector<8x32xf32>, vector<32x64xf32>, vector<8x64xf32> -> vector<8x64xf32>
      %c0_62 = arith.constant 0 : index
      %c0_63 = arith.constant 0 : index
      %92 = vector.load %arg29[%c0_62, %c0_63] : memref<1x64xf32, #tpu.memory_space<vmem>>, vector<1x64xf32>
      %93 = vector.broadcast %92 : vector<1x64xf32> to vector<8x64xf32>
      %94 = arith.addf %91, %93 : vector<8x64xf32>
      %cst_64 = arith.constant 0.000000e+00 : f32
      %95 = vector.broadcast %cst_64 : f32 to vector<8x64xf32>
      %96 = arith.maximumf %94, %95 : vector<8x64xf32>
      %c0_65 = arith.constant 0 : index
      %c0_66 = arith.constant 0 : index
      %97 = vector.load %arg30[%c0_65, %c0_66] : memref<64x32xf32, #tpu.memory_space<vmem>>, vector<64x32xf32>
      %cst_67 = arith.constant dense<0.000000e+00> : vector<8x32xf32>
      %98 = tpu.matmul %96, %97, %cst_67 {dimension_numbers = #tpu.dot_dimension_numbers<[1], [0], [0], [1], [0, 0, 1, 1], [], []>} : vector<8x64xf32>, vector<64x32xf32>, vector<8x32xf32> -> vector<8x32xf32>
      %99 = arith.addf %89, %98 : vector<8x32xf32>
      %c0_68 = arith.constant 0 : index
      %c0_69 = arith.constant 0 : index
      %100 = vector.load %arg31[%c0_68, %c0_69] : memref<1x32xf32, #tpu.memory_space<vmem>>, vector<1x32xf32>
      %101 = vector.broadcast %100 : vector<1x32xf32> to vector<8x32xf32>
      %102 = arith.addf %99, %101 : vector<8x32xf32>
      %c0_70 = arith.constant 0 : index
      %c0_71 = arith.constant 0 : index
      %103 = vector.load %arg32[%c0_70, %c0_71] : memref<1x32xf32, #tpu.memory_space<vmem>>, vector<1x32xf32>
      %c0_72 = arith.constant 0 : index
      %c0_73 = arith.constant 0 : index
      %104 = vector.load %arg33[%c0_72, %c0_73] : memref<1x32xf32, #tpu.memory_space<vmem>>, vector<1x32xf32>
      %cst_74 = arith.constant dense<0.000000e+00> : vector<8xf32>
      %105 = vector.multi_reduction <add>, %102, %cst_74 [1] : vector<8x32xf32> to vector<8xf32>
      %106 = vector.shape_cast %105 : vector<8xf32> to vector<8x1xf32>
      %cst_75 = arith.constant 3.200000e+01 : f32
      %107 = vector.broadcast %cst_75 : f32 to vector<8x1xf32>
      %108 = arith.divf %106, %107 : vector<8x1xf32>
      %109 = vector.broadcast %108 : vector<8x1xf32> to vector<8x32xf32>
      %110 = arith.subf %102, %109 : vector<8x32xf32>
      %111 = arith.mulf %110, %110 : vector<8x32xf32>
      %cst_76 = arith.constant dense<0.000000e+00> : vector<8xf32>
      %112 = vector.multi_reduction <add>, %111, %cst_76 [1] : vector<8x32xf32> to vector<8xf32>
      %113 = vector.shape_cast %112 : vector<8xf32> to vector<8x1xf32>
      %cst_77 = arith.constant 3.200000e+01 : f32
      %114 = vector.broadcast %cst_77 : f32 to vector<8x1xf32>
      %115 = arith.divf %113, %114 : vector<8x1xf32>
      %116 = vector.broadcast %108 : vector<8x1xf32> to vector<8x32xf32>
      %117 = arith.subf %102, %116 : vector<8x32xf32>
      %cst_78 = arith.constant 9.99999974E-6 : f32
      %118 = vector.broadcast %cst_78 : f32 to vector<8x1xf32>
      %119 = arith.addf %115, %118 : vector<8x1xf32>
      %120 = math.rsqrt %119 : vector<8x1xf32>
      %121 = vector.broadcast %120 : vector<8x1xf32> to vector<8x32xf32>
      %122 = arith.mulf %117, %121 : vector<8x32xf32>
      %123 = vector.broadcast %103 : vector<1x32xf32> to vector<8x32xf32>
      %124 = arith.mulf %122, %123 : vector<8x32xf32>
      %125 = vector.broadcast %104 : vector<1x32xf32> to vector<8x32xf32>
      %126 = arith.addf %124, %125 : vector<8x32xf32>
      %c0_79 = arith.constant 0 : index
      %c0_80 = arith.constant 0 : index
      %127 = vector.load %arg48[%c0_79, %c0_80] : memref<8x32xf32, #tpu.memory_space<vmem>>, vector<8x32xf32>
      tpu.vector_store %arg48[%c0_79, %c0_80], %126 {strides = array<i32>} : memref<8x32xf32, #tpu.memory_space<vmem>>, vector<8x32xf32>,
      %c0_81 = arith.constant 0 : index
      %c0_82 = arith.constant 0 : index
      %128 = vector.load %arg34[%c0_81, %c0_82] : memref<1x32xf32, #tpu.memory_space<vmem>>, vector<1x32xf32>
      %c0_83 = arith.constant 0 : index
      %c0_84 = arith.constant 0 : index
      %129 = vector.load %arg35[%c0_83, %c0_84] : memref<1x32xf32, #tpu.memory_space<vmem>>, vector<1x32xf32>
      %cst_85 = arith.constant dense<0.000000e+00> : vector<8xf32>
      %130 = vector.multi_reduction <add>, %126, %cst_85 [1] : vector<8x32xf32> to vector<8xf32>
      %131 = vector.shape_cast %130 : vector<8xf32> to vector<8x1xf32>
      %cst_86 = arith.constant 3.200000e+01 : f32
      %132 = vector.broadcast %cst_86 : f32 to vector<8x1xf32>
      %133 = arith.divf %131, %132 : vector<8x1xf32>
      %134 = vector.broadcast %133 : vector<8x1xf32> to vector<8x32xf32>
      %135 = arith.subf %126, %134 : vector<8x32xf32>
      %136 = arith.mulf %135, %135 : vector<8x32xf32>
      %cst_87 = arith.constant dense<0.000000e+00> : vector<8xf32>
      %137 = vector.multi_reduction <add>, %136, %cst_87 [1] : vector<8x32xf32> to vector<8xf32>
      %138 = vector.shape_cast %137 : vector<8xf32> to vector<8x1xf32>
      %cst_88 = arith.constant 3.200000e+01 : f32
      %139 = vector.broadcast %cst_88 : f32 to vector<8x1xf32>
      %140 = arith.divf %138, %139 : vector<8x1xf32>
      %141 = vector.broadcast %133 : vector<8x1xf32> to vector<8x32xf32>
      %142 = arith.subf %126, %141 : vector<8x32xf32>
      %cst_89 = arith.constant 9.99999974E-6 : f32
      %143 = vector.broadcast %cst_89 : f32 to vector<8x1xf32>
      %144 = arith.addf %140, %143 : vector<8x1xf32>
      %145 = math.rsqrt %144 : vector<8x1xf32>
      %146 = vector.broadcast %145 : vector<8x1xf32> to vector<8x32xf32>
      %147 = arith.mulf %142, %146 : vector<8x32xf32>
      %148 = vector.broadcast %128 : vector<1x32xf32> to vector<8x32xf32>
      %149 = arith.mulf %147, %148 : vector<8x32xf32>
      %150 = vector.broadcast %129 : vector<1x32xf32> to vector<8x32xf32>
      %151 = arith.addf %149, %150 : vector<8x32xf32>
      %c0_90 = arith.constant 0 : index
      %c0_91 = arith.constant 0 : index
      %152 = vector.load %arg36[%c0_90, %c0_91] : memref<32x32xf32, #tpu.memory_space<vmem>>, vector<32x32xf32>
      %cst_92 = arith.constant dense<0.000000e+00> : vector<8x32xf32>
      %153 = tpu.matmul %151, %152, %cst_92 {dimension_numbers = #tpu.dot_dimension_numbers<[1], [0], [0], [1], [0, 0, 1, 1], [], []>} : vector<8x32xf32>, vector<32x32xf32>, vector<8x32xf32> -> vector<8x32xf32>
      %c0_93 = arith.constant 0 : index
      %c0_94 = arith.constant 0 : index
      %154 = vector.load %arg37[%c0_93, %c0_94] : memref<1x32xf32, #tpu.memory_space<vmem>>, vector<1x32xf32>
      %155 = vector.broadcast %154 : vector<1x32xf32> to vector<8x32xf32>
      %156 = arith.addf %153, %155 : vector<8x32xf32>
      %cst_95 = arith.constant 0.000000e+00 : f32
      %157 = vector.broadcast %cst_95 : f32 to vector<8x32xf32>
      %158 = arith.maximumf %156, %157 : vector<8x32xf32>
      %c0_96 = arith.constant 0 : index
      %c0_97 = arith.constant 0 : index
      %159 = vector.load %arg38[%c0_96, %c0_97] : memref<32x32xf32, #tpu.memory_space<vmem>>, vector<32x32xf32>
      %cst_98 = arith.constant dense<0.000000e+00> : vector<8x32xf32>
      %160 = tpu.matmul %158, %159, %cst_98 {dimension_numbers = #tpu.dot_dimension_numbers<[1], [0], [0], [1], [0, 0, 1, 1], [], []>} : vector<8x32xf32>, vector<32x32xf32>, vector<8x32xf32> -> vector<8x32xf32>
      %c0_99 = arith.constant 0 : index
      %c0_100 = arith.constant 0 : index
      %161 = vector.load %arg39[%c0_99, %c0_100] : memref<1x32xf32, #tpu.memory_space<vmem>>, vector<1x32xf32>
      %162 = vector.broadcast %161 : vector<1x32xf32> to vector<8x32xf32>
      %163 = arith.addf %160, %162 : vector<8x32xf32>
      %c0_101 = arith.constant 0 : index
      %c0_102 = arith.constant 0 : index
      %164 = vector.load %arg52[%c0_101, %c0_102] : memref<8x32xf32, #tpu.memory_space<vmem>>, vector<8x32xf32>
      tpu.vector_store %arg52[%c0_101, %c0_102], %163 {strides = array<i32>} : memref<8x32xf32, #tpu.memory_space<vmem>>, vector<8x32xf32>,
      %c0_103 = arith.constant 0 : index
      %c0_104 = arith.constant 0 : index
      %165 = vector.load %arg40[%c0_103, %c0_104] : memref<32x32xf32, #tpu.memory_space<vmem>>, vector<32x32xf32>
      %cst_105 = arith.constant dense<0.000000e+00> : vector<8x32xf32>
      %166 = tpu.matmul %151, %165, %cst_105 {dimension_numbers = #tpu.dot_dimension_numbers<[1], [0], [0], [1], [0, 0, 1, 1], [], []>} : vector<8x32xf32>, vector<32x32xf32>, vector<8x32xf32> -> vector<8x32xf32>
      %c0_106 = arith.constant 0 : index
      %c0_107 = arith.constant 0 : index
      %167 = vector.load %arg41[%c0_106, %c0_107] : memref<1x32xf32, #tpu.memory_space<vmem>>, vector<1x32xf32>
      %168 = vector.broadcast %167 : vector<1x32xf32> to vector<8x32xf32>
      %169 = arith.addf %166, %168 : vector<8x32xf32>
      %cst_108 = arith.constant 0.000000e+00 : f32
      %170 = vector.broadcast %cst_108 : f32 to vector<8x32xf32>
      %171 = arith.maximumf %169, %170 : vector<8x32xf32>
      %c0_109 = arith.constant 0 : index
      %c0_110 = arith.constant 0 : index
      %172 = vector.load %arg42[%c0_109, %c0_110] : memref<32x8xf32, #tpu.memory_space<vmem>>, vector<32x8xf32>
      %cst_111 = arith.constant dense<0.000000e+00> : vector<8x8xf32>
      %173 = tpu.matmul %171, %172, %cst_111 {dimension_numbers = #tpu.dot_dimension_numbers<[1], [0], [0], [1], [0, 0, 1, 1], [], []>} : vector<8x32xf32>, vector<32x8xf32>, vector<8x8xf32> -> vector<8x8xf32>
      %c0_112 = arith.constant 0 : index
      %c0_113 = arith.constant 0 : index
      %174 = vector.load %arg43[%c0_112, %c0_113] : memref<1x8xf32, #tpu.memory_space<vmem>>, vector<1x8xf32>
      %175 = vector.broadcast %174 : vector<1x8xf32> to vector<8x8xf32>
      %176 = arith.addf %173, %175 : vector<8x8xf32>
      %c0_114 = arith.constant 0 : index
      %c0_115 = arith.constant 0 : index
      %177 = vector.load %arg49[%c0_114, %c0_115] : memref<8x8xf32, #tpu.memory_space<vmem>>, vector<8x8xf32>
      tpu.vector_store %arg49[%c0_114, %c0_115], %176 {strides = array<i32>} : memref<8x8xf32, #tpu.memory_space<vmem>>, vector<8x8xf32>,
      %c0_116 = arith.constant 0 : index
      %c0_117 = arith.constant 0 : index
      %178 = vector.load %arg5[%c0_116, %c0_117] : memref<8x32xf32, #tpu.memory_space<vmem>>, vector<8x32xf32>
      %179 = arith.addf %126, %178 : vector<8x32xf32>
      %c0_118 = arith.constant 0 : index
      %c0_119 = arith.constant 0 : index
      %180 = vector.load %arg44[%c0_118, %c0_119] : memref<32x32xf32, #tpu.memory_space<vmem>>, vector<32x32xf32>
      %cst_120 = arith.constant dense<0.000000e+00> : vector<8x32xf32>
      %181 = tpu.matmul %179, %180, %cst_120 {dimension_numbers = #tpu.dot_dimension_numbers<[1], [0], [0], [1], [0, 0, 1, 1], [], []>} : vector<8x32xf32>, vector<32x32xf32>, vector<8x32xf32> -> vector<8x32xf32>
      %c0_121 = arith.constant 0 : index
      %c0_122 = arith.constant 0 : index
      %182 = vector.load %arg45[%c0_121, %c0_122] : memref<1x32xf32, #tpu.memory_space<vmem>>, vector<1x32xf32>
      %183 = vector.broadcast %182 : vector<1x32xf32> to vector<8x32xf32>
      %184 = arith.addf %181, %183 : vector<8x32xf32>
      %c0_123 = arith.constant 0 : index
      %c0_124 = arith.constant 0 : index
      %185 = vector.load %arg50[%c0_123, %c0_124] : memref<8x32xf32, #tpu.memory_space<vmem>>, vector<8x32xf32>
      tpu.vector_store %arg50[%c0_123, %c0_124], %184 {strides = array<i32>} : memref<8x32xf32, #tpu.memory_space<vmem>>, vector<8x32xf32>,
      %c0_125 = arith.constant 0 : index
      %c0_126 = arith.constant 0 : index
      %186 = vector.load %arg46[%c0_125, %c0_126] : memref<32x32xf32, #tpu.memory_space<vmem>>, vector<32x32xf32>
      %cst_127 = arith.constant dense<0.000000e+00> : vector<8x32xf32>
      %187 = tpu.matmul %126, %186, %cst_127 {dimension_numbers = #tpu.dot_dimension_numbers<[1], [0], [0], [1], [0, 0, 1, 1], [], []>} : vector<8x32xf32>, vector<32x32xf32>, vector<8x32xf32> -> vector<8x32xf32>
      %c0_128 = arith.constant 0 : index
      %c0_129 = arith.constant 0 : index
      %188 = vector.load %arg47[%c0_128, %c0_129] : memref<1x32xf32, #tpu.memory_space<vmem>>, vector<1x32xf32>
      %189 = vector.broadcast %188 : vector<1x32xf32> to vector<8x32xf32>
      %190 = arith.addf %187, %189 : vector<8x32xf32>
      %c0_130 = arith.constant 0 : index
      %c0_131 = arith.constant 0 : index
      %191 = vector.load %arg51[%c0_130, %c0_131] : memref<8x32xf32, #tpu.memory_space<vmem>>, vector<8x32xf32>
      tpu.vector_store %arg51[%c0_130, %c0_131], %190 {strides = array<i32>} : memref<8x32xf32, #tpu.memory_space<vmem>>, vector<8x32xf32>,
    } else {
    }
    return
  }
  func.func @transform_0(%arg0: i32) -> (i32, i32) {
    %c0_i32 = arith.constant 0 : i32
    %c0_i32_0 = arith.constant 0 : i32
    return %c0_i32, %arg0 : i32, i32
  }
  func.func @transform_1(%arg0: i32) -> (i32, i32) {
    %c0_i32 = arith.constant 0 : i32
    %c0_i32_0 = arith.constant 0 : i32
    return %c0_i32, %arg0 : i32, i32
  }
  func.func @transform_2(%arg0: i32) -> (i32, i32) {
    %c0_i32 = arith.constant 0 : i32
    %c0_i32_0 = arith.constant 0 : i32
    return %c0_i32, %arg0 : i32, i32
  }
  func.func @transform_3(%arg0: i32) -> (i32, i32) {
    %c0_i32 = arith.constant 0 : i32
    %c0_i32_0 = arith.constant 0 : i32
    %c0_i32_1 = arith.constant 0 : i32
    return %c0_i32, %c0_i32_0 : i32, i32
  }
  func.func @transform_4(%arg0: i32) -> (i32, i32) {
    %c0_i32 = arith.constant 0 : i32
    %c0_i32_0 = arith.constant 0 : i32
    %c0_i32_1 = arith.constant 0 : i32
    return %c0_i32, %c0_i32_0 : i32, i32
  }
  func.func @transform_5(%arg0: i32) -> (i32, i32) {
    %c0_i32 = arith.constant 0 : i32
    %c0_i32_0 = arith.constant 0 : i32
    %c0_i32_1 = arith.constant 0 : i32
    return %c0_i32, %c0_i32_0 : i32, i32
  }
  func.func @transform_6(%arg0: i32) -> (i32, i32) {
    %c0_i32 = arith.constant 0 : i32
    %c0_i32_0 = arith.constant 0 : i32
    %c0_i32_1 = arith.constant 0 : i32
    return %c0_i32, %c0_i32_0 : i32, i32
  }
  func.func @transform_7(%arg0: i32) -> (i32, i32) {
    %c0_i32 = arith.constant 0 : i32
    %c0_i32_0 = arith.constant 0 : i32
    %c0_i32_1 = arith.constant 0 : i32
    return %c0_i32, %c0_i32_0 : i32, i32
  }
  func.func @transform_8(%arg0: i32) -> (i32, i32) {
    %c0_i32 = arith.constant 0 : i32
    %c0_i32_0 = arith.constant 0 : i32
    %c0_i32_1 = arith.constant 0 : i32
    return %c0_i32, %c0_i32_0 : i32, i32
  }
  func.func @transform_9(%arg0: i32) -> (i32, i32) {
    %c0_i32 = arith.constant 0 : i32
    %c0_i32_0 = arith.constant 0 : i32
    %c0_i32_1 = arith.constant 0 : i32
    return %c0_i32, %c0_i32_0 : i32, i32
  }
  func.func @transform_10(%arg0: i32) -> (i32, i32) {
    %c0_i32 = arith.constant 0 : i32
    %c0_i32_0 = arith.constant 0 : i32
    %c0_i32_1 = arith.constant 0 : i32
    return %c0_i32, %c0_i32_0 : i32, i32
  }
  func.func @transform_11(%arg0: i32) -> (i32, i32) {
    %c0_i32 = arith.constant 0 : i32
    %c0_i32_0 = arith.constant 0 : i32
    %c0_i32_1 = arith.constant 0 : i32
    return %c0_i32, %c0_i32_0 : i32, i32
  }
  func.func @transform_12(%arg0: i32) -> (i32, i32) {
    %c0_i32 = arith.constant 0 : i32
    %c0_i32_0 = arith.constant 0 : i32
    %c0_i32_1 = arith.constant 0 : i32
    return %c0_i32, %c0_i32_0 : i32, i32
  }
  func.func @transform_13(%arg0: i32) -> (i32, i32) {
    %c0_i32 = arith.constant 0 : i32
    %c0_i32_0 = arith.constant 0 : i32
    %c0_i32_1 = arith.constant 0 : i32
    return %c0_i32, %c0_i32_0 : i32, i32
  }
  func.func @transform_14(%arg0: i32) -> (i32, i32) {
    %c0_i32 = arith.constant 0 : i32
    %c0_i32_0 = arith.constant 0 : i32
    %c0_i32_1 = arith.constant 0 : i32
    return %c0_i32, %c0_i32_0 : i32, i32
  }
  func.func @transform_15(%arg0: i32) -> (i32, i32) {
    %c0_i32 = arith.constant 0 : i32
    %c0_i32_0 = arith.constant 0 : i32
    %c0_i32_1 = arith.constant 0 : i32
    return %c0_i32, %c0_i32_0 : i32, i32
  }
  func.func @transform_16(%arg0: i32) -> (i32, i32) {
    %c0_i32 = arith.constant 0 : i32
    %c0_i32_0 = arith.constant 0 : i32
    %c0_i32_1 = arith.constant 0 : i32
    return %c0_i32, %c0_i32_0 : i32, i32
  }
  func.func @transform_17(%arg0: i32) -> (i32, i32) {
    %c0_i32 = arith.constant 0 : i32
    %c0_i32_0 = arith.constant 0 : i32
    %c0_i32_1 = arith.constant 0 : i32
    return %c0_i32, %c0_i32_0 : i32, i32
  }
  func.func @transform_18(%arg0: i32) -> (i32, i32) {
    %c0_i32 = arith.constant 0 : i32
    %c0_i32_0 = arith.constant 0 : i32
    %c0_i32_1 = arith.constant 0 : i32
    return %c0_i32, %c0_i32_0 : i32, i32
  }
  func.func @transform_19(%arg0: i32) -> (i32, i32) {
    %c0_i32 = arith.constant 0 : i32
    %c0_i32_0 = arith.constant 0 : i32
    %c0_i32_1 = arith.constant 0 : i32
    return %c0_i32, %c0_i32_0 : i32, i32
  }
  func.func @transform_20(%arg0: i32) -> (i32, i32) {
    %c0_i32 = arith.constant 0 : i32
    %c0_i32_0 = arith.constant 0 : i32
    %c0_i32_1 = arith.constant 0 : i32
    return %c0_i32, %c0_i32_0 : i32, i32
  }
  func.func @transform_21(%arg0: i32) -> (i32, i32) {
    %c0_i32 = arith.constant 0 : i32
    %c0_i32_0 = arith.constant 0 : i32
    %c0_i32_1 = arith.constant 0 : i32
    return %c0_i32, %c0_i32_0 : i32, i32
  }
  func.func @transform_22(%arg0: i32) -> (i32, i32) {
    %c0_i32 = arith.constant 0 : i32
    %c0_i32_0 = arith.constant 0 : i32
    %c0_i32_1 = arith.constant 0 : i32
    return %c0_i32, %c0_i32_0 : i32, i32
  }
  func.func @transform_23(%arg0: i32) -> (i32, i32) {
    %c0_i32 = arith.constant 0 : i32
    %c0_i32_0 = arith.constant 0 : i32
    %c0_i32_1 = arith.constant 0 : i32
    return %c0_i32, %c0_i32_0 : i32, i32
  }
  func.func @transform_24(%arg0: i32) -> (i32, i32) {
    %c0_i32 = arith.constant 0 : i32
    %c0_i32_0 = arith.constant 0 : i32
    %c0_i32_1 = arith.constant 0 : i32
    return %c0_i32, %c0_i32_0 : i32, i32
  }
  func.func @transform_25(%arg0: i32) -> (i32, i32) {
    %c0_i32 = arith.constant 0 : i32
    %c0_i32_0 = arith.constant 0 : i32
    %c0_i32_1 = arith.constant 0 : i32
    return %c0_i32, %c0_i32_0 : i32, i32
  }
  func.func @transform_26(%arg0: i32) -> (i32, i32) {
    %c0_i32 = arith.constant 0 : i32
    %c0_i32_0 = arith.constant 0 : i32
    %c0_i32_1 = arith.constant 0 : i32
    return %c0_i32, %c0_i32_0 : i32, i32
  }
  func.func @transform_27(%arg0: i32) -> (i32, i32) {
    %c0_i32 = arith.constant 0 : i32
    %c0_i32_0 = arith.constant 0 : i32
    %c0_i32_1 = arith.constant 0 : i32
    return %c0_i32, %c0_i32_0 : i32, i32
  }
  func.func @transform_28(%arg0: i32) -> (i32, i32) {
    %c0_i32 = arith.constant 0 : i32
    %c0_i32_0 = arith.constant 0 : i32
    %c0_i32_1 = arith.constant 0 : i32
    return %c0_i32, %c0_i32_0 : i32, i32
  }
  func.func @transform_29(%arg0: i32) -> (i32, i32) {
    %c0_i32 = arith.constant 0 : i32
    %c0_i32_0 = arith.constant 0 : i32
    %c0_i32_1 = arith.constant 0 : i32
    return %c0_i32, %c0_i32_0 : i32, i32
  }
  func.func @transform_30(%arg0: i32) -> (i32, i32) {
    %c0_i32 = arith.constant 0 : i32
    %c0_i32_0 = arith.constant 0 : i32
    %c0_i32_1 = arith.constant 0 : i32
    return %c0_i32, %c0_i32_0 : i32, i32
  }
  func.func @transform_31(%arg0: i32) -> (i32, i32) {
    %c0_i32 = arith.constant 0 : i32
    %c0_i32_0 = arith.constant 0 : i32
    %c0_i32_1 = arith.constant 0 : i32
    return %c0_i32, %c0_i32_0 : i32, i32
  }
  func.func @transform_32(%arg0: i32) -> (i32, i32) {
    %c0_i32 = arith.constant 0 : i32
    %c0_i32_0 = arith.constant 0 : i32
    %c0_i32_1 = arith.constant 0 : i32
    return %c0_i32, %c0_i32_0 : i32, i32
  }
  func.func @transform_33(%arg0: i32) -> (i32, i32) {
    %c0_i32 = arith.constant 0 : i32
    %c0_i32_0 = arith.constant 0 : i32
    %c0_i32_1 = arith.constant 0 : i32
    return %c0_i32, %c0_i32_0 : i32, i32
  }
  func.func @transform_34(%arg0: i32) -> (i32, i32) {
    %c0_i32 = arith.constant 0 : i32
    %c0_i32_0 = arith.constant 0 : i32
    %c0_i32_1 = arith.constant 0 : i32
    return %c0_i32, %c0_i32_0 : i32, i32
  }
  func.func @transform_35(%arg0: i32) -> (i32, i32) {
    %c0_i32 = arith.constant 0 : i32
    %c0_i32_0 = arith.constant 0 : i32
    %c0_i32_1 = arith.constant 0 : i32
    return %c0_i32, %c0_i32_0 : i32, i32
  }
  func.func @transform_36(%arg0: i32) -> (i32, i32) {
    %c0_i32 = arith.constant 0 : i32
    %c0_i32_0 = arith.constant 0 : i32
    %c0_i32_1 = arith.constant 0 : i32
    return %c0_i32, %c0_i32_0 : i32, i32
  }
  func.func @transform_37(%arg0: i32) -> (i32, i32) {
    %c0_i32 = arith.constant 0 : i32
    %c0_i32_0 = arith.constant 0 : i32
    %c0_i32_1 = arith.constant 0 : i32
    return %c0_i32, %c0_i32_0 : i32, i32
  }
  func.func @transform_38(%arg0: i32) -> (i32, i32) {
    %c0_i32 = arith.constant 0 : i32
    %c0_i32_0 = arith.constant 0 : i32
    %c0_i32_1 = arith.constant 0 : i32
    return %c0_i32, %c0_i32_0 : i32, i32
  }
  func.func @transform_39(%arg0: i32) -> (i32, i32) {
    %c0_i32 = arith.constant 0 : i32
    %c0_i32_0 = arith.constant 0 : i32
    %c0_i32_1 = arith.constant 0 : i32
    return %c0_i32, %c0_i32_0 : i32, i32
  }
  func.func @transform_40(%arg0: i32) -> (i32, i32) {
    %c0_i32 = arith.constant 0 : i32
    %c0_i32_0 = arith.constant 0 : i32
    %c0_i32_1 = arith.constant 0 : i32
    return %c0_i32, %c0_i32_0 : i32, i32
  }
  func.func @transform_41(%arg0: i32) -> (i32, i32) {
    %c0_i32 = arith.constant 0 : i32
    %c0_i32_0 = arith.constant 0 : i32
    %c0_i32_1 = arith.constant 0 : i32
    return %c0_i32, %c0_i32_0 : i32, i32
  }
  func.func @transform_42(%arg0: i32) -> (i32, i32) {
    %c0_i32 = arith.constant 0 : i32
    %c0_i32_0 = arith.constant 0 : i32
    %c0_i32_1 = arith.constant 0 : i32
    return %c0_i32, %c0_i32_0 : i32, i32
  }
  func.func @transform_43(%arg0: i32) -> (i32, i32) {
    %c0_i32 = arith.constant 0 : i32
    %c0_i32_0 = arith.constant 0 : i32
    %c0_i32_1 = arith.constant 0 : i32
    return %c0_i32, %c0_i32_0 : i32, i32
  }
  func.func @transform_44(%arg0: i32) -> (i32, i32) {
    %c0_i32 = arith.constant 0 : i32
    %c0_i32_0 = arith.constant 0 : i32
    %c0_i32_1 = arith.constant 0 : i32
    return %c0_i32, %c0_i32_0 : i32, i32
  }
  func.func @transform_45(%arg0: i32) -> (i32, i32) {
    %c0_i32 = arith.constant 0 : i32
    %c0_i32_0 = arith.constant 0 : i32
    %c0_i32_1 = arith.constant 0 : i32
    return %c0_i32, %c0_i32_0 : i32, i32
  }
  func.func @transform_46(%arg0: i32) -> (i32, i32) {
    %c0_i32 = arith.constant 0 : i32
    %c0_i32_0 = arith.constant 0 : i32
    %c0_i32_1 = arith.constant 0 : i32
    return %c0_i32, %c0_i32_0 : i32, i32
  }
  func.func @transform_47(%arg0: i32) -> (i32, i32) {
    %c0_i32 = arith.constant 0 : i32
    %c0_i32_0 = arith.constant 0 : i32
    %c0_i32_1 = arith.constant 0 : i32
    return %c0_i32, %c0_i32_0 : i32, i32
  }
  func.func @transform_48(%arg0: i32) -> (i32, i32) {
    %c0_i32 = arith.constant 0 : i32
    %c0_i32_0 = arith.constant 0 : i32
    %c0_i32_1 = arith.constant 0 : i32
    return %c0_i32, %c0_i32_0 : i32, i32
  }
  func.func @transform_49(%arg0: i32) -> (i32, i32) {
    %c0_i32 = arith.constant 0 : i32
    %c0_i32_0 = arith.constant 0 : i32
    %c0_i32_1 = arith.constant 0 : i32
    return %c0_i32, %c0_i32_0 : i32, i32
  }
  func.func @transform_50(%arg0: i32) -> (i32, i32) {
    %c0_i32 = arith.constant 0 : i32
    %c0_i32_0 = arith.constant 0 : i32
    %c0_i32_1 = arith.constant 0 : i32
    return %c0_i32, %c0_i32_0 : i32, i32
  }
  func.func @transform_51(%arg0: i32) -> (i32, i32) {
    %c0_i32 = arith.constant 0 : i32
    %c0_i32_0 = arith.constant 0 : i32
    %c0_i32_1 = arith.constant 0 : i32
    return %c0_i32, %c0_i32_0 : i32, i32
  }
}

module attributes {stable_mosaic.version = 11 : i64} {
  func.func @kernel(%arg0: i32, %arg1: memref<32x256xbf16, #tpu.memory_space<vmem>>, %arg2: memref<32x256xbf16, #tpu.memory_space<vmem>>, %arg3: memref<1x256xi32, #tpu.memory_space<vmem>>, %arg4: memref<8x32xf32, #tpu.memory_space<vmem>>, %arg5: memref<8x32xf32, #tpu.memory_space<vmem>>, %arg6: memref<8x32xf32, #tpu.memory_space<vmem>>, %arg7: memref<8x1xi32, #tpu.memory_space<vmem>>, %arg8: memref<32x32xf32, #tpu.memory_space<vmem>>, %arg9: memref<32x1xf32, #tpu.memory_space<vmem>>, %arg10: memref<32x32xf32, #tpu.memory_space<vmem>>, %arg11: memref<32x1xf32, #tpu.memory_space<vmem>>, %arg12: memref<32x1xf32, #tpu.memory_space<vmem>>, %arg13: memref<32x1xf32, #tpu.memory_space<vmem>>, %arg14: memref<32x256xbf16, #tpu.memory_space<vmem>>, %arg15: memref<8x256xbf16, #tpu.memory_space<vmem>>, %arg16: memref<8x1xf32, #tpu.memory_space<vmem>>) attributes {dimension_semantics = [#tpu.dimension_semantics<arbitrary>], iteration_bounds = array<i64: 1>, scalar_prefetch = 0 : i64, scratch_operands = 0 : i64, tpu.core_type = #tpu.core_type<tc>, window_params = [{transform_indices = @transform_0, window_bounds = array<i64: 32, 256>}, {transform_indices = @transform_1, window_bounds = array<i64: 32, 256>}, {transform_indices = @transform_2, window_bounds = array<i64: 1, 256>}, {pipeline_mode = #tpu.pipeline_mode<synchronous>, transform_indices = @transform_3, window_bounds = array<i64: 8, 32>}, {pipeline_mode = #tpu.pipeline_mode<synchronous>, transform_indices = @transform_4, window_bounds = array<i64: 8, 32>}, {pipeline_mode = #tpu.pipeline_mode<synchronous>, transform_indices = @transform_5, window_bounds = array<i64: 8, 32>}, {pipeline_mode = #tpu.pipeline_mode<synchronous>, transform_indices = @transform_6, window_bounds = array<i64: 8, 1>}, {pipeline_mode = #tpu.pipeline_mode<synchronous>, transform_indices = @transform_7, window_bounds = array<i64: 32, 32>}, {pipeline_mode = #tpu.pipeline_mode<synchronous>, transform_indices = @transform_8, window_bounds = array<i64: 32, 1>}, {pipeline_mode = #tpu.pipeline_mode<synchronous>, transform_indices = @transform_9, window_bounds = array<i64: 32, 32>}, {pipeline_mode = #tpu.pipeline_mode<synchronous>, transform_indices = @transform_10, window_bounds = array<i64: 32, 1>}, {pipeline_mode = #tpu.pipeline_mode<synchronous>, transform_indices = @transform_11, window_bounds = array<i64: 32, 1>}, {pipeline_mode = #tpu.pipeline_mode<synchronous>, transform_indices = @transform_12, window_bounds = array<i64: 32, 1>}, {transform_indices = @transform_13, window_bounds = array<i64: 32, 256>}, {transform_indices = @transform_14, window_bounds = array<i64: 8, 256>}, {pipeline_mode = #tpu.pipeline_mode<synchronous>, transform_indices = @transform_15, window_bounds = array<i64: 8, 1>}]} {
    %c0_i32 = arith.constant 0 : i32
    %0 = arith.cmpi eq, %arg0, %c0_i32 : i32
    %1 = arith.extui %0 : i1 to i32
    %c0_i32_0 = arith.constant 0 : i32
    %2 = arith.cmpi ne, %1, %c0_i32_0 : i32
    scf.if %2 {
      %cst_57 = arith.constant 0.000000e+00 : f32
      %95 = vector.broadcast %cst_57 : f32 to vector<8x1xf32>
      %c0_58 = arith.constant 0 : index
      %c0_59 = arith.constant 0 : index
      %96 = vector.load %arg16[%c0_58, %c0_59] : memref<8x1xf32, #tpu.memory_space<vmem>>, vector<8x1xf32>
      tpu.vector_store %arg16[%c0_58, %c0_59], %95 {strides = array<i32>} : memref<8x1xf32, #tpu.memory_space<vmem>>, vector<8x1xf32>,
    } else {
    }
    %c0 = arith.constant 0 : index
    %c0_1 = arith.constant 0 : index
    %3 = vector.load %arg1[%c0, %c0_1] : memref<32x256xbf16, #tpu.memory_space<vmem>>, vector<32x256xbf16>
    %4 = arith.extf %3 : vector<32x256xbf16> to vector<32x256xf32>
    %c0_2 = arith.constant 0 : index
    %c0_3 = arith.constant 0 : index
    %5 = vector.load %arg8[%c0_2, %c0_3] : memref<32x32xf32, #tpu.memory_space<vmem>>, vector<32x32xf32>
    %c0_4 = arith.constant 0 : index
    %c0_5 = arith.constant 0 : index
    %6 = vector.load %arg2[%c0_4, %c0_5] : memref<32x256xbf16, #tpu.memory_space<vmem>>, vector<32x256xbf16>
    %7 = arith.extf %6 : vector<32x256xbf16> to vector<32x256xf32>
    %8 = arith.addf %4, %7 : vector<32x256xf32>
    %cst = arith.constant dense<0.000000e+00> : vector<32x256xf32>
    %9 = tpu.matmul %5, %8, %cst {dimension_numbers = #tpu.dot_dimension_numbers<[1], [0], [0], [1], [0, 0, 1, 1], [], []>} : vector<32x32xf32>, vector<32x256xf32>, vector<32x256xf32> -> vector<32x256xf32>
    %c0_6 = arith.constant 0 : index
    %c0_7 = arith.constant 0 : index
    %10 = vector.load %arg9[%c0_6, %c0_7] : memref<32x1xf32, #tpu.memory_space<vmem>>, vector<32x1xf32>
    %11 = vector.broadcast %10 : vector<32x1xf32> to vector<32x256xf32>
    %12 = arith.addf %9, %11 : vector<32x256xf32>
    %c0_8 = arith.constant 0 : index
    %c0_9 = arith.constant 0 : index
    %13 = vector.load %arg4[%c0_8, %c0_9] : memref<8x32xf32, #tpu.memory_space<vmem>>, vector<8x32xf32>
    %cst_10 = arith.constant dense<0.000000e+00> : vector<8x256xf32>
    %14 = tpu.matmul %13, %12, %cst_10 {dimension_numbers = #tpu.dot_dimension_numbers<[1], [0], [0], [1], [0, 0, 1, 1], [], []>} : vector<8x32xf32>, vector<32x256xf32>, vector<8x256xf32> -> vector<8x256xf32>
    %cst_11 = arith.constant 0.176776692 : f32
    %15 = vector.broadcast %cst_11 : f32 to vector<8x256xf32>
    %16 = arith.mulf %14, %15 : vector<8x256xf32>
    %c0_12 = arith.constant 0 : index
    %c0_13 = arith.constant 0 : index
    %17 = vector.load %arg7[%c0_12, %c0_13] : memref<8x1xi32, #tpu.memory_space<vmem>>, vector<8x1xi32>
    %c0_14 = arith.constant 0 : index
    %c0_15 = arith.constant 0 : index
    %18 = vector.load %arg3[%c0_14, %c0_15] : memref<1x256xi32, #tpu.memory_space<vmem>>, vector<1x256xi32>
    %19 = vector.broadcast %17 : vector<8x1xi32> to vector<8x256xi32>
    %20 = vector.broadcast %18 : vector<1x256xi32> to vector<8x256xi32>
    %21 = arith.cmpi eq, %19, %20 : vector<8x256xi32>
    %cst_16 = arith.constant -1.000000e+09 : f32
    %22 = vector.broadcast %cst_16 : f32 to vector<8x256xf32>
    %23 = arith.select %21, %16, %22 : vector<8x256xi1>, vector<8x256xf32>
    %cst_17 = arith.constant dense<0xFF800000> : vector<256xf32>
    %24 = vector.multi_reduction <maximumf>, %23, %cst_17 [0] : vector<8x256xf32> to vector<256xf32>
    %25 = vector.shape_cast %24 : vector<256xf32> to vector<1x256xf32>
    %26 = vector.broadcast %25 : vector<1x256xf32> to vector<8x256xf32>
    %27 = arith.subf %23, %26 : vector<8x256xf32>
    %28 = math.exp %27 : vector<8x256xf32>
    %cst_18 = arith.constant dense<0.000000e+00> : vector<256xf32>
    %29 = vector.multi_reduction <add>, %28, %cst_18 [0] : vector<8x256xf32> to vector<256xf32>
    %30 = vector.shape_cast %29 : vector<256xf32> to vector<1x256xf32>
    %31 = tpu.reciprocal %30 {approx = true} : vector<1x256xf32> -> vector<1x256xf32>
    %32 = vector.broadcast %31 : vector<1x256xf32> to vector<8x256xf32>
    %33 = arith.mulf %28, %32 : vector<8x256xf32>
    %c0_19 = arith.constant 0 : index
    %c0_20 = arith.constant 0 : index
    %34 = vector.load %arg5[%c0_19, %c0_20] : memref<8x32xf32, #tpu.memory_space<vmem>>, vector<8x32xf32>
    %cst_21 = arith.constant dense<0.000000e+00> : vector<32x256xf32>
    %35 = tpu.matmul %34, %33, %cst_21 {dimension_numbers = #tpu.dot_dimension_numbers<[0], [0], [1], [1], [0, 1, 1, 1], [], []>} : vector<8x32xf32>, vector<8x256xf32>, vector<32x256xf32> -> vector<32x256xf32>
    %c0_22 = arith.constant 0 : index
    %c0_23 = arith.constant 0 : index
    %36 = vector.load %arg10[%c0_22, %c0_23] : memref<32x32xf32, #tpu.memory_space<vmem>>, vector<32x32xf32>
    %cst_24 = arith.constant dense<0.000000e+00> : vector<32x256xf32>
    %37 = tpu.matmul %36, %35, %cst_24 {dimension_numbers = #tpu.dot_dimension_numbers<[1], [0], [0], [1], [0, 0, 1, 1], [], []>} : vector<32x32xf32>, vector<32x256xf32>, vector<32x256xf32> -> vector<32x256xf32>
    %c0_25 = arith.constant 0 : index
    %c0_26 = arith.constant 0 : index
    %38 = vector.load %arg11[%c0_25, %c0_26] : memref<32x1xf32, #tpu.memory_space<vmem>>, vector<32x1xf32>
    %39 = vector.broadcast %38 : vector<32x1xf32> to vector<32x256xf32>
    %40 = arith.addf %37, %39 : vector<32x256xf32>
    %41 = arith.addf %4, %40 : vector<32x256xf32>
    %c0_27 = arith.constant 0 : index
    %c0_28 = arith.constant 0 : index
    %42 = vector.load %arg12[%c0_27, %c0_28] : memref<32x1xf32, #tpu.memory_space<vmem>>, vector<32x1xf32>
    %c0_29 = arith.constant 0 : index
    %c0_30 = arith.constant 0 : index
    %43 = vector.load %arg13[%c0_29, %c0_30] : memref<32x1xf32, #tpu.memory_space<vmem>>, vector<32x1xf32>
    %cst_31 = arith.constant dense<0.000000e+00> : vector<256xf32>
    %44 = vector.multi_reduction <add>, %41, %cst_31 [0] : vector<32x256xf32> to vector<256xf32>
    %45 = vector.shape_cast %44 : vector<256xf32> to vector<1x256xf32>
    %cst_32 = arith.constant 3.200000e+01 : f32
    %46 = vector.broadcast %cst_32 : f32 to vector<1x256xf32>
    %47 = arith.divf %45, %46 : vector<1x256xf32>
    %48 = vector.broadcast %47 : vector<1x256xf32> to vector<32x256xf32>
    %49 = arith.subf %41, %48 : vector<32x256xf32>
    %50 = arith.mulf %49, %49 : vector<32x256xf32>
    %cst_33 = arith.constant dense<0.000000e+00> : vector<256xf32>
    %51 = vector.multi_reduction <add>, %50, %cst_33 [0] : vector<32x256xf32> to vector<256xf32>
    %52 = vector.shape_cast %51 : vector<256xf32> to vector<1x256xf32>
    %cst_34 = arith.constant 3.200000e+01 : f32
    %53 = vector.broadcast %cst_34 : f32 to vector<1x256xf32>
    %54 = arith.divf %52, %53 : vector<1x256xf32>
    %55 = vector.broadcast %47 : vector<1x256xf32> to vector<32x256xf32>
    %56 = arith.subf %41, %55 : vector<32x256xf32>
    %cst_35 = arith.constant 9.99999974E-6 : f32
    %57 = vector.broadcast %cst_35 : f32 to vector<1x256xf32>
    %58 = arith.addf %54, %57 : vector<1x256xf32>
    %59 = math.rsqrt %58 : vector<1x256xf32>
    %60 = vector.broadcast %59 : vector<1x256xf32> to vector<32x256xf32>
    %61 = arith.mulf %56, %60 : vector<32x256xf32>
    %62 = vector.broadcast %42 : vector<32x1xf32> to vector<32x256xf32>
    %63 = arith.mulf %61, %62 : vector<32x256xf32>
    %64 = vector.broadcast %43 : vector<32x1xf32> to vector<32x256xf32>
    %65 = arith.addf %63, %64 : vector<32x256xf32>
    %66 = arith.truncf %65 : vector<32x256xf32> to vector<32x256xbf16>
    %c0_36 = arith.constant 0 : index
    %c0_37 = arith.constant 0 : index
    %67 = vector.load %arg14[%c0_36, %c0_37] : memref<32x256xbf16, #tpu.memory_space<vmem>>, vector<32x256xbf16>
    tpu.vector_store %arg14[%c0_36, %c0_37], %66 {strides = array<i32>} : memref<32x256xbf16, #tpu.memory_space<vmem>>, vector<32x256xbf16>,
    %c0_38 = arith.constant 0 : index
    %c0_39 = arith.constant 0 : index
    %68 = vector.load %arg6[%c0_38, %c0_39] : memref<8x32xf32, #tpu.memory_space<vmem>>, vector<8x32xf32>
    %cst_40 = arith.constant dense<0.000000e+00> : vector<8x256xf32>
    %69 = tpu.matmul %68, %65, %cst_40 {dimension_numbers = #tpu.dot_dimension_numbers<[1], [0], [0], [1], [0, 0, 1, 1], [], []>} : vector<8x32xf32>, vector<32x256xf32>, vector<8x256xf32> -> vector<8x256xf32>
    %cst_41 = arith.constant 0.000000e+00 : f32
    %70 = vector.broadcast %cst_41 : f32 to vector<8x256xf32>
    %71 = arith.subf %70, %69 : vector<8x256xf32>
    %72 = math.exp %71 : vector<8x256xf32>
    %cst_42 = arith.constant 1.000000e+00 : f32
    %73 = vector.broadcast %cst_42 : f32 to vector<8x256xf32>
    %74 = arith.addf %73, %72 : vector<8x256xf32>
    %75 = tpu.reciprocal %74 {approx = true} : vector<8x256xf32> -> vector<8x256xf32>
    %cst_43 = arith.constant 1.000000e+00 : f32
    %76 = vector.broadcast %cst_43 : f32 to vector<8x256xf32>
    %77 = arith.minimumf %75, %76 : vector<8x256xf32>
    %78 = arith.truncf %77 : vector<8x256xf32> to vector<8x256xbf16>
    %c0_44 = arith.constant 0 : index
    %c0_45 = arith.constant 0 : index
    %79 = vector.load %arg15[%c0_44, %c0_45] : memref<8x256xbf16, #tpu.memory_space<vmem>>, vector<8x256xbf16>
    tpu.vector_store %arg15[%c0_44, %c0_45], %78 {strides = array<i32>} : memref<8x256xbf16, #tpu.memory_space<vmem>>, vector<8x256xbf16>,
    %c0_46 = arith.constant 0 : index
    %c0_47 = arith.constant 0 : index
    %80 = vector.load %arg3[%c0_46, %c0_47] : memref<1x256xi32, #tpu.memory_space<vmem>>, vector<1x256xi32>
    %c0_i32_48 = arith.constant 0 : i32
    %81 = vector.broadcast %c0_i32_48 : i32 to vector<1x256xi32>
    %82 = arith.cmpi sge, %80, %81 : vector<1x256xi32>
    %cst_49 = arith.constant 5.000000e-01 : f32
    %83 = vector.broadcast %cst_49 : f32 to vector<8x256xf32>
    %84 = arith.cmpf oge, %77, %83 : vector<8x256xf32>
    %85 = vector.broadcast %82 : vector<1x256xi1> to vector<8x256xi1>
    %86 = arith.andi %84, %85 : vector<8x256xi1>
    %cst_50 = arith.constant 1.000000e+00 : f32
    %cst_51 = arith.constant 0.000000e+00 : f32
    %87 = vector.broadcast %cst_50 : f32 to vector<8x256xf32>
    %88 = vector.broadcast %cst_51 : f32 to vector<8x256xf32>
    %89 = arith.select %86, %87, %88 : vector<8x256xi1>, vector<8x256xf32>
    %c0_52 = arith.constant 0 : index
    %c0_53 = arith.constant 0 : index
    %90 = vector.load %arg16[%c0_52, %c0_53] : memref<8x1xf32, #tpu.memory_space<vmem>>, vector<8x1xf32>
    %cst_54 = arith.constant dense<0xFF800000> : vector<8xf32>
    %91 = vector.multi_reduction <maximumf>, %89, %cst_54 [1] : vector<8x256xf32> to vector<8xf32>
    %92 = vector.shape_cast %91 : vector<8xf32> to vector<8x1xf32>
    %93 = arith.maximumf %90, %92 : vector<8x1xf32>
    %c0_55 = arith.constant 0 : index
    %c0_56 = arith.constant 0 : index
    %94 = vector.load %arg16[%c0_55, %c0_56] : memref<8x1xf32, #tpu.memory_space<vmem>>, vector<8x1xf32>
    tpu.vector_store %arg16[%c0_55, %c0_56], %93 {strides = array<i32>} : memref<8x1xf32, #tpu.memory_space<vmem>>, vector<8x1xf32>,
    return
  }
  func.func @transform_0(%arg0: i32) -> (i32, i32) {
    %c0_i32 = arith.constant 0 : i32
    %c0_i32_0 = arith.constant 0 : i32
    return %c0_i32, %arg0 : i32, i32
  }
  func.func @transform_1(%arg0: i32) -> (i32, i32) {
    %c0_i32 = arith.constant 0 : i32
    %c0_i32_0 = arith.constant 0 : i32
    return %c0_i32, %arg0 : i32, i32
  }
  func.func @transform_2(%arg0: i32) -> (i32, i32) {
    %c0_i32 = arith.constant 0 : i32
    %c0_i32_0 = arith.constant 0 : i32
    return %c0_i32, %arg0 : i32, i32
  }
  func.func @transform_3(%arg0: i32) -> (i32, i32) {
    %c0_i32 = arith.constant 0 : i32
    %c0_i32_0 = arith.constant 0 : i32
    %c0_i32_1 = arith.constant 0 : i32
    return %c0_i32, %c0_i32_0 : i32, i32
  }
  func.func @transform_4(%arg0: i32) -> (i32, i32) {
    %c0_i32 = arith.constant 0 : i32
    %c0_i32_0 = arith.constant 0 : i32
    %c0_i32_1 = arith.constant 0 : i32
    return %c0_i32, %c0_i32_0 : i32, i32
  }
  func.func @transform_5(%arg0: i32) -> (i32, i32) {
    %c0_i32 = arith.constant 0 : i32
    %c0_i32_0 = arith.constant 0 : i32
    %c0_i32_1 = arith.constant 0 : i32
    return %c0_i32, %c0_i32_0 : i32, i32
  }
  func.func @transform_6(%arg0: i32) -> (i32, i32) {
    %c0_i32 = arith.constant 0 : i32
    %c0_i32_0 = arith.constant 0 : i32
    %c0_i32_1 = arith.constant 0 : i32
    return %c0_i32, %c0_i32_0 : i32, i32
  }
  func.func @transform_7(%arg0: i32) -> (i32, i32) {
    %c0_i32 = arith.constant 0 : i32
    %c0_i32_0 = arith.constant 0 : i32
    %c0_i32_1 = arith.constant 0 : i32
    return %c0_i32, %c0_i32_0 : i32, i32
  }
  func.func @transform_8(%arg0: i32) -> (i32, i32) {
    %c0_i32 = arith.constant 0 : i32
    %c0_i32_0 = arith.constant 0 : i32
    %c0_i32_1 = arith.constant 0 : i32
    return %c0_i32, %c0_i32_0 : i32, i32
  }
  func.func @transform_9(%arg0: i32) -> (i32, i32) {
    %c0_i32 = arith.constant 0 : i32
    %c0_i32_0 = arith.constant 0 : i32
    %c0_i32_1 = arith.constant 0 : i32
    return %c0_i32, %c0_i32_0 : i32, i32
  }
  func.func @transform_10(%arg0: i32) -> (i32, i32) {
    %c0_i32 = arith.constant 0 : i32
    %c0_i32_0 = arith.constant 0 : i32
    %c0_i32_1 = arith.constant 0 : i32
    return %c0_i32, %c0_i32_0 : i32, i32
  }
  func.func @transform_11(%arg0: i32) -> (i32, i32) {
    %c0_i32 = arith.constant 0 : i32
    %c0_i32_0 = arith.constant 0 : i32
    %c0_i32_1 = arith.constant 0 : i32
    return %c0_i32, %c0_i32_0 : i32, i32
  }
  func.func @transform_12(%arg0: i32) -> (i32, i32) {
    %c0_i32 = arith.constant 0 : i32
    %c0_i32_0 = arith.constant 0 : i32
    %c0_i32_1 = arith.constant 0 : i32
    return %c0_i32, %c0_i32_0 : i32, i32
  }
  func.func @transform_13(%arg0: i32) -> (i32, i32) {
    %c0_i32 = arith.constant 0 : i32
    %c0_i32_0 = arith.constant 0 : i32
    return %c0_i32, %arg0 : i32, i32
  }
  func.func @transform_14(%arg0: i32) -> (i32, i32) {
    %c0_i32 = arith.constant 0 : i32
    %c0_i32_0 = arith.constant 0 : i32
    return %c0_i32, %arg0 : i32, i32
  }
  func.func @transform_15(%arg0: i32) -> (i32, i32) {
    %c0_i32 = arith.constant 0 : i32
    %c0_i32_0 = arith.constant 0 : i32
    %c0_i32_1 = arith.constant 0 : i32
    return %c0_i32, %c0_i32_0 : i32, i32
  }
}

module attributes {stable_mosaic.version = 11 : i64} {
  func.func @kernel(%arg0: i32, %arg1: memref<32x256xbf16, #tpu.memory_space<vmem>>, %arg2: memref<32x256xbf16, #tpu.memory_space<vmem>>, %arg3: memref<1x256xi32, #tpu.memory_space<vmem>>, %arg4: memref<8x32xf32, #tpu.memory_space<vmem>>, %arg5: memref<8x32xf32, #tpu.memory_space<vmem>>, %arg6: memref<8x32xf32, #tpu.memory_space<vmem>>, %arg7: memref<8x1xi32, #tpu.memory_space<vmem>>, %arg8: memref<32x32xf32, #tpu.memory_space<vmem>>, %arg9: memref<32x1xf32, #tpu.memory_space<vmem>>, %arg10: memref<32x32xf32, #tpu.memory_space<vmem>>, %arg11: memref<32x1xf32, #tpu.memory_space<vmem>>, %arg12: memref<32x1xf32, #tpu.memory_space<vmem>>, %arg13: memref<32x1xf32, #tpu.memory_space<vmem>>, %arg14: memref<32x256xbf16, #tpu.memory_space<vmem>>, %arg15: memref<8x256xbf16, #tpu.memory_space<vmem>>, %arg16: memref<8x1xf32, #tpu.memory_space<vmem>>) attributes {dimension_semantics = [#tpu.dimension_semantics<arbitrary>], iteration_bounds = array<i64: 1>, scalar_prefetch = 0 : i64, scratch_operands = 0 : i64, tpu.core_type = #tpu.core_type<tc>, window_params = [{transform_indices = @transform_0, window_bounds = array<i64: 32, 256>}, {transform_indices = @transform_1, window_bounds = array<i64: 32, 256>}, {transform_indices = @transform_2, window_bounds = array<i64: 1, 256>}, {pipeline_mode = #tpu.pipeline_mode<synchronous>, transform_indices = @transform_3, window_bounds = array<i64: 8, 32>}, {pipeline_mode = #tpu.pipeline_mode<synchronous>, transform_indices = @transform_4, window_bounds = array<i64: 8, 32>}, {pipeline_mode = #tpu.pipeline_mode<synchronous>, transform_indices = @transform_5, window_bounds = array<i64: 8, 32>}, {pipeline_mode = #tpu.pipeline_mode<synchronous>, transform_indices = @transform_6, window_bounds = array<i64: 8, 1>}, {pipeline_mode = #tpu.pipeline_mode<synchronous>, transform_indices = @transform_7, window_bounds = array<i64: 32, 32>}, {pipeline_mode = #tpu.pipeline_mode<synchronous>, transform_indices = @transform_8, window_bounds = array<i64: 32, 1>}, {pipeline_mode = #tpu.pipeline_mode<synchronous>, transform_indices = @transform_9, window_bounds = array<i64: 32, 32>}, {pipeline_mode = #tpu.pipeline_mode<synchronous>, transform_indices = @transform_10, window_bounds = array<i64: 32, 1>}, {pipeline_mode = #tpu.pipeline_mode<synchronous>, transform_indices = @transform_11, window_bounds = array<i64: 32, 1>}, {pipeline_mode = #tpu.pipeline_mode<synchronous>, transform_indices = @transform_12, window_bounds = array<i64: 32, 1>}, {transform_indices = @transform_13, window_bounds = array<i64: 32, 256>}, {transform_indices = @transform_14, window_bounds = array<i64: 8, 256>}, {pipeline_mode = #tpu.pipeline_mode<synchronous>, transform_indices = @transform_15, window_bounds = array<i64: 8, 1>}]} {
    %c0_i32 = arith.constant 0 : i32
    %0 = arith.cmpi eq, %arg0, %c0_i32 : i32
    %1 = arith.extui %0 : i1 to i32
    %c0_i32_0 = arith.constant 0 : i32
    %2 = arith.cmpi ne, %1, %c0_i32_0 : i32
    scf.if %2 {
      %cst_57 = arith.constant 0.000000e+00 : f32
      %95 = vector.broadcast %cst_57 : f32 to vector<8x1xf32>
      %c0_58 = arith.constant 0 : index
      %c0_59 = arith.constant 0 : index
      %96 = vector.load %arg16[%c0_58, %c0_59] : memref<8x1xf32, #tpu.memory_space<vmem>>, vector<8x1xf32>
      tpu.vector_store %arg16[%c0_58, %c0_59], %95 {strides = array<i32>} : memref<8x1xf32, #tpu.memory_space<vmem>>, vector<8x1xf32>,
    } else {
    }
    %c0 = arith.constant 0 : index
    %c0_1 = arith.constant 0 : index
    %3 = vector.load %arg1[%c0, %c0_1] : memref<32x256xbf16, #tpu.memory_space<vmem>>, vector<32x256xbf16>
    %4 = arith.extf %3 : vector<32x256xbf16> to vector<32x256xf32>
    %c0_2 = arith.constant 0 : index
    %c0_3 = arith.constant 0 : index
    %5 = vector.load %arg8[%c0_2, %c0_3] : memref<32x32xf32, #tpu.memory_space<vmem>>, vector<32x32xf32>
    %c0_4 = arith.constant 0 : index
    %c0_5 = arith.constant 0 : index
    %6 = vector.load %arg2[%c0_4, %c0_5] : memref<32x256xbf16, #tpu.memory_space<vmem>>, vector<32x256xbf16>
    %7 = arith.extf %6 : vector<32x256xbf16> to vector<32x256xf32>
    %8 = arith.addf %4, %7 : vector<32x256xf32>
    %cst = arith.constant dense<0.000000e+00> : vector<32x256xf32>
    %9 = tpu.matmul %5, %8, %cst {dimension_numbers = #tpu.dot_dimension_numbers<[1], [0], [0], [1], [0, 0, 1, 1], [], []>} : vector<32x32xf32>, vector<32x256xf32>, vector<32x256xf32> -> vector<32x256xf32>
    %c0_6 = arith.constant 0 : index
    %c0_7 = arith.constant 0 : index
    %10 = vector.load %arg9[%c0_6, %c0_7] : memref<32x1xf32, #tpu.memory_space<vmem>>, vector<32x1xf32>
    %11 = vector.broadcast %10 : vector<32x1xf32> to vector<32x256xf32>
    %12 = arith.addf %9, %11 : vector<32x256xf32>
    %c0_8 = arith.constant 0 : index
    %c0_9 = arith.constant 0 : index
    %13 = vector.load %arg4[%c0_8, %c0_9] : memref<8x32xf32, #tpu.memory_space<vmem>>, vector<8x32xf32>
    %cst_10 = arith.constant dense<0.000000e+00> : vector<8x256xf32>
    %14 = tpu.matmul %13, %12, %cst_10 {dimension_numbers = #tpu.dot_dimension_numbers<[1], [0], [0], [1], [0, 0, 1, 1], [], []>} : vector<8x32xf32>, vector<32x256xf32>, vector<8x256xf32> -> vector<8x256xf32>
    %cst_11 = arith.constant 0.176776692 : f32
    %15 = vector.broadcast %cst_11 : f32 to vector<8x256xf32>
    %16 = arith.mulf %14, %15 : vector<8x256xf32>
    %c0_12 = arith.constant 0 : index
    %c0_13 = arith.constant 0 : index
    %17 = vector.load %arg7[%c0_12, %c0_13] : memref<8x1xi32, #tpu.memory_space<vmem>>, vector<8x1xi32>
    %c0_14 = arith.constant 0 : index
    %c0_15 = arith.constant 0 : index
    %18 = vector.load %arg3[%c0_14, %c0_15] : memref<1x256xi32, #tpu.memory_space<vmem>>, vector<1x256xi32>
    %19 = vector.broadcast %17 : vector<8x1xi32> to vector<8x256xi32>
    %20 = vector.broadcast %18 : vector<1x256xi32> to vector<8x256xi32>
    %21 = arith.cmpi eq, %19, %20 : vector<8x256xi32>
    %cst_16 = arith.constant -1.000000e+09 : f32
    %22 = vector.broadcast %cst_16 : f32 to vector<8x256xf32>
    %23 = arith.select %21, %16, %22 : vector<8x256xi1>, vector<8x256xf32>
    %cst_17 = arith.constant dense<0xFF800000> : vector<256xf32>
    %24 = vector.multi_reduction <maximumf>, %23, %cst_17 [0] : vector<8x256xf32> to vector<256xf32>
    %25 = vector.shape_cast %24 : vector<256xf32> to vector<1x256xf32>
    %26 = vector.broadcast %25 : vector<1x256xf32> to vector<8x256xf32>
    %27 = arith.subf %23, %26 : vector<8x256xf32>
    %28 = math.exp %27 : vector<8x256xf32>
    %cst_18 = arith.constant dense<0.000000e+00> : vector<256xf32>
    %29 = vector.multi_reduction <add>, %28, %cst_18 [0] : vector<8x256xf32> to vector<256xf32>
    %30 = vector.shape_cast %29 : vector<256xf32> to vector<1x256xf32>
    %31 = tpu.reciprocal %30 {approx = true} : vector<1x256xf32> -> vector<1x256xf32>
    %32 = vector.broadcast %31 : vector<1x256xf32> to vector<8x256xf32>
    %33 = arith.mulf %28, %32 : vector<8x256xf32>
    %c0_19 = arith.constant 0 : index
    %c0_20 = arith.constant 0 : index
    %34 = vector.load %arg5[%c0_19, %c0_20] : memref<8x32xf32, #tpu.memory_space<vmem>>, vector<8x32xf32>
    %cst_21 = arith.constant dense<0.000000e+00> : vector<32x256xf32>
    %35 = tpu.matmul %34, %33, %cst_21 {dimension_numbers = #tpu.dot_dimension_numbers<[0], [0], [1], [1], [0, 1, 1, 1], [], []>} : vector<8x32xf32>, vector<8x256xf32>, vector<32x256xf32> -> vector<32x256xf32>
    %c0_22 = arith.constant 0 : index
    %c0_23 = arith.constant 0 : index
    %36 = vector.load %arg10[%c0_22, %c0_23] : memref<32x32xf32, #tpu.memory_space<vmem>>, vector<32x32xf32>
    %cst_24 = arith.constant dense<0.000000e+00> : vector<32x256xf32>
    %37 = tpu.matmul %36, %35, %cst_24 {dimension_numbers = #tpu.dot_dimension_numbers<[1], [0], [0], [1], [0, 0, 1, 1], [], []>} : vector<32x32xf32>, vector<32x256xf32>, vector<32x256xf32> -> vector<32x256xf32>
    %c0_25 = arith.constant 0 : index
    %c0_26 = arith.constant 0 : index
    %38 = vector.load %arg11[%c0_25, %c0_26] : memref<32x1xf32, #tpu.memory_space<vmem>>, vector<32x1xf32>
    %39 = vector.broadcast %38 : vector<32x1xf32> to vector<32x256xf32>
    %40 = arith.addf %37, %39 : vector<32x256xf32>
    %41 = arith.addf %4, %40 : vector<32x256xf32>
    %c0_27 = arith.constant 0 : index
    %c0_28 = arith.constant 0 : index
    %42 = vector.load %arg12[%c0_27, %c0_28] : memref<32x1xf32, #tpu.memory_space<vmem>>, vector<32x1xf32>
    %c0_29 = arith.constant 0 : index
    %c0_30 = arith.constant 0 : index
    %43 = vector.load %arg13[%c0_29, %c0_30] : memref<32x1xf32, #tpu.memory_space<vmem>>, vector<32x1xf32>
    %cst_31 = arith.constant dense<0.000000e+00> : vector<256xf32>
    %44 = vector.multi_reduction <add>, %41, %cst_31 [0] : vector<32x256xf32> to vector<256xf32>
    %45 = vector.shape_cast %44 : vector<256xf32> to vector<1x256xf32>
    %cst_32 = arith.constant 3.200000e+01 : f32
    %46 = vector.broadcast %cst_32 : f32 to vector<1x256xf32>
    %47 = arith.divf %45, %46 : vector<1x256xf32>
    %48 = vector.broadcast %47 : vector<1x256xf32> to vector<32x256xf32>
    %49 = arith.subf %41, %48 : vector<32x256xf32>
    %50 = arith.mulf %49, %49 : vector<32x256xf32>
    %cst_33 = arith.constant dense<0.000000e+00> : vector<256xf32>
    %51 = vector.multi_reduction <add>, %50, %cst_33 [0] : vector<32x256xf32> to vector<256xf32>
    %52 = vector.shape_cast %51 : vector<256xf32> to vector<1x256xf32>
    %cst_34 = arith.constant 3.200000e+01 : f32
    %53 = vector.broadcast %cst_34 : f32 to vector<1x256xf32>
    %54 = arith.divf %52, %53 : vector<1x256xf32>
    %55 = vector.broadcast %47 : vector<1x256xf32> to vector<32x256xf32>
    %56 = arith.subf %41, %55 : vector<32x256xf32>
    %cst_35 = arith.constant 9.99999974E-6 : f32
    %57 = vector.broadcast %cst_35 : f32 to vector<1x256xf32>
    %58 = arith.addf %54, %57 : vector<1x256xf32>
    %59 = math.rsqrt %58 : vector<1x256xf32>
    %60 = vector.broadcast %59 : vector<1x256xf32> to vector<32x256xf32>
    %61 = arith.mulf %56, %60 : vector<32x256xf32>
    %62 = vector.broadcast %42 : vector<32x1xf32> to vector<32x256xf32>
    %63 = arith.mulf %61, %62 : vector<32x256xf32>
    %64 = vector.broadcast %43 : vector<32x1xf32> to vector<32x256xf32>
    %65 = arith.addf %63, %64 : vector<32x256xf32>
    %66 = arith.truncf %65 : vector<32x256xf32> to vector<32x256xbf16>
    %c0_36 = arith.constant 0 : index
    %c0_37 = arith.constant 0 : index
    %67 = vector.load %arg14[%c0_36, %c0_37] : memref<32x256xbf16, #tpu.memory_space<vmem>>, vector<32x256xbf16>
    tpu.vector_store %arg14[%c0_36, %c0_37], %66 {strides = array<i32>} : memref<32x256xbf16, #tpu.memory_space<vmem>>, vector<32x256xbf16>,
    %c0_38 = arith.constant 0 : index
    %c0_39 = arith.constant 0 : index
    %68 = vector.load %arg6[%c0_38, %c0_39] : memref<8x32xf32, #tpu.memory_space<vmem>>, vector<8x32xf32>
    %cst_40 = arith.constant dense<0.000000e+00> : vector<8x256xf32>
    %69 = tpu.matmul %68, %65, %cst_40 {dimension_numbers = #tpu.dot_dimension_numbers<[1], [0], [0], [1], [0, 0, 1, 1], [], []>} : vector<8x32xf32>, vector<32x256xf32>, vector<8x256xf32> -> vector<8x256xf32>
    %cst_41 = arith.constant 0.000000e+00 : f32
    %70 = vector.broadcast %cst_41 : f32 to vector<8x256xf32>
    %71 = arith.subf %70, %69 : vector<8x256xf32>
    %72 = math.exp %71 : vector<8x256xf32>
    %cst_42 = arith.constant 1.000000e+00 : f32
    %73 = vector.broadcast %cst_42 : f32 to vector<8x256xf32>
    %74 = arith.addf %73, %72 : vector<8x256xf32>
    %75 = tpu.reciprocal %74 {approx = true} : vector<8x256xf32> -> vector<8x256xf32>
    %cst_43 = arith.constant 1.000000e+00 : f32
    %76 = vector.broadcast %cst_43 : f32 to vector<8x256xf32>
    %77 = arith.minimumf %75, %76 : vector<8x256xf32>
    %78 = arith.truncf %77 : vector<8x256xf32> to vector<8x256xbf16>
    %c0_44 = arith.constant 0 : index
    %c0_45 = arith.constant 0 : index
    %79 = vector.load %arg15[%c0_44, %c0_45] : memref<8x256xbf16, #tpu.memory_space<vmem>>, vector<8x256xbf16>
    tpu.vector_store %arg15[%c0_44, %c0_45], %78 {strides = array<i32>} : memref<8x256xbf16, #tpu.memory_space<vmem>>, vector<8x256xbf16>,
    %c0_46 = arith.constant 0 : index
    %c0_47 = arith.constant 0 : index
    %80 = vector.load %arg3[%c0_46, %c0_47] : memref<1x256xi32, #tpu.memory_space<vmem>>, vector<1x256xi32>
    %c0_i32_48 = arith.constant 0 : i32
    %81 = vector.broadcast %c0_i32_48 : i32 to vector<1x256xi32>
    %82 = arith.cmpi sge, %80, %81 : vector<1x256xi32>
    %cst_49 = arith.constant 5.000000e-01 : f32
    %83 = vector.broadcast %cst_49 : f32 to vector<8x256xf32>
    %84 = arith.cmpf oge, %77, %83 : vector<8x256xf32>
    %85 = vector.broadcast %82 : vector<1x256xi1> to vector<8x256xi1>
    %86 = arith.andi %84, %85 : vector<8x256xi1>
    %cst_50 = arith.constant 1.000000e+00 : f32
    %cst_51 = arith.constant 0.000000e+00 : f32
    %87 = vector.broadcast %cst_50 : f32 to vector<8x256xf32>
    %88 = vector.broadcast %cst_51 : f32 to vector<8x256xf32>
    %89 = arith.select %86, %87, %88 : vector<8x256xi1>, vector<8x256xf32>
    %c0_52 = arith.constant 0 : index
    %c0_53 = arith.constant 0 : index
    %90 = vector.load %arg16[%c0_52, %c0_53] : memref<8x1xf32, #tpu.memory_space<vmem>>, vector<8x1xf32>
    %cst_54 = arith.constant dense<0xFF800000> : vector<8xf32>
    %91 = vector.multi_reduction <maximumf>, %89, %cst_54 [1] : vector<8x256xf32> to vector<8xf32>
    %92 = vector.shape_cast %91 : vector<8xf32> to vector<8x1xf32>
    %93 = arith.maximumf %90, %92 : vector<8x1xf32>
    %c0_55 = arith.constant 0 : index
    %c0_56 = arith.constant 0 : index
    %94 = vector.load %arg16[%c0_55, %c0_56] : memref<8x1xf32, #tpu.memory_space<vmem>>, vector<8x1xf32>
    tpu.vector_store %arg16[%c0_55, %c0_56], %93 {strides = array<i32>} : memref<8x1xf32, #tpu.memory_space<vmem>>, vector<8x1xf32>,
    return
  }
  func.func @transform_0(%arg0: i32) -> (i32, i32) {
    %c0_i32 = arith.constant 0 : i32
    %c0_i32_0 = arith.constant 0 : i32
    return %c0_i32, %arg0 : i32, i32
  }
  func.func @transform_1(%arg0: i32) -> (i32, i32) {
    %c0_i32 = arith.constant 0 : i32
    %c0_i32_0 = arith.constant 0 : i32
    return %c0_i32, %arg0 : i32, i32
  }
  func.func @transform_2(%arg0: i32) -> (i32, i32) {
    %c0_i32 = arith.constant 0 : i32
    %c0_i32_0 = arith.constant 0 : i32
    return %c0_i32, %arg0 : i32, i32
  }
  func.func @transform_3(%arg0: i32) -> (i32, i32) {
    %c0_i32 = arith.constant 0 : i32
    %c0_i32_0 = arith.constant 0 : i32
    %c0_i32_1 = arith.constant 0 : i32
    return %c0_i32, %c0_i32_0 : i32, i32
  }
  func.func @transform_4(%arg0: i32) -> (i32, i32) {
    %c0_i32 = arith.constant 0 : i32
    %c0_i32_0 = arith.constant 0 : i32
    %c0_i32_1 = arith.constant 0 : i32
    return %c0_i32, %c0_i32_0 : i32, i32
  }
  func.func @transform_5(%arg0: i32) -> (i32, i32) {
    %c0_i32 = arith.constant 0 : i32
    %c0_i32_0 = arith.constant 0 : i32
    %c0_i32_1 = arith.constant 0 : i32
    return %c0_i32, %c0_i32_0 : i32, i32
  }
  func.func @transform_6(%arg0: i32) -> (i32, i32) {
    %c0_i32 = arith.constant 0 : i32
    %c0_i32_0 = arith.constant 0 : i32
    %c0_i32_1 = arith.constant 0 : i32
    return %c0_i32, %c0_i32_0 : i32, i32
  }
  func.func @transform_7(%arg0: i32) -> (i32, i32) {
    %c0_i32 = arith.constant 0 : i32
    %c0_i32_0 = arith.constant 0 : i32
    %c0_i32_1 = arith.constant 0 : i32
    return %c0_i32, %c0_i32_0 : i32, i32
  }
  func.func @transform_8(%arg0: i32) -> (i32, i32) {
    %c0_i32 = arith.constant 0 : i32
    %c0_i32_0 = arith.constant 0 : i32
    %c0_i32_1 = arith.constant 0 : i32
    return %c0_i32, %c0_i32_0 : i32, i32
  }
  func.func @transform_9(%arg0: i32) -> (i32, i32) {
    %c0_i32 = arith.constant 0 : i32
    %c0_i32_0 = arith.constant 0 : i32
    %c0_i32_1 = arith.constant 0 : i32
    return %c0_i32, %c0_i32_0 : i32, i32
  }
  func.func @transform_10(%arg0: i32) -> (i32, i32) {
    %c0_i32 = arith.constant 0 : i32
    %c0_i32_0 = arith.constant 0 : i32
    %c0_i32_1 = arith.constant 0 : i32
    return %c0_i32, %c0_i32_0 : i32, i32
  }
  func.func @transform_11(%arg0: i32) -> (i32, i32) {
    %c0_i32 = arith.constant 0 : i32
    %c0_i32_0 = arith.constant 0 : i32
    %c0_i32_1 = arith.constant 0 : i32
    return %c0_i32, %c0_i32_0 : i32, i32
  }
  func.func @transform_12(%arg0: i32) -> (i32, i32) {
    %c0_i32 = arith.constant 0 : i32
    %c0_i32_0 = arith.constant 0 : i32
    %c0_i32_1 = arith.constant 0 : i32
    return %c0_i32, %c0_i32_0 : i32, i32
  }
  func.func @transform_13(%arg0: i32) -> (i32, i32) {
    %c0_i32 = arith.constant 0 : i32
    %c0_i32_0 = arith.constant 0 : i32
    return %c0_i32, %arg0 : i32, i32
  }
  func.func @transform_14(%arg0: i32) -> (i32, i32) {
    %c0_i32 = arith.constant 0 : i32
    %c0_i32_0 = arith.constant 0 : i32
    return %c0_i32, %arg0 : i32, i32
  }
  func.func @transform_15(%arg0: i32) -> (i32, i32) {
    %c0_i32 = arith.constant 0 : i32
    %c0_i32_0 = arith.constant 0 : i32
    %c0_i32_1 = arith.constant 0 : i32
    return %c0_i32, %c0_i32_0 : i32, i32
  }
}

module attributes {stable_mosaic.version = 11 : i64} {
  func.func @kernel(%arg0: i32, %arg1: memref<32x256xbf16, #tpu.memory_space<vmem>>, %arg2: memref<32x256xbf16, #tpu.memory_space<vmem>>, %arg3: memref<1x256xi32, #tpu.memory_space<vmem>>, %arg4: memref<8x256xbf16, #tpu.memory_space<vmem>>, %arg5: memref<8x1xf32, #tpu.memory_space<vmem>>, %arg6: memref<8x32xf32, #tpu.memory_space<vmem>>, %arg7: memref<8x32xf32, #tpu.memory_space<vmem>>, %arg8: memref<8x1xi32, #tpu.memory_space<vmem>>, %arg9: memref<1x8xi32, #tpu.memory_space<vmem>>, %arg10: memref<32x32xf32, #tpu.memory_space<vmem>>, %arg11: memref<1x32xf32, #tpu.memory_space<vmem>>, %arg12: memref<32x32xf32, #tpu.memory_space<vmem>>, %arg13: memref<1x32xf32, #tpu.memory_space<vmem>>, %arg14: memref<32x32xf32, #tpu.memory_space<vmem>>, %arg15: memref<1x32xf32, #tpu.memory_space<vmem>>, %arg16: memref<32x32xf32, #tpu.memory_space<vmem>>, %arg17: memref<1x32xf32, #tpu.memory_space<vmem>>, %arg18: memref<1x32xf32, #tpu.memory_space<vmem>>, %arg19: memref<1x32xf32, #tpu.memory_space<vmem>>, %arg20: memref<32x32xf32, #tpu.memory_space<vmem>>, %arg21: memref<1x32xf32, #tpu.memory_space<vmem>>, %arg22: memref<32x32xf32, #tpu.memory_space<vmem>>, %arg23: memref<32x1xf32, #tpu.memory_space<vmem>>, %arg24: memref<32x32xf32, #tpu.memory_space<vmem>>, %arg25: memref<32x1xf32, #tpu.memory_space<vmem>>, %arg26: memref<32x32xf32, #tpu.memory_space<vmem>>, %arg27: memref<1x32xf32, #tpu.memory_space<vmem>>, %arg28: memref<1x32xf32, #tpu.memory_space<vmem>>, %arg29: memref<1x32xf32, #tpu.memory_space<vmem>>, %arg30: memref<32x64xf32, #tpu.memory_space<vmem>>, %arg31: memref<1x64xf32, #tpu.memory_space<vmem>>, %arg32: memref<64x32xf32, #tpu.memory_space<vmem>>, %arg33: memref<1x32xf32, #tpu.memory_space<vmem>>, %arg34: memref<1x32xf32, #tpu.memory_space<vmem>>, %arg35: memref<1x32xf32, #tpu.memory_space<vmem>>, %arg36: memref<1x32xf32, #tpu.memory_space<vmem>>, %arg37: memref<1x32xf32, #tpu.memory_space<vmem>>, %arg38: memref<32x32xf32, #tpu.memory_space<vmem>>, %arg39: memref<1x32xf32, #tpu.memory_space<vmem>>, %arg40: memref<32x32xf32, #tpu.memory_space<vmem>>, %arg41: memref<1x32xf32, #tpu.memory_space<vmem>>, %arg42: memref<32x32xf32, #tpu.memory_space<vmem>>, %arg43: memref<1x32xf32, #tpu.memory_space<vmem>>, %arg44: memref<32x8xf32, #tpu.memory_space<vmem>>, %arg45: memref<1x8xf32, #tpu.memory_space<vmem>>, %arg46: memref<32x32xf32, #tpu.memory_space<vmem>>, %arg47: memref<1x32xf32, #tpu.memory_space<vmem>>, %arg48: memref<32x32xf32, #tpu.memory_space<vmem>>, %arg49: memref<1x32xf32, #tpu.memory_space<vmem>>, %arg50: memref<8x32xf32, #tpu.memory_space<vmem>>, %arg51: memref<8x8xf32, #tpu.memory_space<vmem>>, %arg52: memref<8x32xf32, #tpu.memory_space<vmem>>, %arg53: memref<8x32xf32, #tpu.memory_space<vmem>>, %arg54: memref<8x32xf32, #tpu.memory_space<vmem>>, %arg55: memref<8x32xf32, #tpu.memory_space<vmem>>, %arg56: memref<8x32xf32, #tpu.memory_space<vmem>>, %arg57: memref<8x1xf32, #tpu.memory_space<vmem>>, %arg58: memref<8x1xf32, #tpu.memory_space<vmem>>, %arg59: memref<8x32xf32, #tpu.memory_space<vmem>>) attributes {dimension_semantics = [#tpu.dimension_semantics<arbitrary>], iteration_bounds = array<i64: 1>, scalar_prefetch = 0 : i64, scratch_operands = 5 : i64, tpu.core_type = #tpu.core_type<tc>, window_params = [{transform_indices = @transform_0, window_bounds = array<i64: 32, 256>}, {transform_indices = @transform_1, window_bounds = array<i64: 32, 256>}, {transform_indices = @transform_2, window_bounds = array<i64: 1, 256>}, {transform_indices = @transform_3, window_bounds = array<i64: 8, 256>}, {pipeline_mode = #tpu.pipeline_mode<synchronous>, transform_indices = @transform_4, window_bounds = array<i64: 8, 1>}, {pipeline_mode = #tpu.pipeline_mode<synchronous>, transform_indices = @transform_5, window_bounds = array<i64: 8, 32>}, {pipeline_mode = #tpu.pipeline_mode<synchronous>, transform_indices = @transform_6, window_bounds = array<i64: 8, 32>}, {pipeline_mode = #tpu.pipeline_mode<synchronous>, transform_indices = @transform_7, window_bounds = array<i64: 8, 1>}, {pipeline_mode = #tpu.pipeline_mode<synchronous>, transform_indices = @transform_8, window_bounds = array<i64: 1, 8>}, {pipeline_mode = #tpu.pipeline_mode<synchronous>, transform_indices = @transform_9, window_bounds = array<i64: 32, 32>}, {pipeline_mode = #tpu.pipeline_mode<synchronous>, transform_indices = @transform_10, window_bounds = array<i64: 1, 32>}, {pipeline_mode = #tpu.pipeline_mode<synchronous>, transform_indices = @transform_11, window_bounds = array<i64: 32, 32>}, {pipeline_mode = #tpu.pipeline_mode<synchronous>, transform_indices = @transform_12, window_bounds = array<i64: 1, 32>}, {pipeline_mode = #tpu.pipeline_mode<synchronous>, transform_indices = @transform_13, window_bounds = array<i64: 32, 32>}, {pipeline_mode = #tpu.pipeline_mode<synchronous>, transform_indices = @transform_14, window_bounds = array<i64: 1, 32>}, {pipeline_mode = #tpu.pipeline_mode<synchronous>, transform_indices = @transform_15, window_bounds = array<i64: 32, 32>}, {pipeline_mode = #tpu.pipeline_mode<synchronous>, transform_indices = @transform_16, window_bounds = array<i64: 1, 32>}, {pipeline_mode = #tpu.pipeline_mode<synchronous>, transform_indices = @transform_17, window_bounds = array<i64: 1, 32>}, {pipeline_mode = #tpu.pipeline_mode<synchronous>, transform_indices = @transform_18, window_bounds = array<i64: 1, 32>}, {pipeline_mode = #tpu.pipeline_mode<synchronous>, transform_indices = @transform_19, window_bounds = array<i64: 32, 32>}, {pipeline_mode = #tpu.pipeline_mode<synchronous>, transform_indices = @transform_20, window_bounds = array<i64: 1, 32>}, {pipeline_mode = #tpu.pipeline_mode<synchronous>, transform_indices = @transform_21, window_bounds = array<i64: 32, 32>}, {pipeline_mode = #tpu.pipeline_mode<synchronous>, transform_indices = @transform_22, window_bounds = array<i64: 32, 1>}, {pipeline_mode = #tpu.pipeline_mode<synchronous>, transform_indices = @transform_23, window_bounds = array<i64: 32, 32>}, {pipeline_mode = #tpu.pipeline_mode<synchronous>, transform_indices = @transform_24, window_bounds = array<i64: 32, 1>}, {pipeline_mode = #tpu.pipeline_mode<synchronous>, transform_indices = @transform_25, window_bounds = array<i64: 32, 32>}, {pipeline_mode = #tpu.pipeline_mode<synchronous>, transform_indices = @transform_26, window_bounds = array<i64: 1, 32>}, {pipeline_mode = #tpu.pipeline_mode<synchronous>, transform_indices = @transform_27, window_bounds = array<i64: 1, 32>}, {pipeline_mode = #tpu.pipeline_mode<synchronous>, transform_indices = @transform_28, window_bounds = array<i64: 1, 32>}, {pipeline_mode = #tpu.pipeline_mode<synchronous>, transform_indices = @transform_29, window_bounds = array<i64: 32, 64>}, {pipeline_mode = #tpu.pipeline_mode<synchronous>, transform_indices = @transform_30, window_bounds = array<i64: 1, 64>}, {pipeline_mode = #tpu.pipeline_mode<synchronous>, transform_indices = @transform_31, window_bounds = array<i64: 64, 32>}, {pipeline_mode = #tpu.pipeline_mode<synchronous>, transform_indices = @transform_32, window_bounds = array<i64: 1, 32>}, {pipeline_mode = #tpu.pipeline_mode<synchronous>, transform_indices = @transform_33, window_bounds = array<i64: 1, 32>}, {pipeline_mode = #tpu.pipeline_mode<synchronous>, transform_indices = @transform_34, window_bounds = array<i64: 1, 32>}, {pipeline_mode = #tpu.pipeline_mode<synchronous>, transform_indices = @transform_35, window_bounds = array<i64: 1, 32>}, {pipeline_mode = #tpu.pipeline_mode<synchronous>, transform_indices = @transform_36, window_bounds = array<i64: 1, 32>}, {pipeline_mode = #tpu.pipeline_mode<synchronous>, transform_indices = @transform_37, window_bounds = array<i64: 32, 32>}, {pipeline_mode = #tpu.pipeline_mode<synchronous>, transform_indices = @transform_38, window_bounds = array<i64: 1, 32>}, {pipeline_mode = #tpu.pipeline_mode<synchronous>, transform_indices = @transform_39, window_bounds = array<i64: 32, 32>}, {pipeline_mode = #tpu.pipeline_mode<synchronous>, transform_indices = @transform_40, window_bounds = array<i64: 1, 32>}, {pipeline_mode = #tpu.pipeline_mode<synchronous>, transform_indices = @transform_41, window_bounds = array<i64: 32, 32>}, {pipeline_mode = #tpu.pipeline_mode<synchronous>, transform_indices = @transform_42, window_bounds = array<i64: 1, 32>}, {pipeline_mode = #tpu.pipeline_mode<synchronous>, transform_indices = @transform_43, window_bounds = array<i64: 32, 8>}, {pipeline_mode = #tpu.pipeline_mode<synchronous>, transform_indices = @transform_44, window_bounds = array<i64: 1, 8>}, {pipeline_mode = #tpu.pipeline_mode<synchronous>, transform_indices = @transform_45, window_bounds = array<i64: 32, 32>}, {pipeline_mode = #tpu.pipeline_mode<synchronous>, transform_indices = @transform_46, window_bounds = array<i64: 1, 32>}, {pipeline_mode = #tpu.pipeline_mode<synchronous>, transform_indices = @transform_47, window_bounds = array<i64: 32, 32>}, {pipeline_mode = #tpu.pipeline_mode<synchronous>, transform_indices = @transform_48, window_bounds = array<i64: 1, 32>}, {pipeline_mode = #tpu.pipeline_mode<synchronous>, transform_indices = @transform_49, window_bounds = array<i64: 8, 32>}, {pipeline_mode = #tpu.pipeline_mode<synchronous>, transform_indices = @transform_50, window_bounds = array<i64: 8, 8>}, {pipeline_mode = #tpu.pipeline_mode<synchronous>, transform_indices = @transform_51, window_bounds = array<i64: 8, 32>}, {pipeline_mode = #tpu.pipeline_mode<synchronous>, transform_indices = @transform_52, window_bounds = array<i64: 8, 32>}, {pipeline_mode = #tpu.pipeline_mode<synchronous>, transform_indices = @transform_53, window_bounds = array<i64: 8, 32>}]} {
    %c0_i32 = arith.constant 0 : i32
    %0 = arith.cmpi eq, %arg0, %c0_i32 : i32
    %1 = arith.extui %0 : i1 to i32
    %c0_i32_0 = arith.constant 0 : i32
    %2 = arith.cmpi ne, %1, %c0_i32_0 : i32
    scf.if %2 {
      %c0_46 = arith.constant 0 : index
      %c0_47 = arith.constant 0 : index
      %65 = vector.load %arg6[%c0_46, %c0_47] : memref<8x32xf32, #tpu.memory_space<vmem>>, vector<8x32xf32>
      %c0_48 = arith.constant 0 : index
      %c0_49 = arith.constant 0 : index
      %66 = vector.load %arg7[%c0_48, %c0_49] : memref<8x32xf32, #tpu.memory_space<vmem>>, vector<8x32xf32>
      %67 = arith.addf %65, %66 : vector<8x32xf32>
      %c0_50 = arith.constant 0 : index
      %c0_51 = arith.constant 0 : index
      %68 = vector.load %arg10[%c0_50, %c0_51] : memref<32x32xf32, #tpu.memory_space<vmem>>, vector<32x32xf32>
      %cst_52 = arith.constant dense<0.000000e+00> : vector<8x32xf32>
      %69 = tpu.matmul %67, %68, %cst_52 {dimension_numbers = #tpu.dot_dimension_numbers<[1], [0], [0], [1], [0, 0, 1, 1], [], []>} : vector<8x32xf32>, vector<32x32xf32>, vector<8x32xf32> -> vector<8x32xf32>
      %c0_53 = arith.constant 0 : index
      %c0_54 = arith.constant 0 : index
      %70 = vector.load %arg11[%c0_53, %c0_54] : memref<1x32xf32, #tpu.memory_space<vmem>>, vector<1x32xf32>
      %71 = vector.broadcast %70 : vector<1x32xf32> to vector<8x32xf32>
      %72 = arith.addf %69, %71 : vector<8x32xf32>
      %c0_55 = arith.constant 0 : index
      %c0_56 = arith.constant 0 : index
      %73 = vector.load %arg12[%c0_55, %c0_56] : memref<32x32xf32, #tpu.memory_space<vmem>>, vector<32x32xf32>
      %cst_57 = arith.constant dense<0.000000e+00> : vector<8x32xf32>
      %74 = tpu.matmul %67, %73, %cst_57 {dimension_numbers = #tpu.dot_dimension_numbers<[1], [0], [0], [1], [0, 0, 1, 1], [], []>} : vector<8x32xf32>, vector<32x32xf32>, vector<8x32xf32> -> vector<8x32xf32>
      %c0_58 = arith.constant 0 : index
      %c0_59 = arith.constant 0 : index
      %75 = vector.load %arg13[%c0_58, %c0_59] : memref<1x32xf32, #tpu.memory_space<vmem>>, vector<1x32xf32>
      %76 = vector.broadcast %75 : vector<1x32xf32> to vector<8x32xf32>
      %77 = arith.addf %74, %76 : vector<8x32xf32>
      %c0_60 = arith.constant 0 : index
      %c0_61 = arith.constant 0 : index
      %78 = vector.load %arg14[%c0_60, %c0_61] : memref<32x32xf32, #tpu.memory_space<vmem>>, vector<32x32xf32>
      %cst_62 = arith.constant dense<0.000000e+00> : vector<8x32xf32>
      %79 = tpu.matmul %65, %78, %cst_62 {dimension_numbers = #tpu.dot_dimension_numbers<[1], [0], [0], [1], [0, 0, 1, 1], [], []>} : vector<8x32xf32>, vector<32x32xf32>, vector<8x32xf32> -> vector<8x32xf32>
      %c0_63 = arith.constant 0 : index
      %c0_64 = arith.constant 0 : index
      %80 = vector.load %arg15[%c0_63, %c0_64] : memref<1x32xf32, #tpu.memory_space<vmem>>, vector<1x32xf32>
      %81 = vector.broadcast %80 : vector<1x32xf32> to vector<8x32xf32>
      %82 = arith.addf %79, %81 : vector<8x32xf32>
      %cst_65 = arith.constant dense<0.000000e+00> : vector<8x8xf32>
      %83 = tpu.matmul %72, %77, %cst_65 {dimension_numbers = #tpu.dot_dimension_numbers<[1], [1], [0], [0], [0, 0, 1, 0], [], []>} : vector<8x32xf32>, vector<8x32xf32>, vector<8x8xf32> -> vector<8x8xf32>
      %cst_66 = arith.constant 0.176776692 : f32
      %84 = vector.broadcast %cst_66 : f32 to vector<8x8xf32>
      %85 = arith.mulf %83, %84 : vector<8x8xf32>
      %c0_67 = arith.constant 0 : index
      %c0_68 = arith.constant 0 : index
      %86 = vector.load %arg8[%c0_67, %c0_68] : memref<8x1xi32, #tpu.memory_space<vmem>>, vector<8x1xi32>
      %c0_69 = arith.constant 0 : index
      %c0_70 = arith.constant 0 : index
      %87 = vector.load %arg9[%c0_69, %c0_70] : memref<1x8xi32, #tpu.memory_space<vmem>>, vector<1x8xi32>
      %88 = vector.broadcast %86 : vector<8x1xi32> to vector<8x8xi32>
      %89 = vector.broadcast %87 : vector<1x8xi32> to vector<8x8xi32>
      %90 = arith.cmpi eq, %88, %89 : vector<8x8xi32>
      %cst_71 = arith.constant -1.000000e+09 : f32
      %91 = vector.broadcast %cst_71 : f32 to vector<8x8xf32>
      %92 = arith.select %90, %85, %91 : vector<8x8xi1>, vector<8x8xf32>
      %cst_72 = arith.constant dense<0xFF800000> : vector<8xf32>
      %93 = vector.multi_reduction <maximumf>, %92, %cst_72 [1] : vector<8x8xf32> to vector<8xf32>
      %94 = vector.shape_cast %93 : vector<8xf32> to vector<8x1xf32>
      %95 = vector.broadcast %94 : vector<8x1xf32> to vector<8x8xf32>
      %96 = arith.subf %92, %95 : vector<8x8xf32>
      %97 = math.exp %96 : vector<8x8xf32>
      %cst_73 = arith.constant dense<0.000000e+00> : vector<8xf32>
      %98 = vector.multi_reduction <add>, %97, %cst_73 [1] : vector<8x8xf32> to vector<8xf32>
      %99 = vector.shape_cast %98 : vector<8xf32> to vector<8x1xf32>
      %100 = tpu.reciprocal %99 {approx = true} : vector<8x1xf32> -> vector<8x1xf32>
      %101 = vector.broadcast %100 : vector<8x1xf32> to vector<8x8xf32>
      %102 = arith.mulf %97, %101 : vector<8x8xf32>
      %cst_74 = arith.constant dense<0.000000e+00> : vector<8x32xf32>
      %103 = tpu.matmul %102, %82, %cst_74 {dimension_numbers = #tpu.dot_dimension_numbers<[1], [0], [0], [1], [0, 0, 1, 1], [], []>} : vector<8x8xf32>, vector<8x32xf32>, vector<8x32xf32> -> vector<8x32xf32>
      %c0_75 = arith.constant 0 : index
      %c0_76 = arith.constant 0 : index
      %104 = vector.load %arg16[%c0_75, %c0_76] : memref<32x32xf32, #tpu.memory_space<vmem>>, vector<32x32xf32>
      %cst_77 = arith.constant dense<0.000000e+00> : vector<8x32xf32>
      %105 = tpu.matmul %103, %104, %cst_77 {dimension_numbers = #tpu.dot_dimension_numbers<[1], [0], [0], [1], [0, 0, 1, 1], [], []>} : vector<8x32xf32>, vector<32x32xf32>, vector<8x32xf32> -> vector<8x32xf32>
      %c0_78 = arith.constant 0 : index
      %c0_79 = arith.constant 0 : index
      %106 = vector.load %arg17[%c0_78, %c0_79] : memref<1x32xf32, #tpu.memory_space<vmem>>, vector<1x32xf32>
      %107 = vector.broadcast %106 : vector<1x32xf32> to vector<8x32xf32>
      %108 = arith.addf %105, %107 : vector<8x32xf32>
      %109 = arith.addf %65, %108 : vector<8x32xf32>
      %c0_80 = arith.constant 0 : index
      %c0_81 = arith.constant 0 : index
      %110 = vector.load %arg18[%c0_80, %c0_81] : memref<1x32xf32, #tpu.memory_space<vmem>>, vector<1x32xf32>
      %c0_82 = arith.constant 0 : index
      %c0_83 = arith.constant 0 : index
      %111 = vector.load %arg19[%c0_82, %c0_83] : memref<1x32xf32, #tpu.memory_space<vmem>>, vector<1x32xf32>
      %cst_84 = arith.constant dense<0.000000e+00> : vector<8xf32>
      %112 = vector.multi_reduction <add>, %109, %cst_84 [1] : vector<8x32xf32> to vector<8xf32>
      %113 = vector.shape_cast %112 : vector<8xf32> to vector<8x1xf32>
      %cst_85 = arith.constant 3.200000e+01 : f32
      %114 = vector.broadcast %cst_85 : f32 to vector<8x1xf32>
      %115 = arith.divf %113, %114 : vector<8x1xf32>
      %116 = vector.broadcast %115 : vector<8x1xf32> to vector<8x32xf32>
      %117 = arith.subf %109, %116 : vector<8x32xf32>
      %118 = arith.mulf %117, %117 : vector<8x32xf32>
      %cst_86 = arith.constant dense<0.000000e+00> : vector<8xf32>
      %119 = vector.multi_reduction <add>, %118, %cst_86 [1] : vector<8x32xf32> to vector<8xf32>
      %120 = vector.shape_cast %119 : vector<8xf32> to vector<8x1xf32>
      %cst_87 = arith.constant 3.200000e+01 : f32
      %121 = vector.broadcast %cst_87 : f32 to vector<8x1xf32>
      %122 = arith.divf %120, %121 : vector<8x1xf32>
      %123 = vector.broadcast %115 : vector<8x1xf32> to vector<8x32xf32>
      %124 = arith.subf %109, %123 : vector<8x32xf32>
      %cst_88 = arith.constant 9.99999974E-6 : f32
      %125 = vector.broadcast %cst_88 : f32 to vector<8x1xf32>
      %126 = arith.addf %122, %125 : vector<8x1xf32>
      %127 = math.rsqrt %126 : vector<8x1xf32>
      %128 = vector.broadcast %127 : vector<8x1xf32> to vector<8x32xf32>
      %129 = arith.mulf %124, %128 : vector<8x32xf32>
      %130 = vector.broadcast %110 : vector<1x32xf32> to vector<8x32xf32>
      %131 = arith.mulf %129, %130 : vector<8x32xf32>
      %132 = vector.broadcast %111 : vector<1x32xf32> to vector<8x32xf32>
      %133 = arith.addf %131, %132 : vector<8x32xf32>
      %c0_89 = arith.constant 0 : index
      %c0_90 = arith.constant 0 : index
      %134 = vector.load %arg55[%c0_89, %c0_90] : memref<8x32xf32, #tpu.memory_space<vmem>>, vector<8x32xf32>
      tpu.vector_store %arg55[%c0_89, %c0_90], %133 {strides = array<i32>} : memref<8x32xf32, #tpu.memory_space<vmem>>, vector<8x32xf32>,
      %c0_91 = arith.constant 0 : index
      %c0_92 = arith.constant 0 : index
      %135 = vector.load %arg7[%c0_91, %c0_92] : memref<8x32xf32, #tpu.memory_space<vmem>>, vector<8x32xf32>
      %136 = arith.addf %133, %135 : vector<8x32xf32>
      %c0_93 = arith.constant 0 : index
      %c0_94 = arith.constant 0 : index
      %137 = vector.load %arg20[%c0_93, %c0_94] : memref<32x32xf32, #tpu.memory_space<vmem>>, vector<32x32xf32>
      %cst_95 = arith.constant dense<0.000000e+00> : vector<8x32xf32>
      %138 = tpu.matmul %136, %137, %cst_95 {dimension_numbers = #tpu.dot_dimension_numbers<[1], [0], [0], [1], [0, 0, 1, 1], [], []>} : vector<8x32xf32>, vector<32x32xf32>, vector<8x32xf32> -> vector<8x32xf32>
      %c0_96 = arith.constant 0 : index
      %c0_97 = arith.constant 0 : index
      %139 = vector.load %arg21[%c0_96, %c0_97] : memref<1x32xf32, #tpu.memory_space<vmem>>, vector<1x32xf32>
      %140 = vector.broadcast %139 : vector<1x32xf32> to vector<8x32xf32>
      %141 = arith.addf %138, %140 : vector<8x32xf32>
      %c0_98 = arith.constant 0 : index
      %c0_99 = arith.constant 0 : index
      %142 = vector.load %arg56[%c0_98, %c0_99] : memref<8x32xf32, #tpu.memory_space<vmem>>, vector<8x32xf32>
      tpu.vector_store %arg56[%c0_98, %c0_99], %141 {strides = array<i32>} : memref<8x32xf32, #tpu.memory_space<vmem>>, vector<8x32xf32>,
      %cst_100 = arith.constant -1.000000e+30 : f32
      %143 = vector.broadcast %cst_100 : f32 to vector<8x1xf32>
      %c0_101 = arith.constant 0 : index
      %c0_102 = arith.constant 0 : index
      %144 = vector.load %arg57[%c0_101, %c0_102] : memref<8x1xf32, #tpu.memory_space<vmem>>, vector<8x1xf32>
      tpu.vector_store %arg57[%c0_101, %c0_102], %143 {strides = array<i32>} : memref<8x1xf32, #tpu.memory_space<vmem>>, vector<8x1xf32>,
      %cst_103 = arith.constant 0.000000e+00 : f32
      %145 = vector.broadcast %cst_103 : f32 to vector<8x1xf32>
      %c0_104 = arith.constant 0 : index
      %c0_105 = arith.constant 0 : index
      %146 = vector.load %arg58[%c0_104, %c0_105] : memref<8x1xf32, #tpu.memory_space<vmem>>, vector<8x1xf32>
      tpu.vector_store %arg58[%c0_104, %c0_105], %145 {strides = array<i32>} : memref<8x1xf32, #tpu.memory_space<vmem>>, vector<8x1xf32>,
      %cst_106 = arith.constant 0.000000e+00 : f32
      %147 = vector.broadcast %cst_106 : f32 to vector<8x32xf32>
      %c0_107 = arith.constant 0 : index
      %c0_108 = arith.constant 0 : index
      %148 = vector.load %arg59[%c0_107, %c0_108] : memref<8x32xf32, #tpu.memory_space<vmem>>, vector<8x32xf32>
      tpu.vector_store %arg59[%c0_107, %c0_108], %147 {strides = array<i32>} : memref<8x32xf32, #tpu.memory_space<vmem>>, vector<8x32xf32>,
    } else {
    }
    %c0 = arith.constant 0 : index
    %c0_1 = arith.constant 0 : index
    %3 = vector.load %arg1[%c0, %c0_1] : memref<32x256xbf16, #tpu.memory_space<vmem>>, vector<32x256xbf16>
    %4 = arith.extf %3 : vector<32x256xbf16> to vector<32x256xf32>
    %c0_2 = arith.constant 0 : index
    %c0_3 = arith.constant 0 : index
    %5 = vector.load %arg2[%c0_2, %c0_3] : memref<32x256xbf16, #tpu.memory_space<vmem>>, vector<32x256xbf16>
    %6 = arith.extf %5 : vector<32x256xbf16> to vector<32x256xf32>
    %7 = arith.addf %4, %6 : vector<32x256xf32>
    %c0_4 = arith.constant 0 : index
    %c0_5 = arith.constant 0 : index
    %8 = vector.load %arg22[%c0_4, %c0_5] : memref<32x32xf32, #tpu.memory_space<vmem>>, vector<32x32xf32>
    %cst = arith.constant dense<0.000000e+00> : vector<32x256xf32>
    %9 = tpu.matmul %8, %7, %cst {dimension_numbers = #tpu.dot_dimension_numbers<[1], [0], [0], [1], [0, 0, 1, 1], [], []>} : vector<32x32xf32>, vector<32x256xf32>, vector<32x256xf32> -> vector<32x256xf32>
    %c0_6 = arith.constant 0 : index
    %c0_7 = arith.constant 0 : index
    %10 = vector.load %arg23[%c0_6, %c0_7] : memref<32x1xf32, #tpu.memory_space<vmem>>, vector<32x1xf32>
    %11 = vector.broadcast %10 : vector<32x1xf32> to vector<32x256xf32>
    %12 = arith.addf %9, %11 : vector<32x256xf32>
    %c0_8 = arith.constant 0 : index
    %c0_9 = arith.constant 0 : index
    %13 = vector.load %arg24[%c0_8, %c0_9] : memref<32x32xf32, #tpu.memory_space<vmem>>, vector<32x32xf32>
    %cst_10 = arith.constant dense<0.000000e+00> : vector<32x256xf32>
    %14 = tpu.matmul %13, %4, %cst_10 {dimension_numbers = #tpu.dot_dimension_numbers<[1], [0], [0], [1], [0, 0, 1, 1], [], []>} : vector<32x32xf32>, vector<32x256xf32>, vector<32x256xf32> -> vector<32x256xf32>
    %c0_11 = arith.constant 0 : index
    %c0_12 = arith.constant 0 : index
    %15 = vector.load %arg25[%c0_11, %c0_12] : memref<32x1xf32, #tpu.memory_space<vmem>>, vector<32x1xf32>
    %16 = vector.broadcast %15 : vector<32x1xf32> to vector<32x256xf32>
    %17 = arith.addf %14, %16 : vector<32x256xf32>
    %c0_13 = arith.constant 0 : index
    %c0_14 = arith.constant 0 : index
    %18 = vector.load %arg56[%c0_13, %c0_14] : memref<8x32xf32, #tpu.memory_space<vmem>>, vector<8x32xf32>
    %cst_15 = arith.constant dense<0.000000e+00> : vector<8x256xf32>
    %19 = tpu.matmul %18, %12, %cst_15 {dimension_numbers = #tpu.dot_dimension_numbers<[1], [0], [0], [1], [0, 0, 1, 1], [], []>} : vector<8x32xf32>, vector<32x256xf32>, vector<8x256xf32> -> vector<8x256xf32>
    %cst_16 = arith.constant 0.176776692 : f32
    %20 = vector.broadcast %cst_16 : f32 to vector<8x256xf32>
    %21 = arith.mulf %19, %20 : vector<8x256xf32>
    %c0_17 = arith.constant 0 : index
    %c0_18 = arith.constant 0 : index
    %22 = vector.load %arg8[%c0_17, %c0_18] : memref<8x1xi32, #tpu.memory_space<vmem>>, vector<8x1xi32>
    %c0_19 = arith.constant 0 : index
    %c0_20 = arith.constant 0 : index
    %23 = vector.load %arg3[%c0_19, %c0_20] : memref<1x256xi32, #tpu.memory_space<vmem>>, vector<1x256xi32>
    %24 = vector.broadcast %22 : vector<8x1xi32> to vector<8x256xi32>
    %25 = vector.broadcast %23 : vector<1x256xi32> to vector<8x256xi32>
    %26 = arith.cmpi eq, %24, %25 : vector<8x256xi32>
    %c0_21 = arith.constant 0 : index
    %c0_22 = arith.constant 0 : index
    %27 = vector.load %arg4[%c0_21, %c0_22] : memref<8x256xbf16, #tpu.memory_space<vmem>>, vector<8x256xbf16>
    %28 = arith.extf %27 : vector<8x256xbf16> to vector<8x256xf32>
    %cst_23 = arith.constant 5.000000e-01 : f32
    %29 = vector.broadcast %cst_23 : f32 to vector<8x256xf32>
    %30 = arith.cmpf olt, %28, %29 : vector<8x256xf32>
    %c0_24 = arith.constant 0 : index
    %c0_25 = arith.constant 0 : index
    %31 = vector.load %arg5[%c0_24, %c0_25] : memref<8x1xf32, #tpu.memory_space<vmem>>, vector<8x1xf32>
    %cst_26 = arith.constant 0.000000e+00 : f32
    %32 = vector.broadcast %cst_26 : f32 to vector<8x1xf32>
    %33 = arith.cmpf ogt, %31, %32 : vector<8x1xf32>
    %34 = vector.broadcast %33 : vector<8x1xi1> to vector<8x256xi1>
    %35 = arith.andi %30, %34 : vector<8x256xi1>
    %cst_27 = arith.constant dense<true> : vector<8x256xi1>
    %36 = arith.xori %35, %cst_27 : vector<8x256xi1>
    %37 = arith.andi %26, %36 : vector<8x256xi1>
    %cst_28 = arith.constant -1.000000e+09 : f32
    %38 = vector.broadcast %cst_28 : f32 to vector<8x256xf32>
    %39 = arith.select %37, %21, %38 : vector<8x256xi1>, vector<8x256xf32>
    %c0_29 = arith.constant 0 : index
    %c0_30 = arith.constant 0 : index
    %40 = vector.load %arg57[%c0_29, %c0_30] : memref<8x1xf32, #tpu.memory_space<vmem>>, vector<8x1xf32>
    %cst_31 = arith.constant dense<0xFF800000> : vector<8xf32>
    %41 = vector.multi_reduction <maximumf>, %39, %cst_31 [1] : vector<8x256xf32> to vector<8xf32>
    %42 = vector.shape_cast %41 : vector<8xf32> to vector<8x1xf32>
    %43 = arith.maximumf %40, %42 : vector<8x1xf32>
    %44 = arith.subf %40, %43 : vector<8x1xf32>
    %45 = math.exp %44 : vector<8x1xf32>
    %46 = vector.broadcast %43 : vector<8x1xf32> to vector<8x256xf32>
    %47 = arith.subf %39, %46 : vector<8x256xf32>
    %48 = math.exp %47 : vector<8x256xf32>
    %c0_32 = arith.constant 0 : index
    %c0_33 = arith.constant 0 : index
    %49 = vector.load %arg58[%c0_32, %c0_33] : memref<8x1xf32, #tpu.memory_space<vmem>>, vector<8x1xf32>
    %50 = arith.mulf %45, %49 : vector<8x1xf32>
    %cst_34 = arith.constant dense<0.000000e+00> : vector<8xf32>
    %51 = vector.multi_reduction <add>, %48, %cst_34 [1] : vector<8x256xf32> to vector<8xf32>
    %52 = vector.shape_cast %51 : vector<8xf32> to vector<8x1xf32>
    %53 = arith.addf %50, %52 : vector<8x1xf32>
    %c0_35 = arith.constant 0 : index
    %c0_36 = arith.constant 0 : index
    %54 = vector.load %arg58[%c0_35, %c0_36] : memref<8x1xf32, #tpu.memory_space<vmem>>, vector<8x1xf32>
    tpu.vector_store %arg58[%c0_35, %c0_36], %53 {strides = array<i32>} : memref<8x1xf32, #tpu.memory_space<vmem>>, vector<8x1xf32>,
    %c0_37 = arith.constant 0 : index
    %c0_38 = arith.constant 0 : index
    %55 = vector.load %arg59[%c0_37, %c0_38] : memref<8x32xf32, #tpu.memory_space<vmem>>, vector<8x32xf32>
    %56 = vector.broadcast %45 : vector<8x1xf32> to vector<8x32xf32>
    %57 = arith.mulf %56, %55 : vector<8x32xf32>
    %cst_39 = arith.constant dense<0.000000e+00> : vector<8x32xf32>
    %58 = tpu.matmul %48, %17, %cst_39 {dimension_numbers = #tpu.dot_dimension_numbers<[1], [1], [0], [0], [0, 0, 1, 0], [], []>} : vector<8x256xf32>, vector<32x256xf32>, vector<8x32xf32> -> vector<8x32xf32>
    %59 = arith.addf %57, %58 : vector<8x32xf32>
    %c0_40 = arith.constant 0 : index
    %c0_41 = arith.constant 0 : index
    %60 = vector.load %arg59[%c0_40, %c0_41] : memref<8x32xf32, #tpu.memory_space<vmem>>, vector<8x32xf32>
    tpu.vector_store %arg59[%c0_40, %c0_41], %59 {strides = array<i32>} : memref<8x32xf32, #tpu.memory_space<vmem>>, vector<8x32xf32>,
    %c0_42 = arith.constant 0 : index
    %c0_43 = arith.constant 0 : index
    %61 = vector.load %arg57[%c0_42, %c0_43] : memref<8x1xf32, #tpu.memory_space<vmem>>, vector<8x1xf32>
    tpu.vector_store %arg57[%c0_42, %c0_43], %43 {strides = array<i32>} : memref<8x1xf32, #tpu.memory_space<vmem>>, vector<8x1xf32>,
    %c0_i32_44 = arith.constant 0 : i32
    %62 = arith.cmpi eq, %arg0, %c0_i32_44 : i32
    %63 = arith.extui %62 : i1 to i32
    %c0_i32_45 = arith.constant 0 : i32
    %64 = arith.cmpi ne, %63, %c0_i32_45 : i32
    scf.if %64 {
      %c0_46 = arith.constant 0 : index
      %c0_47 = arith.constant 0 : index
      %65 = vector.load %arg59[%c0_46, %c0_47] : memref<8x32xf32, #tpu.memory_space<vmem>>, vector<8x32xf32>
      %c0_48 = arith.constant 0 : index
      %c0_49 = arith.constant 0 : index
      %66 = vector.load %arg58[%c0_48, %c0_49] : memref<8x1xf32, #tpu.memory_space<vmem>>, vector<8x1xf32>
      %67 = tpu.reciprocal %66 {approx = true} : vector<8x1xf32> -> vector<8x1xf32>
      %68 = vector.broadcast %67 : vector<8x1xf32> to vector<8x32xf32>
      %69 = arith.mulf %65, %68 : vector<8x32xf32>
      %c0_50 = arith.constant 0 : index
      %c0_51 = arith.constant 0 : index
      %70 = vector.load %arg26[%c0_50, %c0_51] : memref<32x32xf32, #tpu.memory_space<vmem>>, vector<32x32xf32>
      %cst_52 = arith.constant dense<0.000000e+00> : vector<8x32xf32>
      %71 = tpu.matmul %69, %70, %cst_52 {dimension_numbers = #tpu.dot_dimension_numbers<[1], [0], [0], [1], [0, 0, 1, 1], [], []>} : vector<8x32xf32>, vector<32x32xf32>, vector<8x32xf32> -> vector<8x32xf32>
      %c0_53 = arith.constant 0 : index
      %c0_54 = arith.constant 0 : index
      %72 = vector.load %arg27[%c0_53, %c0_54] : memref<1x32xf32, #tpu.memory_space<vmem>>, vector<1x32xf32>
      %73 = vector.broadcast %72 : vector<1x32xf32> to vector<8x32xf32>
      %74 = arith.addf %71, %73 : vector<8x32xf32>
      %c0_55 = arith.constant 0 : index
      %c0_56 = arith.constant 0 : index
      %75 = vector.load %arg55[%c0_55, %c0_56] : memref<8x32xf32, #tpu.memory_space<vmem>>, vector<8x32xf32>
      %76 = arith.addf %75, %74 : vector<8x32xf32>
      %c0_57 = arith.constant 0 : index
      %c0_58 = arith.constant 0 : index
      %77 = vector.load %arg28[%c0_57, %c0_58] : memref<1x32xf32, #tpu.memory_space<vmem>>, vector<1x32xf32>
      %c0_59 = arith.constant 0 : index
      %c0_60 = arith.constant 0 : index
      %78 = vector.load %arg29[%c0_59, %c0_60] : memref<1x32xf32, #tpu.memory_space<vmem>>, vector<1x32xf32>
      %cst_61 = arith.constant dense<0.000000e+00> : vector<8xf32>
      %79 = vector.multi_reduction <add>, %76, %cst_61 [1] : vector<8x32xf32> to vector<8xf32>
      %80 = vector.shape_cast %79 : vector<8xf32> to vector<8x1xf32>
      %cst_62 = arith.constant 3.200000e+01 : f32
      %81 = vector.broadcast %cst_62 : f32 to vector<8x1xf32>
      %82 = arith.divf %80, %81 : vector<8x1xf32>
      %83 = vector.broadcast %82 : vector<8x1xf32> to vector<8x32xf32>
      %84 = arith.subf %76, %83 : vector<8x32xf32>
      %85 = arith.mulf %84, %84 : vector<8x32xf32>
      %cst_63 = arith.constant dense<0.000000e+00> : vector<8xf32>
      %86 = vector.multi_reduction <add>, %85, %cst_63 [1] : vector<8x32xf32> to vector<8xf32>
      %87 = vector.shape_cast %86 : vector<8xf32> to vector<8x1xf32>
      %cst_64 = arith.constant 3.200000e+01 : f32
      %88 = vector.broadcast %cst_64 : f32 to vector<8x1xf32>
      %89 = arith.divf %87, %88 : vector<8x1xf32>
      %90 = vector.broadcast %82 : vector<8x1xf32> to vector<8x32xf32>
      %91 = arith.subf %76, %90 : vector<8x32xf32>
      %cst_65 = arith.constant 9.99999974E-6 : f32
      %92 = vector.broadcast %cst_65 : f32 to vector<8x1xf32>
      %93 = arith.addf %89, %92 : vector<8x1xf32>
      %94 = math.rsqrt %93 : vector<8x1xf32>
      %95 = vector.broadcast %94 : vector<8x1xf32> to vector<8x32xf32>
      %96 = arith.mulf %91, %95 : vector<8x32xf32>
      %97 = vector.broadcast %77 : vector<1x32xf32> to vector<8x32xf32>
      %98 = arith.mulf %96, %97 : vector<8x32xf32>
      %99 = vector.broadcast %78 : vector<1x32xf32> to vector<8x32xf32>
      %100 = arith.addf %98, %99 : vector<8x32xf32>
      %c0_66 = arith.constant 0 : index
      %c0_67 = arith.constant 0 : index
      %101 = vector.load %arg30[%c0_66, %c0_67] : memref<32x64xf32, #tpu.memory_space<vmem>>, vector<32x64xf32>
      %cst_68 = arith.constant dense<0.000000e+00> : vector<8x64xf32>
      %102 = tpu.matmul %100, %101, %cst_68 {dimension_numbers = #tpu.dot_dimension_numbers<[1], [0], [0], [1], [0, 0, 1, 1], [], []>} : vector<8x32xf32>, vector<32x64xf32>, vector<8x64xf32> -> vector<8x64xf32>
      %c0_69 = arith.constant 0 : index
      %c0_70 = arith.constant 0 : index
      %103 = vector.load %arg31[%c0_69, %c0_70] : memref<1x64xf32, #tpu.memory_space<vmem>>, vector<1x64xf32>
      %104 = vector.broadcast %103 : vector<1x64xf32> to vector<8x64xf32>
      %105 = arith.addf %102, %104 : vector<8x64xf32>
      %cst_71 = arith.constant 0.000000e+00 : f32
      %106 = vector.broadcast %cst_71 : f32 to vector<8x64xf32>
      %107 = arith.maximumf %105, %106 : vector<8x64xf32>
      %c0_72 = arith.constant 0 : index
      %c0_73 = arith.constant 0 : index
      %108 = vector.load %arg32[%c0_72, %c0_73] : memref<64x32xf32, #tpu.memory_space<vmem>>, vector<64x32xf32>
      %cst_74 = arith.constant dense<0.000000e+00> : vector<8x32xf32>
      %109 = tpu.matmul %107, %108, %cst_74 {dimension_numbers = #tpu.dot_dimension_numbers<[1], [0], [0], [1], [0, 0, 1, 1], [], []>} : vector<8x64xf32>, vector<64x32xf32>, vector<8x32xf32> -> vector<8x32xf32>
      %110 = arith.addf %100, %109 : vector<8x32xf32>
      %c0_75 = arith.constant 0 : index
      %c0_76 = arith.constant 0 : index
      %111 = vector.load %arg33[%c0_75, %c0_76] : memref<1x32xf32, #tpu.memory_space<vmem>>, vector<1x32xf32>
      %112 = vector.broadcast %111 : vector<1x32xf32> to vector<8x32xf32>
      %113 = arith.addf %110, %112 : vector<8x32xf32>
      %c0_77 = arith.constant 0 : index
      %c0_78 = arith.constant 0 : index
      %114 = vector.load %arg34[%c0_77, %c0_78] : memref<1x32xf32, #tpu.memory_space<vmem>>, vector<1x32xf32>
      %c0_79 = arith.constant 0 : index
      %c0_80 = arith.constant 0 : index
      %115 = vector.load %arg35[%c0_79, %c0_80] : memref<1x32xf32, #tpu.memory_space<vmem>>, vector<1x32xf32>
      %cst_81 = arith.constant dense<0.000000e+00> : vector<8xf32>
      %116 = vector.multi_reduction <add>, %113, %cst_81 [1] : vector<8x32xf32> to vector<8xf32>
      %117 = vector.shape_cast %116 : vector<8xf32> to vector<8x1xf32>
      %cst_82 = arith.constant 3.200000e+01 : f32
      %118 = vector.broadcast %cst_82 : f32 to vector<8x1xf32>
      %119 = arith.divf %117, %118 : vector<8x1xf32>
      %120 = vector.broadcast %119 : vector<8x1xf32> to vector<8x32xf32>
      %121 = arith.subf %113, %120 : vector<8x32xf32>
      %122 = arith.mulf %121, %121 : vector<8x32xf32>
      %cst_83 = arith.constant dense<0.000000e+00> : vector<8xf32>
      %123 = vector.multi_reduction <add>, %122, %cst_83 [1] : vector<8x32xf32> to vector<8xf32>
      %124 = vector.shape_cast %123 : vector<8xf32> to vector<8x1xf32>
      %cst_84 = arith.constant 3.200000e+01 : f32
      %125 = vector.broadcast %cst_84 : f32 to vector<8x1xf32>
      %126 = arith.divf %124, %125 : vector<8x1xf32>
      %127 = vector.broadcast %119 : vector<8x1xf32> to vector<8x32xf32>
      %128 = arith.subf %113, %127 : vector<8x32xf32>
      %cst_85 = arith.constant 9.99999974E-6 : f32
      %129 = vector.broadcast %cst_85 : f32 to vector<8x1xf32>
      %130 = arith.addf %126, %129 : vector<8x1xf32>
      %131 = math.rsqrt %130 : vector<8x1xf32>
      %132 = vector.broadcast %131 : vector<8x1xf32> to vector<8x32xf32>
      %133 = arith.mulf %128, %132 : vector<8x32xf32>
      %134 = vector.broadcast %114 : vector<1x32xf32> to vector<8x32xf32>
      %135 = arith.mulf %133, %134 : vector<8x32xf32>
      %136 = vector.broadcast %115 : vector<1x32xf32> to vector<8x32xf32>
      %137 = arith.addf %135, %136 : vector<8x32xf32>
      %c0_86 = arith.constant 0 : index
      %c0_87 = arith.constant 0 : index
      %138 = vector.load %arg50[%c0_86, %c0_87] : memref<8x32xf32, #tpu.memory_space<vmem>>, vector<8x32xf32>
      tpu.vector_store %arg50[%c0_86, %c0_87], %137 {strides = array<i32>} : memref<8x32xf32, #tpu.memory_space<vmem>>, vector<8x32xf32>,
      %c0_88 = arith.constant 0 : index
      %c0_89 = arith.constant 0 : index
      %139 = vector.load %arg36[%c0_88, %c0_89] : memref<1x32xf32, #tpu.memory_space<vmem>>, vector<1x32xf32>
      %c0_90 = arith.constant 0 : index
      %c0_91 = arith.constant 0 : index
      %140 = vector.load %arg37[%c0_90, %c0_91] : memref<1x32xf32, #tpu.memory_space<vmem>>, vector<1x32xf32>
      %cst_92 = arith.constant dense<0.000000e+00> : vector<8xf32>
      %141 = vector.multi_reduction <add>, %137, %cst_92 [1] : vector<8x32xf32> to vector<8xf32>
      %142 = vector.shape_cast %141 : vector<8xf32> to vector<8x1xf32>
      %cst_93 = arith.constant 3.200000e+01 : f32
      %143 = vector.broadcast %cst_93 : f32 to vector<8x1xf32>
      %144 = arith.divf %142, %143 : vector<8x1xf32>
      %145 = vector.broadcast %144 : vector<8x1xf32> to vector<8x32xf32>
      %146 = arith.subf %137, %145 : vector<8x32xf32>
      %147 = arith.mulf %146, %146 : vector<8x32xf32>
      %cst_94 = arith.constant dense<0.000000e+00> : vector<8xf32>
      %148 = vector.multi_reduction <add>, %147, %cst_94 [1] : vector<8x32xf32> to vector<8xf32>
      %149 = vector.shape_cast %148 : vector<8xf32> to vector<8x1xf32>
      %cst_95 = arith.constant 3.200000e+01 : f32
      %150 = vector.broadcast %cst_95 : f32 to vector<8x1xf32>
      %151 = arith.divf %149, %150 : vector<8x1xf32>
      %152 = vector.broadcast %144 : vector<8x1xf32> to vector<8x32xf32>
      %153 = arith.subf %137, %152 : vector<8x32xf32>
      %cst_96 = arith.constant 9.99999974E-6 : f32
      %154 = vector.broadcast %cst_96 : f32 to vector<8x1xf32>
      %155 = arith.addf %151, %154 : vector<8x1xf32>
      %156 = math.rsqrt %155 : vector<8x1xf32>
      %157 = vector.broadcast %156 : vector<8x1xf32> to vector<8x32xf32>
      %158 = arith.mulf %153, %157 : vector<8x32xf32>
      %159 = vector.broadcast %139 : vector<1x32xf32> to vector<8x32xf32>
      %160 = arith.mulf %158, %159 : vector<8x32xf32>
      %161 = vector.broadcast %140 : vector<1x32xf32> to vector<8x32xf32>
      %162 = arith.addf %160, %161 : vector<8x32xf32>
      %c0_97 = arith.constant 0 : index
      %c0_98 = arith.constant 0 : index
      %163 = vector.load %arg38[%c0_97, %c0_98] : memref<32x32xf32, #tpu.memory_space<vmem>>, vector<32x32xf32>
      %cst_99 = arith.constant dense<0.000000e+00> : vector<8x32xf32>
      %164 = tpu.matmul %162, %163, %cst_99 {dimension_numbers = #tpu.dot_dimension_numbers<[1], [0], [0], [1], [0, 0, 1, 1], [], []>} : vector<8x32xf32>, vector<32x32xf32>, vector<8x32xf32> -> vector<8x32xf32>
      %c0_100 = arith.constant 0 : index
      %c0_101 = arith.constant 0 : index
      %165 = vector.load %arg39[%c0_100, %c0_101] : memref<1x32xf32, #tpu.memory_space<vmem>>, vector<1x32xf32>
      %166 = vector.broadcast %165 : vector<1x32xf32> to vector<8x32xf32>
      %167 = arith.addf %164, %166 : vector<8x32xf32>
      %cst_102 = arith.constant 0.000000e+00 : f32
      %168 = vector.broadcast %cst_102 : f32 to vector<8x32xf32>
      %169 = arith.maximumf %167, %168 : vector<8x32xf32>
      %c0_103 = arith.constant 0 : index
      %c0_104 = arith.constant 0 : index
      %170 = vector.load %arg40[%c0_103, %c0_104] : memref<32x32xf32, #tpu.memory_space<vmem>>, vector<32x32xf32>
      %cst_105 = arith.constant dense<0.000000e+00> : vector<8x32xf32>
      %171 = tpu.matmul %169, %170, %cst_105 {dimension_numbers = #tpu.dot_dimension_numbers<[1], [0], [0], [1], [0, 0, 1, 1], [], []>} : vector<8x32xf32>, vector<32x32xf32>, vector<8x32xf32> -> vector<8x32xf32>
      %c0_106 = arith.constant 0 : index
      %c0_107 = arith.constant 0 : index
      %172 = vector.load %arg41[%c0_106, %c0_107] : memref<1x32xf32, #tpu.memory_space<vmem>>, vector<1x32xf32>
      %173 = vector.broadcast %172 : vector<1x32xf32> to vector<8x32xf32>
      %174 = arith.addf %171, %173 : vector<8x32xf32>
      %c0_108 = arith.constant 0 : index
      %c0_109 = arith.constant 0 : index
      %175 = vector.load %arg54[%c0_108, %c0_109] : memref<8x32xf32, #tpu.memory_space<vmem>>, vector<8x32xf32>
      tpu.vector_store %arg54[%c0_108, %c0_109], %174 {strides = array<i32>} : memref<8x32xf32, #tpu.memory_space<vmem>>, vector<8x32xf32>,
      %c0_110 = arith.constant 0 : index
      %c0_111 = arith.constant 0 : index
      %176 = vector.load %arg42[%c0_110, %c0_111] : memref<32x32xf32, #tpu.memory_space<vmem>>, vector<32x32xf32>
      %cst_112 = arith.constant dense<0.000000e+00> : vector<8x32xf32>
      %177 = tpu.matmul %162, %176, %cst_112 {dimension_numbers = #tpu.dot_dimension_numbers<[1], [0], [0], [1], [0, 0, 1, 1], [], []>} : vector<8x32xf32>, vector<32x32xf32>, vector<8x32xf32> -> vector<8x32xf32>
      %c0_113 = arith.constant 0 : index
      %c0_114 = arith.constant 0 : index
      %178 = vector.load %arg43[%c0_113, %c0_114] : memref<1x32xf32, #tpu.memory_space<vmem>>, vector<1x32xf32>
      %179 = vector.broadcast %178 : vector<1x32xf32> to vector<8x32xf32>
      %180 = arith.addf %177, %179 : vector<8x32xf32>
      %cst_115 = arith.constant 0.000000e+00 : f32
      %181 = vector.broadcast %cst_115 : f32 to vector<8x32xf32>
      %182 = arith.maximumf %180, %181 : vector<8x32xf32>
      %c0_116 = arith.constant 0 : index
      %c0_117 = arith.constant 0 : index
      %183 = vector.load %arg44[%c0_116, %c0_117] : memref<32x8xf32, #tpu.memory_space<vmem>>, vector<32x8xf32>
      %cst_118 = arith.constant dense<0.000000e+00> : vector<8x8xf32>
      %184 = tpu.matmul %182, %183, %cst_118 {dimension_numbers = #tpu.dot_dimension_numbers<[1], [0], [0], [1], [0, 0, 1, 1], [], []>} : vector<8x32xf32>, vector<32x8xf32>, vector<8x8xf32> -> vector<8x8xf32>
      %c0_119 = arith.constant 0 : index
      %c0_120 = arith.constant 0 : index
      %185 = vector.load %arg45[%c0_119, %c0_120] : memref<1x8xf32, #tpu.memory_space<vmem>>, vector<1x8xf32>
      %186 = vector.broadcast %185 : vector<1x8xf32> to vector<8x8xf32>
      %187 = arith.addf %184, %186 : vector<8x8xf32>
      %c0_121 = arith.constant 0 : index
      %c0_122 = arith.constant 0 : index
      %188 = vector.load %arg51[%c0_121, %c0_122] : memref<8x8xf32, #tpu.memory_space<vmem>>, vector<8x8xf32>
      tpu.vector_store %arg51[%c0_121, %c0_122], %187 {strides = array<i32>} : memref<8x8xf32, #tpu.memory_space<vmem>>, vector<8x8xf32>,
      %c0_123 = arith.constant 0 : index
      %c0_124 = arith.constant 0 : index
      %189 = vector.load %arg7[%c0_123, %c0_124] : memref<8x32xf32, #tpu.memory_space<vmem>>, vector<8x32xf32>
      %190 = arith.addf %137, %189 : vector<8x32xf32>
      %c0_125 = arith.constant 0 : index
      %c0_126 = arith.constant 0 : index
      %191 = vector.load %arg46[%c0_125, %c0_126] : memref<32x32xf32, #tpu.memory_space<vmem>>, vector<32x32xf32>
      %cst_127 = arith.constant dense<0.000000e+00> : vector<8x32xf32>
      %192 = tpu.matmul %190, %191, %cst_127 {dimension_numbers = #tpu.dot_dimension_numbers<[1], [0], [0], [1], [0, 0, 1, 1], [], []>} : vector<8x32xf32>, vector<32x32xf32>, vector<8x32xf32> -> vector<8x32xf32>
      %c0_128 = arith.constant 0 : index
      %c0_129 = arith.constant 0 : index
      %193 = vector.load %arg47[%c0_128, %c0_129] : memref<1x32xf32, #tpu.memory_space<vmem>>, vector<1x32xf32>
      %194 = vector.broadcast %193 : vector<1x32xf32> to vector<8x32xf32>
      %195 = arith.addf %192, %194 : vector<8x32xf32>
      %c0_130 = arith.constant 0 : index
      %c0_131 = arith.constant 0 : index
      %196 = vector.load %arg52[%c0_130, %c0_131] : memref<8x32xf32, #tpu.memory_space<vmem>>, vector<8x32xf32>
      tpu.vector_store %arg52[%c0_130, %c0_131], %195 {strides = array<i32>} : memref<8x32xf32, #tpu.memory_space<vmem>>, vector<8x32xf32>,
      %c0_132 = arith.constant 0 : index
      %c0_133 = arith.constant 0 : index
      %197 = vector.load %arg48[%c0_132, %c0_133] : memref<32x32xf32, #tpu.memory_space<vmem>>, vector<32x32xf32>
      %cst_134 = arith.constant dense<0.000000e+00> : vector<8x32xf32>
      %198 = tpu.matmul %137, %197, %cst_134 {dimension_numbers = #tpu.dot_dimension_numbers<[1], [0], [0], [1], [0, 0, 1, 1], [], []>} : vector<8x32xf32>, vector<32x32xf32>, vector<8x32xf32> -> vector<8x32xf32>
      %c0_135 = arith.constant 0 : index
      %c0_136 = arith.constant 0 : index
      %199 = vector.load %arg49[%c0_135, %c0_136] : memref<1x32xf32, #tpu.memory_space<vmem>>, vector<1x32xf32>
      %200 = vector.broadcast %199 : vector<1x32xf32> to vector<8x32xf32>
      %201 = arith.addf %198, %200 : vector<8x32xf32>
      %c0_137 = arith.constant 0 : index
      %c0_138 = arith.constant 0 : index
      %202 = vector.load %arg53[%c0_137, %c0_138] : memref<8x32xf32, #tpu.memory_space<vmem>>, vector<8x32xf32>
      tpu.vector_store %arg53[%c0_137, %c0_138], %201 {strides = array<i32>} : memref<8x32xf32, #tpu.memory_space<vmem>>, vector<8x32xf32>,
    } else {
    }
    return
  }
  func.func @transform_0(%arg0: i32) -> (i32, i32) {
    %c0_i32 = arith.constant 0 : i32
    %c0_i32_0 = arith.constant 0 : i32
    return %c0_i32, %arg0 : i32, i32
  }
  func.func @transform_1(%arg0: i32) -> (i32, i32) {
    %c0_i32 = arith.constant 0 : i32
    %c0_i32_0 = arith.constant 0 : i32
    return %c0_i32, %arg0 : i32, i32
  }
  func.func @transform_2(%arg0: i32) -> (i32, i32) {
    %c0_i32 = arith.constant 0 : i32
    %c0_i32_0 = arith.constant 0 : i32
    return %c0_i32, %arg0 : i32, i32
  }
  func.func @transform_3(%arg0: i32) -> (i32, i32) {
    %c0_i32 = arith.constant 0 : i32
    %c0_i32_0 = arith.constant 0 : i32
    return %c0_i32, %arg0 : i32, i32
  }
  func.func @transform_4(%arg0: i32) -> (i32, i32) {
    %c0_i32 = arith.constant 0 : i32
    %c0_i32_0 = arith.constant 0 : i32
    %c0_i32_1 = arith.constant 0 : i32
    return %c0_i32, %c0_i32_0 : i32, i32
  }
  func.func @transform_5(%arg0: i32) -> (i32, i32) {
    %c0_i32 = arith.constant 0 : i32
    %c0_i32_0 = arith.constant 0 : i32
    %c0_i32_1 = arith.constant 0 : i32
    return %c0_i32, %c0_i32_0 : i32, i32
  }
  func.func @transform_6(%arg0: i32) -> (i32, i32) {
    %c0_i32 = arith.constant 0 : i32
    %c0_i32_0 = arith.constant 0 : i32
    %c0_i32_1 = arith.constant 0 : i32
    return %c0_i32, %c0_i32_0 : i32, i32
  }
  func.func @transform_7(%arg0: i32) -> (i32, i32) {
    %c0_i32 = arith.constant 0 : i32
    %c0_i32_0 = arith.constant 0 : i32
    %c0_i32_1 = arith.constant 0 : i32
    return %c0_i32, %c0_i32_0 : i32, i32
  }
  func.func @transform_8(%arg0: i32) -> (i32, i32) {
    %c0_i32 = arith.constant 0 : i32
    %c0_i32_0 = arith.constant 0 : i32
    %c0_i32_1 = arith.constant 0 : i32
    return %c0_i32, %c0_i32_0 : i32, i32
  }
  func.func @transform_9(%arg0: i32) -> (i32, i32) {
    %c0_i32 = arith.constant 0 : i32
    %c0_i32_0 = arith.constant 0 : i32
    %c0_i32_1 = arith.constant 0 : i32
    return %c0_i32, %c0_i32_0 : i32, i32
  }
  func.func @transform_10(%arg0: i32) -> (i32, i32) {
    %c0_i32 = arith.constant 0 : i32
    %c0_i32_0 = arith.constant 0 : i32
    %c0_i32_1 = arith.constant 0 : i32
    return %c0_i32, %c0_i32_0 : i32, i32
  }
  func.func @transform_11(%arg0: i32) -> (i32, i32) {
    %c0_i32 = arith.constant 0 : i32
    %c0_i32_0 = arith.constant 0 : i32
    %c0_i32_1 = arith.constant 0 : i32
    return %c0_i32, %c0_i32_0 : i32, i32
  }
  func.func @transform_12(%arg0: i32) -> (i32, i32) {
    %c0_i32 = arith.constant 0 : i32
    %c0_i32_0 = arith.constant 0 : i32
    %c0_i32_1 = arith.constant 0 : i32
    return %c0_i32, %c0_i32_0 : i32, i32
  }
  func.func @transform_13(%arg0: i32) -> (i32, i32) {
    %c0_i32 = arith.constant 0 : i32
    %c0_i32_0 = arith.constant 0 : i32
    %c0_i32_1 = arith.constant 0 : i32
    return %c0_i32, %c0_i32_0 : i32, i32
  }
  func.func @transform_14(%arg0: i32) -> (i32, i32) {
    %c0_i32 = arith.constant 0 : i32
    %c0_i32_0 = arith.constant 0 : i32
    %c0_i32_1 = arith.constant 0 : i32
    return %c0_i32, %c0_i32_0 : i32, i32
  }
  func.func @transform_15(%arg0: i32) -> (i32, i32) {
    %c0_i32 = arith.constant 0 : i32
    %c0_i32_0 = arith.constant 0 : i32
    %c0_i32_1 = arith.constant 0 : i32
    return %c0_i32, %c0_i32_0 : i32, i32
  }
  func.func @transform_16(%arg0: i32) -> (i32, i32) {
    %c0_i32 = arith.constant 0 : i32
    %c0_i32_0 = arith.constant 0 : i32
    %c0_i32_1 = arith.constant 0 : i32
    return %c0_i32, %c0_i32_0 : i32, i32
  }
  func.func @transform_17(%arg0: i32) -> (i32, i32) {
    %c0_i32 = arith.constant 0 : i32
    %c0_i32_0 = arith.constant 0 : i32
    %c0_i32_1 = arith.constant 0 : i32
    return %c0_i32, %c0_i32_0 : i32, i32
  }
  func.func @transform_18(%arg0: i32) -> (i32, i32) {
    %c0_i32 = arith.constant 0 : i32
    %c0_i32_0 = arith.constant 0 : i32
    %c0_i32_1 = arith.constant 0 : i32
    return %c0_i32, %c0_i32_0 : i32, i32
  }
  func.func @transform_19(%arg0: i32) -> (i32, i32) {
    %c0_i32 = arith.constant 0 : i32
    %c0_i32_0 = arith.constant 0 : i32
    %c0_i32_1 = arith.constant 0 : i32
    return %c0_i32, %c0_i32_0 : i32, i32
  }
  func.func @transform_20(%arg0: i32) -> (i32, i32) {
    %c0_i32 = arith.constant 0 : i32
    %c0_i32_0 = arith.constant 0 : i32
    %c0_i32_1 = arith.constant 0 : i32
    return %c0_i32, %c0_i32_0 : i32, i32
  }
  func.func @transform_21(%arg0: i32) -> (i32, i32) {
    %c0_i32 = arith.constant 0 : i32
    %c0_i32_0 = arith.constant 0 : i32
    %c0_i32_1 = arith.constant 0 : i32
    return %c0_i32, %c0_i32_0 : i32, i32
  }
  func.func @transform_22(%arg0: i32) -> (i32, i32) {
    %c0_i32 = arith.constant 0 : i32
    %c0_i32_0 = arith.constant 0 : i32
    %c0_i32_1 = arith.constant 0 : i32
    return %c0_i32, %c0_i32_0 : i32, i32
  }
  func.func @transform_23(%arg0: i32) -> (i32, i32) {
    %c0_i32 = arith.constant 0 : i32
    %c0_i32_0 = arith.constant 0 : i32
    %c0_i32_1 = arith.constant 0 : i32
    return %c0_i32, %c0_i32_0 : i32, i32
  }
  func.func @transform_24(%arg0: i32) -> (i32, i32) {
    %c0_i32 = arith.constant 0 : i32
    %c0_i32_0 = arith.constant 0 : i32
    %c0_i32_1 = arith.constant 0 : i32
    return %c0_i32, %c0_i32_0 : i32, i32
  }
  func.func @transform_25(%arg0: i32) -> (i32, i32) {
    %c0_i32 = arith.constant 0 : i32
    %c0_i32_0 = arith.constant 0 : i32
    %c0_i32_1 = arith.constant 0 : i32
    return %c0_i32, %c0_i32_0 : i32, i32
  }
  func.func @transform_26(%arg0: i32) -> (i32, i32) {
    %c0_i32 = arith.constant 0 : i32
    %c0_i32_0 = arith.constant 0 : i32
    %c0_i32_1 = arith.constant 0 : i32
    return %c0_i32, %c0_i32_0 : i32, i32
  }
  func.func @transform_27(%arg0: i32) -> (i32, i32) {
    %c0_i32 = arith.constant 0 : i32
    %c0_i32_0 = arith.constant 0 : i32
    %c0_i32_1 = arith.constant 0 : i32
    return %c0_i32, %c0_i32_0 : i32, i32
  }
  func.func @transform_28(%arg0: i32) -> (i32, i32) {
    %c0_i32 = arith.constant 0 : i32
    %c0_i32_0 = arith.constant 0 : i32
    %c0_i32_1 = arith.constant 0 : i32
    return %c0_i32, %c0_i32_0 : i32, i32
  }
  func.func @transform_29(%arg0: i32) -> (i32, i32) {
    %c0_i32 = arith.constant 0 : i32
    %c0_i32_0 = arith.constant 0 : i32
    %c0_i32_1 = arith.constant 0 : i32
    return %c0_i32, %c0_i32_0 : i32, i32
  }
  func.func @transform_30(%arg0: i32) -> (i32, i32) {
    %c0_i32 = arith.constant 0 : i32
    %c0_i32_0 = arith.constant 0 : i32
    %c0_i32_1 = arith.constant 0 : i32
    return %c0_i32, %c0_i32_0 : i32, i32
  }
  func.func @transform_31(%arg0: i32) -> (i32, i32) {
    %c0_i32 = arith.constant 0 : i32
    %c0_i32_0 = arith.constant 0 : i32
    %c0_i32_1 = arith.constant 0 : i32
    return %c0_i32, %c0_i32_0 : i32, i32
  }
  func.func @transform_32(%arg0: i32) -> (i32, i32) {
    %c0_i32 = arith.constant 0 : i32
    %c0_i32_0 = arith.constant 0 : i32
    %c0_i32_1 = arith.constant 0 : i32
    return %c0_i32, %c0_i32_0 : i32, i32
  }
  func.func @transform_33(%arg0: i32) -> (i32, i32) {
    %c0_i32 = arith.constant 0 : i32
    %c0_i32_0 = arith.constant 0 : i32
    %c0_i32_1 = arith.constant 0 : i32
    return %c0_i32, %c0_i32_0 : i32, i32
  }
  func.func @transform_34(%arg0: i32) -> (i32, i32) {
    %c0_i32 = arith.constant 0 : i32
    %c0_i32_0 = arith.constant 0 : i32
    %c0_i32_1 = arith.constant 0 : i32
    return %c0_i32, %c0_i32_0 : i32, i32
  }
  func.func @transform_35(%arg0: i32) -> (i32, i32) {
    %c0_i32 = arith.constant 0 : i32
    %c0_i32_0 = arith.constant 0 : i32
    %c0_i32_1 = arith.constant 0 : i32
    return %c0_i32, %c0_i32_0 : i32, i32
  }
  func.func @transform_36(%arg0: i32) -> (i32, i32) {
    %c0_i32 = arith.constant 0 : i32
    %c0_i32_0 = arith.constant 0 : i32
    %c0_i32_1 = arith.constant 0 : i32
    return %c0_i32, %c0_i32_0 : i32, i32
  }
  func.func @transform_37(%arg0: i32) -> (i32, i32) {
    %c0_i32 = arith.constant 0 : i32
    %c0_i32_0 = arith.constant 0 : i32
    %c0_i32_1 = arith.constant 0 : i32
    return %c0_i32, %c0_i32_0 : i32, i32
  }
  func.func @transform_38(%arg0: i32) -> (i32, i32) {
    %c0_i32 = arith.constant 0 : i32
    %c0_i32_0 = arith.constant 0 : i32
    %c0_i32_1 = arith.constant 0 : i32
    return %c0_i32, %c0_i32_0 : i32, i32
  }
  func.func @transform_39(%arg0: i32) -> (i32, i32) {
    %c0_i32 = arith.constant 0 : i32
    %c0_i32_0 = arith.constant 0 : i32
    %c0_i32_1 = arith.constant 0 : i32
    return %c0_i32, %c0_i32_0 : i32, i32
  }
  func.func @transform_40(%arg0: i32) -> (i32, i32) {
    %c0_i32 = arith.constant 0 : i32
    %c0_i32_0 = arith.constant 0 : i32
    %c0_i32_1 = arith.constant 0 : i32
    return %c0_i32, %c0_i32_0 : i32, i32
  }
  func.func @transform_41(%arg0: i32) -> (i32, i32) {
    %c0_i32 = arith.constant 0 : i32
    %c0_i32_0 = arith.constant 0 : i32
    %c0_i32_1 = arith.constant 0 : i32
    return %c0_i32, %c0_i32_0 : i32, i32
  }
  func.func @transform_42(%arg0: i32) -> (i32, i32) {
    %c0_i32 = arith.constant 0 : i32
    %c0_i32_0 = arith.constant 0 : i32
    %c0_i32_1 = arith.constant 0 : i32
    return %c0_i32, %c0_i32_0 : i32, i32
  }
  func.func @transform_43(%arg0: i32) -> (i32, i32) {
    %c0_i32 = arith.constant 0 : i32
    %c0_i32_0 = arith.constant 0 : i32
    %c0_i32_1 = arith.constant 0 : i32
    return %c0_i32, %c0_i32_0 : i32, i32
  }
  func.func @transform_44(%arg0: i32) -> (i32, i32) {
    %c0_i32 = arith.constant 0 : i32
    %c0_i32_0 = arith.constant 0 : i32
    %c0_i32_1 = arith.constant 0 : i32
    return %c0_i32, %c0_i32_0 : i32, i32
  }
  func.func @transform_45(%arg0: i32) -> (i32, i32) {
    %c0_i32 = arith.constant 0 : i32
    %c0_i32_0 = arith.constant 0 : i32
    %c0_i32_1 = arith.constant 0 : i32
    return %c0_i32, %c0_i32_0 : i32, i32
  }
  func.func @transform_46(%arg0: i32) -> (i32, i32) {
    %c0_i32 = arith.constant 0 : i32
    %c0_i32_0 = arith.constant 0 : i32
    %c0_i32_1 = arith.constant 0 : i32
    return %c0_i32, %c0_i32_0 : i32, i32
  }
  func.func @transform_47(%arg0: i32) -> (i32, i32) {
    %c0_i32 = arith.constant 0 : i32
    %c0_i32_0 = arith.constant 0 : i32
    %c0_i32_1 = arith.constant 0 : i32
    return %c0_i32, %c0_i32_0 : i32, i32
  }
  func.func @transform_48(%arg0: i32) -> (i32, i32) {
    %c0_i32 = arith.constant 0 : i32
    %c0_i32_0 = arith.constant 0 : i32
    %c0_i32_1 = arith.constant 0 : i32
    return %c0_i32, %c0_i32_0 : i32, i32
  }
  func.func @transform_49(%arg0: i32) -> (i32, i32) {
    %c0_i32 = arith.constant 0 : i32
    %c0_i32_0 = arith.constant 0 : i32
    %c0_i32_1 = arith.constant 0 : i32
    return %c0_i32, %c0_i32_0 : i32, i32
  }
  func.func @transform_50(%arg0: i32) -> (i32, i32) {
    %c0_i32 = arith.constant 0 : i32
    %c0_i32_0 = arith.constant 0 : i32
    %c0_i32_1 = arith.constant 0 : i32
    return %c0_i32, %c0_i32_0 : i32, i32
  }
  func.func @transform_51(%arg0: i32) -> (i32, i32) {
    %c0_i32 = arith.constant 0 : i32
    %c0_i32_0 = arith.constant 0 : i32
    %c0_i32_1 = arith.constant 0 : i32
    return %c0_i32, %c0_i32_0 : i32, i32
  }
  func.func @transform_52(%arg0: i32) -> (i32, i32) {
    %c0_i32 = arith.constant 0 : i32
    %c0_i32_0 = arith.constant 0 : i32
    %c0_i32_1 = arith.constant 0 : i32
    return %c0_i32, %c0_i32_0 : i32, i32
  }
  func.func @transform_53(%arg0: i32) -> (i32, i32) {
    %c0_i32 = arith.constant 0 : i32
    %c0_i32_0 = arith.constant 0 : i32
    %c0_i32_1 = arith.constant 0 : i32
    return %c0_i32, %c0_i32_0 : i32, i32
  }
}

</mosaic_0001>

<llo_original>
// kernel: _lambda_.6
$region0: #{_lambda_.6}
  #allocation0 [shape = 'u32[]', space=smem, size = 0x4, offset = 0x4, fixed_abs, tag = 'smem constant byte address 0x4 - core index']
  #allocation1 [shape = 'u32[144,128]{1,0:T(1,128)}', space=vmem, size = 0x12000, scoped, tag = 'internal scratch']
  %s0 = inlined_call_operand.vmem [shape: f32[8,32], index: 0, kind: input, shape index: {}]
  %s1 = inlined_call_operand.vmem [shape: f32[32,32], index: 1, kind: input, shape index: {}]
  %s2 = inlined_call_operand.vmem [shape: f32[1,32], index: 2, kind: input, shape index: {}]
  %s3 = inlined_call_operand.vmem [shape: f32[1,32], index: 3, kind: input, shape index: {}]
  %s4 = inlined_call_operand.vmem [shape: f32[1,32], index: 4, kind: input, shape index: {}]
  %s5 = inlined_call_operand.vmem [shape: f32[32,32], index: 5, kind: input, shape index: {}]
  %s6 = inlined_call_operand.vmem [shape: f32[1,32], index: 6, kind: input, shape index: {}]
  %s7 = inlined_call_operand.vmem [shape: f32[32,32], index: 7, kind: input, shape index: {}]
  %s8 = inlined_call_operand.vmem [shape: f32[1,32], index: 8, kind: input, shape index: {}]
  %s9 = inlined_call_operand.vmem [shape: f32[8,32], index: 9, kind: output, shape index: {0}]
  %s10 = inlined_call_operand.vmem [shape: f32[8,32], index: 10, kind: output, shape index: {1}]
  %11 = xla_tuple %s9, %s10
  %s12 = sld [smem:[#allocation0]]
  $region54: #{_lambda_.6} parent=0
    _
  %s14 = ssub.s32 1, %s12
  %s15 = scalar_select 0, %s14, %s12
  // Predicated region
  $region2: #{_lambda_.6} parent=0 // pred_check
    _
  $region3: #{_lambda_.6} parent=0 // pred_check_branch
    %17 = sbr.rel (0) target = $region5
  $region4: #{_lambda_.6} parent=0 // pred_region
    _
  $region5: #{_lambda_.6} parent=0 // pred_fallthru
    _
  // Predicated region
  $region6: #{_lambda_.6} parent=0 // pred_check
    _
  $region7: #{_lambda_.6} parent=0 // pred_check_branch
    %19 = sbr.rel (0) target = $region9
  $region8: #{_lambda_.6} parent=0 // pred_region
    _
  $region9: #{_lambda_.6} parent=0 // pred_fallthru
    _
  // Predicated region
  $region10: #{_lambda_.6} parent=0 // pred_check
    _
  $region11: #{_lambda_.6} parent=0 // pred_check_branch
    %21 = sbr.rel (0) target = $region13
  $region12: #{_lambda_.6} parent=0 // pred_region
    _
  $region13: #{_lambda_.6} parent=0 // pred_fallthru
    _
  // Predicated region
  $region14: #{_lambda_.6} parent=0 // pred_check
    _
  $region15: #{_lambda_.6} parent=0 // pred_check_branch
    %23 = sbr.rel (0) target = $region17
  $region16: #{_lambda_.6} parent=0 // pred_region
    _
  $region17: #{_lambda_.6} parent=0 // pred_fallthru
    _
  // Predicated region
  $region18: #{_lambda_.6} parent=0 // pred_check
    _
  $region19: #{_lambda_.6} parent=0 // pred_check_branch
    %25 = sbr.rel (0) target = $region21
  $region20: #{_lambda_.6} parent=0 // pred_region
    _
  $region21: #{_lambda_.6} parent=0 // pred_fallthru
    _
  // Predicated region
  $region22: #{_lambda_.6} parent=0 // pred_check
    _
  $region23: #{_lambda_.6} parent=0 // pred_check_branch
    %27 = sbr.rel (0) target = $region25
  $region24: #{_lambda_.6} parent=0 // pred_region
    _
  $region25: #{_lambda_.6} parent=0 // pred_fallthru
    _
  // Predicated region
  $region26: #{_lambda_.6} parent=0 // pred_check
    _
  $region27: #{_lambda_.6} parent=0 // pred_check_branch
    %29 = sbr.rel (0) target = $region29
  $region28: #{_lambda_.6} parent=0 // pred_region
    _
  $region29: #{_lambda_.6} parent=0 // pred_fallthru
    _
  // Predicated region
  $region30: #{_lambda_.6} parent=0 // pred_check
    _
  $region31: #{_lambda_.6} parent=0 // pred_check_branch
    %31 = sbr.rel (0) target = $region33
  $region32: #{_lambda_.6} parent=0 // pred_region
    _
  $region33: #{_lambda_.6} parent=0 // pred_fallthru
    _
  // Predicated region
  $region34: #{_lambda_.6} parent=0 // pred_check
    _
  $region35: #{_lambda_.6} parent=0 // pred_check_branch
    %33 = sbr.rel (0) target = $region37
  $region36: #{_lambda_.6} parent=0 // pred_region
    _
  $region37: #{_lambda_.6} parent=0 // pred_fallthru
    _
  %v34 = vld [vmem:[%s0] sm:$0xff]
  %v35 = vld [vmem:[%s1] sm:$0xff]
  %v36 = vld [vmem:[%s1 + $0x8] sm:$0xff]
  %v37 = vld [vmem:[%s1 + $0x10] sm:$0xff]
  %v38 = vld [vmem:[%s1 + $0x18] sm:$0xff]
  %v39 = vld [vmem:[%s2] sm:$0x1]
  %v41 = vlaneseq
  %v42 = vshrl.u32 %v41, 7
  %v43 = vsub.s32 0, %v42
  %v44 = vrot.slane %v39, %v43
  %vm46 = vcmask 261120
  %v48 = vsel %vm46, %v34, 0
  %50 = vmatprep.subr.mxu0 0.0
  %51 = vmatpush1.msra.mxu0 %v35
  %52 = vmatprep.subr.mxu0 0.0
  %53 = vmatpush1.msra.mxu0 %v36
  %54 = vmatprep.subr.mxu0 0.0
  %55 = vmatpush1.msra.mxu0 %v37
  %56 = vmatprep.subr.mxu0 0.0
  %57 = vmatpush1.msra.mxu0 %v38
  %58 = vmatprep.subr.mxu0 0.0
  %59 = vmatpush1.msra.mxu0 0.0
  %60 = vmatprep.subr.mxu0 0.0
  %61 = vmatpush1.msra.mxu0 0.0
  %62 = vmatprep.subr.mxu0 0.0
  %63 = vmatpush1.msra.mxu0 0.0
  %64 = vmatprep.subr.mxu0 0.0
  %65 = vmatpush1.msra.mxu0 0.0
  %66 = vmatprep.subr.mxu0 0.0
  %67 = vmatpush1.msra.mxu0 0.0
  %68 = vmatprep.subr.mxu0 0.0
  %69 = vmatpush1.msra.mxu0 0.0
  %70 = vmatprep.subr.mxu0 0.0
  %71 = vmatpush1.msra.mxu0 0.0
  %72 = vmatprep.subr.mxu0 0.0
  %73 = vmatpush1.msra.mxu0 0.0
  %74 = vmatprep.subr.mxu0 0.0
  %75 = vmatpush1.msra.mxu0 0.0
  %76 = vmatprep.subr.mxu0 0.0
  %77 = vmatpush1.msra.mxu0 0.0
  %78 = vmatprep.subr.mxu0 0.0
  %79 = vmatpush1.msra.mxu0 0.0
  %80 = vmatprep.subr.mxu0 0.0
  %81 = vmatpush1.msra.mxu0 0.0
  %82 = vmatprep.subr.mxu0 0.0
  %83 = vmatpush1.msra.mxu0 0.0
  %84 = vmatprep.subr.mxu0 0.0
  %85 = vmatpush1.msra.mxu0 0.0
  %86 = vmatprep.subr.mxu0 0.0
  %87 = vmatpush1.msra.mxu0 0.0
  %88 = vmatprep.subr.mxu0 0.0
  %89 = vmatpush1.msra.mxu0 0.0
  %90 = vmatprep.subr.mxu0 0.0
  %91 = vmatpush1.msra.mxu0 0.0
  %92 = vmatprep.subr.mxu0 0.0
  %93 = vmatpush1.msra.mxu0 0.0
  %94 = vmatprep.subr.mxu0 0.0
  %95 = vmatpush1.msra.mxu0 0.0
  %96 = vmatprep.subr.mxu0 0.0
  %97 = vmatpush1.msra.mxu0 0.0
  %98 = vmatprep.subr.mxu0 0.0
  %99 = vmatpush1.msra.mxu0 0.0
  %100 = vmatprep.subr.mxu0 0.0
  %101 = vmatpush1.msra.mxu0 0.0
  %102 = vmatprep.subr.mxu0 0.0
  %103 = vmatpush1.msra.mxu0 0.0
  %104 = vmatprep.subr.mxu0 0.0
  %105 = vmatpush1.msra.mxu0 0.0
  %106 = vmatprep.subr.mxu0 0.0
  %107 = vmatpush1.msra.mxu0 0.0
  %108 = vmatprep.subr.mxu0 0.0
  %109 = vmatpush1.msra.mxu0 0.0
  %110 = vmatprep.subr.mxu0 0.0
  %111 = vmatpush1.msra.mxu0 0.0
  %112 = vmatprep.subr.mxu0 0.0
  %113 = vmatpush1.msra.mxu0 0.0
  %114 = vmatprep.mubr.f32.mxu0 0.0
  %115 = vmatmul.mubr.f32.gmra.mrb[0].mxu0 %v48
  %v116 = vpop.f32.mrb[0].mxu0
  %v117 = vadd.f32 %v44, %v116
  %v118 = vpop.f32.mrb[0].mxu0
  %119 = vdwg.mxu0
  %120 = vst.msk [vmem:[%s9] sm:$0xff] %vm46, %v117
  %v121 = vld [vmem:[%s3] sm:$0x1]
  %v122 = vld [vmem:[%s4] sm:$0x1]
  %v123 = vsel %vm46, %v117, 0.0
  %124 = vadd.xlane.f32.xlu0 %v123
  %v125 = vpop.xlane.xlu0 %124
  %v126 = vrcp.pop 32.0
  %v127 = vmul.f32 %v125, %v126
  %v128 = vsub.f32 %v117, %v127
  %v129 = vmul.f32 %v128, %v128
  %v130 = vsel %vm46, %v129, 0.0
  %131 = vadd.xlane.f32.xlu0 %v130
  %v132 = vpop.xlane.xlu0 %131
  %v133 = vmul.f32 %v132, %v126
  %v134 = vadd.f32 %v133, 1e-05
  %v135 = vrsqrt.pop %v134
  %v136 = vmul.f32 %v128, %v135
  %v138 = vlaneseq
  %v139 = vshrl.u32 %v138, 7
  %v140 = vsub.s32 0, %v139
  %v141 = vrot.slane %v121, %v140
  %v143 = vmul.f32 %v136, %v141
  %v145 = vlaneseq
  %v146 = vshrl.u32 %v145, 7
  %v147 = vsub.s32 0, %v146
  %v148 = vrot.slane %v122, %v147
  %v150 = vadd.f32 %v143, %v148
  %v151 = vld [vmem:[%s5] sm:$0xff]
  %v152 = vld [vmem:[%s5 + $0x8] sm:$0xff]
  %v153 = vld [vmem:[%s5 + $0x10] sm:$0xff]
  %v154 = vld [vmem:[%s5 + $0x18] sm:$0xff]
  %v155 = vld [vmem:[%s6] sm:$0x1]
  %v157 = vlaneseq
  %v158 = vshrl.u32 %v157, 7
  %v159 = vsub.s32 0, %v158
  %v160 = vrot.slane %v155, %v159
  %v163 = vsel %vm46, %v150, 0
  %165 = vmatprep.subr.mxu0 0.0
  %166 = vmatpush1.msra.mxu0 %v151
  %167 = vmatprep.subr.mxu0 0.0
  %168 = vmatpush1.msra.mxu0 %v152
  %169 = vmatprep.subr.mxu0 0.0
  %170 = vmatpush1.msra.mxu0 %v153
  %171 = vmatprep.subr.mxu0 0.0
  %172 = vmatpush1.msra.mxu0 %v154
  %173 = vmatprep.subr.mxu0 0.0
  %174 = vmatpush1.msra.mxu0 0.0
  %175 = vmatprep.subr.mxu0 0.0
  %176 = vmatpush1.msra.mxu0 0.0
  %177 = vmatprep.subr.mxu0 0.0
  %178 = vmatpush1.msra.mxu0 0.0
  %179 = vmatprep.subr.mxu0 0.0
  %180 = vmatpush1.msra.mxu0 0.0
  %181 = vmatprep.subr.mxu0 0.0
  %182 = vmatpush1.msra.mxu0 0.0
  %183 = vmatprep.subr.mxu0 0.0
  %184 = vmatpush1.msra.mxu0 0.0
  %185 = vmatprep.subr.mxu0 0.0
  %186 = vmatpush1.msra.mxu0 0.0
  %187 = vmatprep.subr.mxu0 0.0
  %188 = vmatpush1.msra.mxu0 0.0
  %189 = vmatprep.subr.mxu0 0.0
  %190 = vmatpush1.msra.mxu0 0.0
  %191 = vmatprep.subr.mxu0 0.0
  %192 = vmatpush1.msra.mxu0 0.0
  %193 = vmatprep.subr.mxu0 0.0
  %194 = vmatpush1.msra.mxu0 0.0
  %195 = vmatprep.subr.mxu0 0.0
  %196 = vmatpush1.msra.mxu0 0.0
  %197 = vmatprep.subr.mxu0 0.0
  %198 = vmatpush1.msra.mxu0 0.0
  %199 = vmatprep.subr.mxu0 0.0
  %200 = vmatpush1.msra.mxu0 0.0
  %201 = vmatprep.subr.mxu0 0.0
  %202 = vmatpush1.msra.mxu0 0.0
  %203 = vmatprep.subr.mxu0 0.0
  %204 = vmatpush1.msra.mxu0 0.0
  %205 = vmatprep.subr.mxu0 0.0
  %206 = vmatpush1.msra.mxu0 0.0
  %207 = vmatprep.subr.mxu0 0.0
  %208 = vmatpush1.msra.mxu0 0.0
  %209 = vmatprep.subr.mxu0 0.0
  %210 = vmatpush1.msra.mxu0 0.0
  %211 = vmatprep.subr.mxu0 0.0
  %212 = vmatpush1.msra.mxu0 0.0
  %213 = vmatprep.subr.mxu0 0.0
  %214 = vmatpush1.msra.mxu0 0.0
  %215 = vmatprep.subr.mxu0 0.0
  %216 = vmatpush1.msra.mxu0 0.0
  %217 = vmatprep.subr.mxu0 0.0
  %218 = vmatpush1.msra.mxu0 0.0
  %219 = vmatprep.subr.mxu0 0.0
  %220 = vmatpush1.msra.mxu0 0.0
  %221 = vmatprep.subr.mxu0 0.0
  %222 = vmatpush1.msra.mxu0 0.0
  %223 = vmatprep.subr.mxu0 0.0
  %224 = vmatpush1.msra.mxu0 0.0
  %225 = vmatprep.subr.mxu0 0.0
  %226 = vmatpush1.msra.mxu0 0.0
  %227 = vmatprep.subr.mxu0 0.0
  %228 = vmatpush1.msra.mxu0 0.0
  %229 = vmatprep.mubr.f32.mxu0 0.0
  %230 = vmatmul.mubr.f32.gmra.mrb[0].mxu0 %v163
  %v231 = vpop.f32.mrb[0].mxu0
  %v232 = vadd.f32 %v160, %v231
  %v233 = vpop.f32.mrb[0].mxu0
  %234 = vdwg.mxu0
  %v235 = vmax.f32 %v232, 0.0
  %v236 = vld [vmem:[%s7] sm:$0xff]
  %v237 = vld [vmem:[%s7 + $0x8] sm:$0xff]
  %v238 = vld [vmem:[%s7 + $0x10] sm:$0xff]
  %v239 = vld [vmem:[%s7 + $0x18] sm:$0xff]
  %v240 = vld [vmem:[%s8] sm:$0x1]
  %v242 = vlaneseq
  %v243 = vshrl.u32 %v242, 7
  %v244 = vsub.s32 0, %v243
  %v245 = vrot.slane %v240, %v244
  %v248 = vsel %vm46, %v235, 0
  %250 = vmatprep.subr.mxu0 0.0
  %251 = vmatpush1.msra.mxu0 %v236
  %252 = vmatprep.subr.mxu0 0.0
  %253 = vmatpush1.msra.mxu0 %v237
  %254 = vmatprep.subr.mxu0 0.0
  %255 = vmatpush1.msra.mxu0 %v238
  %256 = vmatprep.subr.mxu0 0.0
  %257 = vmatpush1.msra.mxu0 %v239
  %258 = vmatprep.subr.mxu0 0.0
  %259 = vmatpush1.msra.mxu0 0.0
  %260 = vmatprep.subr.mxu0 0.0
  %261 = vmatpush1.msra.mxu0 0.0
  %262 = vmatprep.subr.mxu0 0.0
  %263 = vmatpush1.msra.mxu0 0.0
  %264 = vmatprep.subr.mxu0 0.0
  %265 = vmatpush1.msra.mxu0 0.0
  %266 = vmatprep.subr.mxu0 0.0
  %267 = vmatpush1.msra.mxu0 0.0
  %268 = vmatprep.subr.mxu0 0.0
  %269 = vmatpush1.msra.mxu0 0.0
  %270 = vmatprep.subr.mxu0 0.0
  %271 = vmatpush1.msra.mxu0 0.0
  %272 = vmatprep.subr.mxu0 0.0
  %273 = vmatpush1.msra.mxu0 0.0
  %274 = vmatprep.subr.mxu0 0.0
  %275 = vmatpush1.msra.mxu0 0.0
  %276 = vmatprep.subr.mxu0 0.0
  %277 = vmatpush1.msra.mxu0 0.0
  %278 = vmatprep.subr.mxu0 0.0
  %279 = vmatpush1.msra.mxu0 0.0
  %280 = vmatprep.subr.mxu0 0.0
  %281 = vmatpush1.msra.mxu0 0.0
  %282 = vmatprep.subr.mxu0 0.0
  %283 = vmatpush1.msra.mxu0 0.0
  %284 = vmatprep.subr.mxu0 0.0
  %285 = vmatpush1.msra.mxu0 0.0
  %286 = vmatprep.subr.mxu0 0.0
  %287 = vmatpush1.msra.mxu0 0.0
  %288 = vmatprep.subr.mxu0 0.0
  %289 = vmatpush1.msra.mxu0 0.0
  %290 = vmatprep.subr.mxu0 0.0
  %291 = vmatpush1.msra.mxu0 0.0
  %292 = vmatprep.subr.mxu0 0.0
  %293 = vmatpush1.msra.mxu0 0.0
  %294 = vmatprep.subr.mxu0 0.0
  %295 = vmatpush1.msra.mxu0 0.0
  %296 = vmatprep.subr.mxu0 0.0
  %297 = vmatpush1.msra.mxu0 0.0
  %298 = vmatprep.subr.mxu0 0.0
  %299 = vmatpush1.msra.mxu0 0.0
  %300 = vmatprep.subr.mxu0 0.0
  %301 = vmatpush1.msra.mxu0 0.0
  %302 = vmatprep.subr.mxu0 0.0
  %303 = vmatpush1.msra.mxu0 0.0
  %304 = vmatprep.subr.mxu0 0.0
  %305 = vmatpush1.msra.mxu0 0.0
  %306 = vmatprep.subr.mxu0 0.0
  %307 = vmatpush1.msra.mxu0 0.0
  %308 = vmatprep.subr.mxu0 0.0
  %309 = vmatpush1.msra.mxu0 0.0
  %310 = vmatprep.subr.mxu0 0.0
  %311 = vmatpush1.msra.mxu0 0.0
  %312 = vmatprep.subr.mxu0 0.0
  %313 = vmatpush1.msra.mxu0 0.0
  %314 = vmatprep.mubr.f32.mxu0 0.0
  %315 = vmatmul.mubr.f32.gmra.mrb[0].mxu0 %v248
  %v316 = vpop.f32.mrb[0].mxu0
  %v317 = vadd.f32 %v245, %v316
  %v318 = vpop.f32.mrb[0].mxu0
  %319 = vdwg.mxu0
  %320 = vst.msk [vmem:[%s10] sm:$0xff] %vm46, %v317
  // Predicated region
  $region38: #{_lambda_.6} parent=0 // pred_check
    _
  $region39: #{_lambda_.6} parent=0 // pred_check_branch
    %322 = sbr.rel (0) target = $region41
  $region40: #{_lambda_.6} parent=0 // pred_region
    _
  $region41: #{_lambda_.6} parent=0 // pred_fallthru
    _
  // Predicated region
  $region42: #{_lambda_.6} parent=0 // pred_check
    _
  $region43: #{_lambda_.6} parent=0 // pred_check_branch
    %324 = sbr.rel (0) target = $region45
  $region44: #{_lambda_.6} parent=0 // pred_region
    _
  $region45: #{_lambda_.6} parent=0 // pred_fallthru
    _
  // Predicated region
  $region46: #{_lambda_.6} parent=0 // pred_check
    _
  $region47: #{_lambda_.6} parent=0 // pred_check_branch
    %326 = sbr.rel (0) target = $region49
  $region48: #{_lambda_.6} parent=0 // pred_region
    _
  $region49: #{_lambda_.6} parent=0 // pred_fallthru
    _
  // Predicated region
  $region50: #{_lambda_.6} parent=0 // pred_check
    _
  $region51: #{_lambda_.6} parent=0 // pred_check_branch
    %328 = sbr.rel (0) target = $region53
  $region52: #{_lambda_.6} parent=0 // pred_region
    _
  $region53: #{_lambda_.6} parent=0 // pred_fallthru
    _

// kernel: _lambda_.7
$region0: #{_lambda_.7}
  #allocation0 [shape = 'u32[]', space=smem, size = 0x4, offset = 0x4, fixed_abs, tag = 'smem constant byte address 0x4 - core index']
  #allocation1 [shape = 'u32[144,128]{1,0:T(1,128)}', space=vmem, size = 0x12000, scoped, tag = 'internal scratch']
  %s0 = inlined_call_operand.vmem [shape: bf16[32,256], index: 0, kind: input, shape index: {}]
  %s1 = inlined_call_operand.vmem [shape: s32[1,256], index: 1, kind: input, shape index: {}]
  %s2 = inlined_call_operand.vmem [shape: f32[32,32], index: 2, kind: input, shape index: {}]
  %s3 = inlined_call_operand.vmem [shape: f32[32,1], index: 3, kind: input, shape index: {}]
  %s4 = inlined_call_operand.vmem [shape: f32[8,32], index: 4, kind: input, shape index: {}]
  %s5 = inlined_call_operand.vmem [shape: bf16[32,256], index: 5, kind: output, shape index: {0}]
  %s6 = inlined_call_operand.hbm [shape: bf16[8,256], index: 6, kind: output, shape index: {1}]
  %s7 = inlined_call_operand.hbm [shape: f32[8,1], index: 7, kind: output, shape index: {2}]
  %8 = xla_tuple %s5, %s6, %s7
  %s9 = sld [smem:[#allocation0]]
  $region50: #{_lambda_.7} parent=0
    _
  %s11 = ssub.s32 1, %s9
  %s12 = scalar_select 0, %s11, %s9
  $region1: #{_lambda_.7} parent=0
    #allocation2 [shape = 'u8[4096]{0}', space=vmem, size = 0x1000, scoped, tag = 'output window, operand 1, single buffered']
    #allocation3 [shape = 's32[1]{0}', space=sflag, size = 0x4, scoped, tag = 'scoped memory for _lambda_.7']
    #allocation4 [shape = 'u8[4096]{0}', space=vmem, size = 0x1000, scoped, tag = 'output window, operand 2, single buffered']
    #allocation5 [shape = 's32[1]{0}', space=sflag, size = 0x4, scoped, tag = 'scoped memory for _lambda_.7']
    %13 = vsyncpa [#allocation3], 0
    %14 = vsyncpa [#allocation5], 0
    // Predicated region
    $region2: #{_lambda_.7} parent=1 // pred_check
      _
    $region3: #{_lambda_.7} parent=1 // pred_check_branch
      %16 = sbr.rel (0) target = $region5
    $region4: #{_lambda_.7} parent=1 // pred_region
      _
    $region5: #{_lambda_.7} parent=1 // pred_fallthru
      _
    // Predicated region
    $region6: #{_lambda_.7} parent=1 // pred_check
      _
    $region7: #{_lambda_.7} parent=1 // pred_check_branch
      %18 = sbr.rel (0) target = $region9
    $region8: #{_lambda_.7} parent=1 // pred_region
      _
    $region9: #{_lambda_.7} parent=1 // pred_fallthru
      _
    // Predicated region
    $region10: #{_lambda_.7} parent=1 // pred_check
      _
    $region11: #{_lambda_.7} parent=1 // pred_check_branch
      %20 = sbr.rel (0) target = $region13
    $region12: #{_lambda_.7} parent=1 // pred_region
      _
    $region13: #{_lambda_.7} parent=1 // pred_fallthru
      _
    // Predicated region
    $region14: #{_lambda_.7} parent=1 // pred_check
      _
    $region15: #{_lambda_.7} parent=1 // pred_check_branch
      %22 = sbr.rel (0) target = $region17
    $region16: #{_lambda_.7} parent=1 // pred_region
      _
    $region17: #{_lambda_.7} parent=1 // pred_fallthru
      _
    // Predicated region
    $region18: #{_lambda_.7} parent=1 // pred_check
      _
    $region19: #{_lambda_.7} parent=1 // pred_check_branch
      %24 = sbr.rel (0) target = $region21
    $region20: #{_lambda_.7} parent=1 // pred_region
      _
    $region21: #{_lambda_.7} parent=1 // pred_fallthru
      _
    %p25 = scmp.eq.s32.totalorder 0, 0
    // Predicated region
    $region22: #{_lambda_.7} parent=1 // pred_check
      %p26 = pneg %p25
    $region23: #{_lambda_.7} parent=1 // pred_check_branch
      %28 = sbr.rel (%p26) target = $region25
    $region24: #{_lambda_.7} parent=1 // pred_region
      %vm29 = vcmask 7168
      %30 = vst.msk [vmem:[#allocation4] sm:$0xff] %vm29, 0.0
    $region25: #{_lambda_.7} parent=1 // pred_fallthru
      _
    %v31 = vld [vmem:[%s2] sm:$0xff]
    %v32 = vld [vmem:[%s2 + $0x8] sm:$0xff]
    %v33 = vld [vmem:[%s2 + $0x10] sm:$0xff]
    %v34 = vld [vmem:[%s2 + $0x18] sm:$0xff]
    %v35 = vld [vmem:[%s0] sm:$0xff]
    %v36 = vld [vmem:[%s0 + $0x8] sm:$0xff]
    %v37 = vld [vmem:[%s0 + $0x10] sm:$0xff]
    %v38 = vld [vmem:[%s0 + $0x18] sm:$0xff]
    %v39 = vunpack.c.l.bf16 %v35
    %v40 = vunpack.c.h.bf16 %v35
    %v41 = vunpack.c.l.bf16 %v36
    %v42 = vunpack.c.h.bf16 %v36
    %v43 = vunpack.c.l.bf16 %v37
    %v44 = vunpack.c.h.bf16 %v37
    %v45 = vunpack.c.l.bf16 %v38
    %v46 = vunpack.c.h.bf16 %v38
    %v47 = vld [vmem:[%s3] sm:$0xff]
    %v48 = vld [vmem:[%s3 + $0x8] sm:$0xff]
    %v49 = vld [vmem:[%s3 + $0x10] sm:$0xff]
    %v50 = vld [vmem:[%s3 + $0x18] sm:$0xff]
    %52 = vset.pattern.permute.xlu0 0
    %53 = vperm.xlu0 %52, %v47
    %v54 = vpop.permute.xlu0 %53
    %57 = vset.pattern.permute.xlu0 0
    %58 = vperm.xlu0 %57, %v48
    %v59 = vpop.permute.xlu0 %58
    %62 = vset.pattern.permute.xlu0 0
    %63 = vperm.xlu0 %62, %v49
    %v64 = vpop.permute.xlu0 %63
    %67 = vset.pattern.permute.xlu0 0
    %68 = vperm.xlu0 %67, %v50
    %v69 = vpop.permute.xlu0 %68
    %vm71 = vcmask 261120
    %v73 = vsel %vm71, %v31, 0
    %v76 = vsel %vm71, %v32, 0
    %v79 = vsel %vm71, %v33, 0
    %v82 = vsel %vm71, %v34, 0
    %84 = vmatprep.subr.mxu0 %v40
    %85 = vmatpush1.msra.mxu0 %v39
    %86 = vmatprep.subr.mxu0 %v42
    %87 = vmatpush1.msra.mxu0 %v41
    %88 = vmatprep.subr.mxu0 %v44
    %89 = vmatpush1.msra.mxu0 %v43
    %90 = vmatprep.subr.mxu0 %v46
    %91 = vmatpush1.msra.mxu0 %v45
    %92 = vmatprep.subr.mxu0 0.0
    %93 = vmatpush1.msra.mxu0 0.0
    %94 = vmatprep.subr.mxu0 0.0
    %95 = vmatpush1.msra.mxu0 0.0
    %96 = vmatprep.subr.mxu0 0.0
    %97 = vmatpush1.msra.mxu0 0.0
    %98 = vmatprep.subr.mxu0 0.0
    %99 = vmatpush1.msra.mxu0 0.0
    %100 = vmatprep.subr.mxu0 0.0
    %101 = vmatpush1.msra.mxu0 0.0
    %102 = vmatprep.subr.mxu0 0.0
    %103 = vmatpush1.msra.mxu0 0.0
    %104 = vmatprep.subr.mxu0 0.0
    %105 = vmatpush1.msra.mxu0 0.0
    %106 = vmatprep.subr.mxu0 0.0
    %107 = vmatpush1.msra.mxu0 0.0
    %108 = vmatprep.subr.mxu0 0.0
    %109 = vmatpush1.msra.mxu0 0.0
    %110 = vmatprep.subr.mxu0 0.0
    %111 = vmatpush1.msra.mxu0 0.0
    %112 = vmatprep.subr.mxu0 0.0
    %113 = vmatpush1.msra.mxu0 0.0
    %114 = vmatprep.subr.mxu0 0.0
    %115 = vmatpush1.msra.mxu0 0.0
    %116 = vmatprep.subr.mxu0 0.0
    %117 = vmatpush1.msra.mxu0 0.0
    %118 = vmatprep.subr.mxu0 0.0
    %119 = vmatpush1.msra.mxu0 0.0
    %120 = vmatprep.subr.mxu0 0.0
    %121 = vmatpush1.msra.mxu0 0.0
    %122 = vmatprep.subr.mxu0 0.0
    %123 = vmatpush1.msra.mxu0 0.0
    %124 = vmatprep.subr.mxu0 0.0
    %125 = vmatpush1.msra.mxu0 0.0
    %126 = vmatprep.subr.mxu0 0.0
    %127 = vmatpush1.msra.mxu0 0.0
    %128 = vmatprep.subr.mxu0 0.0
    %129 = vmatpush1.msra.mxu0 0.0
    %130 = vmatprep.subr.mxu0 0.0
    %131 = vmatpush1.msra.mxu0 0.0
    %132 = vmatprep.subr.mxu0 0.0
    %133 = vmatpush1.msra.mxu0 0.0
    %134 = vmatprep.subr.mxu0 0.0
    %135 = vmatpush1.msra.mxu0 0.0
    %136 = vmatprep.subr.mxu0 0.0
    %137 = vmatpush1.msra.mxu0 0.0
    %138 = vmatprep.subr.mxu0 0.0
    %139 = vmatpush1.msra.mxu0 0.0
    %140 = vmatprep.subr.mxu0 0.0
    %141 = vmatpush1.msra.mxu0 0.0
    %142 = vmatprep.subr.mxu0 0.0
    %143 = vmatpush1.msra.mxu0 0.0
    %144 = vmatprep.subr.mxu0 0.0
    %145 = vmatpush1.msra.mxu0 0.0
    %146 = vmatprep.subr.mxu0 0.0
    %147 = vmatpush1.msra.mxu0 0.0
    %148 = vmatprep.mubr.f32.mxu0 0.0
    %149 = vmatmul.mubr.f32.gmra.mrb[0].mxu0 %v73
    %v150 = vpop.f32.mrb[0].mxu0
    %v151 = vadd.f32 %v54, %v150
    %v152 = vpop.f32.mrb[0].mxu0
    %v153 = vadd.f32 %v54, %v152
    %154 = vmatprep.mubr.f32.mxu0 0.0
    %155 = vmatmul.mubr.f32.gmra.mrb[0].mxu0 %v76
    %v156 = vpop.f32.mrb[0].mxu0
    %v157 = vadd.f32 %v59, %v156
    %v158 = vpop.f32.mrb[0].mxu0
    %v159 = vadd.f32 %v59, %v158
    %160 = vmatprep.mubr.f32.mxu0 0.0
    %161 = vmatmul.mubr.f32.gmra.mrb[0].mxu0 %v79
    %v162 = vpop.f32.mrb[0].mxu0
    %v163 = vadd.f32 %v64, %v162
    %v164 = vpop.f32.mrb[0].mxu0
    %v165 = vadd.f32 %v64, %v164
    %166 = vmatprep.mubr.f32.mxu0 0.0
    %167 = vmatmul.mubr.f32.gmra.mrb[0].mxu0 %v82
    %v168 = vpop.f32.mrb[0].mxu0
    %v169 = vadd.f32 %v69, %v168
    %v170 = vpop.f32.mrb[0].mxu0
    %v171 = vadd.f32 %v69, %v170
    %172 = vdwg.mxu0
    %v173 = vpack.c.bf16 %v157, %v151
    %v174 = vpack.c.bf16 %v159, %v153
    %v175 = vpack.c.bf16 %v169, %v163
    %v176 = vpack.c.bf16 %v171, %v165
    %v181 = vunpack.c.l.b16 %v173
    %v182 = vunpack.c.l.b16 %v174
    %v183 = vunpack.c.h.b16 %v173
    %v184 = vunpack.c.h.b16 %v174
    %v185 = vunpack.c.l.b16 %v175
    %v186 = vunpack.c.l.b16 %v176
    %v187 = vunpack.c.h.b16 %v175
    %v188 = vunpack.c.h.b16 %v176
    %v189 = vpack.c.b16 %v182, %v181
    %v190 = vpack.c.b16 %v184, %v183
    %v191 = vpack.c.b16 %v186, %v185
    %v192 = vpack.c.b16 %v188, %v187
    %197 = vst [vmem:[%s5] sm:$0xff] %v189
    %198 = vst [vmem:[%s5 + $0x8] sm:$0xff] %v190
    %199 = vst [vmem:[%s5 + $0x10] sm:$0xff] %v191
    %200 = vst [vmem:[%s5 + $0x18] sm:$0xff] %v192
    %v201 = vld [vmem:[%s4] sm:$0xff]
    %v203 = vsel %vm71, %v201, 0
    %205 = vmatprep.subr.mxu0 %v153
    %206 = vmatpush1.msra.mxu0 %v151
    %207 = vmatprep.subr.mxu0 %v159
    %208 = vmatpush1.msra.mxu0 %v157
    %209 = vmatprep.subr.mxu0 %v165
    %210 = vmatpush1.msra.mxu0 %v163
    %211 = vmatprep.subr.mxu0 %v171
    %212 = vmatpush1.msra.mxu0 %v169
    %213 = vmatprep.subr.mxu0 0.0
    %214 = vmatpush1.msra.mxu0 0.0
    %215 = vmatprep.subr.mxu0 0.0
    %216 = vmatpush1.msra.mxu0 0.0
    %217 = vmatprep.subr.mxu0 0.0
    %218 = vmatpush1.msra.mxu0 0.0
    %219 = vmatprep.subr.mxu0 0.0
    %220 = vmatpush1.msra.mxu0 0.0
    %221 = vmatprep.subr.mxu0 0.0
    %222 = vmatpush1.msra.mxu0 0.0
    %223 = vmatprep.subr.mxu0 0.0
    %224 = vmatpush1.msra.mxu0 0.0
    %225 = vmatprep.subr.mxu0 0.0
    %226 = vmatpush1.msra.mxu0 0.0
    %227 = vmatprep.subr.mxu0 0.0
    %228 = vmatpush1.msra.mxu0 0.0
    %229 = vmatprep.subr.mxu0 0.0
    %230 = vmatpush1.msra.mxu0 0.0
    %231 = vmatprep.subr.mxu0 0.0
    %232 = vmatpush1.msra.mxu0 0.0
    %233 = vmatprep.subr.mxu0 0.0
    %234 = vmatpush1.msra.mxu0 0.0
    %235 = vmatprep.subr.mxu0 0.0
    %236 = vmatpush1.msra.mxu0 0.0
    %237 = vmatprep.subr.mxu0 0.0
    %238 = vmatpush1.msra.mxu0 0.0
    %239 = vmatprep.subr.mxu0 0.0
    %240 = vmatpush1.msra.mxu0 0.0
    %241 = vmatprep.subr.mxu0 0.0
    %242 = vmatpush1.msra.mxu0 0.0
    %243 = vmatprep.subr.mxu0 0.0
    %244 = vmatpush1.msra.mxu0 0.0
    %245 = vmatprep.subr.mxu0 0.0
    %246 = vmatpush1.msra.mxu0 0.0
    %247 = vmatprep.subr.mxu0 0.0
    %248 = vmatpush1.msra.mxu0 0.0
    %249 = vmatprep.subr.mxu0 0.0
    %250 = vmatpush1.msra.mxu0 0.0
    %251 = vmatprep.subr.mxu0 0.0
    %252 = vmatpush1.msra.mxu0 0.0
    %253 = vmatprep.subr.mxu0 0.0
    %254 = vmatpush1.msra.mxu0 0.0
    %255 = vmatprep.subr.mxu0 0.0
    %256 = vmatpush1.msra.mxu0 0.0
    %257 = vmatprep.subr.mxu0 0.0
    %258 = vmatpush1.msra.mxu0 0.0
    %259 = vmatprep.subr.mxu0 0.0
    %260 = vmatpush1.msra.mxu0 0.0
    %261 = vmatprep.subr.mxu0 0.0
    %262 = vmatpush1.msra.mxu0 0.0
    %263 = vmatprep.subr.mxu0 0.0
    %264 = vmatpush1.msra.mxu0 0.0
    %265 = vmatprep.subr.mxu0 0.0
    %266 = vmatpush1.msra.mxu0 0.0
    %267 = vmatprep.subr.mxu0 0.0
    %268 = vmatpush1.msra.mxu0 0.0
    %269 = vmatprep.mubr.f32.mxu0 0.0
    %270 = vmatmul.mubr.f32.gmra.mrb[0].mxu0 %v203
    %v271 = vpop.f32.mrb[0].mxu0
    %v272 = vadd.f32 0.0, %v271
    %v273 = vpop.f32.mrb[0].mxu0
    %v274 = vadd.f32 0.0, %v273
    %275 = vdwg.mxu0
    %v276 = vsub.f32 0.0, %v272
    %v277 = vsub.f32 0.0, %v274
    %v278 = vmul.f32 %v276, 1.442695
    %v279 = vpow.pop %v278
    %v280 = vmul.f32 %v277, 1.442695
    %v281 = vpow.pop %v280
    %v282 = vadd.f32 %v279, 1.0
    %v283 = vadd.f32 %v281, 1.0
    %v284 = vrcp.pop %v282
    %v285 = vrcp.pop %v283
    %v286 = vmin.f32 %v284, 1.0
    %v287 = vmin.f32 %v285, 1.0
    %v288 = vpack.c.bf16 %v286, %v286
    %v289 = vpack.c.bf16 %v287, %v287
    %v292 = vunpack.c.l.b16 %v288
    %v293 = vunpack.c.l.b16 %v289
    %v294 = vpack.c.b16 %v293, %v292
    %296 = vst [vmem:[#allocation2] sm:$0xff] %v294
    %v297 = vld [vmem:[%s1] sm:$0x3]
    %vm298 = vcmp.ge.s32.totalorder %v297, 0
    %vm299 = vcmp.ge.f32.partialorder %v286, 0.5
    %vm300 = vcmp.ge.f32.partialorder %v287, 0.5
    %v301 = vsel %vm298, 1, 0
    %v302 = vlaneseq
    %v303 = vshrl.u32 %v302, 7
    %v304 = vsub.s32 0, %v303
    %v305 = vrot.slane %v301, %v304
    %v306 = vlaneseq
    %v307 = vshrl.u32 %v306, 7
    %v308 = vsub.s32 1, %v307
    %v309 = vrot.slane %v301, %v308
    %vm310 = vcmp.eq.s32.totalorder %v305, 1
    %vm311 = vcmp.eq.s32.totalorder %v309, 1
    %vm312 = vmand %vm299, %vm310
    %vm313 = vmand %vm300, %vm311
    %v314 = vsel %vm312, 1.0, 0.0
    %v315 = vsel %vm313, 1.0, 0.0
    %v316 = vld [vmem:[#allocation4] sm:$0xff]
    %v317 = vmax.f32 %v314, %v315
    %318 = vmax.xlane.f32.xlu0 %v317
    %v319 = vpop.xlane.xlu0 %318
    %v320 = vmax.f32 %v316, %v319
    %vm321 = vcmask 7168
    %322 = vst.msk [vmem:[#allocation4] sm:$0xff] %vm321, %v320
    // Predicated region
    $region26: #{_lambda_.7} parent=1 // pred_check
      _
    $region27: #{_lambda_.7} parent=1 // pred_check_branch
      %324 = sbr.rel (0) target = $region29
    $region28: #{_lambda_.7} parent=1 // pred_region
      _
    $region29: #{_lambda_.7} parent=1 // pred_fallthru
      _
    // Predicated region
    $region30: #{_lambda_.7} parent=1 // pred_check
      _
    $region31: #{_lambda_.7} parent=1 // pred_check_branch
      %326 = sbr.rel (0) target = $region33
    $region32: #{_lambda_.7} parent=1 // pred_region
      %s328 = ssub.s32 128, 128
      %329 = vsyncadd [#allocation3], %s328
      %s331 = sshll.u32 [#allocation2], 4
      %s332 = int_to_ptr.vmem [resolvable:$true] %s331
      %334 = dma.vmem_to_hbm [thread:$0]  %s332, 128, %s6, [#allocation3]
    $region33: #{_lambda_.7} parent=1 // pred_fallthru
      _
    // Predicated region
    $region34: #{_lambda_.7} parent=1 // pred_check
      _
    $region35: #{_lambda_.7} parent=1 // pred_check_branch
      %336 = sbr.rel (0) target = $region37
    $region36: #{_lambda_.7} parent=1 // pred_region
      %s338 = ssub.s32 128, 128
      %339 = vsyncadd [#allocation5], %s338
      %s341 = sshll.u32 [#allocation4], 4
      %s342 = int_to_ptr.vmem [resolvable:$true] %s341
      %344 = dma.vmem_to_hbm [thread:$0]  %s342, 128, %s7, [#allocation5]
    $region37: #{_lambda_.7} parent=1 // pred_fallthru
      _
    // Predicated region
    $region38: #{_lambda_.7} parent=1 // pred_check
      _
    $region39: #{_lambda_.7} parent=1 // pred_check_branch
      %346 = sbr.rel (0) target = $region41
    $region40: #{_lambda_.7} parent=1 // pred_region
      _
    $region41: #{_lambda_.7} parent=1 // pred_fallthru
      _
    // Predicated region
    $region42: #{_lambda_.7} parent=1 // pred_check
      _
    $region43: #{_lambda_.7} parent=1 // pred_check_branch
      %348 = sbr.rel (0) target = $region45
    $region44: #{_lambda_.7} parent=1 // pred_region
      %349 = dma.done [#allocation3], 128
    $region45: #{_lambda_.7} parent=1 // pred_fallthru
      _
    // Predicated region
    $region46: #{_lambda_.7} parent=1 // pred_check
      _
    $region47: #{_lambda_.7} parent=1 // pred_check_branch
      %351 = sbr.rel (0) target = $region49
    $region48: #{_lambda_.7} parent=1 // pred_region
      %352 = dma.done [#allocation5], 128
    $region49: #{_lambda_.7} parent=1 // pred_fallthru
      _
    %353 = vsyncpa [#allocation3], 1
    %354 = vsyncpa [#allocation5], 1

// kernel: _lambda_.9
$region0: #{_lambda_.9}
  #allocation0 [shape = 'u32[]', space=smem, size = 0x4, offset = 0x4, fixed_abs, tag = 'smem constant byte address 0x4 - core index']
  #allocation1 [shape = 'u32[144,128]{1,0:T(1,128)}', space=vmem, size = 0x12000, scoped, tag = 'internal scratch']
  %s0 = inlined_call_operand.vmem [shape: bf16[32,256], index: 0, kind: input, shape index: {}, may-alias: {0,13}]
  %s1 = inlined_call_operand.vmem [shape: bf16[32,256], index: 1, kind: input, shape index: {}]
  %s2 = inlined_call_operand.vmem [shape: s32[1,256], index: 2, kind: input, shape index: {}]
  %s3 = inlined_call_operand.vmem [shape: f32[8,32], index: 3, kind: input, shape index: {}]
  %s4 = inlined_call_operand.vmem [shape: f32[8,32], index: 4, kind: input, shape index: {}]
  %s5 = inlined_call_operand.vmem [shape: f32[8,32], index: 5, kind: input, shape index: {}]
  %s6 = inlined_call_operand.vmem [shape: s32[8,1], index: 6, kind: input, shape index: {}]
  %s7 = inlined_call_operand.vmem [shape: f32[32,32], index: 7, kind: input, shape index: {}]
  %s8 = inlined_call_operand.vmem [shape: f32[32,1], index: 8, kind: input, shape index: {}]
  %s9 = inlined_call_operand.vmem [shape: f32[32,32], index: 9, kind: input, shape index: {}]
  %s10 = inlined_call_operand.vmem [shape: f32[32,1], index: 10, kind: input, shape index: {}]
  %s11 = inlined_call_operand.vmem [shape: f32[32,1], index: 11, kind: input, shape index: {}]
  %s12 = inlined_call_operand.vmem [shape: f32[32,1], index: 12, kind: input, shape index: {}]
  %s13 = inlined_call_operand.vmem [shape: bf16[32,256], index: 13, kind: output, shape index: {0}, may-alias: {0,13}]
  %s14 = inlined_call_operand.vmem [shape: bf16[8,256], index: 14, kind: output, shape index: {1}]
  %s15 = inlined_call_operand.vmem [shape: f32[8,1], index: 15, kind: output, shape index: {2}]
  %16 = xla_tuple %s13, %s14, %s15
  %s17 = sld [smem:[#allocation0]]
  $region82: #{_lambda_.9} parent=0
    _
  %s19 = ssub.s32 1, %s17
  %s20 = scalar_select 0, %s19, %s17
  // Predicated region
  $region2: #{_lambda_.9} parent=0 // pred_check
    _
  $region3: #{_lambda_.9} parent=0 // pred_check_branch
    %22 = sbr.rel (0) target = $region5
  $region4: #{_lambda_.9} parent=0 // pred_region
    _
  $region5: #{_lambda_.9} parent=0 // pred_fallthru
    _
  // Predicated region
  $region6: #{_lambda_.9} parent=0 // pred_check
    _
  $region7: #{_lambda_.9} parent=0 // pred_check_branch
    %24 = sbr.rel (0) target = $region9
  $region8: #{_lambda_.9} parent=0 // pred_region
    _
  $region9: #{_lambda_.9} parent=0 // pred_fallthru
    _
  // Predicated region
  $region10: #{_lambda_.9} parent=0 // pred_check
    _
  $region11: #{_lambda_.9} parent=0 // pred_check_branch
    %26 = sbr.rel (0) target = $region13
  $region12: #{_lambda_.9} parent=0 // pred_region
    _
  $region13: #{_lambda_.9} parent=0 // pred_fallthru
    _
  // Predicated region
  $region14: #{_lambda_.9} parent=0 // pred_check
    _
  $region15: #{_lambda_.9} parent=0 // pred_check_branch
    %28 = sbr.rel (0) target = $region17
  $region16: #{_lambda_.9} parent=0 // pred_region
    _
  $region17: #{_lambda_.9} parent=0 // pred_fallthru
    _
  // Predicated region
  $region18: #{_lambda_.9} parent=0 // pred_check
    _
  $region19: #{_lambda_.9} parent=0 // pred_check_branch
    %30 = sbr.rel (0) target = $region21
  $region20: #{_lambda_.9} parent=0 // pred_region
    _
  $region21: #{_lambda_.9} parent=0 // pred_fallthru
    _
  // Predicated region
  $region22: #{_lambda_.9} parent=0 // pred_check
    _
  $region23: #{_lambda_.9} parent=0 // pred_check_branch
    %32 = sbr.rel (0) target = $region25
  $region24: #{_lambda_.9} parent=0 // pred_region
    _
  $region25: #{_lambda_.9} parent=0 // pred_fallthru
    _
  // Predicated region
  $region26: #{_lambda_.9} parent=0 // pred_check
    _
  $region27: #{_lambda_.9} parent=0 // pred_check_branch
    %34 = sbr.rel (0) target = $region29
  $region28: #{_lambda_.9} parent=0 // pred_region
    _
  $region29: #{_lambda_.9} parent=0 // pred_fallthru
    _
  // Predicated region
  $region30: #{_lambda_.9} parent=0 // pred_check
    _
  $region31: #{_lambda_.9} parent=0 // pred_check_branch
    %36 = sbr.rel (0) target = $region33
  $region32: #{_lambda_.9} parent=0 // pred_region
    _
  $region33: #{_lambda_.9} parent=0 // pred_fallthru
    _
  // Predicated region
  $region34: #{_lambda_.9} parent=0 // pred_check
    _
  $region35: #{_lambda_.9} parent=0 // pred_check_branch
    %38 = sbr.rel (0) target = $region37
  $region36: #{_lambda_.9} parent=0 // pred_region
    _
  $region37: #{_lambda_.9} parent=0 // pred_fallthru
    _
  // Predicated region
  $region38: #{_lambda_.9} parent=0 // pred_check
    _
  $region39: #{_lambda_.9} parent=0 // pred_check_branch
    %40 = sbr.rel (0) target = $region41
  $region40: #{_lambda_.9} parent=0 // pred_region
    _
  $region41: #{_lambda_.9} parent=0 // pred_fallthru
    _
  // Predicated region
  $region42: #{_lambda_.9} parent=0 // pred_check
    _
  $region43: #{_lambda_.9} parent=0 // pred_check_branch
    %42 = sbr.rel (0) target = $region45
  $region44: #{_lambda_.9} parent=0 // pred_region
    _
  $region45: #{_lambda_.9} parent=0 // pred_fallthru
    _
  // Predicated region
  $region46: #{_lambda_.9} parent=0 // pred_check
    _
  $region47: #{_lambda_.9} parent=0 // pred_check_branch
    %44 = sbr.rel (0) target = $region49
  $region48: #{_lambda_.9} parent=0 // pred_region
    _
  $region49: #{_lambda_.9} parent=0 // pred_fallthru
    _
  // Predicated region
  $region50: #{_lambda_.9} parent=0 // pred_check
    _
  $region51: #{_lambda_.9} parent=0 // pred_check_branch
    %46 = sbr.rel (0) target = $region53
  $region52: #{_lambda_.9} parent=0 // pred_region
    _
  $region53: #{_lambda_.9} parent=0 // pred_fallthru
    _
  %p47 = scmp.eq.s32.totalorder 0, 0
  // Predicated region
  $region54: #{_lambda_.9} parent=0 // pred_check
    %p48 = pneg %p47
  $region55: #{_lambda_.9} parent=0 // pred_check_branch
    %50 = sbr.rel (%p48) target = $region57
  $region56: #{_lambda_.9} parent=0 // pred_region
    %vm51 = vcmask 7168
    %52 = vst.msk [vmem:[%s15] sm:$0xff] %vm51, 0.0
  $region57: #{_lambda_.9} parent=0 // pred_fallthru
    _
  %v53 = vld [vmem:[%s0] sm:$0xff]
  %v54 = vld [vmem:[%s0 + $0x8] sm:$0xff]
  %v55 = vld [vmem:[%s0 + $0x10] sm:$0xff]
  %v56 = vld [vmem:[%s0 + $0x18] sm:$0xff]
  %v57 = vunpack.c.l.bf16 %v53
  %v58 = vunpack.c.h.bf16 %v53
  %v59 = vunpack.c.l.bf16 %v54
  %v60 = vunpack.c.h.bf16 %v54
  %v61 = vunpack.c.l.bf16 %v55
  %v62 = vunpack.c.h.bf16 %v55
  %v63 = vunpack.c.l.bf16 %v56
  %v64 = vunpack.c.h.bf16 %v56
  %v65 = vld [vmem:[%s7] sm:$0xff]
  %v66 = vld [vmem:[%s7 + $0x8] sm:$0xff]
  %v67 = vld [vmem:[%s7 + $0x10] sm:$0xff]
  %v68 = vld [vmem:[%s7 + $0x18] sm:$0xff]
  %v69 = vld [vmem:[%s1] sm:$0xff]
  %v70 = vld [vmem:[%s1 + $0x8] sm:$0xff]
  %v71 = vld [vmem:[%s1 + $0x10] sm:$0xff]
  %v72 = vld [vmem:[%s1 + $0x18] sm:$0xff]
  %v73 = vunpack.c.l.bf16 %v69
  %v74 = vunpack.c.h.bf16 %v69
  %v75 = vunpack.c.l.bf16 %v70
  %v76 = vunpack.c.h.bf16 %v70
  %v77 = vunpack.c.l.bf16 %v71
  %v78 = vunpack.c.h.bf16 %v71
  %v79 = vunpack.c.l.bf16 %v72
  %v80 = vunpack.c.h.bf16 %v72
  %v81 = vadd.f32 %v57, %v73
  %v82 = vadd.f32 %v58, %v74
  %v83 = vadd.f32 %v59, %v75
  %v84 = vadd.f32 %v60, %v76
  %v85 = vadd.f32 %v61, %v77
  %v86 = vadd.f32 %v62, %v78
  %v87 = vadd.f32 %v63, %v79
  %v88 = vadd.f32 %v64, %v80
  %v89 = vld [vmem:[%s8] sm:$0xff]
  %v90 = vld [vmem:[%s8 + $0x8] sm:$0xff]
  %v91 = vld [vmem:[%s8 + $0x10] sm:$0xff]
  %v92 = vld [vmem:[%s8 + $0x18] sm:$0xff]
  %94 = vset.pattern.permute.xlu0 0
  %95 = vperm.xlu0 %94, %v89
  %v96 = vpop.permute.xlu0 %95
  %99 = vset.pattern.permute.xlu0 0
  %100 = vperm.xlu0 %99, %v90
  %v101 = vpop.permute.xlu0 %100
  %104 = vset.pattern.permute.xlu0 0
  %105 = vperm.xlu0 %104, %v91
  %v106 = vpop.permute.xlu0 %105
  %109 = vset.pattern.permute.xlu0 0
  %110 = vperm.xlu0 %109, %v92
  %v111 = vpop.permute.xlu0 %110
  %vm113 = vcmask 261120
  %v115 = vsel %vm113, %v65, 0
  %v118 = vsel %vm113, %v66, 0
  %v121 = vsel %vm113, %v67, 0
  %v124 = vsel %vm113, %v68, 0
  %126 = vmatprep.subr.mxu0 %v82
  %127 = vmatpush1.msra.mxu0 %v81
  %128 = vmatprep.subr.mxu0 %v84
  %129 = vmatpush1.msra.mxu0 %v83
  %130 = vmatprep.subr.mxu0 %v86
  %131 = vmatpush1.msra.mxu0 %v85
  %132 = vmatprep.subr.mxu0 %v88
  %133 = vmatpush1.msra.mxu0 %v87
  %134 = vmatprep.subr.mxu0 0.0
  %135 = vmatpush1.msra.mxu0 0.0
  %136 = vmatprep.subr.mxu0 0.0
  %137 = vmatpush1.msra.mxu0 0.0
  %138 = vmatprep.subr.mxu0 0.0
  %139 = vmatpush1.msra.mxu0 0.0
  %140 = vmatprep.subr.mxu0 0.0
  %141 = vmatpush1.msra.mxu0 0.0
  %142 = vmatprep.subr.mxu0 0.0
  %143 = vmatpush1.msra.mxu0 0.0
  %144 = vmatprep.subr.mxu0 0.0
  %145 = vmatpush1.msra.mxu0 0.0
  %146 = vmatprep.subr.mxu0 0.0
  %147 = vmatpush1.msra.mxu0 0.0
  %148 = vmatprep.subr.mxu0 0.0
  %149 = vmatpush1.msra.mxu0 0.0
  %150 = vmatprep.subr.mxu0 0.0
  %151 = vmatpush1.msra.mxu0 0.0
  %152 = vmatprep.subr.mxu0 0.0
  %153 = vmatpush1.msra.mxu0 0.0
  %154 = vmatprep.subr.mxu0 0.0
  %155 = vmatpush1.msra.mxu0 0.0
  %156 = vmatprep.subr.mxu0 0.0
  %157 = vmatpush1.msra.mxu0 0.0
  %158 = vmatprep.subr.mxu0 0.0
  %159 = vmatpush1.msra.mxu0 0.0
  %160 = vmatprep.subr.mxu0 0.0
  %161 = vmatpush1.msra.mxu0 0.0
  %162 = vmatprep.subr.mxu0 0.0
  %163 = vmatpush1.msra.mxu0 0.0
  %164 = vmatprep.subr.mxu0 0.0
  %165 = vmatpush1.msra.mxu0 0.0
  %166 = vmatprep.subr.mxu0 0.0
  %167 = vmatpush1.msra.mxu0 0.0
  %168 = vmatprep.subr.mxu0 0.0
  %169 = vmatpush1.msra.mxu0 0.0
  %170 = vmatprep.subr.mxu0 0.0
  %171 = vmatpush1.msra.mxu0 0.0
  %172 = vmatprep.subr.mxu0 0.0
  %173 = vmatpush1.msra.mxu0 0.0
  %174 = vmatprep.subr.mxu0 0.0
  %175 = vmatpush1.msra.mxu0 0.0
  %176 = vmatprep.subr.mxu0 0.0
  %177 = vmatpush1.msra.mxu0 0.0
  %178 = vmatprep.subr.mxu0 0.0
  %179 = vmatpush1.msra.mxu0 0.0
  %180 = vmatprep.subr.mxu0 0.0
  %181 = vmatpush1.msra.mxu0 0.0
  %182 = vmatprep.subr.mxu0 0.0
  %183 = vmatpush1.msra.mxu0 0.0
  %184 = vmatprep.subr.mxu0 0.0
  %185 = vmatpush1.msra.mxu0 0.0
  %186 = vmatprep.subr.mxu0 0.0
  %187 = vmatpush1.msra.mxu0 0.0
  %188 = vmatprep.subr.mxu0 0.0
  %189 = vmatpush1.msra.mxu0 0.0
  %190 = vmatprep.mubr.f32.mxu0 0.0
  %191 = vmatmul.mubr.f32.gmra.mrb[0].mxu0 %v115
  %v192 = vpop.f32.mrb[0].mxu0
  %v193 = vadd.f32 %v96, %v192
  %v194 = vpop.f32.mrb[0].mxu0
  %v195 = vadd.f32 %v96, %v194
  %196 = vmatprep.mubr.f32.mxu0 0.0
  %197 = vmatmul.mubr.f32.gmra.mrb[0].mxu0 %v118
  %v198 = vpop.f32.mrb[0].mxu0
  %v199 = vadd.f32 %v101, %v198
  %v200 = vpop.f32.mrb[0].mxu0
  %v201 = vadd.f32 %v101, %v200
  %202 = vmatprep.mubr.f32.mxu0 0.0
  %203 = vmatmul.mubr.f32.gmra.mrb[0].mxu0 %v121
  %v204 = vpop.f32.mrb[0].mxu0
  %v205 = vadd.f32 %v106, %v204
  %v206 = vpop.f32.mrb[0].mxu0
  %v207 = vadd.f32 %v106, %v206
  %208 = vmatprep.mubr.f32.mxu0 0.0
  %209 = vmatmul.mubr.f32.gmra.mrb[0].mxu0 %v124
  %v210 = vpop.f32.mrb[0].mxu0
  %v211 = vadd.f32 %v111, %v210
  %v212 = vpop.f32.mrb[0].mxu0
  %v213 = vadd.f32 %v111, %v212
  %214 = vdwg.mxu0
  %v215 = vld [vmem:[%s3] sm:$0xff]
  %v217 = vsel %vm113, %v215, 0
  %219 = vmatprep.subr.mxu0 %v195
  %220 = vmatpush1.msra.mxu0 %v193
  %221 = vmatprep.subr.mxu0 %v201
  %222 = vmatpush1.msra.mxu0 %v199
  %223 = vmatprep.subr.mxu0 %v207
  %224 = vmatpush1.msra.mxu0 %v205
  %225 = vmatprep.subr.mxu0 %v213
  %226 = vmatpush1.msra.mxu0 %v211
  %227 = vmatprep.subr.mxu0 0.0
  %228 = vmatpush1.msra.mxu0 0.0
  %229 = vmatprep.subr.mxu0 0.0
  %230 = vmatpush1.msra.mxu0 0.0
  %231 = vmatprep.subr.mxu0 0.0
  %232 = vmatpush1.msra.mxu0 0.0
  %233 = vmatprep.subr.mxu0 0.0
  %234 = vmatpush1.msra.mxu0 0.0
  %235 = vmatprep.subr.mxu0 0.0
  %236 = vmatpush1.msra.mxu0 0.0
  %237 = vmatprep.subr.mxu0 0.0
  %238 = vmatpush1.msra.mxu0 0.0
  %239 = vmatprep.subr.mxu0 0.0
  %240 = vmatpush1.msra.mxu0 0.0
  %241 = vmatprep.subr.mxu0 0.0
  %242 = vmatpush1.msra.mxu0 0.0
  %243 = vmatprep.subr.mxu0 0.0
  %244 = vmatpush1.msra.mxu0 0.0
  %245 = vmatprep.subr.mxu0 0.0
  %246 = vmatpush1.msra.mxu0 0.0
  %247 = vmatprep.subr.mxu0 0.0
  %248 = vmatpush1.msra.mxu0 0.0
  %249 = vmatprep.subr.mxu0 0.0
  %250 = vmatpush1.msra.mxu0 0.0
  %251 = vmatprep.subr.mxu0 0.0
  %252 = vmatpush1.msra.mxu0 0.0
  %253 = vmatprep.subr.mxu0 0.0
  %254 = vmatpush1.msra.mxu0 0.0
  %255 = vmatprep.subr.mxu0 0.0
  %256 = vmatpush1.msra.mxu0 0.0
  %257 = vmatprep.subr.mxu0 0.0
  %258 = vmatpush1.msra.mxu0 0.0
  %259 = vmatprep.subr.mxu0 0.0
  %260 = vmatpush1.msra.mxu0 0.0
  %261 = vmatprep.subr.mxu0 0.0
  %262 = vmatpush1.msra.mxu0 0.0
  %263 = vmatprep.subr.mxu0 0.0
  %264 = vmatpush1.msra.mxu0 0.0
  %265 = vmatprep.subr.mxu0 0.0
  %266 = vmatpush1.msra.mxu0 0.0
  %267 = vmatprep.subr.mxu0 0.0
  %268 = vmatpush1.msra.mxu0 0.0
  %269 = vmatprep.subr.mxu0 0.0
  %270 = vmatpush1.msra.mxu0 0.0
  %271 = vmatprep.subr.mxu0 0.0
  %272 = vmatpush1.msra.mxu0 0.0
  %273 = vmatprep.subr.mxu0 0.0
  %274 = vmatpush1.msra.mxu0 0.0
  %275 = vmatprep.subr.mxu0 0.0
  %276 = vmatpush1.msra.mxu0 0.0
  %277 = vmatprep.subr.mxu0 0.0
  %278 = vmatpush1.msra.mxu0 0.0
  %279 = vmatprep.subr.mxu0 0.0
  %280 = vmatpush1.msra.mxu0 0.0
  %281 = vmatprep.subr.mxu0 0.0
  %282 = vmatpush1.msra.mxu0 0.0
  %283 = vmatprep.mubr.f32.mxu0 0.0
  %284 = vmatmul.mubr.f32.gmra.mrb[0].mxu0 %v217
  %v285 = vpop.f32.mrb[0].mxu0
  %v286 = vadd.f32 0.0, %v285
  %v287 = vpop.f32.mrb[0].mxu0
  %v288 = vadd.f32 0.0, %v287
  %289 = vdwg.mxu0
  %v290 = vmul.f32 %v286, 0.17677669
  %v291 = vmul.f32 %v288, 0.17677669
  %v292 = vld [vmem:[%s6] sm:$0xff]
  %v293 = vld [vmem:[%s2] sm:$0x3]
  %294 = vset.pattern.permute.xlu0 0
  %295 = vperm.xlu0 %294, %v292
  %v296 = vpop.permute.xlu0 %295
  %v297 = vlaneseq
  %v298 = vshrl.u32 %v297, 7
  %v299 = vsub.s32 0, %v298
  %v300 = vrot.slane %v293, %v299
  %v301 = vlaneseq
  %v302 = vshrl.u32 %v301, 7
  %v303 = vsub.s32 1, %v302
  %v304 = vrot.slane %v293, %v303
  %vm305 = vcmp.eq.s32.totalorder %v296, %v300
  %vm306 = vcmp.eq.s32.totalorder %v296, %v304
  %v307 = vsel %vm305, %v290, -1e+09
  %v308 = vsel %vm306, %v291, -1e+09
  %v309 = vrot.slane %v307, 4
  %v310 = vmax.f32 %v307, %v309
  %v311 = vrot.slane %v310, 2
  %v312 = vmax.f32 %v310, %v311
  %v313 = vrot.slane %v312, 1
  %v314 = vmax.f32 %v312, %v313
  %v315 = vrot.slane %v308, 4
  %v316 = vmax.f32 %v308, %v315
  %v317 = vrot.slane %v316, 2
  %v318 = vmax.f32 %v316, %v317
  %v319 = vrot.slane %v318, 1
  %v320 = vmax.f32 %v318, %v319
  %v321 = vsub.f32 %v307, %v314
  %v322 = vsub.f32 %v308, %v320
  %v323 = vmul.f32 %v321, 1.442695
  %v324 = vpow.pop %v323
  %v325 = vmul.f32 %v322, 1.442695
  %v326 = vpow.pop %v325
  %v327 = vrot.slane %v324, 4
  %v328 = vadd.f32 %v324, %v327
  %v329 = vrot.slane %v328, 2
  %v330 = vadd.f32 %v328, %v329
  %v331 = vrot.slane %v330, 1
  %v332 = vadd.f32 %v330, %v331
  %v333 = vrot.slane %v326, 4
  %v334 = vadd.f32 %v326, %v333
  %v335 = vrot.slane %v334, 2
  %v336 = vadd.f32 %v334, %v335
  %v337 = vrot.slane %v336, 1
  %v338 = vadd.f32 %v336, %v337
  %v339 = vrcp.pop %v332
  %v340 = vrcp.pop %v338
  %v341 = vmul.f32 %v324, %v339
  %v342 = vmul.f32 %v326, %v340
  %v343 = vld [vmem:[%s4] sm:$0xff]
  %344 = vxpose.xlu0.b32.start [1/16] %v343, 128
  %345 = vxpose.xlu0.b32.cont [2/16] 0.0, 128
  %346 = vxpose.xlu0.b32.cont [3/16] 0.0, 128
  %347 = vxpose.xlu0.b32.cont [4/16] 0.0, 128
  %348 = vxpose.xlu0.b32.cont [5/16] 0.0, 128
  %349 = vxpose.xlu0.b32.cont [6/16] 0.0, 128
  %350 = vxpose.xlu0.b32.cont [7/16] 0.0, 128
  %351 = vxpose.xlu0.b32.cont [8/16] 0.0, 128
  %352 = vxpose.xlu0.b32.cont [9/16] 0.0, 128
  %353 = vxpose.xlu0.b32.cont [10/16] 0.0, 128
  %354 = vxpose.xlu0.b32.cont [11/16] 0.0, 128
  %355 = vxpose.xlu0.b32.cont [12/16] 0.0, 128
  %356 = vxpose.xlu0.b32.cont [13/16] 0.0, 128
  %357 = vxpose.xlu0.b32.cont [14/16] 0.0, 128
  %358 = vxpose.xlu0.b32.cont [15/16] 0.0, 128
  %359 = vxpose.xlu0.b32.end [16/16] 0.0, 128
  %v360 = vpop.trf.xlu0
  %v361 = vpop.trf.xlu0
  %v362 = vpop.trf.xlu0
  %v363 = vpop.trf.xlu0
  %v364 = vpop.trf.xlu0
  %v365 = vpop.trf.xlu0
  %v366 = vpop.trf.xlu0
  %v367 = vpop.trf.xlu0
  %v368 = vpop.trf.xlu0
  %v369 = vpop.trf.xlu0
  %v370 = vpop.trf.xlu0
  %v371 = vpop.trf.xlu0
  %v372 = vpop.trf.xlu0
  %v373 = vpop.trf.xlu0
  %v374 = vpop.trf.xlu0
  %v375 = vpop.trf.xlu0
  %vm376 = vcmask 64512
  %v378 = vsel %vm376, %v360, 0
  %v381 = vsel %vm376, %v361, 0
  %v384 = vsel %vm376, %v362, 0
  %v387 = vsel %vm376, %v363, 0
  %389 = vmatprep.subr.mxu0 %v342
  %390 = vmatpush1.msra.mxu0 %v341
  %391 = vmatprep.subr.mxu0 0.0
  %392 = vmatpush1.msra.mxu0 0.0
  %393 = vmatprep.subr.mxu0 0.0
  %394 = vmatpush1.msra.mxu0 0.0
  %395 = vmatprep.subr.mxu0 0.0
  %396 = vmatpush1.msra.mxu0 0.0
  %397 = vmatprep.subr.mxu0 0.0
  %398 = vmatpush1.msra.mxu0 0.0
  %399 = vmatprep.subr.mxu0 0.0
  %400 = vmatpush1.msra.mxu0 0.0
  %401 = vmatprep.subr.mxu0 0.0
  %402 = vmatpush1.msra.mxu0 0.0
  %403 = vmatprep.subr.mxu0 0.0
  %404 = vmatpush1.msra.mxu0 0.0
  %405 = vmatprep.subr.mxu0 0.0
  %406 = vmatpush1.msra.mxu0 0.0
  %407 = vmatprep.subr.mxu0 0.0
  %408 = vmatpush1.msra.mxu0 0.0
  %409 = vmatprep.subr.mxu0 0.0
  %410 = vmatpush1.msra.mxu0 0.0
  %411 = vmatprep.subr.mxu0 0.0
  %412 = vmatpush1.msra.mxu0 0.0
  %413 = vmatprep.subr.mxu0 0.0
  %414 = vmatpush1.msra.mxu0 0.0
  %415 = vmatprep.subr.mxu0 0.0
  %416 = vmatpush1.msra.mxu0 0.0
  %417 = vmatprep.subr.mxu0 0.0
  %418 = vmatpush1.msra.mxu0 0.0
  %419 = vmatprep.subr.mxu0 0.0
  %420 = vmatpush1.msra.mxu0 0.0
  %421 = vmatprep.subr.mxu0 0.0
  %422 = vmatpush1.msra.mxu0 0.0
  %423 = vmatprep.subr.mxu0 0.0
  %424 = vmatpush1.msra.mxu0 0.0
  %425 = vmatprep.subr.mxu0 0.0
  %426 = vmatpush1.msra.mxu0 0.0
  %427 = vmatprep.subr.mxu0 0.0
  %428 = vmatpush1.msra.mxu0 0.0
  %429 = vmatprep.subr.mxu0 0.0
  %430 = vmatpush1.msra.mxu0 0.0
  %431 = vmatprep.subr.mxu0 0.0
  %432 = vmatpush1.msra.mxu0 0.0
  %433 = vmatprep.subr.mxu0 0.0
  %434 = vmatpush1.msra.mxu0 0.0
  %435 = vmatprep.subr.mxu0 0.0
  %436 = vmatpush1.msra.mxu0 0.0
  %437 = vmatprep.subr.mxu0 0.0
  %438 = vmatpush1.msra.mxu0 0.0
  %439 = vmatprep.subr.mxu0 0.0
  %440 = vmatpush1.msra.mxu0 0.0
  %441 = vmatprep.subr.mxu0 0.0
  %442 = vmatpush1.msra.mxu0 0.0
  %443 = vmatprep.subr.mxu0 0.0
  %444 = vmatpush1.msra.mxu0 0.0
  %445 = vmatprep.subr.mxu0 0.0
  %446 = vmatpush1.msra.mxu0 0.0
  %447 = vmatprep.subr.mxu0 0.0
  %448 = vmatpush1.msra.mxu0 0.0
  %449 = vmatprep.subr.mxu0 0.0
  %450 = vmatpush1.msra.mxu0 0.0
  %451 = vmatprep.subr.mxu0 0.0
  %452 = vmatpush1.msra.mxu0 0.0
  %453 = vmatprep.mubr.f32.mxu0 0.0
  %454 = vmatmul.mubr.f32.gmra.mrb[0].mxu0 %v378
  %v455 = vpop.f32.mrb[0].mxu0
  %v456 = vadd.f32 0.0, %v455
  %v457 = vpop.f32.mrb[0].mxu0
  %v458 = vadd.f32 0.0, %v457
  %459 = vmatprep.mubr.f32.mxu0 0.0
  %460 = vmatmul.mubr.f32.gmra.mrb[0].mxu0 %v381
  %v461 = vpop.f32.mrb[0].mxu0
  %v462 = vadd.f32 0.0, %v461
  %v463 = vpop.f32.mrb[0].mxu0
  %v464 = vadd.f32 0.0, %v463
  %465 = vmatprep.mubr.f32.mxu0 0.0
  %466 = vmatmul.mubr.f32.gmra.mrb[0].mxu0 %v384
  %v467 = vpop.f32.mrb[0].mxu0
  %v468 = vadd.f32 0.0, %v467
  %v469 = vpop.f32.mrb[0].mxu0
  %v470 = vadd.f32 0.0, %v469
  %471 = vmatprep.mubr.f32.mxu0 0.0
  %472 = vmatmul.mubr.f32.gmra.mrb[0].mxu0 %v387
  %v473 = vpop.f32.mrb[0].mxu0
  %v474 = vadd.f32 0.0, %v473
  %v475 = vpop.f32.mrb[0].mxu0
  %v476 = vadd.f32 0.0, %v475
  %477 = vdwg.mxu0
  %v478 = vld [vmem:[%s9] sm:$0xff]
  %v479 = vld [vmem:[%s9 + $0x8] sm:$0xff]
  %v480 = vld [vmem:[%s9 + $0x10] sm:$0xff]
  %v481 = vld [vmem:[%s9 + $0x18] sm:$0xff]
  %v482 = vld [vmem:[%s10] sm:$0xff]
  %v483 = vld [vmem:[%s10 + $0x8] sm:$0xff]
  %v484 = vld [vmem:[%s10 + $0x10] sm:$0xff]
  %v485 = vld [vmem:[%s10 + $0x18] sm:$0xff]
  %487 = vset.pattern.permute.xlu0 0
  %488 = vperm.xlu0 %487, %v482
  %v489 = vpop.permute.xlu0 %488
  %492 = vset.pattern.permute.xlu0 0
  %493 = vperm.xlu0 %492, %v483
  %v494 = vpop.permute.xlu0 %493
  %497 = vset.pattern.permute.xlu0 0
  %498 = vperm.xlu0 %497, %v484
  %v499 = vpop.permute.xlu0 %498
  %502 = vset.pattern.permute.xlu0 0
  %503 = vperm.xlu0 %502, %v485
  %v504 = vpop.permute.xlu0 %503
  %v507 = vsel %vm113, %v478, 0
  %v510 = vsel %vm113, %v479, 0
  %v513 = vsel %vm113, %v480, 0
  %v516 = vsel %vm113, %v481, 0
  %518 = vmatprep.subr.mxu0 %v458
  %519 = vmatpush1.msra.mxu0 %v456
  %520 = vmatprep.subr.mxu0 %v464
  %521 = vmatpush1.msra.mxu0 %v462
  %522 = vmatprep.subr.mxu0 %v470
  %523 = vmatpush1.msra.mxu0 %v468
  %524 = vmatprep.subr.mxu0 %v476
  %525 = vmatpush1.msra.mxu0 %v474
  %526 = vmatprep.subr.mxu0 0.0
  %527 = vmatpush1.msra.mxu0 0.0
  %528 = vmatprep.subr.mxu0 0.0
  %529 = vmatpush1.msra.mxu0 0.0
  %530 = vmatprep.subr.mxu0 0.0
  %531 = vmatpush1.msra.mxu0 0.0
  %532 = vmatprep.subr.mxu0 0.0
  %533 = vmatpush1.msra.mxu0 0.0
  %534 = vmatprep.subr.mxu0 0.0
  %535 = vmatpush1.msra.mxu0 0.0
  %536 = vmatprep.subr.mxu0 0.0
  %537 = vmatpush1.msra.mxu0 0.0
  %538 = vmatprep.subr.mxu0 0.0
  %539 = vmatpush1.msra.mxu0 0.0
  %540 = vmatprep.subr.mxu0 0.0
  %541 = vmatpush1.msra.mxu0 0.0
  %542 = vmatprep.subr.mxu0 0.0
  %543 = vmatpush1.msra.mxu0 0.0
  %544 = vmatprep.subr.mxu0 0.0
  %545 = vmatpush1.msra.mxu0 0.0
  %546 = vmatprep.subr.mxu0 0.0
  %547 = vmatpush1.msra.mxu0 0.0
  %548 = vmatprep.subr.mxu0 0.0
  %549 = vmatpush1.msra.mxu0 0.0
  %550 = vmatprep.subr.mxu0 0.0
  %551 = vmatpush1.msra.mxu0 0.0
  %552 = vmatprep.subr.mxu0 0.0
  %553 = vmatpush1.msra.mxu0 0.0
  %554 = vmatprep.subr.mxu0 0.0
  %555 = vmatpush1.msra.mxu0 0.0
  %556 = vmatprep.subr.mxu0 0.0
  %557 = vmatpush1.msra.mxu0 0.0
  %558 = vmatprep.subr.mxu0 0.0
  %559 = vmatpush1.msra.mxu0 0.0
  %560 = vmatprep.subr.mxu0 0.0
  %561 = vmatpush1.msra.mxu0 0.0
  %562 = vmatprep.subr.mxu0 0.0
  %563 = vmatpush1.msra.mxu0 0.0
  %564 = vmatprep.subr.mxu0 0.0
  %565 = vmatpush1.msra.mxu0 0.0
  %566 = vmatprep.subr.mxu0 0.0
  %567 = vmatpush1.msra.mxu0 0.0
  %568 = vmatprep.subr.mxu0 0.0
  %569 = vmatpush1.msra.mxu0 0.0
  %570 = vmatprep.subr.mxu0 0.0
  %571 = vmatpush1.msra.mxu0 0.0
  %572 = vmatprep.subr.mxu0 0.0
  %573 = vmatpush1.msra.mxu0 0.0
  %574 = vmatprep.subr.mxu0 0.0
  %575 = vmatpush1.msra.mxu0 0.0
  %576 = vmatprep.subr.mxu0 0.0
  %577 = vmatpush1.msra.mxu0 0.0
  %578 = vmatprep.subr.mxu0 0.0
  %579 = vmatpush1.msra.mxu0 0.0
  %580 = vmatprep.subr.mxu0 0.0
  %581 = vmatpush1.msra.mxu0 0.0
  %582 = vmatprep.mubr.f32.mxu0 0.0
  %583 = vmatmul.mubr.f32.gmra.mrb[0].mxu0 %v507
  %v584 = vpop.f32.mrb[0].mxu0
  %v585 = vadd.f32 %v489, %v584
  %v586 = vpop.f32.mrb[0].mxu0
  %v587 = vadd.f32 %v489, %v586
  %588 = vmatprep.mubr.f32.mxu0 0.0
  %589 = vmatmul.mubr.f32.gmra.mrb[0].mxu0 %v510
  %v590 = vpop.f32.mrb[0].mxu0
  %v591 = vadd.f32 %v494, %v590
  %v592 = vpop.f32.mrb[0].mxu0
  %v593 = vadd.f32 %v494, %v592
  %594 = vmatprep.mubr.f32.mxu0 0.0
  %595 = vmatmul.mubr.f32.gmra.mrb[0].mxu0 %v513
  %v596 = vpop.f32.mrb[0].mxu0
  %v597 = vadd.f32 %v499, %v596
  %v598 = vpop.f32.mrb[0].mxu0
  %v599 = vadd.f32 %v499, %v598
  %600 = vmatprep.mubr.f32.mxu0 0.0
  %601 = vmatmul.mubr.f32.gmra.mrb[0].mxu0 %v516
  %v602 = vpop.f32.mrb[0].mxu0
  %v603 = vadd.f32 %v504, %v602
  %v604 = vpop.f32.mrb[0].mxu0
  %v605 = vadd.f32 %v504, %v604
  %606 = vdwg.mxu0
  %v607 = vadd.f32 %v57, %v585
  %v608 = vadd.f32 %v58, %v587
  %v609 = vadd.f32 %v59, %v591
  %v610 = vadd.f32 %v60, %v593
  %v611 = vadd.f32 %v61, %v597
  %v612 = vadd.f32 %v62, %v599
  %v613 = vadd.f32 %v63, %v603
  %v614 = vadd.f32 %v64, %v605
  %v615 = vld [vmem:[%s11] sm:$0xff]
  %v616 = vld [vmem:[%s11 + $0x8] sm:$0xff]
  %v617 = vld [vmem:[%s11 + $0x10] sm:$0xff]
  %v618 = vld [vmem:[%s11 + $0x18] sm:$0xff]
  %v619 = vld [vmem:[%s12] sm:$0xff]
  %v620 = vld [vmem:[%s12 + $0x8] sm:$0xff]
  %v621 = vld [vmem:[%s12 + $0x10] sm:$0xff]
  %v622 = vld [vmem:[%s12 + $0x18] sm:$0xff]
  %v623 = vadd.f32 %v607, %v609
  %v624 = vadd.f32 %v623, %v611
  %v625 = vadd.f32 %v624, %v613
  %v626 = vrot.slane %v625, 4
  %v627 = vadd.f32 %v625, %v626
  %v628 = vrot.slane %v627, 2
  %v629 = vadd.f32 %v627, %v628
  %v630 = vrot.slane %v629, 1
  %v631 = vadd.f32 %v629, %v630
  %v632 = vadd.f32 %v608, %v610
  %v633 = vadd.f32 %v632, %v612
  %v634 = vadd.f32 %v633, %v614
  %v635 = vrot.slane %v634, 4
  %v636 = vadd.f32 %v634, %v635
  %v637 = vrot.slane %v636, 2
  %v638 = vadd.f32 %v636, %v637
  %v639 = vrot.slane %v638, 1
  %v640 = vadd.f32 %v638, %v639
  %v641 = vrcp.pop 32.0
  %v642 = vmul.f32 %v631, %v641
  %v643 = vmul.f32 %v640, %v641
  %v644 = vsub.f32 %v607, %v642
  %v645 = vsub.f32 %v608, %v643
  %v646 = vsub.f32 %v609, %v642
  %v647 = vsub.f32 %v610, %v643
  %v648 = vsub.f32 %v611, %v642
  %v649 = vsub.f32 %v612, %v643
  %v650 = vsub.f32 %v613, %v642
  %v651 = vsub.f32 %v614, %v643
  %v652 = vmul.f32 %v644, %v644
  %v653 = vmul.f32 %v645, %v645
  %v654 = vmul.f32 %v646, %v646
  %v655 = vmul.f32 %v647, %v647
  %v656 = vmul.f32 %v648, %v648
  %v657 = vmul.f32 %v649, %v649
  %v658 = vmul.f32 %v650, %v650
  %v659 = vmul.f32 %v651, %v651
  %v660 = vadd.f32 %v652, %v654
  %v661 = vadd.f32 %v660, %v656
  %v662 = vadd.f32 %v661, %v658
  %v663 = vrot.slane %v662, 4
  %v664 = vadd.f32 %v662, %v663
  %v665 = vrot.slane %v664, 2
  %v666 = vadd.f32 %v664, %v665
  %v667 = vrot.slane %v666, 1
  %v668 = vadd.f32 %v666, %v667
  %v669 = vadd.f32 %v653, %v655
  %v670 = vadd.f32 %v669, %v657
  %v671 = vadd.f32 %v670, %v659
  %v672 = vrot.slane %v671, 4
  %v673 = vadd.f32 %v671, %v672
  %v674 = vrot.slane %v673, 2
  %v675 = vadd.f32 %v673, %v674
  %v676 = vrot.slane %v675, 1
  %v677 = vadd.f32 %v675, %v676
  %v678 = vmul.f32 %v668, %v641
  %v679 = vmul.f32 %v677, %v641
  %v680 = vadd.f32 %v678, 1e-05
  %v681 = vadd.f32 %v679, 1e-05
  %v682 = vrsqrt.pop %v680
  %v683 = vrsqrt.pop %v681
  %v684 = vmul.f32 %v644, %v682
  %v685 = vmul.f32 %v645, %v683
  %v686 = vmul.f32 %v646, %v682
  %v687 = vmul.f32 %v647, %v683
  %v688 = vmul.f32 %v648, %v682
  %v689 = vmul.f32 %v649, %v683
  %v690 = vmul.f32 %v650, %v682
  %v691 = vmul.f32 %v651, %v683
  %693 = vset.pattern.permute.xlu0 0
  %694 = vperm.xlu0 %693, %v615
  %v695 = vpop.permute.xlu0 %694
  %698 = vset.pattern.permute.xlu0 0
  %699 = vperm.xlu0 %698, %v616
  %v700 = vpop.permute.xlu0 %699
  %703 = vset.pattern.permute.xlu0 0
  %704 = vperm.xlu0 %703, %v617
  %v705 = vpop.permute.xlu0 %704
  %708 = vset.pattern.permute.xlu0 0
  %709 = vperm.xlu0 %708, %v618
  %v710 = vpop.permute.xlu0 %709
  %v712 = vmul.f32 %v684, %v695
  %v713 = vmul.f32 %v685, %v695
  %v714 = vmul.f32 %v686, %v700
  %v715 = vmul.f32 %v687, %v700
  %v716 = vmul.f32 %v688, %v705
  %v717 = vmul.f32 %v689, %v705
  %v718 = vmul.f32 %v690, %v710
  %v719 = vmul.f32 %v691, %v710
  %721 = vset.pattern.permute.xlu0 0
  %722 = vperm.xlu0 %721, %v619
  %v723 = vpop.permute.xlu0 %722
  %726 = vset.pattern.permute.xlu0 0
  %727 = vperm.xlu0 %726, %v620
  %v728 = vpop.permute.xlu0 %727
  %731 = vset.pattern.permute.xlu0 0
  %732 = vperm.xlu0 %731, %v621
  %v733 = vpop.permute.xlu0 %732
  %736 = vset.pattern.permute.xlu0 0
  %737 = vperm.xlu0 %736, %v622
  %v738 = vpop.permute.xlu0 %737
  %v740 = vadd.f32 %v712, %v723
  %v741 = vadd.f32 %v713, %v723
  %v742 = vadd.f32 %v714, %v728
  %v743 = vadd.f32 %v715, %v728
  %v744 = vadd.f32 %v716, %v733
  %v745 = vadd.f32 %v717, %v733
  %v746 = vadd.f32 %v718, %v738
  %v747 = vadd.f32 %v719, %v738
  %v748 = vpack.c.bf16 %v742, %v740
  %v749 = vpack.c.bf16 %v743, %v741
  %v750 = vpack.c.bf16 %v746, %v744
  %v751 = vpack.c.bf16 %v747, %v745
  %v756 = vunpack.c.l.b16 %v748
  %v757 = vunpack.c.l.b16 %v749
  %v758 = vunpack.c.h.b16 %v748
  %v759 = vunpack.c.h.b16 %v749
  %v760 = vunpack.c.l.b16 %v750
  %v761 = vunpack.c.l.b16 %v751
  %v762 = vunpack.c.h.b16 %v750
  %v763 = vunpack.c.h.b16 %v751
  %v764 = vpack.c.b16 %v757, %v756
  %v765 = vpack.c.b16 %v759, %v758
  %v766 = vpack.c.b16 %v761, %v760
  %v767 = vpack.c.b16 %v763, %v762
  %772 = vst [vmem:[%s13] sm:$0xff] %v764
  %773 = vst [vmem:[%s13 + $0x8] sm:$0xff] %v765
  %774 = vst [vmem:[%s13 + $0x10] sm:$0xff] %v766
  %775 = vst [vmem:[%s13 + $0x18] sm:$0xff] %v767
  %v776 = vld [vmem:[%s5] sm:$0xff]
  %v778 = vsel %vm113, %v776, 0
  %780 = vmatprep.subr.mxu0 %v741
  %781 = vmatpush1.msra.mxu0 %v740
  %782 = vmatprep.subr.mxu0 %v743
  %783 = vmatpush1.msra.mxu0 %v742
  %784 = vmatprep.subr.mxu0 %v745
  %785 = vmatpush1.msra.mxu0 %v744
  %786 = vmatprep.subr.mxu0 %v747
  %787 = vmatpush1.msra.mxu0 %v746
  %788 = vmatprep.subr.mxu0 0.0
  %789 = vmatpush1.msra.mxu0 0.0
  %790 = vmatprep.subr.mxu0 0.0
  %791 = vmatpush1.msra.mxu0 0.0
  %792 = vmatprep.subr.mxu0 0.0
  %793 = vmatpush1.msra.mxu0 0.0
  %794 = vmatprep.subr.mxu0 0.0
  %795 = vmatpush1.msra.mxu0 0.0
  %796 = vmatprep.subr.mxu0 0.0
  %797 = vmatpush1.msra.mxu0 0.0
  %798 = vmatprep.subr.mxu0 0.0
  %799 = vmatpush1.msra.mxu0 0.0
  %800 = vmatprep.subr.mxu0 0.0
  %801 = vmatpush1.msra.mxu0 0.0
  %802 = vmatprep.subr.mxu0 0.0
  %803 = vmatpush1.msra.mxu0 0.0
  %804 = vmatprep.subr.mxu0 0.0
  %805 = vmatpush1.msra.mxu0 0.0
  %806 = vmatprep.subr.mxu0 0.0
  %807 = vmatpush1.msra.mxu0 0.0
  %808 = vmatprep.subr.mxu0 0.0
  %809 = vmatpush1.msra.mxu0 0.0
  %810 = vmatprep.subr.mxu0 0.0
  %811 = vmatpush1.msra.mxu0 0.0
  %812 = vmatprep.subr.mxu0 0.0
  %813 = vmatpush1.msra.mxu0 0.0
  %814 = vmatprep.subr.mxu0 0.0
  %815 = vmatpush1.msra.mxu0 0.0
  %816 = vmatprep.subr.mxu0 0.0
  %817 = vmatpush1.msra.mxu0 0.0
  %818 = vmatprep.subr.mxu0 0.0
  %819 = vmatpush1.msra.mxu0 0.0
  %820 = vmatprep.subr.mxu0 0.0
  %821 = vmatpush1.msra.mxu0 0.0
  %822 = vmatprep.subr.mxu0 0.0
  %823 = vmatpush1.msra.mxu0 0.0
  %824 = vmatprep.subr.mxu0 0.0
  %825 = vmatpush1.msra.mxu0 0.0
  %826 = vmatprep.subr.mxu0 0.0
  %827 = vmatpush1.msra.mxu0 0.0
  %828 = vmatprep.subr.mxu0 0.0
  %829 = vmatpush1.msra.mxu0 0.0
  %830 = vmatprep.subr.mxu0 0.0
  %831 = vmatpush1.msra.mxu0 0.0
  %832 = vmatprep.subr.mxu0 0.0
  %833 = vmatpush1.msra.mxu0 0.0
  %834 = vmatprep.subr.mxu0 0.0
  %835 = vmatpush1.msra.mxu0 0.0
  %836 = vmatprep.subr.mxu0 0.0
  %837 = vmatpush1.msra.mxu0 0.0
  %838 = vmatprep.subr.mxu0 0.0
  %839 = vmatpush1.msra.mxu0 0.0
  %840 = vmatprep.subr.mxu0 0.0
  %841 = vmatpush1.msra.mxu0 0.0
  %842 = vmatprep.subr.mxu0 0.0
  %843 = vmatpush1.msra.mxu0 0.0
  %844 = vmatprep.mubr.f32.mxu0 0.0
  %845 = vmatmul.mubr.f32.gmra.mrb[0].mxu0 %v778
  %v846 = vpop.f32.mrb[0].mxu0
  %v847 = vadd.f32 0.0, %v846
  %v848 = vpop.f32.mrb[0].mxu0
  %v849 = vadd.f32 0.0, %v848
  %850 = vdwg.mxu0
  %v851 = vsub.f32 0.0, %v847
  %v852 = vsub.f32 0.0, %v849
  %v853 = vmul.f32 %v851, 1.442695
  %v854 = vpow.pop %v853
  %v855 = vmul.f32 %v852, 1.442695
  %v856 = vpow.pop %v855
  %v857 = vadd.f32 %v854, 1.0
  %v858 = vadd.f32 %v856, 1.0
  %v859 = vrcp.pop %v857
  %v860 = vrcp.pop %v858
  %v861 = vmin.f32 %v859, 1.0
  %v862 = vmin.f32 %v860, 1.0
  %v863 = vpack.c.bf16 %v861, %v861
  %v864 = vpack.c.bf16 %v862, %v862
  %v867 = vunpack.c.l.b16 %v863
  %v868 = vunpack.c.l.b16 %v864
  %v869 = vpack.c.b16 %v868, %v867
  %871 = vst [vmem:[%s14] sm:$0xff] %v869
  %v872 = vld [vmem:[%s2] sm:$0x3]
  %vm873 = vcmp.ge.s32.totalorder %v872, 0
  %vm874 = vcmp.ge.f32.partialorder %v861, 0.5
  %vm875 = vcmp.ge.f32.partialorder %v862, 0.5
  %v876 = vsel %vm873, 1, 0
  %v877 = vlaneseq
  %v878 = vshrl.u32 %v877, 7
  %v879 = vsub.s32 0, %v878
  %v880 = vrot.slane %v876, %v879
  %v881 = vlaneseq
  %v882 = vshrl.u32 %v881, 7
  %v883 = vsub.s32 1, %v882
  %v884 = vrot.slane %v876, %v883
  %vm885 = vcmp.eq.s32.totalorder %v880, 1
  %vm886 = vcmp.eq.s32.totalorder %v884, 1
  %vm887 = vmand %vm874, %vm885
  %vm888 = vmand %vm875, %vm886
  %v889 = vsel %vm887, 1.0, 0.0
  %v890 = vsel %vm888, 1.0, 0.0
  %v891 = vld [vmem:[%s15] sm:$0xff]
  %v892 = vmax.f32 %v889, %v890
  %893 = vmax.xlane.f32.xlu0 %v892
  %v894 = vpop.xlane.xlu0 %893
  %v895 = vmax.f32 %v891, %v894
  %vm896 = vcmask 7168
  %897 = vst.msk [vmem:[%s15] sm:$0xff] %vm896, %v895
  // Predicated region
  $region58: #{_lambda_.9} parent=0 // pred_check
    _
  $region59: #{_lambda_.9} parent=0 // pred_check_branch
    %899 = sbr.rel (0) target = $region61
  $region60: #{_lambda_.9} parent=0 // pred_region
    _
  $region61: #{_lambda_.9} parent=0 // pred_fallthru
    _
  // Predicated region
  $region62: #{_lambda_.9} parent=0 // pred_check
    _
  $region63: #{_lambda_.9} parent=0 // pred_check_branch
    %901 = sbr.rel (0) target = $region65
  $region64: #{_lambda_.9} parent=0 // pred_region
    _
  $region65: #{_lambda_.9} parent=0 // pred_fallthru
    _
  // Predicated region
  $region66: #{_lambda_.9} parent=0 // pred_check
    _
  $region67: #{_lambda_.9} parent=0 // pred_check_branch
    %903 = sbr.rel (0) target = $region69
  $region68: #{_lambda_.9} parent=0 // pred_region
    _
  $region69: #{_lambda_.9} parent=0 // pred_fallthru
    _
  // Predicated region
  $region70: #{_lambda_.9} parent=0 // pred_check
    _
  $region71: #{_lambda_.9} parent=0 // pred_check_branch
    %905 = sbr.rel (0) target = $region73
  $region72: #{_lambda_.9} parent=0 // pred_region
    _
  $region73: #{_lambda_.9} parent=0 // pred_fallthru
    _
  // Predicated region
  $region74: #{_lambda_.9} parent=0 // pred_check
    _
  $region75: #{_lambda_.9} parent=0 // pred_check_branch
    %907 = sbr.rel (0) target = $region77
  $region76: #{_lambda_.9} parent=0 // pred_region
    _
  $region77: #{_lambda_.9} parent=0 // pred_fallthru
    _
  // Predicated region
  $region78: #{_lambda_.9} parent=0 // pred_check
    _
  $region79: #{_lambda_.9} parent=0 // pred_check_branch
    %909 = sbr.rel (0) target = $region81
  $region80: #{_lambda_.9} parent=0 // pred_region
    _
  $region81: #{_lambda_.9} parent=0 // pred_fallthru
    _

// kernel: _lambda_.8
$region0: #{_lambda_.8}
  #allocation0 [shape = 'u32[]', space=smem, size = 0x4, offset = 0x4, fixed_abs, tag = 'smem constant byte address 0x4 - core index']
  #allocation1 [shape = 'u32[144,128]{1,0:T(1,128)}', space=vmem, size = 0x12000, scoped, tag = 'internal scratch']
  #allocation2 [shape = 'f32[8,32]{1,0:T(8,128)}', space=vmem, size = 0x1000, scoped, tag = 'scratch operand']
  #allocation3 [shape = 'f32[8,32]{1,0:T(8,128)}', space=vmem, size = 0x1000, scoped, tag = 'scratch operand']
  #allocation4 [shape = 'f32[8,1]{1,0:T(8,128)}', space=vmem, size = 0x1000, scoped, tag = 'scratch operand']
  #allocation5 [shape = 'f32[8,1]{1,0:T(8,128)}', space=vmem, size = 0x1000, scoped, tag = 'scratch operand']
  #allocation6 [shape = 'f32[8,32]{1,0:T(8,128)}', space=vmem, size = 0x1000, scoped, tag = 'scratch operand']
  %s0 = inlined_call_operand.smem [shape: u32[52], index: -1, kind: input, shape index: {}]
  %s1 = sld [smem:[%s0]]
  %s2 = scalar_lea.smem %s0, 1
  %s3 = sld [smem:[%s2]]
  %s4 = scalar_lea.smem %s0, 2
  %s5 = sld [smem:[%s4]]
  %s6 = scalar_lea.smem %s0, 3
  %s7 = sld [smem:[%s6]]
  %s8 = scalar_lea.smem %s0, 4
  %s9 = sld [smem:[%s8]]
  %s10 = scalar_lea.smem %s0, 5
  %s11 = sld [smem:[%s10]]
  %s12 = scalar_lea.smem %s0, 6
  %s13 = sld [smem:[%s12]]
  %s14 = scalar_lea.smem %s0, 7
  %s15 = sld [smem:[%s14]]
  %s16 = scalar_lea.smem %s0, 8
  %s17 = sld [smem:[%s16]]
  %s18 = scalar_lea.smem %s0, 9
  %s19 = sld [smem:[%s18]]
  %s20 = scalar_lea.smem %s0, 10
  %s21 = sld [smem:[%s20]]
  %s22 = scalar_lea.smem %s0, 11
  %s23 = sld [smem:[%s22]]
  %s24 = scalar_lea.smem %s0, 12
  %s25 = sld [smem:[%s24]]
  %s26 = scalar_lea.smem %s0, 13
  %s27 = sld [smem:[%s26]]
  %s28 = scalar_lea.smem %s0, 14
  %s29 = sld [smem:[%s28]]
  %s30 = scalar_lea.smem %s0, 15
  %s31 = sld [smem:[%s30]]
  %s32 = scalar_lea.smem %s0, 16
  %s33 = sld [smem:[%s32]]
  %s34 = scalar_lea.smem %s0, 17
  %s35 = sld [smem:[%s34]]
  %s36 = scalar_lea.smem %s0, 18
  %s37 = sld [smem:[%s36]]
  %s38 = scalar_lea.smem %s0, 19
  %s39 = sld [smem:[%s38]]
  %s40 = scalar_lea.smem %s0, 20
  %s41 = sld [smem:[%s40]]
  %s42 = scalar_lea.smem %s0, 21
  %s43 = sld [smem:[%s42]]
  %s44 = scalar_lea.smem %s0, 22
  %s45 = sld [smem:[%s44]]
  %s46 = scalar_lea.smem %s0, 23
  %s47 = sld [smem:[%s46]]
  %s48 = scalar_lea.smem %s0, 24
  %s49 = sld [smem:[%s48]]
  %s50 = scalar_lea.smem %s0, 25
  %s51 = sld [smem:[%s50]]
  %s52 = scalar_lea.smem %s0, 26
  %s53 = sld [smem:[%s52]]
  %s54 = scalar_lea.smem %s0, 27
  %s55 = sld [smem:[%s54]]
  %s56 = scalar_lea.smem %s0, 28
  %s57 = sld [smem:[%s56]]
  %s58 = scalar_lea.smem %s0, 29
  %s59 = sld [smem:[%s58]]
  %s60 = scalar_lea.smem %s0, 30
  %s61 = sld [smem:[%s60]]
  %s62 = scalar_lea.smem %s0, 31
  %s63 = sld [smem:[%s62]]
  %s64 = scalar_lea.smem %s0, 32
  %s65 = sld [smem:[%s64]]
  %s66 = scalar_lea.smem %s0, 33
  %s67 = sld [smem:[%s66]]
  %s68 = scalar_lea.smem %s0, 34
  %s69 = sld [smem:[%s68]]
  %s70 = scalar_lea.smem %s0, 35
  %s71 = sld [smem:[%s70]]
  %s72 = scalar_lea.smem %s0, 36
  %s73 = sld [smem:[%s72]]
  %s74 = scalar_lea.smem %s0, 37
  %s75 = sld [smem:[%s74]]
  %s76 = scalar_lea.smem %s0, 38
  %s77 = sld [smem:[%s76]]
  %s78 = scalar_lea.smem %s0, 39
  %s79 = sld [smem:[%s78]]
  %s80 = scalar_lea.smem %s0, 40
  %s81 = sld [smem:[%s80]]
  %s82 = scalar_lea.smem %s0, 41
  %s83 = sld [smem:[%s82]]
  %s84 = scalar_lea.smem %s0, 42
  %s85 = sld [smem:[%s84]]
  %s86 = scalar_lea.smem %s0, 43
  %s87 = sld [smem:[%s86]]
  %s88 = scalar_lea.smem %s0, 44
  %s89 = sld [smem:[%s88]]
  %s90 = scalar_lea.smem %s0, 45
  %s91 = sld [smem:[%s90]]
  %s92 = scalar_lea.smem %s0, 46
  %s93 = sld [smem:[%s92]]
  %s94 = scalar_lea.smem %s0, 47
  %s95 = sld [smem:[%s94]]
  %s96 = scalar_lea.smem %s0, 48
  %s97 = sld [smem:[%s96]]
  %s98 = scalar_lea.smem %s0, 49
  %s99 = sld [smem:[%s98]]
  %s100 = scalar_lea.smem %s0, 50
  %s101 = sld [smem:[%s100]]
  %s102 = scalar_lea.smem %s0, 51
  %s103 = sld [smem:[%s102]]
  %104 = xla_tuple %s95, %s97, %s99, %s101, %s103
  %s105 = sld [smem:[#allocation0]]
  $region238: #{_lambda_.8} parent=0
    _
  %s107 = ssub.s32 1, %s105
  %s108 = scalar_select 0, %s107, %s105
  $region1: #{_lambda_.8} parent=0
    #allocation7 [shape = 'u8[4096]{0}', space=vmem, size = 0x1000, scoped, tag = 'output window, operand 1, single buffered']
    #allocation8 [shape = 's32[1]{0}', space=sflag, size = 0x4, scoped, tag = 'scoped memory for _lambda_.8']
    %109 = vsyncpa [#allocation8], 0
    // Predicated region
    $region2: #{_lambda_.8} parent=1 // pred_check
      _
    $region3: #{_lambda_.8} parent=1 // pred_check_branch
      %111 = sbr.rel (0) target = $region5
    $region4: #{_lambda_.8} parent=1 // pred_region
      _
    $region5: #{_lambda_.8} parent=1 // pred_fallthru
      _
    // Predicated region
    $region6: #{_lambda_.8} parent=1 // pred_check
      _
    $region7: #{_lambda_.8} parent=1 // pred_check_branch
      %113 = sbr.rel (0) target = $region9
    $region8: #{_lambda_.8} parent=1 // pred_region
      _
    $region9: #{_lambda_.8} parent=1 // pred_fallthru
      _
    // Predicated region
    $region10: #{_lambda_.8} parent=1 // pred_check
      _
    $region11: #{_lambda_.8} parent=1 // pred_check_branch
      %115 = sbr.rel (0) target = $region13
    $region12: #{_lambda_.8} parent=1 // pred_region
      _
    $region13: #{_lambda_.8} parent=1 // pred_fallthru
      _
    // Predicated region
    $region14: #{_lambda_.8} parent=1 // pred_check
      _
    $region15: #{_lambda_.8} parent=1 // pred_check_branch
      %117 = sbr.rel (0) target = $region17
    $region16: #{_lambda_.8} parent=1 // pred_region
      _
    $region17: #{_lambda_.8} parent=1 // pred_fallthru
      _
    // Predicated region
    $region18: #{_lambda_.8} parent=1 // pred_check
      _
    $region19: #{_lambda_.8} parent=1 // pred_check_branch
      %119 = sbr.rel (0) target = $region21
    $region20: #{_lambda_.8} parent=1 // pred_region
      _
    $region21: #{_lambda_.8} parent=1 // pred_fallthru
      _
    // Predicated region
    $region22: #{_lambda_.8} parent=1 // pred_check
      _
    $region23: #{_lambda_.8} parent=1 // pred_check_branch
      %121 = sbr.rel (0) target = $region25
    $region24: #{_lambda_.8} parent=1 // pred_region
      _
    $region25: #{_lambda_.8} parent=1 // pred_fallthru
      _
    // Predicated region
    $region26: #{_lambda_.8} parent=1 // pred_check
      _
    $region27: #{_lambda_.8} parent=1 // pred_check_branch
      %123 = sbr.rel (0) target = $region29
    $region28: #{_lambda_.8} parent=1 // pred_region
      _
    $region29: #{_lambda_.8} parent=1 // pred_fallthru
      _
    // Predicated region
    $region30: #{_lambda_.8} parent=1 // pred_check
      _
    $region31: #{_lambda_.8} parent=1 // pred_check_branch
      %125 = sbr.rel (0) target = $region33
    $region32: #{_lambda_.8} parent=1 // pred_region
      _
    $region33: #{_lambda_.8} parent=1 // pred_fallthru
      _
    // Predicated region
    $region34: #{_lambda_.8} parent=1 // pred_check
      _
    $region35: #{_lambda_.8} parent=1 // pred_check_branch
      %127 = sbr.rel (0) target = $region37
    $region36: #{_lambda_.8} parent=1 // pred_region
      _
    $region37: #{_lambda_.8} parent=1 // pred_fallthru
      _
    // Predicated region
    $region38: #{_lambda_.8} parent=1 // pred_check
      _
    $region39: #{_lambda_.8} parent=1 // pred_check_branch
      %129 = sbr.rel (0) target = $region41
    $region40: #{_lambda_.8} parent=1 // pred_region
      _
    $region41: #{_lambda_.8} parent=1 // pred_fallthru
      _
    // Predicated region
    $region42: #{_lambda_.8} parent=1 // pred_check
      _
    $region43: #{_lambda_.8} parent=1 // pred_check_branch
      %131 = sbr.rel (0) target = $region45
    $region44: #{_lambda_.8} parent=1 // pred_region
      _
    $region45: #{_lambda_.8} parent=1 // pred_fallthru
      _
    // Predicated region
    $region46: #{_lambda_.8} parent=1 // pred_check
      _
    $region47: #{_lambda_.8} parent=1 // pred_check_branch
      %133 = sbr.rel (0) target = $region49
    $region48: #{_lambda_.8} parent=1 // pred_region
      _
    $region49: #{_lambda_.8} parent=1 // pred_fallthru
      _
    // Predicated region
    $region50: #{_lambda_.8} parent=1 // pred_check
      _
    $region51: #{_lambda_.8} parent=1 // pred_check_branch
      %135 = sbr.rel (0) target = $region53
    $region52: #{_lambda_.8} parent=1 // pred_region
      _
    $region53: #{_lambda_.8} parent=1 // pred_fallthru
      _
    // Predicated region
    $region54: #{_lambda_.8} parent=1 // pred_check
      _
    $region55: #{_lambda_.8} parent=1 // pred_check_branch
      %137 = sbr.rel (0) target = $region57
    $region56: #{_lambda_.8} parent=1 // pred_region
      _
    $region57: #{_lambda_.8} parent=1 // pred_fallthru
      _
    // Predicated region
    $region58: #{_lambda_.8} parent=1 // pred_check
      _
    $region59: #{_lambda_.8} parent=1 // pred_check_branch
      %139 = sbr.rel (0) target = $region61
    $region60: #{_lambda_.8} parent=1 // pred_region
      _
    $region61: #{_lambda_.8} parent=1 // pred_fallthru
      _
    // Predicated region
    $region62: #{_lambda_.8} parent=1 // pred_check
      _
    $region63: #{_lambda_.8} parent=1 // pred_check_branch
      %141 = sbr.rel (0) target = $region65
    $region64: #{_lambda_.8} parent=1 // pred_region
      _
    $region65: #{_lambda_.8} parent=1 // pred_fallthru
      _
    // Predicated region
    $region66: #{_lambda_.8} parent=1 // pred_check
      _
    $region67: #{_lambda_.8} parent=1 // pred_check_branch
      %143 = sbr.rel (0) target = $region69
    $region68: #{_lambda_.8} parent=1 // pred_region
      _
    $region69: #{_lambda_.8} parent=1 // pred_fallthru
      _
    // Predicated region
    $region70: #{_lambda_.8} parent=1 // pred_check
      _
    $region71: #{_lambda_.8} parent=1 // pred_check_branch
      %145 = sbr.rel (0) target = $region73
    $region72: #{_lambda_.8} parent=1 // pred_region
      _
    $region73: #{_lambda_.8} parent=1 // pred_fallthru
      _
    // Predicated region
    $region74: #{_lambda_.8} parent=1 // pred_check
      _
    $region75: #{_lambda_.8} parent=1 // pred_check_branch
      %147 = sbr.rel (0) target = $region77
    $region76: #{_lambda_.8} parent=1 // pred_region
      _
    $region77: #{_lambda_.8} parent=1 // pred_fallthru
      _
    // Predicated region
    $region78: #{_lambda_.8} parent=1 // pred_check
      _
    $region79: #{_lambda_.8} parent=1 // pred_check_branch
      %149 = sbr.rel (0) target = $region81
    $region80: #{_lambda_.8} parent=1 // pred_region
      _
    $region81: #{_lambda_.8} parent=1 // pred_fallthru
      _
    // Predicated region
    $region82: #{_lambda_.8} parent=1 // pred_check
      _
    $region83: #{_lambda_.8} parent=1 // pred_check_branch
      %151 = sbr.rel (0) target = $region85
    $region84: #{_lambda_.8} parent=1 // pred_region
      _
    $region85: #{_lambda_.8} parent=1 // pred_fallthru
      _
    // Predicated region
    $region86: #{_lambda_.8} parent=1 // pred_check
      _
    $region87: #{_lambda_.8} parent=1 // pred_check_branch
      %153 = sbr.rel (0) target = $region89
    $region88: #{_lambda_.8} parent=1 // pred_region
      _
    $region89: #{_lambda_.8} parent=1 // pred_fallthru
      _
    // Predicated region
    $region90: #{_lambda_.8} parent=1 // pred_check
      _
    $region91: #{_lambda_.8} parent=1 // pred_check_branch
      %155 = sbr.rel (0) target = $region93
    $region92: #{_lambda_.8} parent=1 // pred_region
      _
    $region93: #{_lambda_.8} parent=1 // pred_fallthru
      _
    // Predicated region
    $region94: #{_lambda_.8} parent=1 // pred_check
      _
    $region95: #{_lambda_.8} parent=1 // pred_check_branch
      %157 = sbr.rel (0) target = $region97
    $region96: #{_lambda_.8} parent=1 // pred_region
      _
    $region97: #{_lambda_.8} parent=1 // pred_fallthru
      _
    // Predicated region
    $region98: #{_lambda_.8} parent=1 // pred_check
      _
    $region99: #{_lambda_.8} parent=1 // pred_check_branch
      %159 = sbr.rel (0) target = $region101
    $region100: #{_lambda_.8} parent=1 // pred_region
      _
    $region101: #{_lambda_.8} parent=1 // pred_fallthru
      _
    // Predicated region
    $region102: #{_lambda_.8} parent=1 // pred_check
      _
    $region103: #{_lambda_.8} parent=1 // pred_check_branch
      %161 = sbr.rel (0) target = $region105
    $region104: #{_lambda_.8} parent=1 // pred_region
      _
    $region105: #{_lambda_.8} parent=1 // pred_fallthru
      _
    // Predicated region
    $region106: #{_lambda_.8} parent=1 // pred_check
      _
    $region107: #{_lambda_.8} parent=1 // pred_check_branch
      %163 = sbr.rel (0) target = $region109
    $region108: #{_lambda_.8} parent=1 // pred_region
      _
    $region109: #{_lambda_.8} parent=1 // pred_fallthru
      _
    // Predicated region
    $region110: #{_lambda_.8} parent=1 // pred_check
      _
    $region111: #{_lambda_.8} parent=1 // pred_check_branch
      %165 = sbr.rel (0) target = $region113
    $region112: #{_lambda_.8} parent=1 // pred_region
      _
    $region113: #{_lambda_.8} parent=1 // pred_fallthru
      _
    // Predicated region
    $region114: #{_lambda_.8} parent=1 // pred_check
      _
    $region115: #{_lambda_.8} parent=1 // pred_check_branch
      %167 = sbr.rel (0) target = $region117
    $region116: #{_lambda_.8} parent=1 // pred_region
      _
    $region117: #{_lambda_.8} parent=1 // pred_fallthru
      _
    // Predicated region
    $region118: #{_lambda_.8} parent=1 // pred_check
      _
    $region119: #{_lambda_.8} parent=1 // pred_check_branch
      %169 = sbr.rel (0) target = $region121
    $region120: #{_lambda_.8} parent=1 // pred_region
      _
    $region121: #{_lambda_.8} parent=1 // pred_fallthru
      _
    // Predicated region
    $region122: #{_lambda_.8} parent=1 // pred_check
      _
    $region123: #{_lambda_.8} parent=1 // pred_check_branch
      %171 = sbr.rel (0) target = $region125
    $region124: #{_lambda_.8} parent=1 // pred_region
      _
    $region125: #{_lambda_.8} parent=1 // pred_fallthru
      _
    // Predicated region
    $region126: #{_lambda_.8} parent=1 // pred_check
      _
    $region127: #{_lambda_.8} parent=1 // pred_check_branch
      %173 = sbr.rel (0) target = $region129
    $region128: #{_lambda_.8} parent=1 // pred_region
      _
    $region129: #{_lambda_.8} parent=1 // pred_fallthru
      _
    // Predicated region
    $region130: #{_lambda_.8} parent=1 // pred_check
      _
    $region131: #{_lambda_.8} parent=1 // pred_check_branch
      %175 = sbr.rel (0) target = $region133
    $region132: #{_lambda_.8} parent=1 // pred_region
      _
    $region133: #{_lambda_.8} parent=1 // pred_fallthru
      _
    // Predicated region
    $region134: #{_lambda_.8} parent=1 // pred_check
      _
    $region135: #{_lambda_.8} parent=1 // pred_check_branch
      %177 = sbr.rel (0) target = $region137
    $region136: #{_lambda_.8} parent=1 // pred_region
      _
    $region137: #{_lambda_.8} parent=1 // pred_fallthru
      _
    // Predicated region
    $region138: #{_lambda_.8} parent=1 // pred_check
      _
    $region139: #{_lambda_.8} parent=1 // pred_check_branch
      %179 = sbr.rel (0) target = $region141
    $region140: #{_lambda_.8} parent=1 // pred_region
      _
    $region141: #{_lambda_.8} parent=1 // pred_fallthru
      _
    // Predicated region
    $region142: #{_lambda_.8} parent=1 // pred_check
      _
    $region143: #{_lambda_.8} parent=1 // pred_check_branch
      %181 = sbr.rel (0) target = $region145
    $region144: #{_lambda_.8} parent=1 // pred_region
      _
    $region145: #{_lambda_.8} parent=1 // pred_fallthru
      _
    // Predicated region
    $region146: #{_lambda_.8} parent=1 // pred_check
      _
    $region147: #{_lambda_.8} parent=1 // pred_check_branch
      %183 = sbr.rel (0) target = $region149
    $region148: #{_lambda_.8} parent=1 // pred_region
      _
    $region149: #{_lambda_.8} parent=1 // pred_fallthru
      _
    // Predicated region
    $region150: #{_lambda_.8} parent=1 // pred_check
      _
    $region151: #{_lambda_.8} parent=1 // pred_check_branch
      %185 = sbr.rel (0) target = $region153
    $region152: #{_lambda_.8} parent=1 // pred_region
      _
    $region153: #{_lambda_.8} parent=1 // pred_fallthru
      _
    // Predicated region
    $region154: #{_lambda_.8} parent=1 // pred_check
      _
    $region155: #{_lambda_.8} parent=1 // pred_check_branch
      %187 = sbr.rel (0) target = $region157
    $region156: #{_lambda_.8} parent=1 // pred_region
      _
    $region157: #{_lambda_.8} parent=1 // pred_fallthru
      _
    // Predicated region
    $region158: #{_lambda_.8} parent=1 // pred_check
      _
    $region159: #{_lambda_.8} parent=1 // pred_check_branch
      %189 = sbr.rel (0) target = $region161
    $region160: #{_lambda_.8} parent=1 // pred_region
      _
    $region161: #{_lambda_.8} parent=1 // pred_fallthru
      _
    // Predicated region
    $region162: #{_lambda_.8} parent=1 // pred_check
      _
    $region163: #{_lambda_.8} parent=1 // pred_check_branch
      %191 = sbr.rel (0) target = $region165
    $region164: #{_lambda_.8} parent=1 // pred_region
      _
    $region165: #{_lambda_.8} parent=1 // pred_fallthru
      _
    // Predicated region
    $region166: #{_lambda_.8} parent=1 // pred_check
      _
    $region167: #{_lambda_.8} parent=1 // pred_check_branch
      %193 = sbr.rel (0) target = $region169
    $region168: #{_lambda_.8} parent=1 // pred_region
      _
    $region169: #{_lambda_.8} parent=1 // pred_fallthru
      _
    // Predicated region
    $region170: #{_lambda_.8} parent=1 // pred_check
      _
    $region171: #{_lambda_.8} parent=1 // pred_check_branch
      %195 = sbr.rel (0) target = $region173
    $region172: #{_lambda_.8} parent=1 // pred_region
      _
    $region173: #{_lambda_.8} parent=1 // pred_fallthru
      _
    // Predicated region
    $region174: #{_lambda_.8} parent=1 // pred_check
      _
    $region175: #{_lambda_.8} parent=1 // pred_check_branch
      %197 = sbr.rel (0) target = $region177
    $region176: #{_lambda_.8} parent=1 // pred_region
      _
    $region177: #{_lambda_.8} parent=1 // pred_fallthru
      _
    // Predicated region
    $region178: #{_lambda_.8} parent=1 // pred_check
      _
    $region179: #{_lambda_.8} parent=1 // pred_check_branch
      %199 = sbr.rel (0) target = $region181
    $region180: #{_lambda_.8} parent=1 // pred_region
      _
    $region181: #{_lambda_.8} parent=1 // pred_fallthru
      _
    // Predicated region
    $region182: #{_lambda_.8} parent=1 // pred_check
      _
    $region183: #{_lambda_.8} parent=1 // pred_check_branch
      %201 = sbr.rel (0) target = $region185
    $region184: #{_lambda_.8} parent=1 // pred_region
      _
    $region185: #{_lambda_.8} parent=1 // pred_fallthru
      _
    // Predicated region
    $region186: #{_lambda_.8} parent=1 // pred_check
      _
    $region187: #{_lambda_.8} parent=1 // pred_check_branch
      %203 = sbr.rel (0) target = $region189
    $region188: #{_lambda_.8} parent=1 // pred_region
      _
    $region189: #{_lambda_.8} parent=1 // pred_fallthru
      _
    %p204 = scmp.eq.s32.totalorder 0, 0
    // Predicated region
    $region190: #{_lambda_.8} parent=1 // pred_check
      %p205 = pneg %p204
    $region191: #{_lambda_.8} parent=1 // pred_check_branch
      %207 = sbr.rel (%p205) target = $region193
    $region192: #{_lambda_.8} parent=1 // pred_region
      %v208 = vld [vmem:[%s7] sm:$0xff]
      %v209 = vld [vmem:[%s15] sm:$0xff]
      %v210 = vld [vmem:[%s15 + $0x8] sm:$0xff]
      %v211 = vld [vmem:[%s15 + $0x10] sm:$0xff]
      %v212 = vld [vmem:[%s15 + $0x18] sm:$0xff]
      %v213 = vld [vmem:[%s17] sm:$0x1]
      %v215 = vlaneseq
      %v216 = vshrl.u32 %v215, 7
      %v217 = vsub.s32 0, %v216
      %v218 = vrot.slane %v213, %v217
      %vm220 = vcmask 261120
      %v222 = vsel %vm220, %v208, 0
      %224 = vmatprep.subr.mxu0 0.0
      %225 = vmatpush1.msra.mxu0 %v209
      %226 = vmatprep.subr.mxu0 0.0
      %227 = vmatpush1.msra.mxu0 %v210
      %228 = vmatprep.subr.mxu0 0.0
      %229 = vmatpush1.msra.mxu0 %v211
      %230 = vmatprep.subr.mxu0 0.0
      %231 = vmatpush1.msra.mxu0 %v212
      %232 = vmatprep.subr.mxu0 0.0
      %233 = vmatpush1.msra.mxu0 0.0
      %234 = vmatprep.subr.mxu0 0.0
      %235 = vmatpush1.msra.mxu0 0.0
      %236 = vmatprep.subr.mxu0 0.0
      %237 = vmatpush1.msra.mxu0 0.0
      %238 = vmatprep.subr.mxu0 0.0
      %239 = vmatpush1.msra.mxu0 0.0
      %240 = vmatprep.subr.mxu0 0.0
      %241 = vmatpush1.msra.mxu0 0.0
      %242 = vmatprep.subr.mxu0 0.0
      %243 = vmatpush1.msra.mxu0 0.0
      %244 = vmatprep.subr.mxu0 0.0
      %245 = vmatpush1.msra.mxu0 0.0
      %246 = vmatprep.subr.mxu0 0.0
      %247 = vmatpush1.msra.mxu0 0.0
      %248 = vmatprep.subr.mxu0 0.0
      %249 = vmatpush1.msra.mxu0 0.0
      %250 = vmatprep.subr.mxu0 0.0
      %251 = vmatpush1.msra.mxu0 0.0
      %252 = vmatprep.subr.mxu0 0.0
      %253 = vmatpush1.msra.mxu0 0.0
      %254 = vmatprep.subr.mxu0 0.0
      %255 = vmatpush1.msra.mxu0 0.0
      %256 = vmatprep.subr.mxu0 0.0
      %257 = vmatpush1.msra.mxu0 0.0
      %258 = vmatprep.subr.mxu0 0.0
      %259 = vmatpush1.msra.mxu0 0.0
      %260 = vmatprep.subr.mxu0 0.0
      %261 = vmatpush1.msra.mxu0 0.0
      %262 = vmatprep.subr.mxu0 0.0
      %263 = vmatpush1.msra.mxu0 0.0
      %264 = vmatprep.subr.mxu0 0.0
      %265 = vmatpush1.msra.mxu0 0.0
      %266 = vmatprep.subr.mxu0 0.0
      %267 = vmatpush1.msra.mxu0 0.0
      %268 = vmatprep.subr.mxu0 0.0
      %269 = vmatpush1.msra.mxu0 0.0
      %270 = vmatprep.subr.mxu0 0.0
      %271 = vmatpush1.msra.mxu0 0.0
      %272 = vmatprep.subr.mxu0 0.0
      %273 = vmatpush1.msra.mxu0 0.0
      %274 = vmatprep.subr.mxu0 0.0
      %275 = vmatpush1.msra.mxu0 0.0
      %276 = vmatprep.subr.mxu0 0.0
      %277 = vmatpush1.msra.mxu0 0.0
      %278 = vmatprep.subr.mxu0 0.0
      %279 = vmatpush1.msra.mxu0 0.0
      %280 = vmatprep.subr.mxu0 0.0
      %281 = vmatpush1.msra.mxu0 0.0
      %282 = vmatprep.subr.mxu0 0.0
      %283 = vmatpush1.msra.mxu0 0.0
      %284 = vmatprep.subr.mxu0 0.0
      %285 = vmatpush1.msra.mxu0 0.0
      %286 = vmatprep.subr.mxu0 0.0
      %287 = vmatpush1.msra.mxu0 0.0
      %288 = vmatprep.mubr.f32.mxu0 0.0
      %289 = vmatmul.mubr.f32.gmra.mrb[0].mxu0 %v222
      %v290 = vpop.f32.mrb[0].mxu0
      %v291 = vadd.f32 %v218, %v290
      %v292 = vpop.f32.mrb[0].mxu0
      %293 = vdwg.mxu0
      %v294 = vld [vmem:[%s19] sm:$0xff]
      %v295 = vld [vmem:[%s19 + $0x8] sm:$0xff]
      %v296 = vld [vmem:[%s19 + $0x10] sm:$0xff]
      %v297 = vld [vmem:[%s19 + $0x18] sm:$0xff]
      %v298 = vld [vmem:[%s21] sm:$0x1]
      %v300 = vlaneseq
      %v301 = vshrl.u32 %v300, 7
      %v302 = vsub.s32 0, %v301
      %v303 = vrot.slane %v298, %v302
      %305 = vmatprep.subr.mxu0 0.0
      %306 = vmatpush1.msra.mxu0 %v294
      %307 = vmatprep.subr.mxu0 0.0
      %308 = vmatpush1.msra.mxu0 %v295
      %309 = vmatprep.subr.mxu0 0.0
      %310 = vmatpush1.msra.mxu0 %v296
      %311 = vmatprep.subr.mxu0 0.0
      %312 = vmatpush1.msra.mxu0 %v297
      %313 = vmatprep.subr.mxu0 0.0
      %314 = vmatpush1.msra.mxu0 0.0
      %315 = vmatprep.subr.mxu0 0.0
      %316 = vmatpush1.msra.mxu0 0.0
      %317 = vmatprep.subr.mxu0 0.0
      %318 = vmatpush1.msra.mxu0 0.0
      %319 = vmatprep.subr.mxu0 0.0
      %320 = vmatpush1.msra.mxu0 0.0
      %321 = vmatprep.subr.mxu0 0.0
      %322 = vmatpush1.msra.mxu0 0.0
      %323 = vmatprep.subr.mxu0 0.0
      %324 = vmatpush1.msra.mxu0 0.0
      %325 = vmatprep.subr.mxu0 0.0
      %326 = vmatpush1.msra.mxu0 0.0
      %327 = vmatprep.subr.mxu0 0.0
      %328 = vmatpush1.msra.mxu0 0.0
      %329 = vmatprep.subr.mxu0 0.0
      %330 = vmatpush1.msra.mxu0 0.0
      %331 = vmatprep.subr.mxu0 0.0
      %332 = vmatpush1.msra.mxu0 0.0
      %333 = vmatprep.subr.mxu0 0.0
      %334 = vmatpush1.msra.mxu0 0.0
      %335 = vmatprep.subr.mxu0 0.0
      %336 = vmatpush1.msra.mxu0 0.0
      %337 = vmatprep.subr.mxu0 0.0
      %338 = vmatpush1.msra.mxu0 0.0
      %339 = vmatprep.subr.mxu0 0.0
      %340 = vmatpush1.msra.mxu0 0.0
      %341 = vmatprep.subr.mxu0 0.0
      %342 = vmatpush1.msra.mxu0 0.0
      %343 = vmatprep.subr.mxu0 0.0
      %344 = vmatpush1.msra.mxu0 0.0
      %345 = vmatprep.subr.mxu0 0.0
      %346 = vmatpush1.msra.mxu0 0.0
      %347 = vmatprep.subr.mxu0 0.0
      %348 = vmatpush1.msra.mxu0 0.0
      %349 = vmatprep.subr.mxu0 0.0
      %350 = vmatpush1.msra.mxu0 0.0
      %351 = vmatprep.subr.mxu0 0.0
      %352 = vmatpush1.msra.mxu0 0.0
      %353 = vmatprep.subr.mxu0 0.0
      %354 = vmatpush1.msra.mxu0 0.0
      %355 = vmatprep.subr.mxu0 0.0
      %356 = vmatpush1.msra.mxu0 0.0
      %357 = vmatprep.subr.mxu0 0.0
      %358 = vmatpush1.msra.mxu0 0.0
      %359 = vmatprep.subr.mxu0 0.0
      %360 = vmatpush1.msra.mxu0 0.0
      %361 = vmatprep.subr.mxu0 0.0
      %362 = vmatpush1.msra.mxu0 0.0
      %363 = vmatprep.subr.mxu0 0.0
      %364 = vmatpush1.msra.mxu0 0.0
      %365 = vmatprep.subr.mxu0 0.0
      %366 = vmatpush1.msra.mxu0 0.0
      %367 = vmatprep.subr.mxu0 0.0
      %368 = vmatpush1.msra.mxu0 0.0
      %369 = vmatprep.mubr.f32.mxu0 0.0
      %370 = vmatmul.mubr.f32.gmra.mrb[0].mxu0 %v222
      %v371 = vpop.f32.mrb[0].mxu0
      %v372 = vadd.f32 %v303, %v371
      %v373 = vpop.f32.mrb[0].mxu0
      %374 = vdwg.mxu0
      %v375 = vld [vmem:[%s23] sm:$0xff]
      %v376 = vld [vmem:[%s23 + $0x8] sm:$0xff]
      %v377 = vld [vmem:[%s23 + $0x10] sm:$0xff]
      %v378 = vld [vmem:[%s23 + $0x18] sm:$0xff]
      %v379 = vld [vmem:[%s25] sm:$0x1]
      %v381 = vlaneseq
      %v382 = vshrl.u32 %v381, 7
      %v383 = vsub.s32 0, %v382
      %v384 = vrot.slane %v379, %v383
      %386 = vmatprep.subr.mxu0 0.0
      %387 = vmatpush1.msra.mxu0 %v375
      %388 = vmatprep.subr.mxu0 0.0
      %389 = vmatpush1.msra.mxu0 %v376
      %390 = vmatprep.subr.mxu0 0.0
      %391 = vmatpush1.msra.mxu0 %v377
      %392 = vmatprep.subr.mxu0 0.0
      %393 = vmatpush1.msra.mxu0 %v378
      %394 = vmatprep.subr.mxu0 0.0
      %395 = vmatpush1.msra.mxu0 0.0
      %396 = vmatprep.subr.mxu0 0.0
      %397 = vmatpush1.msra.mxu0 0.0
      %398 = vmatprep.subr.mxu0 0.0
      %399 = vmatpush1.msra.mxu0 0.0
      %400 = vmatprep.subr.mxu0 0.0
      %401 = vmatpush1.msra.mxu0 0.0
      %402 = vmatprep.subr.mxu0 0.0
      %403 = vmatpush1.msra.mxu0 0.0
      %404 = vmatprep.subr.mxu0 0.0
      %405 = vmatpush1.msra.mxu0 0.0
      %406 = vmatprep.subr.mxu0 0.0
      %407 = vmatpush1.msra.mxu0 0.0
      %408 = vmatprep.subr.mxu0 0.0
      %409 = vmatpush1.msra.mxu0 0.0
      %410 = vmatprep.subr.mxu0 0.0
      %411 = vmatpush1.msra.mxu0 0.0
      %412 = vmatprep.subr.mxu0 0.0
      %413 = vmatpush1.msra.mxu0 0.0
      %414 = vmatprep.subr.mxu0 0.0
      %415 = vmatpush1.msra.mxu0 0.0
      %416 = vmatprep.subr.mxu0 0.0
      %417 = vmatpush1.msra.mxu0 0.0
      %418 = vmatprep.subr.mxu0 0.0
      %419 = vmatpush1.msra.mxu0 0.0
      %420 = vmatprep.subr.mxu0 0.0
      %421 = vmatpush1.msra.mxu0 0.0
      %422 = vmatprep.subr.mxu0 0.0
      %423 = vmatpush1.msra.mxu0 0.0
      %424 = vmatprep.subr.mxu0 0.0
      %425 = vmatpush1.msra.mxu0 0.0
      %426 = vmatprep.subr.mxu0 0.0
      %427 = vmatpush1.msra.mxu0 0.0
      %428 = vmatprep.subr.mxu0 0.0
      %429 = vmatpush1.msra.mxu0 0.0
      %430 = vmatprep.subr.mxu0 0.0
      %431 = vmatpush1.msra.mxu0 0.0
      %432 = vmatprep.subr.mxu0 0.0
      %433 = vmatpush1.msra.mxu0 0.0
      %434 = vmatprep.subr.mxu0 0.0
      %435 = vmatpush1.msra.mxu0 0.0
      %436 = vmatprep.subr.mxu0 0.0
      %437 = vmatpush1.msra.mxu0 0.0
      %438 = vmatprep.subr.mxu0 0.0
      %439 = vmatpush1.msra.mxu0 0.0
      %440 = vmatprep.subr.mxu0 0.0
      %441 = vmatpush1.msra.mxu0 0.0
      %442 = vmatprep.subr.mxu0 0.0
      %443 = vmatpush1.msra.mxu0 0.0
      %444 = vmatprep.subr.mxu0 0.0
      %445 = vmatpush1.msra.mxu0 0.0
      %446 = vmatprep.subr.mxu0 0.0
      %447 = vmatpush1.msra.mxu0 0.0
      %448 = vmatprep.subr.mxu0 0.0
      %449 = vmatpush1.msra.mxu0 0.0
      %450 = vmatprep.mubr.f32.mxu0 0.0
      %451 = vmatmul.mubr.f32.gmra.mrb[0].mxu0 %v222
      %v452 = vpop.f32.mrb[0].mxu0
      %v453 = vadd.f32 %v384, %v452
      %v454 = vpop.f32.mrb[0].mxu0
      %455 = vdwg.mxu0
      %v457 = vsel %vm220, %v291, 0
      %v460 = vsel %vm220, %v372, 0
      %462 = vmatprep.subr.mxu0 0.0
      %463 = vmatpush1.xpose.msra.mxu0 %v460
      %464 = vmatprep.subr.mxu0 0.0
      %465 = vmatpush1.xpose.msra.mxu0 0.0
      %466 = vmatprep.subr.mxu0 0.0
      %467 = vmatpush1.xpose.msra.mxu0 0.0
      %468 = vmatprep.subr.mxu0 0.0
      %469 = vmatpush1.xpose.msra.mxu0 0.0
      %470 = vmatprep.subr.mxu0 0.0
      %471 = vmatpush1.xpose.msra.mxu0 0.0
      %472 = vmatprep.subr.mxu0 0.0
      %473 = vmatpush1.xpose.msra.mxu0 0.0
      %474 = vmatprep.subr.mxu0 0.0
      %475 = vmatpush1.xpose.msra.mxu0 0.0
      %476 = vmatprep.subr.mxu0 0.0
      %477 = vmatpush1.xpose.msra.mxu0 0.0
      %478 = vmatprep.subr.mxu0 0.0
      %479 = vmatpush1.xpose.msra.mxu0 0.0
      %480 = vmatprep.subr.mxu0 0.0
      %481 = vmatpush1.xpose.msra.mxu0 0.0
      %482 = vmatprep.subr.mxu0 0.0
      %483 = vmatpush1.xpose.msra.mxu0 0.0
      %484 = vmatprep.subr.mxu0 0.0
      %485 = vmatpush1.xpose.msra.mxu0 0.0
      %486 = vmatprep.subr.mxu0 0.0
      %487 = vmatpush1.xpose.msra.mxu0 0.0
      %488 = vmatprep.subr.mxu0 0.0
      %489 = vmatpush1.xpose.msra.mxu0 0.0
      %490 = vmatprep.subr.mxu0 0.0
      %491 = vmatpush1.xpose.msra.mxu0 0.0
      %492 = vmatprep.subr.mxu0 0.0
      %493 = vmatpush1.xpose.msra.mxu0 0.0
      %494 = vmatprep.subr.mxu0 0.0
      %495 = vmatpush1.xpose.msra.mxu0 0.0
      %496 = vmatprep.subr.mxu0 0.0
      %497 = vmatpush1.xpose.msra.mxu0 0.0
      %498 = vmatprep.subr.mxu0 0.0
      %499 = vmatpush1.xpose.msra.mxu0 0.0
      %500 = vmatprep.subr.mxu0 0.0
      %501 = vmatpush1.xpose.msra.mxu0 0.0
      %502 = vmatprep.subr.mxu0 0.0
      %503 = vmatpush1.xpose.msra.mxu0 0.0
      %504 = vmatprep.subr.mxu0 0.0
      %505 = vmatpush1.xpose.msra.mxu0 0.0
      %506 = vmatprep.subr.mxu0 0.0
      %507 = vmatpush1.xpose.msra.mxu0 0.0
      %508 = vmatprep.subr.mxu0 0.0
      %509 = vmatpush1.xpose.msra.mxu0 0.0
      %510 = vmatprep.subr.mxu0 0.0
      %511 = vmatpush1.xpose.msra.mxu0 0.0
      %512 = vmatprep.subr.mxu0 0.0
      %513 = vmatpush1.xpose.msra.mxu0 0.0
      %514 = vmatprep.subr.mxu0 0.0
      %515 = vmatpush1.xpose.msra.mxu0 0.0
      %516 = vmatprep.subr.mxu0 0.0
      %517 = vmatpush1.xpose.msra.mxu0 0.0
      %518 = vmatprep.subr.mxu0 0.0
      %519 = vmatpush1.xpose.msra.mxu0 0.0
      %520 = vmatprep.subr.mxu0 0.0
      %521 = vmatpush1.xpose.msra.mxu0 0.0
      %522 = vmatprep.subr.mxu0 0.0
      %523 = vmatpush1.xpose.msra.mxu0 0.0
      %524 = vmatprep.subr.mxu0 0.0
      %525 = vmatpush1.xpose.msra.mxu0 0.0
      %526 = vmatprep.mubr.f32.mxu0 0.0
      %527 = vmatmul.mubr.f32.gmra.mrb[0].mxu0 %v457
      %v528 = vpop.f32.mrb[0].mxu0
      %v529 = vadd.f32 0.0, %v528
      %v530 = vpop.f32.mrb[0].mxu0
      %531 = vdwg.mxu0
      %v532 = vmul.f32 %v529, 0.17677669
      %v533 = vld [vmem:[%s11] sm:$0xff]
      %v534 = vld [vmem:[%s13] sm:$0x1]
      %535 = vset.pattern.permute.xlu0 0
      %536 = vperm.xlu0 %535, %v533
      %v537 = vpop.permute.xlu0 %536
      %v538 = vlaneseq
      %v539 = vshrl.u32 %v538, 7
      %v540 = vsub.s32 0, %v539
      %v541 = vrot.slane %v534, %v540
      %vm542 = vcmp.eq.s32.totalorder %v537, %v541
      %v543 = vsel %vm542, %v532, -1e+09
      %vm544 = vcmask 64512
      %v545 = vsel %vm544, %v543, -inf
      %546 = vmax.xlane.f32.xlu0 %v545
      %v547 = vpop.xlane.xlu0 %546
      %v548 = vsub.f32 %v543, %v547
      %v549 = vmul.f32 %v548, 1.442695
      %v550 = vpow.pop %v549
      %v551 = vsel %vm544, %v550, 0.0
      %552 = vadd.xlane.f32.xlu0 %v551
      %v553 = vpop.xlane.xlu0 %552
      %v554 = vrcp.pop %v553
      %v555 = vmul.f32 %v550, %v554
      %v557 = vsel %vm544, %v555, 0
      %559 = vmatprep.subr.mxu0 0.0
      %560 = vmatpush1.msra.mxu0 %v453
      %561 = vmatprep.subr.mxu0 0.0
      %562 = vmatpush1.msra.mxu0 0.0
      %563 = vmatprep.subr.mxu0 0.0
      %564 = vmatpush1.msra.mxu0 0.0
      %565 = vmatprep.subr.mxu0 0.0
      %566 = vmatpush1.msra.mxu0 0.0
      %567 = vmatprep.subr.mxu0 0.0
      %568 = vmatpush1.msra.mxu0 0.0
      %569 = vmatprep.subr.mxu0 0.0
      %570 = vmatpush1.msra.mxu0 0.0
      %571 = vmatprep.subr.mxu0 0.0
      %572 = vmatpush1.msra.mxu0 0.0
      %573 = vmatprep.subr.mxu0 0.0
      %574 = vmatpush1.msra.mxu0 0.0
      %575 = vmatprep.subr.mxu0 0.0
      %576 = vmatpush1.msra.mxu0 0.0
      %577 = vmatprep.subr.mxu0 0.0
      %578 = vmatpush1.msra.mxu0 0.0
      %579 = vmatprep.subr.mxu0 0.0
      %580 = vmatpush1.msra.mxu0 0.0
      %581 = vmatprep.subr.mxu0 0.0
      %582 = vmatpush1.msra.mxu0 0.0
      %583 = vmatprep.subr.mxu0 0.0
      %584 = vmatpush1.msra.mxu0 0.0
      %585 = vmatprep.subr.mxu0 0.0
      %586 = vmatpush1.msra.mxu0 0.0
      %587 = vmatprep.subr.mxu0 0.0
      %588 = vmatpush1.msra.mxu0 0.0
      %589 = vmatprep.subr.mxu0 0.0
      %590 = vmatpush1.msra.mxu0 0.0
      %591 = vmatprep.subr.mxu0 0.0
      %592 = vmatpush1.msra.mxu0 0.0
      %593 = vmatprep.subr.mxu0 0.0
      %594 = vmatpush1.msra.mxu0 0.0
      %595 = vmatprep.subr.mxu0 0.0
      %596 = vmatpush1.msra.mxu0 0.0
      %597 = vmatprep.subr.mxu0 0.0
      %598 = vmatpush1.msra.mxu0 0.0
      %599 = vmatprep.subr.mxu0 0.0
      %600 = vmatpush1.msra.mxu0 0.0
      %601 = vmatprep.subr.mxu0 0.0
      %602 = vmatpush1.msra.mxu0 0.0
      %603 = vmatprep.subr.mxu0 0.0
      %604 = vmatpush1.msra.mxu0 0.0
      %605 = vmatprep.subr.mxu0 0.0
      %606 = vmatpush1.msra.mxu0 0.0
      %607 = vmatprep.subr.mxu0 0.0
      %608 = vmatpush1.msra.mxu0 0.0
      %609 = vmatprep.subr.mxu0 0.0
      %610 = vmatpush1.msra.mxu0 0.0
      %611 = vmatprep.subr.mxu0 0.0
      %612 = vmatpush1.msra.mxu0 0.0
      %613 = vmatprep.subr.mxu0 0.0
      %614 = vmatpush1.msra.mxu0 0.0
      %615 = vmatprep.subr.mxu0 0.0
      %616 = vmatpush1.msra.mxu0 0.0
      %617 = vmatprep.subr.mxu0 0.0
      %618 = vmatpush1.msra.mxu0 0.0
      %619 = vmatprep.subr.mxu0 0.0
      %620 = vmatpush1.msra.mxu0 0.0
      %621 = vmatprep.subr.mxu0 0.0
      %622 = vmatpush1.msra.mxu0 0.0
      %623 = vmatprep.mubr.f32.mxu0 0.0
      %624 = vmatmul.mubr.f32.gmra.mrb[0].mxu0 %v557
      %v625 = vpop.f32.mrb[0].mxu0
      %v626 = vadd.f32 0.0, %v625
      %v627 = vpop.f32.mrb[0].mxu0
      %628 = vdwg.mxu0
      %v629 = vld [vmem:[%s27] sm:$0xff]
      %v630 = vld [vmem:[%s27 + $0x8] sm:$0xff]
      %v631 = vld [vmem:[%s27 + $0x10] sm:$0xff]
      %v632 = vld [vmem:[%s27 + $0x18] sm:$0xff]
      %v633 = vld [vmem:[%s29] sm:$0x1]
      %v635 = vlaneseq
      %v636 = vshrl.u32 %v635, 7
      %v637 = vsub.s32 0, %v636
      %v638 = vrot.slane %v633, %v637
      %v641 = vsel %vm220, %v626, 0
      %643 = vmatprep.subr.mxu0 0.0
      %644 = vmatpush1.msra.mxu0 %v629
      %645 = vmatprep.subr.mxu0 0.0
      %646 = vmatpush1.msra.mxu0 %v630
      %647 = vmatprep.subr.mxu0 0.0
      %648 = vmatpush1.msra.mxu0 %v631
      %649 = vmatprep.subr.mxu0 0.0
      %650 = vmatpush1.msra.mxu0 %v632
      %651 = vmatprep.subr.mxu0 0.0
      %652 = vmatpush1.msra.mxu0 0.0
      %653 = vmatprep.subr.mxu0 0.0
      %654 = vmatpush1.msra.mxu0 0.0
      %655 = vmatprep.subr.mxu0 0.0
      %656 = vmatpush1.msra.mxu0 0.0
      %657 = vmatprep.subr.mxu0 0.0
      %658 = vmatpush1.msra.mxu0 0.0
      %659 = vmatprep.subr.mxu0 0.0
      %660 = vmatpush1.msra.mxu0 0.0
      %661 = vmatprep.subr.mxu0 0.0
      %662 = vmatpush1.msra.mxu0 0.0
      %663 = vmatprep.subr.mxu0 0.0
      %664 = vmatpush1.msra.mxu0 0.0
      %665 = vmatprep.subr.mxu0 0.0
      %666 = vmatpush1.msra.mxu0 0.0
      %667 = vmatprep.subr.mxu0 0.0
      %668 = vmatpush1.msra.mxu0 0.0
      %669 = vmatprep.subr.mxu0 0.0
      %670 = vmatpush1.msra.mxu0 0.0
      %671 = vmatprep.subr.mxu0 0.0
      %672 = vmatpush1.msra.mxu0 0.0
      %673 = vmatprep.subr.mxu0 0.0
      %674 = vmatpush1.msra.mxu0 0.0
      %675 = vmatprep.subr.mxu0 0.0
      %676 = vmatpush1.msra.mxu0 0.0
      %677 = vmatprep.subr.mxu0 0.0
      %678 = vmatpush1.msra.mxu0 0.0
      %679 = vmatprep.subr.mxu0 0.0
      %680 = vmatpush1.msra.mxu0 0.0
      %681 = vmatprep.subr.mxu0 0.0
      %682 = vmatpush1.msra.mxu0 0.0
      %683 = vmatprep.subr.mxu0 0.0
      %684 = vmatpush1.msra.mxu0 0.0
      %685 = vmatprep.subr.mxu0 0.0
      %686 = vmatpush1.msra.mxu0 0.0
      %687 = vmatprep.subr.mxu0 0.0
      %688 = vmatpush1.msra.mxu0 0.0
      %689 = vmatprep.subr.mxu0 0.0
      %690 = vmatpush1.msra.mxu0 0.0
      %691 = vmatprep.subr.mxu0 0.0
      %692 = vmatpush1.msra.mxu0 0.0
      %693 = vmatprep.subr.mxu0 0.0
      %694 = vmatpush1.msra.mxu0 0.0
      %695 = vmatprep.subr.mxu0 0.0
      %696 = vmatpush1.msra.mxu0 0.0
      %697 = vmatprep.subr.mxu0 0.0
      %698 = vmatpush1.msra.mxu0 0.0
      %699 = vmatprep.subr.mxu0 0.0
      %700 = vmatpush1.msra.mxu0 0.0
      %701 = vmatprep.subr.mxu0 0.0
      %702 = vmatpush1.msra.mxu0 0.0
      %703 = vmatprep.subr.mxu0 0.0
      %704 = vmatpush1.msra.mxu0 0.0
      %705 = vmatprep.subr.mxu0 0.0
      %706 = vmatpush1.msra.mxu0 0.0
      %707 = vmatprep.mubr.f32.mxu0 0.0
      %708 = vmatmul.mubr.f32.gmra.mrb[0].mxu0 %v641
      %v709 = vpop.f32.mrb[0].mxu0
      %v710 = vadd.f32 %v638, %v709
      %v711 = vpop.f32.mrb[0].mxu0
      %712 = vdwg.mxu0
      %v713 = vld [vmem:[%s31] sm:$0x1]
      %v714 = vld [vmem:[%s33] sm:$0x1]
      %v715 = vsel %vm220, %v710, 0.0
      %716 = vadd.xlane.f32.xlu0 %v715
      %v717 = vpop.xlane.xlu0 %716
      %v718 = vrcp.pop 32.0
      %v719 = vmul.f32 %v717, %v718
      %v720 = vsub.f32 %v710, %v719
      %v721 = vmul.f32 %v720, %v720
      %v722 = vsel %vm220, %v721, 0.0
      %723 = vadd.xlane.f32.xlu0 %v722
      %v724 = vpop.xlane.xlu0 %723
      %v725 = vmul.f32 %v724, %v718
      %v726 = vadd.f32 %v725, 1e-05
      %v727 = vrsqrt.pop %v726
      %v728 = vmul.f32 %v720, %v727
      %v730 = vlaneseq
      %v731 = vshrl.u32 %v730, 7
      %v732 = vsub.s32 0, %v731
      %v733 = vrot.slane %v713, %v732
      %v735 = vmul.f32 %v728, %v733
      %v737 = vlaneseq
      %v738 = vshrl.u32 %v737, 7
      %v739 = vsub.s32 0, %v738
      %v740 = vrot.slane %v714, %v739
      %v742 = vadd.f32 %v735, %v740
      %743 = vst.msk [vmem:[#allocation2] sm:$0xff] %vm220, %v742
      %v744 = vld [vmem:[%s9] sm:$0xff]
      %v745 = vadd.f32 %v742, %v744
      %v746 = vld [vmem:[%s35] sm:$0xff]
      %v747 = vld [vmem:[%s35 + $0x8] sm:$0xff]
      %v748 = vld [vmem:[%s35 + $0x10] sm:$0xff]
      %v749 = vld [vmem:[%s35 + $0x18] sm:$0xff]
      %v750 = vld [vmem:[%s37] sm:$0x1]
      %v752 = vlaneseq
      %v753 = vshrl.u32 %v752, 7
      %v754 = vsub.s32 0, %v753
      %v755 = vrot.slane %v750, %v754
      %v758 = vsel %vm220, %v745, 0
      %760 = vmatprep.subr.mxu0 0.0
      %761 = vmatpush1.msra.mxu0 %v746
      %762 = vmatprep.subr.mxu0 0.0
      %763 = vmatpush1.msra.mxu0 %v747
      %764 = vmatprep.subr.mxu0 0.0
      %765 = vmatpush1.msra.mxu0 %v748
      %766 = vmatprep.subr.mxu0 0.0
      %767 = vmatpush1.msra.mxu0 %v749
      %768 = vmatprep.subr.mxu0 0.0
      %769 = vmatpush1.msra.mxu0 0.0
      %770 = vmatprep.subr.mxu0 0.0
      %771 = vmatpush1.msra.mxu0 0.0
      %772 = vmatprep.subr.mxu0 0.0
      %773 = vmatpush1.msra.mxu0 0.0
      %774 = vmatprep.subr.mxu0 0.0
      %775 = vmatpush1.msra.mxu0 0.0
      %776 = vmatprep.subr.mxu0 0.0
      %777 = vmatpush1.msra.mxu0 0.0
      %778 = vmatprep.subr.mxu0 0.0
      %779 = vmatpush1.msra.mxu0 0.0
      %780 = vmatprep.subr.mxu0 0.0
      %781 = vmatpush1.msra.mxu0 0.0
      %782 = vmatprep.subr.mxu0 0.0
      %783 = vmatpush1.msra.mxu0 0.0
      %784 = vmatprep.subr.mxu0 0.0
      %785 = vmatpush1.msra.mxu0 0.0
      %786 = vmatprep.subr.mxu0 0.0
      %787 = vmatpush1.msra.mxu0 0.0
      %788 = vmatprep.subr.mxu0 0.0
      %789 = vmatpush1.msra.mxu0 0.0
      %790 = vmatprep.subr.mxu0 0.0
      %791 = vmatpush1.msra.mxu0 0.0
      %792 = vmatprep.subr.mxu0 0.0
      %793 = vmatpush1.msra.mxu0 0.0
      %794 = vmatprep.subr.mxu0 0.0
      %795 = vmatpush1.msra.mxu0 0.0
      %796 = vmatprep.subr.mxu0 0.0
      %797 = vmatpush1.msra.mxu0 0.0
      %798 = vmatprep.subr.mxu0 0.0
      %799 = vmatpush1.msra.mxu0 0.0
      %800 = vmatprep.subr.mxu0 0.0
      %801 = vmatpush1.msra.mxu0 0.0
      %802 = vmatprep.subr.mxu0 0.0
      %803 = vmatpush1.msra.mxu0 0.0
      %804 = vmatprep.subr.mxu0 0.0
      %805 = vmatpush1.msra.mxu0 0.0
      %806 = vmatprep.subr.mxu0 0.0
      %807 = vmatpush1.msra.mxu0 0.0
      %808 = vmatprep.subr.mxu0 0.0
      %809 = vmatpush1.msra.mxu0 0.0
      %810 = vmatprep.subr.mxu0 0.0
      %811 = vmatpush1.msra.mxu0 0.0
      %812 = vmatprep.subr.mxu0 0.0
      %813 = vmatpush1.msra.mxu0 0.0
      %814 = vmatprep.subr.mxu0 0.0
      %815 = vmatpush1.msra.mxu0 0.0
      %816 = vmatprep.subr.mxu0 0.0
      %817 = vmatpush1.msra.mxu0 0.0
      %818 = vmatprep.subr.mxu0 0.0
      %819 = vmatpush1.msra.mxu0 0.0
      %820 = vmatprep.subr.mxu0 0.0
      %821 = vmatpush1.msra.mxu0 0.0
      %822 = vmatprep.subr.mxu0 0.0
      %823 = vmatpush1.msra.mxu0 0.0
      %824 = vmatprep.mubr.f32.mxu0 0.0
      %825 = vmatmul.mubr.f32.gmra.mrb[0].mxu0 %v758
      %v826 = vpop.f32.mrb[0].mxu0
      %v827 = vadd.f32 %v755, %v826
      %v828 = vpop.f32.mrb[0].mxu0
      %829 = vdwg.mxu0
      %830 = vst.msk [vmem:[#allocation3] sm:$0xff] %vm220, %v827
      %vm831 = vcmask 7168
      %832 = vst.msk [vmem:[#allocation4] sm:$0xff] %vm831, -1e+30
      %833 = vst.msk [vmem:[#allocation5] sm:$0xff] %vm831, 0.0
      %834 = vst.msk [vmem:[#allocation6] sm:$0xff] %vm220, 0.0
    $region193: #{_lambda_.8} parent=1 // pred_fallthru
      _
    %v835 = vld [vmem:[%s1] sm:$0xff]
    %v836 = vld [vmem:[%s1 + $0x8] sm:$0xff]
    %v837 = vld [vmem:[%s1 + $0x10] sm:$0xff]
    %v838 = vld [vmem:[%s1 + $0x18] sm:$0xff]
    %v839 = vunpack.c.l.bf16 %v835
    %v840 = vunpack.c.h.bf16 %v835
    %v841 = vunpack.c.l.bf16 %v836
    %v842 = vunpack.c.h.bf16 %v836
    %v843 = vunpack.c.l.bf16 %v837
    %v844 = vunpack.c.h.bf16 %v837
    %v845 = vunpack.c.l.bf16 %v838
    %v846 = vunpack.c.h.bf16 %v838
    %v847 = vld [vmem:[%s3] sm:$0xff]
    %v848 = vld [vmem:[%s3 + $0x8] sm:$0xff]
    %v849 = vld [vmem:[%s3 + $0x10] sm:$0xff]
    %v850 = vld [vmem:[%s3 + $0x18] sm:$0xff]
    %v851 = vunpack.c.l.bf16 %v847
    %v852 = vunpack.c.h.bf16 %v847
    %v853 = vunpack.c.l.bf16 %v848
    %v854 = vunpack.c.h.bf16 %v848
    %v855 = vunpack.c.l.bf16 %v849
    %v856 = vunpack.c.h.bf16 %v849
    %v857 = vunpack.c.l.bf16 %v850
    %v858 = vunpack.c.h.bf16 %v850
    %v859 = vadd.f32 %v839, %v851
    %v860 = vadd.f32 %v840, %v852
    %v861 = vadd.f32 %v841, %v853
    %v862 = vadd.f32 %v842, %v854
    %v863 = vadd.f32 %v843, %v855
    %v864 = vadd.f32 %v844, %v856
    %v865 = vadd.f32 %v845, %v857
    %v866 = vadd.f32 %v846, %v858
    %v867 = vld [vmem:[%s39] sm:$0xff]
    %v868 = vld [vmem:[%s39 + $0x8] sm:$0xff]
    %v869 = vld [vmem:[%s39 + $0x10] sm:$0xff]
    %v870 = vld [vmem:[%s39 + $0x18] sm:$0xff]
    %v871 = vld [vmem:[%s41] sm:$0xff]
    %v872 = vld [vmem:[%s41 + $0x8] sm:$0xff]
    %v873 = vld [vmem:[%s41 + $0x10] sm:$0xff]
    %v874 = vld [vmem:[%s41 + $0x18] sm:$0xff]
    %876 = vset.pattern.permute.xlu0 0
    %877 = vperm.xlu0 %876, %v871
    %v878 = vpop.permute.xlu0 %877
    %881 = vset.pattern.permute.xlu0 0
    %882 = vperm.xlu0 %881, %v872
    %v883 = vpop.permute.xlu0 %882
    %886 = vset.pattern.permute.xlu0 0
    %887 = vperm.xlu0 %886, %v873
    %v888 = vpop.permute.xlu0 %887
    %891 = vset.pattern.permute.xlu0 0
    %892 = vperm.xlu0 %891, %v874
    %v893 = vpop.permute.xlu0 %892
    %vm895 = vcmask 261120
    %v897 = vsel %vm895, %v867, 0
    %v900 = vsel %vm895, %v868, 0
    %v903 = vsel %vm895, %v869, 0
    %v906 = vsel %vm895, %v870, 0
    %908 = vmatprep.subr.mxu0 %v860
    %909 = vmatpush1.msra.mxu0 %v859
    %910 = vmatprep.subr.mxu0 %v862
    %911 = vmatpush1.msra.mxu0 %v861
    %912 = vmatprep.subr.mxu0 %v864
    %913 = vmatpush1.msra.mxu0 %v863
    %914 = vmatprep.subr.mxu0 %v866
    %915 = vmatpush1.msra.mxu0 %v865
    %916 = vmatprep.subr.mxu0 0.0
    %917 = vmatpush1.msra.mxu0 0.0
    %918 = vmatprep.subr.mxu0 0.0
    %919 = vmatpush1.msra.mxu0 0.0
    %920 = vmatprep.subr.mxu0 0.0
    %921 = vmatpush1.msra.mxu0 0.0
    %922 = vmatprep.subr.mxu0 0.0
    %923 = vmatpush1.msra.mxu0 0.0
    %924 = vmatprep.subr.mxu0 0.0
    %925 = vmatpush1.msra.mxu0 0.0
    %926 = vmatprep.subr.mxu0 0.0
    %927 = vmatpush1.msra.mxu0 0.0
    %928 = vmatprep.subr.mxu0 0.0
    %929 = vmatpush1.msra.mxu0 0.0
    %930 = vmatprep.subr.mxu0 0.0
    %931 = vmatpush1.msra.mxu0 0.0
    %932 = vmatprep.subr.mxu0 0.0
    %933 = vmatpush1.msra.mxu0 0.0
    %934 = vmatprep.subr.mxu0 0.0
    %935 = vmatpush1.msra.mxu0 0.0
    %936 = vmatprep.subr.mxu0 0.0
    %937 = vmatpush1.msra.mxu0 0.0
    %938 = vmatprep.subr.mxu0 0.0
    %939 = vmatpush1.msra.mxu0 0.0
    %940 = vmatprep.subr.mxu0 0.0
    %941 = vmatpush1.msra.mxu0 0.0
    %942 = vmatprep.subr.mxu0 0.0
    %943 = vmatpush1.msra.mxu0 0.0
    %944 = vmatprep.subr.mxu0 0.0
    %945 = vmatpush1.msra.mxu0 0.0
    %946 = vmatprep.subr.mxu0 0.0
    %947 = vmatpush1.msra.mxu0 0.0
    %948 = vmatprep.subr.mxu0 0.0
    %949 = vmatpush1.msra.mxu0 0.0
    %950 = vmatprep.subr.mxu0 0.0
    %951 = vmatpush1.msra.mxu0 0.0
    %952 = vmatprep.subr.mxu0 0.0
    %953 = vmatpush1.msra.mxu0 0.0
    %954 = vmatprep.subr.mxu0 0.0
    %955 = vmatpush1.msra.mxu0 0.0
    %956 = vmatprep.subr.mxu0 0.0
    %957 = vmatpush1.msra.mxu0 0.0
    %958 = vmatprep.subr.mxu0 0.0
    %959 = vmatpush1.msra.mxu0 0.0
    %960 = vmatprep.subr.mxu0 0.0
    %961 = vmatpush1.msra.mxu0 0.0
    %962 = vmatprep.subr.mxu0 0.0
    %963 = vmatpush1.msra.mxu0 0.0
    %964 = vmatprep.subr.mxu0 0.0
    %965 = vmatpush1.msra.mxu0 0.0
    %966 = vmatprep.subr.mxu0 0.0
    %967 = vmatpush1.msra.mxu0 0.0
    %968 = vmatprep.subr.mxu0 0.0
    %969 = vmatpush1.msra.mxu0 0.0
    %970 = vmatprep.subr.mxu0 0.0
    %971 = vmatpush1.msra.mxu0 0.0
    %972 = vmatprep.mubr.f32.mxu0 0.0
    %973 = vmatmul.mubr.f32.gmra.mrb[0].mxu0 %v897
    %v974 = vpop.f32.mrb[0].mxu0
    %v975 = vadd.f32 %v878, %v974
    %v976 = vpop.f32.mrb[0].mxu0
    %v977 = vadd.f32 %v878, %v976
    %978 = vmatprep.mubr.f32.mxu0 0.0
    %979 = vmatmul.mubr.f32.gmra.mrb[0].mxu0 %v900
    %v980 = vpop.f32.mrb[0].mxu0
    %v981 = vadd.f32 %v883, %v980
    %v982 = vpop.f32.mrb[0].mxu0
    %v983 = vadd.f32 %v883, %v982
    %984 = vmatprep.mubr.f32.mxu0 0.0
    %985 = vmatmul.mubr.f32.gmra.mrb[0].mxu0 %v903
    %v986 = vpop.f32.mrb[0].mxu0
    %v987 = vadd.f32 %v888, %v986
    %v988 = vpop.f32.mrb[0].mxu0
    %v989 = vadd.f32 %v888, %v988
    %990 = vmatprep.mubr.f32.mxu0 0.0
    %991 = vmatmul.mubr.f32.gmra.mrb[0].mxu0 %v906
    %v992 = vpop.f32.mrb[0].mxu0
    %v993 = vadd.f32 %v893, %v992
    %v994 = vpop.f32.mrb[0].mxu0
    %v995 = vadd.f32 %v893, %v994
    %996 = vdwg.mxu0
    %v997 = vld [vmem:[%s43] sm:$0xff]
    %v998 = vld [vmem:[%s43 + $0x8] sm:$0xff]
    %v999 = vld [vmem:[%s43 + $0x10] sm:$0xff]
    %v1000 = vld [vmem:[%s43 + $0x18] sm:$0xff]
    %v1001 = vld [vmem:[%s45] sm:$0xff]
    %v1002 = vld [vmem:[%s45 + $0x8] sm:$0xff]
    %v1003 = vld [vmem:[%s45 + $0x10] sm:$0xff]
    %v1004 = vld [vmem:[%s45 + $0x18] sm:$0xff]
    %1006 = vset.pattern.permute.xlu0 0
    %1007 = vperm.xlu0 %1006, %v1001
    %v1008 = vpop.permute.xlu0 %1007
    %1011 = vset.pattern.permute.xlu0 0
    %1012 = vperm.xlu0 %1011, %v1002
    %v1013 = vpop.permute.xlu0 %1012
    %1016 = vset.pattern.permute.xlu0 0
    %1017 = vperm.xlu0 %1016, %v1003
    %v1018 = vpop.permute.xlu0 %1017
    %1021 = vset.pattern.permute.xlu0 0
    %1022 = vperm.xlu0 %1021, %v1004
    %v1023 = vpop.permute.xlu0 %1022
    %v1026 = vsel %vm895, %v997, 0
    %v1029 = vsel %vm895, %v998, 0
    %v1032 = vsel %vm895, %v999, 0
    %v1035 = vsel %vm895, %v1000, 0
    %1037 = vmatprep.subr.mxu0 %v840
    %1038 = vmatpush1.msra.mxu0 %v839
    %1039 = vmatprep.subr.mxu0 %v842
    %1040 = vmatpush1.msra.mxu0 %v841
    %1041 = vmatprep.subr.mxu0 %v844
    %1042 = vmatpush1.msra.mxu0 %v843
    %1043 = vmatprep.subr.mxu0 %v846
    %1044 = vmatpush1.msra.mxu0 %v845
    %1045 = vmatprep.subr.mxu0 0.0
    %1046 = vmatpush1.msra.mxu0 0.0
    %1047 = vmatprep.subr.mxu0 0.0
    %1048 = vmatpush1.msra.mxu0 0.0
    %1049 = vmatprep.subr.mxu0 0.0
    %1050 = vmatpush1.msra.mxu0 0.0
    %1051 = vmatprep.subr.mxu0 0.0
    %1052 = vmatpush1.msra.mxu0 0.0
    %1053 = vmatprep.subr.mxu0 0.0
    %1054 = vmatpush1.msra.mxu0 0.0
    %1055 = vmatprep.subr.mxu0 0.0
    %1056 = vmatpush1.msra.mxu0 0.0
    %1057 = vmatprep.subr.mxu0 0.0
    %1058 = vmatpush1.msra.mxu0 0.0
    %1059 = vmatprep.subr.mxu0 0.0
    %1060 = vmatpush1.msra.mxu0 0.0
    %1061 = vmatprep.subr.mxu0 0.0
    %1062 = vmatpush1.msra.mxu0 0.0
    %1063 = vmatprep.subr.mxu0 0.0
    %1064 = vmatpush1.msra.mxu0 0.0
    %1065 = vmatprep.subr.mxu0 0.0
    %1066 = vmatpush1.msra.mxu0 0.0
    %1067 = vmatprep.subr.mxu0 0.0
    %1068 = vmatpush1.msra.mxu0 0.0
    %1069 = vmatprep.subr.mxu0 0.0
    %1070 = vmatpush1.msra.mxu0 0.0
    %1071 = vmatprep.subr.mxu0 0.0
    %1072 = vmatpush1.msra.mxu0 0.0
    %1073 = vmatprep.subr.mxu0 0.0
    %1074 = vmatpush1.msra.mxu0 0.0
    %1075 = vmatprep.subr.mxu0 0.0
    %1076 = vmatpush1.msra.mxu0 0.0
    %1077 = vmatprep.subr.mxu0 0.0
    %1078 = vmatpush1.msra.mxu0 0.0
    %1079 = vmatprep.subr.mxu0 0.0
    %1080 = vmatpush1.msra.mxu0 0.0
    %1081 = vmatprep.subr.mxu0 0.0
    %1082 = vmatpush1.msra.mxu0 0.0
    %1083 = vmatprep.subr.mxu0 0.0
    %1084 = vmatpush1.msra.mxu0 0.0
    %1085 = vmatprep.subr.mxu0 0.0
    %1086 = vmatpush1.msra.mxu0 0.0
    %1087 = vmatprep.subr.mxu0 0.0
    %1088 = vmatpush1.msra.mxu0 0.0
    %1089 = vmatprep.subr.mxu0 0.0
    %1090 = vmatpush1.msra.mxu0 0.0
    %1091 = vmatprep.subr.mxu0 0.0
    %1092 = vmatpush1.msra.mxu0 0.0
    %1093 = vmatprep.subr.mxu0 0.0
    %1094 = vmatpush1.msra.mxu0 0.0
    %1095 = vmatprep.subr.mxu0 0.0
    %1096 = vmatpush1.msra.mxu0 0.0
    %1097 = vmatprep.subr.mxu0 0.0
    %1098 = vmatpush1.msra.mxu0 0.0
    %1099 = vmatprep.subr.mxu0 0.0
    %1100 = vmatpush1.msra.mxu0 0.0
    %1101 = vmatprep.mubr.f32.mxu0 0.0
    %1102 = vmatmul.mubr.f32.gmra.mrb[0].mxu0 %v1026
    %v1103 = vpop.f32.mrb[0].mxu0
    %v1104 = vadd.f32 %v1008, %v1103
    %v1105 = vpop.f32.mrb[0].mxu0
    %v1106 = vadd.f32 %v1008, %v1105
    %1107 = vmatprep.mubr.f32.mxu0 0.0
    %1108 = vmatmul.mubr.f32.gmra.mrb[0].mxu0 %v1029
    %v1109 = vpop.f32.mrb[0].mxu0
    %v1110 = vadd.f32 %v1013, %v1109
    %v1111 = vpop.f32.mrb[0].mxu0
    %v1112 = vadd.f32 %v1013, %v1111
    %1113 = vmatprep.mubr.f32.mxu0 0.0
    %1114 = vmatmul.mubr.f32.gmra.mrb[0].mxu0 %v1032
    %v1115 = vpop.f32.mrb[0].mxu0
    %v1116 = vadd.f32 %v1018, %v1115
    %v1117 = vpop.f32.mrb[0].mxu0
    %v1118 = vadd.f32 %v1018, %v1117
    %1119 = vmatprep.mubr.f32.mxu0 0.0
    %1120 = vmatmul.mubr.f32.gmra.mrb[0].mxu0 %v1035
    %v1121 = vpop.f32.mrb[0].mxu0
    %v1122 = vadd.f32 %v1023, %v1121
    %v1123 = vpop.f32.mrb[0].mxu0
    %v1124 = vadd.f32 %v1023, %v1123
    %1125 = vdwg.mxu0
    %v1126 = vld [vmem:[#allocation3] sm:$0xff]
    %v1128 = vsel %vm895, %v1126, 0
    %1130 = vmatprep.subr.mxu0 %v977
    %1131 = vmatpush1.msra.mxu0 %v975
    %1132 = vmatprep.subr.mxu0 %v983
    %1133 = vmatpush1.msra.mxu0 %v981
    %1134 = vmatprep.subr.mxu0 %v989
    %1135 = vmatpush1.msra.mxu0 %v987
    %1136 = vmatprep.subr.mxu0 %v995
    %1137 = vmatpush1.msra.mxu0 %v993
    %1138 = vmatprep.subr.mxu0 0.0
    %1139 = vmatpush1.msra.mxu0 0.0
    %1140 = vmatprep.subr.mxu0 0.0
    %1141 = vmatpush1.msra.mxu0 0.0
    %1142 = vmatprep.subr.mxu0 0.0
    %1143 = vmatpush1.msra.mxu0 0.0
    %1144 = vmatprep.subr.mxu0 0.0
    %1145 = vmatpush1.msra.mxu0 0.0
    %1146 = vmatprep.subr.mxu0 0.0
    %1147 = vmatpush1.msra.mxu0 0.0
    %1148 = vmatprep.subr.mxu0 0.0
    %1149 = vmatpush1.msra.mxu0 0.0
    %1150 = vmatprep.subr.mxu0 0.0
    %1151 = vmatpush1.msra.mxu0 0.0
    %1152 = vmatprep.subr.mxu0 0.0
    %1153 = vmatpush1.msra.mxu0 0.0
    %1154 = vmatprep.subr.mxu0 0.0
    %1155 = vmatpush1.msra.mxu0 0.0
    %1156 = vmatprep.subr.mxu0 0.0
    %1157 = vmatpush1.msra.mxu0 0.0
    %1158 = vmatprep.subr.mxu0 0.0
    %1159 = vmatpush1.msra.mxu0 0.0
    %1160 = vmatprep.subr.mxu0 0.0
    %1161 = vmatpush1.msra.mxu0 0.0
    %1162 = vmatprep.subr.mxu0 0.0
    %1163 = vmatpush1.msra.mxu0 0.0
    %1164 = vmatprep.subr.mxu0 0.0
    %1165 = vmatpush1.msra.mxu0 0.0
    %1166 = vmatprep.subr.mxu0 0.0
    %1167 = vmatpush1.msra.mxu0 0.0
    %1168 = vmatprep.subr.mxu0 0.0
    %1169 = vmatpush1.msra.mxu0 0.0
    %1170 = vmatprep.subr.mxu0 0.0
    %1171 = vmatpush1.msra.mxu0 0.0
    %1172 = vmatprep.subr.mxu0 0.0
    %1173 = vmatpush1.msra.mxu0 0.0
    %1174 = vmatprep.subr.mxu0 0.0
    %1175 = vmatpush1.msra.mxu0 0.0
    %1176 = vmatprep.subr.mxu0 0.0
    %1177 = vmatpush1.msra.mxu0 0.0
    %1178 = vmatprep.subr.mxu0 0.0
    %1179 = vmatpush1.msra.mxu0 0.0
    %1180 = vmatprep.subr.mxu0 0.0
    %1181 = vmatpush1.msra.mxu0 0.0
    %1182 = vmatprep.subr.mxu0 0.0
    %1183 = vmatpush1.msra.mxu0 0.0
    %1184 = vmatprep.subr.mxu0 0.0
    %1185 = vmatpush1.msra.mxu0 0.0
    %1186 = vmatprep.subr.mxu0 0.0
    %1187 = vmatpush1.msra.mxu0 0.0
    %1188 = vmatprep.subr.mxu0 0.0
    %1189 = vmatpush1.msra.mxu0 0.0
    %1190 = vmatprep.subr.mxu0 0.0
    %1191 = vmatpush1.msra.mxu0 0.0
    %1192 = vmatprep.subr.mxu0 0.0
    %1193 = vmatpush1.msra.mxu0 0.0
    %1194 = vmatprep.mubr.f32.mxu0 0.0
    %1195 = vmatmul.mubr.f32.gmra.mrb[0].mxu0 %v1128
    %v1196 = vpop.f32.mrb[0].mxu0
    %v1197 = vadd.f32 0.0, %v1196
    %v1198 = vpop.f32.mrb[0].mxu0
    %v1199 = vadd.f32 0.0, %v1198
    %1200 = vdwg.mxu0
    %v1201 = vmul.f32 %v1197, 0.17677669
    %v1202 = vmul.f32 %v1199, 0.17677669
    %v1203 = vld [vmem:[%s11] sm:$0xff]
    %v1204 = vld [vmem:[%s5] sm:$0x3]
    %1205 = vset.pattern.permute.xlu0 0
    %1206 = vperm.xlu0 %1205, %v1203
    %v1207 = vpop.permute.xlu0 %1206
    %v1208 = vlaneseq
    %v1209 = vshrl.u32 %v1208, 7
    %v1210 = vsub.s32 0, %v1209
    %v1211 = vrot.slane %v1204, %v1210
    %v1212 = vlaneseq
    %v1213 = vshrl.u32 %v1212, 7
    %v1214 = vsub.s32 1, %v1213
    %v1215 = vrot.slane %v1204, %v1214
    %vm1216 = vcmp.eq.s32.totalorder %v1207, %v1211
    %vm1217 = vcmp.eq.s32.totalorder %v1207, %v1215
    %v1218 = vsel %vm1216, %v1201, -1e+09
    %v1219 = vsel %vm1217, %v1202, -1e+09
    %v1220 = vld [vmem:[#allocation4] sm:$0xff]
    %v1221 = vmax.f32 %v1218, %v1219
    %1222 = vmax.xlane.f32.xlu0 %v1221
    %v1223 = vpop.xlane.xlu0 %1222
    %v1224 = vmax.f32 %v1220, %v1223
    %v1225 = vsub.f32 %v1220, %v1224
    %v1226 = vmul.f32 %v1225, 1.442695
    %v1227 = vpow.pop %v1226
    %1229 = vset.pattern.permute.xlu0 0
    %1230 = vperm.xlu0 %1229, %v1224
    %v1231 = vpop.permute.xlu0 %1230
    %v1233 = vsub.f32 %v1218, %v1231
    %v1234 = vsub.f32 %v1219, %v1231
    %v1235 = vmul.f32 %v1233, 1.442695
    %v1236 = vpow.pop %v1235
    %v1237 = vmul.f32 %v1234, 1.442695
    %v1238 = vpow.pop %v1237
    %v1239 = vld [vmem:[#allocation5] sm:$0xff]
    %v1240 = vmul.f32 %v1227, %v1239
    %v1241 = vadd.f32 %v1236, %v1238
    %1242 = vadd.xlane.f32.xlu0 %v1241
    %v1243 = vpop.xlane.xlu0 %1242
    %v1244 = vadd.f32 %v1240, %v1243
    %vm1245 = vcmask 7168
    %1246 = vst.msk [vmem:[#allocation5] sm:$0xff] %vm1245, %v1244
    %v1247 = vld [vmem:[#allocation6] sm:$0xff]
    %1249 = vset.pattern.permute.xlu0 0
    %1250 = vperm.xlu0 %1249, %v1227
    %v1251 = vpop.permute.xlu0 %1250
    %v1253 = vmul.f32 %v1251, %v1247
    %1254 = vmatprep.subr.mxu0 %v1106
    %1255 = vmatpush1.xpose.msra.mxu0 %v1104
    %1256 = vmatprep.subr.mxu0 %v1112
    %1257 = vmatpush1.xpose.msra.mxu0 %v1110
    %1258 = vmatprep.subr.mxu0 %v1118
    %1259 = vmatpush1.xpose.msra.mxu0 %v1116
    %1260 = vmatprep.subr.mxu0 %v1124
    %1261 = vmatpush1.xpose.msra.mxu0 %v1122
    %1262 = vmatprep.subr.mxu0 0.0
    %1263 = vmatpush1.xpose.msra.mxu0 0.0
    %1264 = vmatprep.subr.mxu0 0.0
    %1265 = vmatpush1.xpose.msra.mxu0 0.0
    %1266 = vmatprep.subr.mxu0 0.0
    %1267 = vmatpush1.xpose.msra.mxu0 0.0
    %1268 = vmatprep.subr.mxu0 0.0
    %1269 = vmatpush1.xpose.msra.mxu0 0.0
    %1270 = vmatprep.subr.mxu0 0.0
    %1271 = vmatpush1.xpose.msra.mxu0 0.0
    %1272 = vmatprep.subr.mxu0 0.0
    %1273 = vmatpush1.xpose.msra.mxu0 0.0
    %1274 = vmatprep.subr.mxu0 0.0
    %1275 = vmatpush1.xpose.msra.mxu0 0.0
    %1276 = vmatprep.subr.mxu0 0.0
    %1277 = vmatpush1.xpose.msra.mxu0 0.0
    %1278 = vmatprep.subr.mxu0 0.0
    %1279 = vmatpush1.xpose.msra.mxu0 0.0
    %1280 = vmatprep.subr.mxu0 0.0
    %1281 = vmatpush1.xpose.msra.mxu0 0.0
    %1282 = vmatprep.subr.mxu0 0.0
    %1283 = vmatpush1.xpose.msra.mxu0 0.0
    %1284 = vmatprep.subr.mxu0 0.0
    %1285 = vmatpush1.xpose.msra.mxu0 0.0
    %1286 = vmatprep.subr.mxu0 0.0
    %1287 = vmatpush1.xpose.msra.mxu0 0.0
    %1288 = vmatprep.subr.mxu0 0.0
    %1289 = vmatpush1.xpose.msra.mxu0 0.0
    %1290 = vmatprep.subr.mxu0 0.0
    %1291 = vmatpush1.xpose.msra.mxu0 0.0
    %1292 = vmatprep.subr.mxu0 0.0
    %1293 = vmatpush1.xpose.msra.mxu0 0.0
    %1294 = vmatprep.subr.mxu0 0.0
    %1295 = vmatpush1.xpose.msra.mxu0 0.0
    %1296 = vmatprep.subr.mxu0 0.0
    %1297 = vmatpush1.xpose.msra.mxu0 0.0
    %1298 = vmatprep.subr.mxu0 0.0
    %1299 = vmatpush1.xpose.msra.mxu0 0.0
    %1300 = vmatprep.subr.mxu0 0.0
    %1301 = vmatpush1.xpose.msra.mxu0 0.0
    %1302 = vmatprep.subr.mxu0 0.0
    %1303 = vmatpush1.xpose.msra.mxu0 0.0
    %1304 = vmatprep.subr.mxu0 0.0
    %1305 = vmatpush1.xpose.msra.mxu0 0.0
    %1306 = vmatprep.subr.mxu0 0.0
    %1307 = vmatpush1.xpose.msra.mxu0 0.0
    %1308 = vmatprep.subr.mxu0 0.0
    %1309 = vmatpush1.xpose.msra.mxu0 0.0
    %1310 = vmatprep.subr.mxu0 0.0
    %1311 = vmatpush1.xpose.msra.mxu0 0.0
    %1312 = vmatprep.subr.mxu0 0.0
    %1313 = vmatpush1.xpose.msra.mxu0 0.0
    %1314 = vmatprep.subr.mxu0 0.0
    %1315 = vmatpush1.xpose.msra.mxu0 0.0
    %1316 = vmatprep.subr.mxu0 0.0
    %1317 = vmatpush1.xpose.msra.mxu0 0.0
    %1318 = vmatprep.mubr.f32.mxu0 %v1238
    %1319 = vmatmul.mubr.f32.gmra.mrb[0].mxu0 %v1236
    %v1320 = vpop.f32.mrb[0].mxu0
    %v1321 = vadd.f32 0.0, %v1320
    %v1322 = vpop.f32.mrb[0].mxu0
    %1323 = vdwg.mxu0
    %v1324 = vadd.f32 %v1253, %v1321
    %1325 = vst.msk [vmem:[#allocation6] sm:$0xff] %vm895, %v1324
    %1326 = vst.msk [vmem:[#allocation4] sm:$0xff] %vm1245, %v1224
    // Predicated region
    $region194: #{_lambda_.8} parent=1 // pred_check
      %p1327 = pneg %p204
    $region195: #{_lambda_.8} parent=1 // pred_check_branch
      %1329 = sbr.rel (%p1327) target = $region197
    $region196: #{_lambda_.8} parent=1 // pred_region
      %v1330 = vld [vmem:[#allocation6] sm:$0xff]
      %v1331 = vld [vmem:[#allocation5] sm:$0xff]
      %v1332 = vrcp.pop %v1331
      %1334 = vset.pattern.permute.xlu0 0
      %1335 = vperm.xlu0 %1334, %v1332
      %v1336 = vpop.permute.xlu0 %1335
      %v1338 = vmul.f32 %v1330, %v1336
      %v1339 = vld [vmem:[%s47] sm:$0xff]
      %v1340 = vld [vmem:[%s47 + $0x8] sm:$0xff]
      %v1341 = vld [vmem:[%s47 + $0x10] sm:$0xff]
      %v1342 = vld [vmem:[%s47 + $0x18] sm:$0xff]
      %v1343 = vld [vmem:[%s49] sm:$0x1]
      %v1345 = vlaneseq
      %v1346 = vshrl.u32 %v1345, 7
      %v1347 = vsub.s32 0, %v1346
      %v1348 = vrot.slane %v1343, %v1347
      %v1351 = vsel %vm895, %v1338, 0
      %1353 = vmatprep.subr.mxu0 0.0
      %1354 = vmatpush1.msra.mxu0 %v1339
      %1355 = vmatprep.subr.mxu0 0.0
      %1356 = vmatpush1.msra.mxu0 %v1340
      %1357 = vmatprep.subr.mxu0 0.0
      %1358 = vmatpush1.msra.mxu0 %v1341
      %1359 = vmatprep.subr.mxu0 0.0
      %1360 = vmatpush1.msra.mxu0 %v1342
      %1361 = vmatprep.subr.mxu0 0.0
      %1362 = vmatpush1.msra.mxu0 0.0
      %1363 = vmatprep.subr.mxu0 0.0
      %1364 = vmatpush1.msra.mxu0 0.0
      %1365 = vmatprep.subr.mxu0 0.0
      %1366 = vmatpush1.msra.mxu0 0.0
      %1367 = vmatprep.subr.mxu0 0.0
      %1368 = vmatpush1.msra.mxu0 0.0
      %1369 = vmatprep.subr.mxu0 0.0
      %1370 = vmatpush1.msra.mxu0 0.0
      %1371 = vmatprep.subr.mxu0 0.0
      %1372 = vmatpush1.msra.mxu0 0.0
      %1373 = vmatprep.subr.mxu0 0.0
      %1374 = vmatpush1.msra.mxu0 0.0
      %1375 = vmatprep.subr.mxu0 0.0
      %1376 = vmatpush1.msra.mxu0 0.0
      %1377 = vmatprep.subr.mxu0 0.0
      %1378 = vmatpush1.msra.mxu0 0.0
      %1379 = vmatprep.subr.mxu0 0.0
      %1380 = vmatpush1.msra.mxu0 0.0
      %1381 = vmatprep.subr.mxu0 0.0
      %1382 = vmatpush1.msra.mxu0 0.0
      %1383 = vmatprep.subr.mxu0 0.0
      %1384 = vmatpush1.msra.mxu0 0.0
      %1385 = vmatprep.subr.mxu0 0.0
      %1386 = vmatpush1.msra.mxu0 0.0
      %1387 = vmatprep.subr.mxu0 0.0
      %1388 = vmatpush1.msra.mxu0 0.0
      %1389 = vmatprep.subr.mxu0 0.0
      %1390 = vmatpush1.msra.mxu0 0.0
      %1391 = vmatprep.subr.mxu0 0.0
      %1392 = vmatpush1.msra.mxu0 0.0
      %1393 = vmatprep.subr.mxu0 0.0
      %1394 = vmatpush1.msra.mxu0 0.0
      %1395 = vmatprep.subr.mxu0 0.0
      %1396 = vmatpush1.msra.mxu0 0.0
      %1397 = vmatprep.subr.mxu0 0.0
      %1398 = vmatpush1.msra.mxu0 0.0
      %1399 = vmatprep.subr.mxu0 0.0
      %1400 = vmatpush1.msra.mxu0 0.0
      %1401 = vmatprep.subr.mxu0 0.0
      %1402 = vmatpush1.msra.mxu0 0.0
      %1403 = vmatprep.subr.mxu0 0.0
      %1404 = vmatpush1.msra.mxu0 0.0
      %1405 = vmatprep.subr.mxu0 0.0
      %1406 = vmatpush1.msra.mxu0 0.0
      %1407 = vmatprep.subr.mxu0 0.0
      %1408 = vmatpush1.msra.mxu0 0.0
      %1409 = vmatprep.subr.mxu0 0.0
      %1410 = vmatpush1.msra.mxu0 0.0
      %1411 = vmatprep.subr.mxu0 0.0
      %1412 = vmatpush1.msra.mxu0 0.0
      %1413 = vmatprep.subr.mxu0 0.0
      %1414 = vmatpush1.msra.mxu0 0.0
      %1415 = vmatprep.subr.mxu0 0.0
      %1416 = vmatpush1.msra.mxu0 0.0
      %1417 = vmatprep.mubr.f32.mxu0 0.0
      %1418 = vmatmul.mubr.f32.gmra.mrb[0].mxu0 %v1351
      %v1419 = vpop.f32.mrb[0].mxu0
      %v1420 = vadd.f32 %v1348, %v1419
      %v1421 = vpop.f32.mrb[0].mxu0
      %1422 = vdwg.mxu0
      %v1423 = vld [vmem:[#allocation2] sm:$0xff]
      %v1424 = vadd.f32 %v1423, %v1420
      %v1425 = vld [vmem:[%s51] sm:$0x1]
      %v1426 = vld [vmem:[%s53] sm:$0x1]
      %v1427 = vsel %vm895, %v1424, 0.0
      %1428 = vadd.xlane.f32.xlu0 %v1427
      %v1429 = vpop.xlane.xlu0 %1428
      %v1430 = vrcp.pop 32.0
      %v1431 = vmul.f32 %v1429, %v1430
      %v1432 = vsub.f32 %v1424, %v1431
      %v1433 = vmul.f32 %v1432, %v1432
      %v1434 = vsel %vm895, %v1433, 0.0
      %1435 = vadd.xlane.f32.xlu0 %v1434
      %v1436 = vpop.xlane.xlu0 %1435
      %v1437 = vmul.f32 %v1436, %v1430
      %v1438 = vadd.f32 %v1437, 1e-05
      %v1439 = vrsqrt.pop %v1438
      %v1440 = vmul.f32 %v1432, %v1439
      %v1442 = vlaneseq
      %v1443 = vshrl.u32 %v1442, 7
      %v1444 = vsub.s32 0, %v1443
      %v1445 = vrot.slane %v1425, %v1444
      %v1447 = vmul.f32 %v1440, %v1445
      %v1449 = vlaneseq
      %v1450 = vshrl.u32 %v1449, 7
      %v1451 = vsub.s32 0, %v1450
      %v1452 = vrot.slane %v1426, %v1451
      %v1454 = vadd.f32 %v1447, %v1452
      %v1455 = vld [vmem:[%s55] sm:$0xff]
      %v1456 = vld [vmem:[%s55 + $0x8] sm:$0xff]
      %v1457 = vld [vmem:[%s55 + $0x10] sm:$0xff]
      %v1458 = vld [vmem:[%s55 + $0x18] sm:$0xff]
      %v1459 = vld [vmem:[%s57] sm:$0x1]
      %v1461 = vlaneseq
      %v1462 = vshrl.u32 %v1461, 7
      %v1463 = vsub.s32 0, %v1462
      %v1464 = vrot.slane %v1459, %v1463
      %v1467 = vsel %vm895, %v1454, 0
      %1469 = vmatprep.subr.mxu0 0.0
      %1470 = vmatpush1.msra.mxu0 %v1455
      %1471 = vmatprep.subr.mxu0 0.0
      %1472 = vmatpush1.msra.mxu0 %v1456
      %1473 = vmatprep.subr.mxu0 0.0
      %1474 = vmatpush1.msra.mxu0 %v1457
      %1475 = vmatprep.subr.mxu0 0.0
      %1476 = vmatpush1.msra.mxu0 %v1458
      %1477 = vmatprep.subr.mxu0 0.0
      %1478 = vmatpush1.msra.mxu0 0.0
      %1479 = vmatprep.subr.mxu0 0.0
      %1480 = vmatpush1.msra.mxu0 0.0
      %1481 = vmatprep.subr.mxu0 0.0
      %1482 = vmatpush1.msra.mxu0 0.0
      %1483 = vmatprep.subr.mxu0 0.0
      %1484 = vmatpush1.msra.mxu0 0.0
      %1485 = vmatprep.subr.mxu0 0.0
      %1486 = vmatpush1.msra.mxu0 0.0
      %1487 = vmatprep.subr.mxu0 0.0
      %1488 = vmatpush1.msra.mxu0 0.0
      %1489 = vmatprep.subr.mxu0 0.0
      %1490 = vmatpush1.msra.mxu0 0.0
      %1491 = vmatprep.subr.mxu0 0.0
      %1492 = vmatpush1.msra.mxu0 0.0
      %1493 = vmatprep.subr.mxu0 0.0
      %1494 = vmatpush1.msra.mxu0 0.0
      %1495 = vmatprep.subr.mxu0 0.0
      %1496 = vmatpush1.msra.mxu0 0.0
      %1497 = vmatprep.subr.mxu0 0.0
      %1498 = vmatpush1.msra.mxu0 0.0
      %1499 = vmatprep.subr.mxu0 0.0
      %1500 = vmatpush1.msra.mxu0 0.0
      %1501 = vmatprep.subr.mxu0 0.0
      %1502 = vmatpush1.msra.mxu0 0.0
      %1503 = vmatprep.subr.mxu0 0.0
      %1504 = vmatpush1.msra.mxu0 0.0
      %1505 = vmatprep.subr.mxu0 0.0
      %1506 = vmatpush1.msra.mxu0 0.0
      %1507 = vmatprep.subr.mxu0 0.0
      %1508 = vmatpush1.msra.mxu0 0.0
      %1509 = vmatprep.subr.mxu0 0.0
      %1510 = vmatpush1.msra.mxu0 0.0
      %1511 = vmatprep.subr.mxu0 0.0
      %1512 = vmatpush1.msra.mxu0 0.0
      %1513 = vmatprep.subr.mxu0 0.0
      %1514 = vmatpush1.msra.mxu0 0.0
      %1515 = vmatprep.subr.mxu0 0.0
      %1516 = vmatpush1.msra.mxu0 0.0
      %1517 = vmatprep.subr.mxu0 0.0
      %1518 = vmatpush1.msra.mxu0 0.0
      %1519 = vmatprep.subr.mxu0 0.0
      %1520 = vmatpush1.msra.mxu0 0.0
      %1521 = vmatprep.subr.mxu0 0.0
      %1522 = vmatpush1.msra.mxu0 0.0
      %1523 = vmatprep.subr.mxu0 0.0
      %1524 = vmatpush1.msra.mxu0 0.0
      %1525 = vmatprep.subr.mxu0 0.0
      %1526 = vmatpush1.msra.mxu0 0.0
      %1527 = vmatprep.subr.mxu0 0.0
      %1528 = vmatpush1.msra.mxu0 0.0
      %1529 = vmatprep.subr.mxu0 0.0
      %1530 = vmatpush1.msra.mxu0 0.0
      %1531 = vmatprep.subr.mxu0 0.0
      %1532 = vmatpush1.msra.mxu0 0.0
      %1533 = vmatprep.mubr.f32.mxu0 0.0
      %1534 = vmatmul.mubr.f32.gmra.mrb[0].mxu0 %v1467
      %v1535 = vpop.f32.mrb[0].mxu0
      %v1536 = vadd.f32 %v1464, %v1535
      %v1537 = vpop.f32.mrb[0].mxu0
      %1538 = vdwg.mxu0
      %v1539 = vmax.f32 %v1536, 0.0
      %v1540 = vld [vmem:[%s59] sm:$0xff]
      %v1541 = vld [vmem:[%s59 + $0x8] sm:$0xff]
      %v1542 = vld [vmem:[%s59 + $0x10] sm:$0xff]
      %v1543 = vld [vmem:[%s59 + $0x18] sm:$0xff]
      %v1544 = vld [vmem:[%s59 + $0x20] sm:$0xff]
      %v1545 = vld [vmem:[%s59 + $0x28] sm:$0xff]
      %v1546 = vld [vmem:[%s59 + $0x30] sm:$0xff]
      %v1547 = vld [vmem:[%s59 + $0x38] sm:$0xff]
      %vm1548 = vcmask 523264
      %v1550 = vsel %vm1548, %v1539, 0
      %1552 = vmatprep.subr.mxu0 0.0
      %1553 = vmatpush1.msra.mxu0 %v1540
      %1554 = vmatprep.subr.mxu0 0.0
      %1555 = vmatpush1.msra.mxu0 %v1541
      %1556 = vmatprep.subr.mxu0 0.0
      %1557 = vmatpush1.msra.mxu0 %v1542
      %1558 = vmatprep.subr.mxu0 0.0
      %1559 = vmatpush1.msra.mxu0 %v1543
      %1560 = vmatprep.subr.mxu0 0.0
      %1561 = vmatpush1.msra.mxu0 %v1544
      %1562 = vmatprep.subr.mxu0 0.0
      %1563 = vmatpush1.msra.mxu0 %v1545
      %1564 = vmatprep.subr.mxu0 0.0
      %1565 = vmatpush1.msra.mxu0 %v1546
      %1566 = vmatprep.subr.mxu0 0.0
      %1567 = vmatpush1.msra.mxu0 %v1547
      %1568 = vmatprep.subr.mxu0 0.0
      %1569 = vmatpush1.msra.mxu0 0.0
      %1570 = vmatprep.subr.mxu0 0.0
      %1571 = vmatpush1.msra.mxu0 0.0
      %1572 = vmatprep.subr.mxu0 0.0
      %1573 = vmatpush1.msra.mxu0 0.0
      %1574 = vmatprep.subr.mxu0 0.0
      %1575 = vmatpush1.msra.mxu0 0.0
      %1576 = vmatprep.subr.mxu0 0.0
      %1577 = vmatpush1.msra.mxu0 0.0
      %1578 = vmatprep.subr.mxu0 0.0
      %1579 = vmatpush1.msra.mxu0 0.0
      %1580 = vmatprep.subr.mxu0 0.0
      %1581 = vmatpush1.msra.mxu0 0.0
      %1582 = vmatprep.subr.mxu0 0.0
      %1583 = vmatpush1.msra.mxu0 0.0
      %1584 = vmatprep.subr.mxu0 0.0
      %1585 = vmatpush1.msra.mxu0 0.0
      %1586 = vmatprep.subr.mxu0 0.0
      %1587 = vmatpush1.msra.mxu0 0.0
      %1588 = vmatprep.subr.mxu0 0.0
      %1589 = vmatpush1.msra.mxu0 0.0
      %1590 = vmatprep.subr.mxu0 0.0
      %1591 = vmatpush1.msra.mxu0 0.0
      %1592 = vmatprep.subr.mxu0 0.0
      %1593 = vmatpush1.msra.mxu0 0.0
      %1594 = vmatprep.subr.mxu0 0.0
      %1595 = vmatpush1.msra.mxu0 0.0
      %1596 = vmatprep.subr.mxu0 0.0
      %1597 = vmatpush1.msra.mxu0 0.0
      %1598 = vmatprep.subr.mxu0 0.0
      %1599 = vmatpush1.msra.mxu0 0.0
      %1600 = vmatprep.subr.mxu0 0.0
      %1601 = vmatpush1.msra.mxu0 0.0
      %1602 = vmatprep.subr.mxu0 0.0
      %1603 = vmatpush1.msra.mxu0 0.0
      %1604 = vmatprep.subr.mxu0 0.0
      %1605 = vmatpush1.msra.mxu0 0.0
      %1606 = vmatprep.subr.mxu0 0.0
      %1607 = vmatpush1.msra.mxu0 0.0
      %1608 = vmatprep.subr.mxu0 0.0
      %1609 = vmatpush1.msra.mxu0 0.0
      %1610 = vmatprep.subr.mxu0 0.0
      %1611 = vmatpush1.msra.mxu0 0.0
      %1612 = vmatprep.subr.mxu0 0.0
      %1613 = vmatpush1.msra.mxu0 0.0
      %1614 = vmatprep.subr.mxu0 0.0
      %1615 = vmatpush1.msra.mxu0 0.0
      %1616 = vmatprep.mubr.f32.mxu0 0.0
      %1617 = vmatmul.mubr.f32.gmra.mrb[0].mxu0 %v1550
      %v1618 = vpop.f32.mrb[0].mxu0
      %v1619 = vadd.f32 0.0, %v1618
      %v1620 = vpop.f32.mrb[0].mxu0
      %1621 = vdwg.mxu0
      %v1622 = vadd.f32 %v1454, %v1619
      %v1623 = vld [vmem:[%s61] sm:$0x1]
      %v1625 = vlaneseq
      %v1626 = vshrl.u32 %v1625, 7
      %v1627 = vsub.s32 0, %v1626
      %v1628 = vrot.slane %v1623, %v1627
      %v1630 = vadd.f32 %v1622, %v1628
      %v1631 = vld [vmem:[%s63] sm:$0x1]
      %v1632 = vld [vmem:[%s65] sm:$0x1]
      %v1633 = vsel %vm895, %v1630, 0.0
      %1634 = vadd.xlane.f32.xlu0 %v1633
      %v1635 = vpop.xlane.xlu0 %1634
      %v1636 = vmul.f32 %v1635, %v1430
      %v1637 = vsub.f32 %v1630, %v1636
      %v1638 = vmul.f32 %v1637, %v1637
      %v1639 = vsel %vm895, %v1638, 0.0
      %1640 = vadd.xlane.f32.xlu0 %v1639
      %v1641 = vpop.xlane.xlu0 %1640
      %v1642 = vmul.f32 %v1641, %v1430
      %v1643 = vadd.f32 %v1642, 1e-05
      %v1644 = vrsqrt.pop %v1643
      %v1645 = vmul.f32 %v1637, %v1644
      %v1647 = vlaneseq
      %v1648 = vshrl.u32 %v1647, 7
      %v1649 = vsub.s32 0, %v1648
      %v1650 = vrot.slane %v1631, %v1649
      %v1652 = vmul.f32 %v1645, %v1650
      %v1654 = vlaneseq
      %v1655 = vshrl.u32 %v1654, 7
      %v1656 = vsub.s32 0, %v1655
      %v1657 = vrot.slane %v1632, %v1656
      %v1659 = vadd.f32 %v1652, %v1657
      %1660 = vst.msk [vmem:[%s95] sm:$0xff] %vm895, %v1659
      %v1661 = vld [vmem:[%s67] sm:$0x1]
      %v1662 = vld [vmem:[%s69] sm:$0x1]
      %v1663 = vsel %vm895, %v1659, 0.0
      %1664 = vadd.xlane.f32.xlu0 %v1663
      %v1665 = vpop.xlane.xlu0 %1664
      %v1666 = vmul.f32 %v1665, %v1430
      %v1667 = vsub.f32 %v1659, %v1666
      %v1668 = vmul.f32 %v1667, %v1667
      %v1669 = vsel %vm895, %v1668, 0.0
      %1670 = vadd.xlane.f32.xlu0 %v1669
      %v1671 = vpop.xlane.xlu0 %1670
      %v1672 = vmul.f32 %v1671, %v1430
      %v1673 = vadd.f32 %v1672, 1e-05
      %v1674 = vrsqrt.pop %v1673
      %v1675 = vmul.f32 %v1667, %v1674
      %v1677 = vlaneseq
      %v1678 = vshrl.u32 %v1677, 7
      %v1679 = vsub.s32 0, %v1678
      %v1680 = vrot.slane %v1661, %v1679
      %v1682 = vmul.f32 %v1675, %v1680
      %v1684 = vlaneseq
      %v1685 = vshrl.u32 %v1684, 7
      %v1686 = vsub.s32 0, %v1685
      %v1687 = vrot.slane %v1662, %v1686
      %v1689 = vadd.f32 %v1682, %v1687
      %v1690 = vld [vmem:[%s71] sm:$0xff]
      %v1691 = vld [vmem:[%s71 + $0x8] sm:$0xff]
      %v1692 = vld [vmem:[%s71 + $0x10] sm:$0xff]
      %v1693 = vld [vmem:[%s71 + $0x18] sm:$0xff]
      %v1694 = vld [vmem:[%s73] sm:$0x1]
      %v1696 = vlaneseq
      %v1697 = vshrl.u32 %v1696, 7
      %v1698 = vsub.s32 0, %v1697
      %v1699 = vrot.slane %v1694, %v1698
      %v1702 = vsel %vm895, %v1689, 0
      %1704 = vmatprep.subr.mxu0 0.0
      %1705 = vmatpush1.msra.mxu0 %v1690
      %1706 = vmatprep.subr.mxu0 0.0
      %1707 = vmatpush1.msra.mxu0 %v1691
      %1708 = vmatprep.subr.mxu0 0.0
      %1709 = vmatpush1.msra.mxu0 %v1692
      %1710 = vmatprep.subr.mxu0 0.0
      %1711 = vmatpush1.msra.mxu0 %v1693
      %1712 = vmatprep.subr.mxu0 0.0
      %1713 = vmatpush1.msra.mxu0 0.0
      %1714 = vmatprep.subr.mxu0 0.0
      %1715 = vmatpush1.msra.mxu0 0.0
      %1716 = vmatprep.subr.mxu0 0.0
      %1717 = vmatpush1.msra.mxu0 0.0
      %1718 = vmatprep.subr.mxu0 0.0
      %1719 = vmatpush1.msra.mxu0 0.0
      %1720 = vmatprep.subr.mxu0 0.0
      %1721 = vmatpush1.msra.mxu0 0.0
      %1722 = vmatprep.subr.mxu0 0.0
      %1723 = vmatpush1.msra.mxu0 0.0
      %1724 = vmatprep.subr.mxu0 0.0
      %1725 = vmatpush1.msra.mxu0 0.0
      %1726 = vmatprep.subr.mxu0 0.0
      %1727 = vmatpush1.msra.mxu0 0.0
      %1728 = vmatprep.subr.mxu0 0.0
      %1729 = vmatpush1.msra.mxu0 0.0
      %1730 = vmatprep.subr.mxu0 0.0
      %1731 = vmatpush1.msra.mxu0 0.0
      %1732 = vmatprep.subr.mxu0 0.0
      %1733 = vmatpush1.msra.mxu0 0.0
      %1734 = vmatprep.subr.mxu0 0.0
      %1735 = vmatpush1.msra.mxu0 0.0
      %1736 = vmatprep.subr.mxu0 0.0
      %1737 = vmatpush1.msra.mxu0 0.0
      %1738 = vmatprep.subr.mxu0 0.0
      %1739 = vmatpush1.msra.mxu0 0.0
      %1740 = vmatprep.subr.mxu0 0.0
      %1741 = vmatpush1.msra.mxu0 0.0
      %1742 = vmatprep.subr.mxu0 0.0
      %1743 = vmatpush1.msra.mxu0 0.0
      %1744 = vmatprep.subr.mxu0 0.0
      %1745 = vmatpush1.msra.mxu0 0.0
      %1746 = vmatprep.subr.mxu0 0.0
      %1747 = vmatpush1.msra.mxu0 0.0
      %1748 = vmatprep.subr.mxu0 0.0
      %1749 = vmatpush1.msra.mxu0 0.0
      %1750 = vmatprep.subr.mxu0 0.0
      %1751 = vmatpush1.msra.mxu0 0.0
      %1752 = vmatprep.subr.mxu0 0.0
      %1753 = vmatpush1.msra.mxu0 0.0
      %1754 = vmatprep.subr.mxu0 0.0
      %1755 = vmatpush1.msra.mxu0 0.0
      %1756 = vmatprep.subr.mxu0 0.0
      %1757 = vmatpush1.msra.mxu0 0.0
      %1758 = vmatprep.subr.mxu0 0.0
      %1759 = vmatpush1.msra.mxu0 0.0
      %1760 = vmatprep.subr.mxu0 0.0
      %1761 = vmatpush1.msra.mxu0 0.0
      %1762 = vmatprep.subr.mxu0 0.0
      %1763 = vmatpush1.msra.mxu0 0.0
      %1764 = vmatprep.subr.mxu0 0.0
      %1765 = vmatpush1.msra.mxu0 0.0
      %1766 = vmatprep.subr.mxu0 0.0
      %1767 = vmatpush1.msra.mxu0 0.0
      %1768 = vmatprep.mubr.f32.mxu0 0.0
      %1769 = vmatmul.mubr.f32.gmra.mrb[0].mxu0 %v1702
      %v1770 = vpop.f32.mrb[0].mxu0
      %v1771 = vadd.f32 %v1699, %v1770
      %v1772 = vpop.f32.mrb[0].mxu0
      %1773 = vdwg.mxu0
      %v1774 = vmax.f32 %v1771, 0.0
      %v1775 = vld [vmem:[%s75] sm:$0xff]
      %v1776 = vld [vmem:[%s75 + $0x8] sm:$0xff]
      %v1777 = vld [vmem:[%s75 + $0x10] sm:$0xff]
      %v1778 = vld [vmem:[%s75 + $0x18] sm:$0xff]
      %v1779 = vld [vmem:[%s77] sm:$0x1]
      %v1781 = vlaneseq
      %v1782 = vshrl.u32 %v1781, 7
      %v1783 = vsub.s32 0, %v1782
      %v1784 = vrot.slane %v1779, %v1783
      %v1787 = vsel %vm895, %v1774, 0
      %1789 = vmatprep.subr.mxu0 0.0
      %1790 = vmatpush1.msra.mxu0 %v1775
      %1791 = vmatprep.subr.mxu0 0.0
      %1792 = vmatpush1.msra.mxu0 %v1776
      %1793 = vmatprep.subr.mxu0 0.0
      %1794 = vmatpush1.msra.mxu0 %v1777
      %1795 = vmatprep.subr.mxu0 0.0
      %1796 = vmatpush1.msra.mxu0 %v1778
      %1797 = vmatprep.subr.mxu0 0.0
      %1798 = vmatpush1.msra.mxu0 0.0
      %1799 = vmatprep.subr.mxu0 0.0
      %1800 = vmatpush1.msra.mxu0 0.0
      %1801 = vmatprep.subr.mxu0 0.0
      %1802 = vmatpush1.msra.mxu0 0.0
      %1803 = vmatprep.subr.mxu0 0.0
      %1804 = vmatpush1.msra.mxu0 0.0
      %1805 = vmatprep.subr.mxu0 0.0
      %1806 = vmatpush1.msra.mxu0 0.0
      %1807 = vmatprep.subr.mxu0 0.0
      %1808 = vmatpush1.msra.mxu0 0.0
      %1809 = vmatprep.subr.mxu0 0.0
      %1810 = vmatpush1.msra.mxu0 0.0
      %1811 = vmatprep.subr.mxu0 0.0
      %1812 = vmatpush1.msra.mxu0 0.0
      %1813 = vmatprep.subr.mxu0 0.0
      %1814 = vmatpush1.msra.mxu0 0.0
      %1815 = vmatprep.subr.mxu0 0.0
      %1816 = vmatpush1.msra.mxu0 0.0
      %1817 = vmatprep.subr.mxu0 0.0
      %1818 = vmatpush1.msra.mxu0 0.0
      %1819 = vmatprep.subr.mxu0 0.0
      %1820 = vmatpush1.msra.mxu0 0.0
      %1821 = vmatprep.subr.mxu0 0.0
      %1822 = vmatpush1.msra.mxu0 0.0
      %1823 = vmatprep.subr.mxu0 0.0
      %1824 = vmatpush1.msra.mxu0 0.0
      %1825 = vmatprep.subr.mxu0 0.0
      %1826 = vmatpush1.msra.mxu0 0.0
      %1827 = vmatprep.subr.mxu0 0.0
      %1828 = vmatpush1.msra.mxu0 0.0
      %1829 = vmatprep.subr.mxu0 0.0
      %1830 = vmatpush1.msra.mxu0 0.0
      %1831 = vmatprep.subr.mxu0 0.0
      %1832 = vmatpush1.msra.mxu0 0.0
      %1833 = vmatprep.subr.mxu0 0.0
      %1834 = vmatpush1.msra.mxu0 0.0
      %1835 = vmatprep.subr.mxu0 0.0
      %1836 = vmatpush1.msra.mxu0 0.0
      %1837 = vmatprep.subr.mxu0 0.0
      %1838 = vmatpush1.msra.mxu0 0.0
      %1839 = vmatprep.subr.mxu0 0.0
      %1840 = vmatpush1.msra.mxu0 0.0
      %1841 = vmatprep.subr.mxu0 0.0
      %1842 = vmatpush1.msra.mxu0 0.0
      %1843 = vmatprep.subr.mxu0 0.0
      %1844 = vmatpush1.msra.mxu0 0.0
      %1845 = vmatprep.subr.mxu0 0.0
      %1846 = vmatpush1.msra.mxu0 0.0
      %1847 = vmatprep.subr.mxu0 0.0
      %1848 = vmatpush1.msra.mxu0 0.0
      %1849 = vmatprep.subr.mxu0 0.0
      %1850 = vmatpush1.msra.mxu0 0.0
      %1851 = vmatprep.subr.mxu0 0.0
      %1852 = vmatpush1.msra.mxu0 0.0
      %1853 = vmatprep.mubr.f32.mxu0 0.0
      %1854 = vmatmul.mubr.f32.gmra.mrb[0].mxu0 %v1787
      %v1855 = vpop.f32.mrb[0].mxu0
      %v1856 = vadd.f32 %v1784, %v1855
      %v1857 = vpop.f32.mrb[0].mxu0
      %1858 = vdwg.mxu0
      %1859 = vst.msk [vmem:[%s103] sm:$0xff] %vm895, %v1856
      %v1860 = vld [vmem:[%s79] sm:$0xff]
      %v1861 = vld [vmem:[%s79 + $0x8] sm:$0xff]
      %v1862 = vld [vmem:[%s79 + $0x10] sm:$0xff]
      %v1863 = vld [vmem:[%s79 + $0x18] sm:$0xff]
      %v1864 = vld [vmem:[%s81] sm:$0x1]
      %v1866 = vlaneseq
      %v1867 = vshrl.u32 %v1866, 7
      %v1868 = vsub.s32 0, %v1867
      %v1869 = vrot.slane %v1864, %v1868
      %1871 = vmatprep.subr.mxu0 0.0
      %1872 = vmatpush1.msra.mxu0 %v1860
      %1873 = vmatprep.subr.mxu0 0.0
      %1874 = vmatpush1.msra.mxu0 %v1861
      %1875 = vmatprep.subr.mxu0 0.0
      %1876 = vmatpush1.msra.mxu0 %v1862
      %1877 = vmatprep.subr.mxu0 0.0
      %1878 = vmatpush1.msra.mxu0 %v1863
      %1879 = vmatprep.subr.mxu0 0.0
      %1880 = vmatpush1.msra.mxu0 0.0
      %1881 = vmatprep.subr.mxu0 0.0
      %1882 = vmatpush1.msra.mxu0 0.0
      %1883 = vmatprep.subr.mxu0 0.0
      %1884 = vmatpush1.msra.mxu0 0.0
      %1885 = vmatprep.subr.mxu0 0.0
      %1886 = vmatpush1.msra.mxu0 0.0
      %1887 = vmatprep.subr.mxu0 0.0
      %1888 = vmatpush1.msra.mxu0 0.0
      %1889 = vmatprep.subr.mxu0 0.0
      %1890 = vmatpush1.msra.mxu0 0.0
      %1891 = vmatprep.subr.mxu0 0.0
      %1892 = vmatpush1.msra.mxu0 0.0
      %1893 = vmatprep.subr.mxu0 0.0
      %1894 = vmatpush1.msra.mxu0 0.0
      %1895 = vmatprep.subr.mxu0 0.0
      %1896 = vmatpush1.msra.mxu0 0.0
      %1897 = vmatprep.subr.mxu0 0.0
      %1898 = vmatpush1.msra.mxu0 0.0
      %1899 = vmatprep.subr.mxu0 0.0
      %1900 = vmatpush1.msra.mxu0 0.0
      %1901 = vmatprep.subr.mxu0 0.0
      %1902 = vmatpush1.msra.mxu0 0.0
      %1903 = vmatprep.subr.mxu0 0.0
      %1904 = vmatpush1.msra.mxu0 0.0
      %1905 = vmatprep.subr.mxu0 0.0
      %1906 = vmatpush1.msra.mxu0 0.0
      %1907 = vmatprep.subr.mxu0 0.0
      %1908 = vmatpush1.msra.mxu0 0.0
      %1909 = vmatprep.subr.mxu0 0.0
      %1910 = vmatpush1.msra.mxu0 0.0
      %1911 = vmatprep.subr.mxu0 0.0
      %1912 = vmatpush1.msra.mxu0 0.0
      %1913 = vmatprep.subr.mxu0 0.0
      %1914 = vmatpush1.msra.mxu0 0.0
      %1915 = vmatprep.subr.mxu0 0.0
      %1916 = vmatpush1.msra.mxu0 0.0
      %1917 = vmatprep.subr.mxu0 0.0
      %1918 = vmatpush1.msra.mxu0 0.0
      %1919 = vmatprep.subr.mxu0 0.0
      %1920 = vmatpush1.msra.mxu0 0.0
      %1921 = vmatprep.subr.mxu0 0.0
      %1922 = vmatpush1.msra.mxu0 0.0
      %1923 = vmatprep.subr.mxu0 0.0
      %1924 = vmatpush1.msra.mxu0 0.0
      %1925 = vmatprep.subr.mxu0 0.0
      %1926 = vmatpush1.msra.mxu0 0.0
      %1927 = vmatprep.subr.mxu0 0.0
      %1928 = vmatpush1.msra.mxu0 0.0
      %1929 = vmatprep.subr.mxu0 0.0
      %1930 = vmatpush1.msra.mxu0 0.0
      %1931 = vmatprep.subr.mxu0 0.0
      %1932 = vmatpush1.msra.mxu0 0.0
      %1933 = vmatprep.subr.mxu0 0.0
      %1934 = vmatpush1.msra.mxu0 0.0
      %1935 = vmatprep.mubr.f32.mxu0 0.0
      %1936 = vmatmul.mubr.f32.gmra.mrb[0].mxu0 %v1702
      %v1937 = vpop.f32.mrb[0].mxu0
      %v1938 = vadd.f32 %v1869, %v1937
      %v1939 = vpop.f32.mrb[0].mxu0
      %1940 = vdwg.mxu0
      %v1941 = vmax.f32 %v1938, 0.0
      %v1942 = vld [vmem:[%s83] sm:$0xff]
      %v1943 = vld [vmem:[%s83 + $0x8] sm:$0xff]
      %v1944 = vld [vmem:[%s83 + $0x10] sm:$0xff]
      %v1945 = vld [vmem:[%s83 + $0x18] sm:$0xff]
      %v1946 = vld [vmem:[%s85] sm:$0x1]
      %v1948 = vlaneseq
      %v1949 = vshrl.u32 %v1948, 7
      %v1950 = vsub.s32 0, %v1949
      %v1951 = vrot.slane %v1946, %v1950
      %v1954 = vsel %vm895, %v1941, 0
      %1956 = vmatprep.subr.mxu0 0.0
      %1957 = vmatpush1.msra.mxu0 %v1942
      %1958 = vmatprep.subr.mxu0 0.0
      %1959 = vmatpush1.msra.mxu0 %v1943
      %1960 = vmatprep.subr.mxu0 0.0
      %1961 = vmatpush1.msra.mxu0 %v1944
      %1962 = vmatprep.subr.mxu0 0.0
      %1963 = vmatpush1.msra.mxu0 %v1945
      %1964 = vmatprep.subr.mxu0 0.0
      %1965 = vmatpush1.msra.mxu0 0.0
      %1966 = vmatprep.subr.mxu0 0.0
      %1967 = vmatpush1.msra.mxu0 0.0
      %1968 = vmatprep.subr.mxu0 0.0
      %1969 = vmatpush1.msra.mxu0 0.0
      %1970 = vmatprep.subr.mxu0 0.0
      %1971 = vmatpush1.msra.mxu0 0.0
      %1972 = vmatprep.subr.mxu0 0.0
      %1973 = vmatpush1.msra.mxu0 0.0
      %1974 = vmatprep.subr.mxu0 0.0
      %1975 = vmatpush1.msra.mxu0 0.0
      %1976 = vmatprep.subr.mxu0 0.0
      %1977 = vmatpush1.msra.mxu0 0.0
      %1978 = vmatprep.subr.mxu0 0.0
      %1979 = vmatpush1.msra.mxu0 0.0
      %1980 = vmatprep.subr.mxu0 0.0
      %1981 = vmatpush1.msra.mxu0 0.0
      %1982 = vmatprep.subr.mxu0 0.0
      %1983 = vmatpush1.msra.mxu0 0.0
      %1984 = vmatprep.subr.mxu0 0.0
      %1985 = vmatpush1.msra.mxu0 0.0
      %1986 = vmatprep.subr.mxu0 0.0
      %1987 = vmatpush1.msra.mxu0 0.0
      %1988 = vmatprep.subr.mxu0 0.0
      %1989 = vmatpush1.msra.mxu0 0.0
      %1990 = vmatprep.subr.mxu0 0.0
      %1991 = vmatpush1.msra.mxu0 0.0
      %1992 = vmatprep.subr.mxu0 0.0
      %1993 = vmatpush1.msra.mxu0 0.0
      %1994 = vmatprep.subr.mxu0 0.0
      %1995 = vmatpush1.msra.mxu0 0.0
      %1996 = vmatprep.subr.mxu0 0.0
      %1997 = vmatpush1.msra.mxu0 0.0
      %1998 = vmatprep.subr.mxu0 0.0
      %1999 = vmatpush1.msra.mxu0 0.0
      %2000 = vmatprep.subr.mxu0 0.0
      %2001 = vmatpush1.msra.mxu0 0.0
      %2002 = vmatprep.subr.mxu0 0.0
      %2003 = vmatpush1.msra.mxu0 0.0
      %2004 = vmatprep.subr.mxu0 0.0
      %2005 = vmatpush1.msra.mxu0 0.0
      %2006 = vmatprep.subr.mxu0 0.0
      %2007 = vmatpush1.msra.mxu0 0.0
      %2008 = vmatprep.subr.mxu0 0.0
      %2009 = vmatpush1.msra.mxu0 0.0
      %2010 = vmatprep.subr.mxu0 0.0
      %2011 = vmatpush1.msra.mxu0 0.0
      %2012 = vmatprep.subr.mxu0 0.0
      %2013 = vmatpush1.msra.mxu0 0.0
      %2014 = vmatprep.subr.mxu0 0.0
      %2015 = vmatpush1.msra.mxu0 0.0
      %2016 = vmatprep.subr.mxu0 0.0
      %2017 = vmatpush1.msra.mxu0 0.0
      %2018 = vmatprep.subr.mxu0 0.0
      %2019 = vmatpush1.msra.mxu0 0.0
      %2020 = vmatprep.mubr.f32.mxu0 0.0
      %2021 = vmatmul.mubr.f32.gmra.mrb[0].mxu0 %v1954
      %v2022 = vpop.f32.mrb[0].mxu0
      %v2023 = vadd.f32 %v1951, %v2022
      %v2024 = vpop.f32.mrb[0].mxu0
      %2025 = vdwg.mxu0
      %vm2026 = vcmask 64512
      %2027 = vst.msk [vmem:[#allocation7] sm:$0xff] %vm2026, %v2023
      %v2028 = vld [vmem:[%s9] sm:$0xff]
      %v2029 = vadd.f32 %v1659, %v2028
      %v2030 = vld [vmem:[%s87] sm:$0xff]
      %v2031 = vld [vmem:[%s87 + $0x8] sm:$0xff]
      %v2032 = vld [vmem:[%s87 + $0x10] sm:$0xff]
      %v2033 = vld [vmem:[%s87 + $0x18] sm:$0xff]
      %v2034 = vld [vmem:[%s89] sm:$0x1]
      %v2036 = vlaneseq
      %v2037 = vshrl.u32 %v2036, 7
      %v2038 = vsub.s32 0, %v2037
      %v2039 = vrot.slane %v2034, %v2038
      %v2042 = vsel %vm895, %v2029, 0
      %2044 = vmatprep.subr.mxu0 0.0
      %2045 = vmatpush1.msra.mxu0 %v2030
      %2046 = vmatprep.subr.mxu0 0.0
      %2047 = vmatpush1.msra.mxu0 %v2031
      %2048 = vmatprep.subr.mxu0 0.0
      %2049 = vmatpush1.msra.mxu0 %v2032
      %2050 = vmatprep.subr.mxu0 0.0
      %2051 = vmatpush1.msra.mxu0 %v2033
      %2052 = vmatprep.subr.mxu0 0.0
      %2053 = vmatpush1.msra.mxu0 0.0
      %2054 = vmatprep.subr.mxu0 0.0
      %2055 = vmatpush1.msra.mxu0 0.0
      %2056 = vmatprep.subr.mxu0 0.0
      %2057 = vmatpush1.msra.mxu0 0.0
      %2058 = vmatprep.subr.mxu0 0.0
      %2059 = vmatpush1.msra.mxu0 0.0
      %2060 = vmatprep.subr.mxu0 0.0
      %2061 = vmatpush1.msra.mxu0 0.0
      %2062 = vmatprep.subr.mxu0 0.0
      %2063 = vmatpush1.msra.mxu0 0.0
      %2064 = vmatprep.subr.mxu0 0.0
      %2065 = vmatpush1.msra.mxu0 0.0
      %2066 = vmatprep.subr.mxu0 0.0
      %2067 = vmatpush1.msra.mxu0 0.0
      %2068 = vmatprep.subr.mxu0 0.0
      %2069 = vmatpush1.msra.mxu0 0.0
      %2070 = vmatprep.subr.mxu0 0.0
      %2071 = vmatpush1.msra.mxu0 0.0
      %2072 = vmatprep.subr.mxu0 0.0
      %2073 = vmatpush1.msra.mxu0 0.0
      %2074 = vmatprep.subr.mxu0 0.0
      %2075 = vmatpush1.msra.mxu0 0.0
      %2076 = vmatprep.subr.mxu0 0.0
      %2077 = vmatpush1.msra.mxu0 0.0
      %2078 = vmatprep.subr.mxu0 0.0
      %2079 = vmatpush1.msra.mxu0 0.0
      %2080 = vmatprep.subr.mxu0 0.0
      %2081 = vmatpush1.msra.mxu0 0.0
      %2082 = vmatprep.subr.mxu0 0.0
      %2083 = vmatpush1.msra.mxu0 0.0
      %2084 = vmatprep.subr.mxu0 0.0
      %2085 = vmatpush1.msra.mxu0 0.0
      %2086 = vmatprep.subr.mxu0 0.0
      %2087 = vmatpush1.msra.mxu0 0.0
      %2088 = vmatprep.subr.mxu0 0.0
      %2089 = vmatpush1.msra.mxu0 0.0
      %2090 = vmatprep.subr.mxu0 0.0
      %2091 = vmatpush1.msra.mxu0 0.0
      %2092 = vmatprep.subr.mxu0 0.0
      %2093 = vmatpush1.msra.mxu0 0.0
      %2094 = vmatprep.subr.mxu0 0.0
      %2095 = vmatpush1.msra.mxu0 0.0
      %2096 = vmatprep.subr.mxu0 0.0
      %2097 = vmatpush1.msra.mxu0 0.0
      %2098 = vmatprep.subr.mxu0 0.0
      %2099 = vmatpush1.msra.mxu0 0.0
      %2100 = vmatprep.subr.mxu0 0.0
      %2101 = vmatpush1.msra.mxu0 0.0
      %2102 = vmatprep.subr.mxu0 0.0
      %2103 = vmatpush1.msra.mxu0 0.0
      %2104 = vmatprep.subr.mxu0 0.0
      %2105 = vmatpush1.msra.mxu0 0.0
      %2106 = vmatprep.subr.mxu0 0.0
      %2107 = vmatpush1.msra.mxu0 0.0
      %2108 = vmatprep.mubr.f32.mxu0 0.0
      %2109 = vmatmul.mubr.f32.gmra.mrb[0].mxu0 %v2042
      %v2110 = vpop.f32.mrb[0].mxu0
      %v2111 = vadd.f32 %v2039, %v2110
      %v2112 = vpop.f32.mrb[0].mxu0
      %2113 = vdwg.mxu0
      %2114 = vst.msk [vmem:[%s99] sm:$0xff] %vm895, %v2111
      %v2115 = vld [vmem:[%s91] sm:$0xff]
      %v2116 = vld [vmem:[%s91 + $0x8] sm:$0xff]
      %v2117 = vld [vmem:[%s91 + $0x10] sm:$0xff]
      %v2118 = vld [vmem:[%s91 + $0x18] sm:$0xff]
      %v2119 = vld [vmem:[%s93] sm:$0x1]
      %v2121 = vlaneseq
      %v2122 = vshrl.u32 %v2121, 7
      %v2123 = vsub.s32 0, %v2122
      %v2124 = vrot.slane %v2119, %v2123
      %v2127 = vsel %vm895, %v1659, 0
      %2129 = vmatprep.subr.mxu0 0.0
      %2130 = vmatpush1.msra.mxu0 %v2115
      %2131 = vmatprep.subr.mxu0 0.0
      %2132 = vmatpush1.msra.mxu0 %v2116
      %2133 = vmatprep.subr.mxu0 0.0
      %2134 = vmatpush1.msra.mxu0 %v2117
      %2135 = vmatprep.subr.mxu0 0.0
      %2136 = vmatpush1.msra.mxu0 %v2118
      %2137 = vmatprep.subr.mxu0 0.0
      %2138 = vmatpush1.msra.mxu0 0.0
      %2139 = vmatprep.subr.mxu0 0.0
      %2140 = vmatpush1.msra.mxu0 0.0
      %2141 = vmatprep.subr.mxu0 0.0
      %2142 = vmatpush1.msra.mxu0 0.0
      %2143 = vmatprep.subr.mxu0 0.0
      %2144 = vmatpush1.msra.mxu0 0.0
      %2145 = vmatprep.subr.mxu0 0.0
      %2146 = vmatpush1.msra.mxu0 0.0
      %2147 = vmatprep.subr.mxu0 0.0
      %2148 = vmatpush1.msra.mxu0 0.0
      %2149 = vmatprep.subr.mxu0 0.0
      %2150 = vmatpush1.msra.mxu0 0.0
      %2151 = vmatprep.subr.mxu0 0.0
      %2152 = vmatpush1.msra.mxu0 0.0
      %2153 = vmatprep.subr.mxu0 0.0
      %2154 = vmatpush1.msra.mxu0 0.0
      %2155 = vmatprep.subr.mxu0 0.0
      %2156 = vmatpush1.msra.mxu0 0.0
      %2157 = vmatprep.subr.mxu0 0.0
      %2158 = vmatpush1.msra.mxu0 0.0
      %2159 = vmatprep.subr.mxu0 0.0
      %2160 = vmatpush1.msra.mxu0 0.0
      %2161 = vmatprep.subr.mxu0 0.0
      %2162 = vmatpush1.msra.mxu0 0.0
      %2163 = vmatprep.subr.mxu0 0.0
      %2164 = vmatpush1.msra.mxu0 0.0
      %2165 = vmatprep.subr.mxu0 0.0
      %2166 = vmatpush1.msra.mxu0 0.0
      %2167 = vmatprep.subr.mxu0 0.0
      %2168 = vmatpush1.msra.mxu0 0.0
      %2169 = vmatprep.subr.mxu0 0.0
      %2170 = vmatpush1.msra.mxu0 0.0
      %2171 = vmatprep.subr.mxu0 0.0
      %2172 = vmatpush1.msra.mxu0 0.0
      %2173 = vmatprep.subr.mxu0 0.0
      %2174 = vmatpush1.msra.mxu0 0.0
      %2175 = vmatprep.subr.mxu0 0.0
      %2176 = vmatpush1.msra.mxu0 0.0
      %2177 = vmatprep.subr.mxu0 0.0
      %2178 = vmatpush1.msra.mxu0 0.0
      %2179 = vmatprep.subr.mxu0 0.0
      %2180 = vmatpush1.msra.mxu0 0.0
      %2181 = vmatprep.subr.mxu0 0.0
      %2182 = vmatpush1.msra.mxu0 0.0
      %2183 = vmatprep.subr.mxu0 0.0
      %2184 = vmatpush1.msra.mxu0 0.0
      %2185 = vmatprep.subr.mxu0 0.0
      %2186 = vmatpush1.msra.mxu0 0.0
      %2187 = vmatprep.subr.mxu0 0.0
      %2188 = vmatpush1.msra.mxu0 0.0
      %2189 = vmatprep.subr.mxu0 0.0
      %2190 = vmatpush1.msra.mxu0 0.0
      %2191 = vmatprep.subr.mxu0 0.0
      %2192 = vmatpush1.msra.mxu0 0.0
      %2193 = vmatprep.mubr.f32.mxu0 0.0
      %2194 = vmatmul.mubr.f32.gmra.mrb[0].mxu0 %v2127
      %v2195 = vpop.f32.mrb[0].mxu0
      %v2196 = vadd.f32 %v2124, %v2195
      %v2197 = vpop.f32.mrb[0].mxu0
      %2198 = vdwg.mxu0
      %2199 = vst.msk [vmem:[%s101] sm:$0xff] %vm895, %v2196
    $region197: #{_lambda_.8} parent=1 // pred_fallthru
      _
    // Predicated region
    $region198: #{_lambda_.8} parent=1 // pred_check
      _
    $region199: #{_lambda_.8} parent=1 // pred_check_branch
      %2201 = sbr.rel (0) target = $region201
    $region200: #{_lambda_.8} parent=1 // pred_region
      _
    $region201: #{_lambda_.8} parent=1 // pred_fallthru
      _
    // Predicated region
    $region202: #{_lambda_.8} parent=1 // pred_check
      _
    $region203: #{_lambda_.8} parent=1 // pred_check_branch
      %2203 = sbr.rel (0) target = $region205
    $region204: #{_lambda_.8} parent=1 // pred_region
      %s2205 = ssub.s32 128, 128
      %2206 = vsyncadd [#allocation8], %s2205
      %s2208 = sshll.u32 [#allocation7], 4
      %s2209 = int_to_ptr.vmem [resolvable:$true] %s2208
      %2211 = dma.vmem_to_hbm [thread:$0]  %s2209, 128, %s97, [#allocation8]
    $region205: #{_lambda_.8} parent=1 // pred_fallthru
      _
    // Predicated region
    $region206: #{_lambda_.8} parent=1 // pred_check
      _
    $region207: #{_lambda_.8} parent=1 // pred_check_branch
      %2213 = sbr.rel (0) target = $region209
    $region208: #{_lambda_.8} parent=1 // pred_region
      _
    $region209: #{_lambda_.8} parent=1 // pred_fallthru
      _
    // Predicated region
    $region210: #{_lambda_.8} parent=1 // pred_check
      _
    $region211: #{_lambda_.8} parent=1 // pred_check_branch
      %2215 = sbr.rel (0) target = $region213
    $region212: #{_lambda_.8} parent=1 // pred_region
      _
    $region213: #{_lambda_.8} parent=1 // pred_fallthru
      _
    // Predicated region
    $region214: #{_lambda_.8} parent=1 // pred_check
      _
    $region215: #{_lambda_.8} parent=1 // pred_check_branch
      %2217 = sbr.rel (0) target = $region217
    $region216: #{_lambda_.8} parent=1 // pred_region
      _
    $region217: #{_lambda_.8} parent=1 // pred_fallthru
      _
    // Predicated region
    $region218: #{_lambda_.8} parent=1 // pred_check
      _
    $region219: #{_lambda_.8} parent=1 // pred_check_branch
      %2219 = sbr.rel (0) target = $region221
    $region220: #{_lambda_.8} parent=1 // pred_region
      _
    $region221: #{_lambda_.8} parent=1 // pred_fallthru
      _
    // Predicated region
    $region222: #{_lambda_.8} parent=1 // pred_check
      _
    $region223: #{_lambda_.8} parent=1 // pred_check_branch
      %2221 = sbr.rel (0) target = $region225
    $region224: #{_lambda_.8} parent=1 // pred_region
      %2222 = dma.done [#allocation8], 128
    $region225: #{_lambda_.8} parent=1 // pred_fallthru
      _
    // Predicated region
    $region226: #{_lambda_.8} parent=1 // pred_check
      _
    $region227: #{_lambda_.8} parent=1 // pred_check_branch
      %2224 = sbr.rel (0) target = $region229
    $region228: #{_lambda_.8} parent=1 // pred_region
      _
    $region229: #{_lambda_.8} parent=1 // pred_fallthru
      _
    // Predicated region
    $region230: #{_lambda_.8} parent=1 // pred_check
      _
    $region231: #{_lambda_.8} parent=1 // pred_check_branch
      %2226 = sbr.rel (0) target = $region233
    $region232: #{_lambda_.8} parent=1 // pred_region
      _
    $region233: #{_lambda_.8} parent=1 // pred_fallthru
      _
    // Predicated region
    $region234: #{_lambda_.8} parent=1 // pred_check
      _
    $region235: #{_lambda_.8} parent=1 // pred_check_branch
      %2228 = sbr.rel (0) target = $region237
    $region236: #{_lambda_.8} parent=1 // pred_region
      _
    $region237: #{_lambda_.8} parent=1 // pred_fallthru
      _
    %2229 = vsyncpa [#allocation8], 1

// kernel: _lambda_.11
$region0: #{_lambda_.11}
  #allocation0 [shape = 'u32[]', space=smem, size = 0x4, offset = 0x4, fixed_abs, tag = 'smem constant byte address 0x4 - core index']
  #allocation1 [shape = 'u32[144,128]{1,0:T(1,128)}', space=vmem, size = 0x12000, scoped, tag = 'internal scratch']
  %s0 = inlined_call_operand.vmem [shape: bf16[32,256], index: 0, kind: input, shape index: {}, may-alias: {0,13}]
  %s1 = inlined_call_operand.vmem [shape: bf16[32,256], index: 1, kind: input, shape index: {}]
  %s2 = inlined_call_operand.vmem [shape: s32[1,256], index: 2, kind: input, shape index: {}]
  %s3 = inlined_call_operand.vmem [shape: f32[8,32], index: 3, kind: input, shape index: {}]
  %s4 = inlined_call_operand.vmem [shape: f32[8,32], index: 4, kind: input, shape index: {}]
  %s5 = inlined_call_operand.vmem [shape: f32[8,32], index: 5, kind: input, shape index: {}]
  %s6 = inlined_call_operand.vmem [shape: s32[8,1], index: 6, kind: input, shape index: {}]
  %s7 = inlined_call_operand.vmem [shape: f32[32,32], index: 7, kind: input, shape index: {}]
  %s8 = inlined_call_operand.vmem [shape: f32[32,1], index: 8, kind: input, shape index: {}]
  %s9 = inlined_call_operand.vmem [shape: f32[32,32], index: 9, kind: input, shape index: {}]
  %s10 = inlined_call_operand.vmem [shape: f32[32,1], index: 10, kind: input, shape index: {}]
  %s11 = inlined_call_operand.vmem [shape: f32[32,1], index: 11, kind: input, shape index: {}]
  %s12 = inlined_call_operand.vmem [shape: f32[32,1], index: 12, kind: input, shape index: {}]
  %s13 = inlined_call_operand.vmem [shape: bf16[32,256], index: 13, kind: output, shape index: {0}, may-alias: {0,13}]
  %s14 = inlined_call_operand.vmem [shape: bf16[8,256], index: 14, kind: output, shape index: {1}]
  %s15 = inlined_call_operand.hbm [shape: f32[8,1], index: 15, kind: output, shape index: {2}]
  %16 = xla_tuple %s13, %s14, %s15
  %s17 = sld [smem:[#allocation0]]
  $region82: #{_lambda_.11} parent=0
    _
  %s19 = ssub.s32 1, %s17
  %s20 = scalar_select 0, %s19, %s17
  $region1: #{_lambda_.11} parent=0
    #allocation2 [shape = 'u8[4096]{0}', space=vmem, size = 0x1000, scoped, tag = 'output window, operand 2, single buffered']
    #allocation3 [shape = 's32[1]{0}', space=sflag, size = 0x4, scoped, tag = 'scoped memory for _lambda_.11']
    %21 = vsyncpa [#allocation3], 0
    // Predicated region
    $region2: #{_lambda_.11} parent=1 // pred_check
      _
    $region3: #{_lambda_.11} parent=1 // pred_check_branch
      %23 = sbr.rel (0) target = $region5
    $region4: #{_lambda_.11} parent=1 // pred_region
      _
    $region5: #{_lambda_.11} parent=1 // pred_fallthru
      _
    // Predicated region
    $region6: #{_lambda_.11} parent=1 // pred_check
      _
    $region7: #{_lambda_.11} parent=1 // pred_check_branch
      %25 = sbr.rel (0) target = $region9
    $region8: #{_lambda_.11} parent=1 // pred_region
      _
    $region9: #{_lambda_.11} parent=1 // pred_fallthru
      _
    // Predicated region
    $region10: #{_lambda_.11} parent=1 // pred_check
      _
    $region11: #{_lambda_.11} parent=1 // pred_check_branch
      %27 = sbr.rel (0) target = $region13
    $region12: #{_lambda_.11} parent=1 // pred_region
      _
    $region13: #{_lambda_.11} parent=1 // pred_fallthru
      _
    // Predicated region
    $region14: #{_lambda_.11} parent=1 // pred_check
      _
    $region15: #{_lambda_.11} parent=1 // pred_check_branch
      %29 = sbr.rel (0) target = $region17
    $region16: #{_lambda_.11} parent=1 // pred_region
      _
    $region17: #{_lambda_.11} parent=1 // pred_fallthru
      _
    // Predicated region
    $region18: #{_lambda_.11} parent=1 // pred_check
      _
    $region19: #{_lambda_.11} parent=1 // pred_check_branch
      %31 = sbr.rel (0) target = $region21
    $region20: #{_lambda_.11} parent=1 // pred_region
      _
    $region21: #{_lambda_.11} parent=1 // pred_fallthru
      _
    // Predicated region
    $region22: #{_lambda_.11} parent=1 // pred_check
      _
    $region23: #{_lambda_.11} parent=1 // pred_check_branch
      %33 = sbr.rel (0) target = $region25
    $region24: #{_lambda_.11} parent=1 // pred_region
      _
    $region25: #{_lambda_.11} parent=1 // pred_fallthru
      _
    // Predicated region
    $region26: #{_lambda_.11} parent=1 // pred_check
      _
    $region27: #{_lambda_.11} parent=1 // pred_check_branch
      %35 = sbr.rel (0) target = $region29
    $region28: #{_lambda_.11} parent=1 // pred_region
      _
    $region29: #{_lambda_.11} parent=1 // pred_fallthru
      _
    // Predicated region
    $region30: #{_lambda_.11} parent=1 // pred_check
      _
    $region31: #{_lambda_.11} parent=1 // pred_check_branch
      %37 = sbr.rel (0) target = $region33
    $region32: #{_lambda_.11} parent=1 // pred_region
      _
    $region33: #{_lambda_.11} parent=1 // pred_fallthru
      _
    // Predicated region
    $region34: #{_lambda_.11} parent=1 // pred_check
      _
    $region35: #{_lambda_.11} parent=1 // pred_check_branch
      %39 = sbr.rel (0) target = $region37
    $region36: #{_lambda_.11} parent=1 // pred_region
      _
    $region37: #{_lambda_.11} parent=1 // pred_fallthru
      _
    // Predicated region
    $region38: #{_lambda_.11} parent=1 // pred_check
      _
    $region39: #{_lambda_.11} parent=1 // pred_check_branch
      %41 = sbr.rel (0) target = $region41
    $region40: #{_lambda_.11} parent=1 // pred_region
      _
    $region41: #{_lambda_.11} parent=1 // pred_fallthru
      _
    // Predicated region
    $region42: #{_lambda_.11} parent=1 // pred_check
      _
    $region43: #{_lambda_.11} parent=1 // pred_check_branch
      %43 = sbr.rel (0) target = $region45
    $region44: #{_lambda_.11} parent=1 // pred_region
      _
    $region45: #{_lambda_.11} parent=1 // pred_fallthru
      _
    // Predicated region
    $region46: #{_lambda_.11} parent=1 // pred_check
      _
    $region47: #{_lambda_.11} parent=1 // pred_check_branch
      %45 = sbr.rel (0) target = $region49
    $region48: #{_lambda_.11} parent=1 // pred_region
      _
    $region49: #{_lambda_.11} parent=1 // pred_fallthru
      _
    // Predicated region
    $region50: #{_lambda_.11} parent=1 // pred_check
      _
    $region51: #{_lambda_.11} parent=1 // pred_check_branch
      %47 = sbr.rel (0) target = $region53
    $region52: #{_lambda_.11} parent=1 // pred_region
      _
    $region53: #{_lambda_.11} parent=1 // pred_fallthru
      _
    %p48 = scmp.eq.s32.totalorder 0, 0
    // Predicated region
    $region54: #{_lambda_.11} parent=1 // pred_check
      %p49 = pneg %p48
    $region55: #{_lambda_.11} parent=1 // pred_check_branch
      %51 = sbr.rel (%p49) target = $region57
    $region56: #{_lambda_.11} parent=1 // pred_region
      %vm52 = vcmask 7168
      %53 = vst.msk [vmem:[#allocation2] sm:$0xff] %vm52, 0.0
    $region57: #{_lambda_.11} parent=1 // pred_fallthru
      _
    %v54 = vld [vmem:[%s0] sm:$0xff]
    %v55 = vld [vmem:[%s0 + $0x8] sm:$0xff]
    %v56 = vld [vmem:[%s0 + $0x10] sm:$0xff]
    %v57 = vld [vmem:[%s0 + $0x18] sm:$0xff]
    %v58 = vunpack.c.l.bf16 %v54
    %v59 = vunpack.c.h.bf16 %v54
    %v60 = vunpack.c.l.bf16 %v55
    %v61 = vunpack.c.h.bf16 %v55
    %v62 = vunpack.c.l.bf16 %v56
    %v63 = vunpack.c.h.bf16 %v56
    %v64 = vunpack.c.l.bf16 %v57
    %v65 = vunpack.c.h.bf16 %v57
    %v66 = vld [vmem:[%s7] sm:$0xff]
    %v67 = vld [vmem:[%s7 + $0x8] sm:$0xff]
    %v68 = vld [vmem:[%s7 + $0x10] sm:$0xff]
    %v69 = vld [vmem:[%s7 + $0x18] sm:$0xff]
    %v70 = vld [vmem:[%s1] sm:$0xff]
    %v71 = vld [vmem:[%s1 + $0x8] sm:$0xff]
    %v72 = vld [vmem:[%s1 + $0x10] sm:$0xff]
    %v73 = vld [vmem:[%s1 + $0x18] sm:$0xff]
    %v74 = vunpack.c.l.bf16 %v70
    %v75 = vunpack.c.h.bf16 %v70
    %v76 = vunpack.c.l.bf16 %v71
    %v77 = vunpack.c.h.bf16 %v71
    %v78 = vunpack.c.l.bf16 %v72
    %v79 = vunpack.c.h.bf16 %v72
    %v80 = vunpack.c.l.bf16 %v73
    %v81 = vunpack.c.h.bf16 %v73
    %v82 = vadd.f32 %v58, %v74
    %v83 = vadd.f32 %v59, %v75
    %v84 = vadd.f32 %v60, %v76
    %v85 = vadd.f32 %v61, %v77
    %v86 = vadd.f32 %v62, %v78
    %v87 = vadd.f32 %v63, %v79
    %v88 = vadd.f32 %v64, %v80
    %v89 = vadd.f32 %v65, %v81
    %v90 = vld [vmem:[%s8] sm:$0xff]
    %v91 = vld [vmem:[%s8 + $0x8] sm:$0xff]
    %v92 = vld [vmem:[%s8 + $0x10] sm:$0xff]
    %v93 = vld [vmem:[%s8 + $0x18] sm:$0xff]
    %95 = vset.pattern.permute.xlu0 0
    %96 = vperm.xlu0 %95, %v90
    %v97 = vpop.permute.xlu0 %96
    %100 = vset.pattern.permute.xlu0 0
    %101 = vperm.xlu0 %100, %v91
    %v102 = vpop.permute.xlu0 %101
    %105 = vset.pattern.permute.xlu0 0
    %106 = vperm.xlu0 %105, %v92
    %v107 = vpop.permute.xlu0 %106
    %110 = vset.pattern.permute.xlu0 0
    %111 = vperm.xlu0 %110, %v93
    %v112 = vpop.permute.xlu0 %111
    %vm114 = vcmask 261120
    %v116 = vsel %vm114, %v66, 0
    %v119 = vsel %vm114, %v67, 0
    %v122 = vsel %vm114, %v68, 0
    %v125 = vsel %vm114, %v69, 0
    %127 = vmatprep.subr.mxu0 %v83
    %128 = vmatpush1.msra.mxu0 %v82
    %129 = vmatprep.subr.mxu0 %v85
    %130 = vmatpush1.msra.mxu0 %v84
    %131 = vmatprep.subr.mxu0 %v87
    %132 = vmatpush1.msra.mxu0 %v86
    %133 = vmatprep.subr.mxu0 %v89
    %134 = vmatpush1.msra.mxu0 %v88
    %135 = vmatprep.subr.mxu0 0.0
    %136 = vmatpush1.msra.mxu0 0.0
    %137 = vmatprep.subr.mxu0 0.0
    %138 = vmatpush1.msra.mxu0 0.0
    %139 = vmatprep.subr.mxu0 0.0
    %140 = vmatpush1.msra.mxu0 0.0
    %141 = vmatprep.subr.mxu0 0.0
    %142 = vmatpush1.msra.mxu0 0.0
    %143 = vmatprep.subr.mxu0 0.0
    %144 = vmatpush1.msra.mxu0 0.0
    %145 = vmatprep.subr.mxu0 0.0
    %146 = vmatpush1.msra.mxu0 0.0
    %147 = vmatprep.subr.mxu0 0.0
    %148 = vmatpush1.msra.mxu0 0.0
    %149 = vmatprep.subr.mxu0 0.0
    %150 = vmatpush1.msra.mxu0 0.0
    %151 = vmatprep.subr.mxu0 0.0
    %152 = vmatpush1.msra.mxu0 0.0
    %153 = vmatprep.subr.mxu0 0.0
    %154 = vmatpush1.msra.mxu0 0.0
    %155 = vmatprep.subr.mxu0 0.0
    %156 = vmatpush1.msra.mxu0 0.0
    %157 = vmatprep.subr.mxu0 0.0
    %158 = vmatpush1.msra.mxu0 0.0
    %159 = vmatprep.subr.mxu0 0.0
    %160 = vmatpush1.msra.mxu0 0.0
    %161 = vmatprep.subr.mxu0 0.0
    %162 = vmatpush1.msra.mxu0 0.0
    %163 = vmatprep.subr.mxu0 0.0
    %164 = vmatpush1.msra.mxu0 0.0
    %165 = vmatprep.subr.mxu0 0.0
    %166 = vmatpush1.msra.mxu0 0.0
    %167 = vmatprep.subr.mxu0 0.0
    %168 = vmatpush1.msra.mxu0 0.0
    %169 = vmatprep.subr.mxu0 0.0
    %170 = vmatpush1.msra.mxu0 0.0
    %171 = vmatprep.subr.mxu0 0.0
    %172 = vmatpush1.msra.mxu0 0.0
    %173 = vmatprep.subr.mxu0 0.0
    %174 = vmatpush1.msra.mxu0 0.0
    %175 = vmatprep.subr.mxu0 0.0
    %176 = vmatpush1.msra.mxu0 0.0
    %177 = vmatprep.subr.mxu0 0.0
    %178 = vmatpush1.msra.mxu0 0.0
    %179 = vmatprep.subr.mxu0 0.0
    %180 = vmatpush1.msra.mxu0 0.0
    %181 = vmatprep.subr.mxu0 0.0
    %182 = vmatpush1.msra.mxu0 0.0
    %183 = vmatprep.subr.mxu0 0.0
    %184 = vmatpush1.msra.mxu0 0.0
    %185 = vmatprep.subr.mxu0 0.0
    %186 = vmatpush1.msra.mxu0 0.0
    %187 = vmatprep.subr.mxu0 0.0
    %188 = vmatpush1.msra.mxu0 0.0
    %189 = vmatprep.subr.mxu0 0.0
    %190 = vmatpush1.msra.mxu0 0.0
    %191 = vmatprep.mubr.f32.mxu0 0.0
    %192 = vmatmul.mubr.f32.gmra.mrb[0].mxu0 %v116
    %v193 = vpop.f32.mrb[0].mxu0
    %v194 = vadd.f32 %v97, %v193
    %v195 = vpop.f32.mrb[0].mxu0
    %v196 = vadd.f32 %v97, %v195
    %197 = vmatprep.mubr.f32.mxu0 0.0
    %198 = vmatmul.mubr.f32.gmra.mrb[0].mxu0 %v119
    %v199 = vpop.f32.mrb[0].mxu0
    %v200 = vadd.f32 %v102, %v199
    %v201 = vpop.f32.mrb[0].mxu0
    %v202 = vadd.f32 %v102, %v201
    %203 = vmatprep.mubr.f32.mxu0 0.0
    %204 = vmatmul.mubr.f32.gmra.mrb[0].mxu0 %v122
    %v205 = vpop.f32.mrb[0].mxu0
    %v206 = vadd.f32 %v107, %v205
    %v207 = vpop.f32.mrb[0].mxu0
    %v208 = vadd.f32 %v107, %v207
    %209 = vmatprep.mubr.f32.mxu0 0.0
    %210 = vmatmul.mubr.f32.gmra.mrb[0].mxu0 %v125
    %v211 = vpop.f32.mrb[0].mxu0
    %v212 = vadd.f32 %v112, %v211
    %v213 = vpop.f32.mrb[0].mxu0
    %v214 = vadd.f32 %v112, %v213
    %215 = vdwg.mxu0
    %v216 = vld [vmem:[%s3] sm:$0xff]
    %v218 = vsel %vm114, %v216, 0
    %220 = vmatprep.subr.mxu0 %v196
    %221 = vmatpush1.msra.mxu0 %v194
    %222 = vmatprep.subr.mxu0 %v202
    %223 = vmatpush1.msra.mxu0 %v200
    %224 = vmatprep.subr.mxu0 %v208
    %225 = vmatpush1.msra.mxu0 %v206
    %226 = vmatprep.subr.mxu0 %v214
    %227 = vmatpush1.msra.mxu0 %v212
    %228 = vmatprep.subr.mxu0 0.0
    %229 = vmatpush1.msra.mxu0 0.0
    %230 = vmatprep.subr.mxu0 0.0
    %231 = vmatpush1.msra.mxu0 0.0
    %232 = vmatprep.subr.mxu0 0.0
    %233 = vmatpush1.msra.mxu0 0.0
    %234 = vmatprep.subr.mxu0 0.0
    %235 = vmatpush1.msra.mxu0 0.0
    %236 = vmatprep.subr.mxu0 0.0
    %237 = vmatpush1.msra.mxu0 0.0
    %238 = vmatprep.subr.mxu0 0.0
    %239 = vmatpush1.msra.mxu0 0.0
    %240 = vmatprep.subr.mxu0 0.0
    %241 = vmatpush1.msra.mxu0 0.0
    %242 = vmatprep.subr.mxu0 0.0
    %243 = vmatpush1.msra.mxu0 0.0
    %244 = vmatprep.subr.mxu0 0.0
    %245 = vmatpush1.msra.mxu0 0.0
    %246 = vmatprep.subr.mxu0 0.0
    %247 = vmatpush1.msra.mxu0 0.0
    %248 = vmatprep.subr.mxu0 0.0
    %249 = vmatpush1.msra.mxu0 0.0
    %250 = vmatprep.subr.mxu0 0.0
    %251 = vmatpush1.msra.mxu0 0.0
    %252 = vmatprep.subr.mxu0 0.0
    %253 = vmatpush1.msra.mxu0 0.0
    %254 = vmatprep.subr.mxu0 0.0
    %255 = vmatpush1.msra.mxu0 0.0
    %256 = vmatprep.subr.mxu0 0.0
    %257 = vmatpush1.msra.mxu0 0.0
    %258 = vmatprep.subr.mxu0 0.0
    %259 = vmatpush1.msra.mxu0 0.0
    %260 = vmatprep.subr.mxu0 0.0
    %261 = vmatpush1.msra.mxu0 0.0
    %262 = vmatprep.subr.mxu0 0.0
    %263 = vmatpush1.msra.mxu0 0.0
    %264 = vmatprep.subr.mxu0 0.0
    %265 = vmatpush1.msra.mxu0 0.0
    %266 = vmatprep.subr.mxu0 0.0
    %267 = vmatpush1.msra.mxu0 0.0
    %268 = vmatprep.subr.mxu0 0.0
    %269 = vmatpush1.msra.mxu0 0.0
    %270 = vmatprep.subr.mxu0 0.0
    %271 = vmatpush1.msra.mxu0 0.0
    %272 = vmatprep.subr.mxu0 0.0
    %273 = vmatpush1.msra.mxu0 0.0
    %274 = vmatprep.subr.mxu0 0.0
    %275 = vmatpush1.msra.mxu0 0.0
    %276 = vmatprep.subr.mxu0 0.0
    %277 = vmatpush1.msra.mxu0 0.0
    %278 = vmatprep.subr.mxu0 0.0
    %279 = vmatpush1.msra.mxu0 0.0
    %280 = vmatprep.subr.mxu0 0.0
    %281 = vmatpush1.msra.mxu0 0.0
    %282 = vmatprep.subr.mxu0 0.0
    %283 = vmatpush1.msra.mxu0 0.0
    %284 = vmatprep.mubr.f32.mxu0 0.0
    %285 = vmatmul.mubr.f32.gmra.mrb[0].mxu0 %v218
    %v286 = vpop.f32.mrb[0].mxu0
    %v287 = vadd.f32 0.0, %v286
    %v288 = vpop.f32.mrb[0].mxu0
    %v289 = vadd.f32 0.0, %v288
    %290 = vdwg.mxu0
    %v291 = vmul.f32 %v287, 0.17677669
    %v292 = vmul.f32 %v289, 0.17677669
    %v293 = vld [vmem:[%s6] sm:$0xff]
    %v294 = vld [vmem:[%s2] sm:$0x3]
    %295 = vset.pattern.permute.xlu0 0
    %296 = vperm.xlu0 %295, %v293
    %v297 = vpop.permute.xlu0 %296
    %v298 = vlaneseq
    %v299 = vshrl.u32 %v298, 7
    %v300 = vsub.s32 0, %v299
    %v301 = vrot.slane %v294, %v300
    %v302 = vlaneseq
    %v303 = vshrl.u32 %v302, 7
    %v304 = vsub.s32 1, %v303
    %v305 = vrot.slane %v294, %v304
    %vm306 = vcmp.eq.s32.totalorder %v297, %v301
    %vm307 = vcmp.eq.s32.totalorder %v297, %v305
    %v308 = vsel %vm306, %v291, -1e+09
    %v309 = vsel %vm307, %v292, -1e+09
    %v310 = vrot.slane %v308, 4
    %v311 = vmax.f32 %v308, %v310
    %v312 = vrot.slane %v311, 2
    %v313 = vmax.f32 %v311, %v312
    %v314 = vrot.slane %v313, 1
    %v315 = vmax.f32 %v313, %v314
    %v316 = vrot.slane %v309, 4
    %v317 = vmax.f32 %v309, %v316
    %v318 = vrot.slane %v317, 2
    %v319 = vmax.f32 %v317, %v318
    %v320 = vrot.slane %v319, 1
    %v321 = vmax.f32 %v319, %v320
    %v322 = vsub.f32 %v308, %v315
    %v323 = vsub.f32 %v309, %v321
    %v324 = vmul.f32 %v322, 1.442695
    %v325 = vpow.pop %v324
    %v326 = vmul.f32 %v323, 1.442695
    %v327 = vpow.pop %v326
    %v328 = vrot.slane %v325, 4
    %v329 = vadd.f32 %v325, %v328
    %v330 = vrot.slane %v329, 2
    %v331 = vadd.f32 %v329, %v330
    %v332 = vrot.slane %v331, 1
    %v333 = vadd.f32 %v331, %v332
    %v334 = vrot.slane %v327, 4
    %v335 = vadd.f32 %v327, %v334
    %v336 = vrot.slane %v335, 2
    %v337 = vadd.f32 %v335, %v336
    %v338 = vrot.slane %v337, 1
    %v339 = vadd.f32 %v337, %v338
    %v340 = vrcp.pop %v333
    %v341 = vrcp.pop %v339
    %v342 = vmul.f32 %v325, %v340
    %v343 = vmul.f32 %v327, %v341
    %v344 = vld [vmem:[%s4] sm:$0xff]
    %345 = vxpose.xlu0.b32.start [1/16] %v344, 128
    %346 = vxpose.xlu0.b32.cont [2/16] 0.0, 128
    %347 = vxpose.xlu0.b32.cont [3/16] 0.0, 128
    %348 = vxpose.xlu0.b32.cont [4/16] 0.0, 128
    %349 = vxpose.xlu0.b32.cont [5/16] 0.0, 128
    %350 = vxpose.xlu0.b32.cont [6/16] 0.0, 128
    %351 = vxpose.xlu0.b32.cont [7/16] 0.0, 128
    %352 = vxpose.xlu0.b32.cont [8/16] 0.0, 128
    %353 = vxpose.xlu0.b32.cont [9/16] 0.0, 128
    %354 = vxpose.xlu0.b32.cont [10/16] 0.0, 128
    %355 = vxpose.xlu0.b32.cont [11/16] 0.0, 128
    %356 = vxpose.xlu0.b32.cont [12/16] 0.0, 128
    %357 = vxpose.xlu0.b32.cont [13/16] 0.0, 128
    %358 = vxpose.xlu0.b32.cont [14/16] 0.0, 128
    %359 = vxpose.xlu0.b32.cont [15/16] 0.0, 128
    %360 = vxpose.xlu0.b32.end [16/16] 0.0, 128
    %v361 = vpop.trf.xlu0
    %v362 = vpop.trf.xlu0
    %v363 = vpop.trf.xlu0
    %v364 = vpop.trf.xlu0
    %v365 = vpop.trf.xlu0
    %v366 = vpop.trf.xlu0
    %v367 = vpop.trf.xlu0
    %v368 = vpop.trf.xlu0
    %v369 = vpop.trf.xlu0
    %v370 = vpop.trf.xlu0
    %v371 = vpop.trf.xlu0
    %v372 = vpop.trf.xlu0
    %v373 = vpop.trf.xlu0
    %v374 = vpop.trf.xlu0
    %v375 = vpop.trf.xlu0
    %v376 = vpop.trf.xlu0
    %vm377 = vcmask 64512
    %v379 = vsel %vm377, %v361, 0
    %v382 = vsel %vm377, %v362, 0
    %v385 = vsel %vm377, %v363, 0
    %v388 = vsel %vm377, %v364, 0
    %390 = vmatprep.subr.mxu0 %v343
    %391 = vmatpush1.msra.mxu0 %v342
    %392 = vmatprep.subr.mxu0 0.0
    %393 = vmatpush1.msra.mxu0 0.0
    %394 = vmatprep.subr.mxu0 0.0
    %395 = vmatpush1.msra.mxu0 0.0
    %396 = vmatprep.subr.mxu0 0.0
    %397 = vmatpush1.msra.mxu0 0.0
    %398 = vmatprep.subr.mxu0 0.0
    %399 = vmatpush1.msra.mxu0 0.0
    %400 = vmatprep.subr.mxu0 0.0
    %401 = vmatpush1.msra.mxu0 0.0
    %402 = vmatprep.subr.mxu0 0.0
    %403 = vmatpush1.msra.mxu0 0.0
    %404 = vmatprep.subr.mxu0 0.0
    %405 = vmatpush1.msra.mxu0 0.0
    %406 = vmatprep.subr.mxu0 0.0
    %407 = vmatpush1.msra.mxu0 0.0
    %408 = vmatprep.subr.mxu0 0.0
    %409 = vmatpush1.msra.mxu0 0.0
    %410 = vmatprep.subr.mxu0 0.0
    %411 = vmatpush1.msra.mxu0 0.0
    %412 = vmatprep.subr.mxu0 0.0
    %413 = vmatpush1.msra.mxu0 0.0
    %414 = vmatprep.subr.mxu0 0.0
    %415 = vmatpush1.msra.mxu0 0.0
    %416 = vmatprep.subr.mxu0 0.0
    %417 = vmatpush1.msra.mxu0 0.0
    %418 = vmatprep.subr.mxu0 0.0
    %419 = vmatpush1.msra.mxu0 0.0
    %420 = vmatprep.subr.mxu0 0.0
    %421 = vmatpush1.msra.mxu0 0.0
    %422 = vmatprep.subr.mxu0 0.0
    %423 = vmatpush1.msra.mxu0 0.0
    %424 = vmatprep.subr.mxu0 0.0
    %425 = vmatpush1.msra.mxu0 0.0
    %426 = vmatprep.subr.mxu0 0.0
    %427 = vmatpush1.msra.mxu0 0.0
    %428 = vmatprep.subr.mxu0 0.0
    %429 = vmatpush1.msra.mxu0 0.0
    %430 = vmatprep.subr.mxu0 0.0
    %431 = vmatpush1.msra.mxu0 0.0
    %432 = vmatprep.subr.mxu0 0.0
    %433 = vmatpush1.msra.mxu0 0.0
    %434 = vmatprep.subr.mxu0 0.0
    %435 = vmatpush1.msra.mxu0 0.0
    %436 = vmatprep.subr.mxu0 0.0
    %437 = vmatpush1.msra.mxu0 0.0
    %438 = vmatprep.subr.mxu0 0.0
    %439 = vmatpush1.msra.mxu0 0.0
    %440 = vmatprep.subr.mxu0 0.0
    %441 = vmatpush1.msra.mxu0 0.0
    %442 = vmatprep.subr.mxu0 0.0
    %443 = vmatpush1.msra.mxu0 0.0
    %444 = vmatprep.subr.mxu0 0.0
    %445 = vmatpush1.msra.mxu0 0.0
    %446 = vmatprep.subr.mxu0 0.0
    %447 = vmatpush1.msra.mxu0 0.0
    %448 = vmatprep.subr.mxu0 0.0
    %449 = vmatpush1.msra.mxu0 0.0
    %450 = vmatprep.subr.mxu0 0.0
    %451 = vmatpush1.msra.mxu0 0.0
    %452 = vmatprep.subr.mxu0 0.0
    %453 = vmatpush1.msra.mxu0 0.0
    %454 = vmatprep.mubr.f32.mxu0 0.0
    %455 = vmatmul.mubr.f32.gmra.mrb[0].mxu0 %v379
    %v456 = vpop.f32.mrb[0].mxu0
    %v457 = vadd.f32 0.0, %v456
    %v458 = vpop.f32.mrb[0].mxu0
    %v459 = vadd.f32 0.0, %v458
    %460 = vmatprep.mubr.f32.mxu0 0.0
    %461 = vmatmul.mubr.f32.gmra.mrb[0].mxu0 %v382
    %v462 = vpop.f32.mrb[0].mxu0
    %v463 = vadd.f32 0.0, %v462
    %v464 = vpop.f32.mrb[0].mxu0
    %v465 = vadd.f32 0.0, %v464
    %466 = vmatprep.mubr.f32.mxu0 0.0
    %467 = vmatmul.mubr.f32.gmra.mrb[0].mxu0 %v385
    %v468 = vpop.f32.mrb[0].mxu0
    %v469 = vadd.f32 0.0, %v468
    %v470 = vpop.f32.mrb[0].mxu0
    %v471 = vadd.f32 0.0, %v470
    %472 = vmatprep.mubr.f32.mxu0 0.0
    %473 = vmatmul.mubr.f32.gmra.mrb[0].mxu0 %v388
    %v474 = vpop.f32.mrb[0].mxu0
    %v475 = vadd.f32 0.0, %v474
    %v476 = vpop.f32.mrb[0].mxu0
    %v477 = vadd.f32 0.0, %v476
    %478 = vdwg.mxu0
    %v479 = vld [vmem:[%s9] sm:$0xff]
    %v480 = vld [vmem:[%s9 + $0x8] sm:$0xff]
    %v481 = vld [vmem:[%s9 + $0x10] sm:$0xff]
    %v482 = vld [vmem:[%s9 + $0x18] sm:$0xff]
    %v483 = vld [vmem:[%s10] sm:$0xff]
    %v484 = vld [vmem:[%s10 + $0x8] sm:$0xff]
    %v485 = vld [vmem:[%s10 + $0x10] sm:$0xff]
    %v486 = vld [vmem:[%s10 + $0x18] sm:$0xff]
    %488 = vset.pattern.permute.xlu0 0
    %489 = vperm.xlu0 %488, %v483
    %v490 = vpop.permute.xlu0 %489
    %493 = vset.pattern.permute.xlu0 0
    %494 = vperm.xlu0 %493, %v484
    %v495 = vpop.permute.xlu0 %494
    %498 = vset.pattern.permute.xlu0 0
    %499 = vperm.xlu0 %498, %v485
    %v500 = vpop.permute.xlu0 %499
    %503 = vset.pattern.permute.xlu0 0
    %504 = vperm.xlu0 %503, %v486
    %v505 = vpop.permute.xlu0 %504
    %v508 = vsel %vm114, %v479, 0
    %v511 = vsel %vm114, %v480, 0
    %v514 = vsel %vm114, %v481, 0
    %v517 = vsel %vm114, %v482, 0
    %519 = vmatprep.subr.mxu0 %v459
    %520 = vmatpush1.msra.mxu0 %v457
    %521 = vmatprep.subr.mxu0 %v465
    %522 = vmatpush1.msra.mxu0 %v463
    %523 = vmatprep.subr.mxu0 %v471
    %524 = vmatpush1.msra.mxu0 %v469
    %525 = vmatprep.subr.mxu0 %v477
    %526 = vmatpush1.msra.mxu0 %v475
    %527 = vmatprep.subr.mxu0 0.0
    %528 = vmatpush1.msra.mxu0 0.0
    %529 = vmatprep.subr.mxu0 0.0
    %530 = vmatpush1.msra.mxu0 0.0
    %531 = vmatprep.subr.mxu0 0.0
    %532 = vmatpush1.msra.mxu0 0.0
    %533 = vmatprep.subr.mxu0 0.0
    %534 = vmatpush1.msra.mxu0 0.0
    %535 = vmatprep.subr.mxu0 0.0
    %536 = vmatpush1.msra.mxu0 0.0
    %537 = vmatprep.subr.mxu0 0.0
    %538 = vmatpush1.msra.mxu0 0.0
    %539 = vmatprep.subr.mxu0 0.0
    %540 = vmatpush1.msra.mxu0 0.0
    %541 = vmatprep.subr.mxu0 0.0
    %542 = vmatpush1.msra.mxu0 0.0
    %543 = vmatprep.subr.mxu0 0.0
    %544 = vmatpush1.msra.mxu0 0.0
    %545 = vmatprep.subr.mxu0 0.0
    %546 = vmatpush1.msra.mxu0 0.0
    %547 = vmatprep.subr.mxu0 0.0
    %548 = vmatpush1.msra.mxu0 0.0
    %549 = vmatprep.subr.mxu0 0.0
    %550 = vmatpush1.msra.mxu0 0.0
    %551 = vmatprep.subr.mxu0 0.0
    %552 = vmatpush1.msra.mxu0 0.0
    %553 = vmatprep.subr.mxu0 0.0
    %554 = vmatpush1.msra.mxu0 0.0
    %555 = vmatprep.subr.mxu0 0.0
    %556 = vmatpush1.msra.mxu0 0.0
    %557 = vmatprep.subr.mxu0 0.0
    %558 = vmatpush1.msra.mxu0 0.0
    %559 = vmatprep.subr.mxu0 0.0
    %560 = vmatpush1.msra.mxu0 0.0
    %561 = vmatprep.subr.mxu0 0.0
    %562 = vmatpush1.msra.mxu0 0.0
    %563 = vmatprep.subr.mxu0 0.0
    %564 = vmatpush1.msra.mxu0 0.0
    %565 = vmatprep.subr.mxu0 0.0
    %566 = vmatpush1.msra.mxu0 0.0
    %567 = vmatprep.subr.mxu0 0.0
    %568 = vmatpush1.msra.mxu0 0.0
    %569 = vmatprep.subr.mxu0 0.0
    %570 = vmatpush1.msra.mxu0 0.0
    %571 = vmatprep.subr.mxu0 0.0
    %572 = vmatpush1.msra.mxu0 0.0
    %573 = vmatprep.subr.mxu0 0.0
    %574 = vmatpush1.msra.mxu0 0.0
    %575 = vmatprep.subr.mxu0 0.0
    %576 = vmatpush1.msra.mxu0 0.0
    %577 = vmatprep.subr.mxu0 0.0
    %578 = vmatpush1.msra.mxu0 0.0
    %579 = vmatprep.subr.mxu0 0.0
    %580 = vmatpush1.msra.mxu0 0.0
    %581 = vmatprep.subr.mxu0 0.0
    %582 = vmatpush1.msra.mxu0 0.0
    %583 = vmatprep.mubr.f32.mxu0 0.0
    %584 = vmatmul.mubr.f32.gmra.mrb[0].mxu0 %v508
    %v585 = vpop.f32.mrb[0].mxu0
    %v586 = vadd.f32 %v490, %v585
    %v587 = vpop.f32.mrb[0].mxu0
    %v588 = vadd.f32 %v490, %v587
    %589 = vmatprep.mubr.f32.mxu0 0.0
    %590 = vmatmul.mubr.f32.gmra.mrb[0].mxu0 %v511
    %v591 = vpop.f32.mrb[0].mxu0
    %v592 = vadd.f32 %v495, %v591
    %v593 = vpop.f32.mrb[0].mxu0
    %v594 = vadd.f32 %v495, %v593
    %595 = vmatprep.mubr.f32.mxu0 0.0
    %596 = vmatmul.mubr.f32.gmra.mrb[0].mxu0 %v514
    %v597 = vpop.f32.mrb[0].mxu0
    %v598 = vadd.f32 %v500, %v597
    %v599 = vpop.f32.mrb[0].mxu0
    %v600 = vadd.f32 %v500, %v599
    %601 = vmatprep.mubr.f32.mxu0 0.0
    %602 = vmatmul.mubr.f32.gmra.mrb[0].mxu0 %v517
    %v603 = vpop.f32.mrb[0].mxu0
    %v604 = vadd.f32 %v505, %v603
    %v605 = vpop.f32.mrb[0].mxu0
    %v606 = vadd.f32 %v505, %v605
    %607 = vdwg.mxu0
    %v608 = vadd.f32 %v58, %v586
    %v609 = vadd.f32 %v59, %v588
    %v610 = vadd.f32 %v60, %v592
    %v611 = vadd.f32 %v61, %v594
    %v612 = vadd.f32 %v62, %v598
    %v613 = vadd.f32 %v63, %v600
    %v614 = vadd.f32 %v64, %v604
    %v615 = vadd.f32 %v65, %v606
    %v616 = vld [vmem:[%s11] sm:$0xff]
    %v617 = vld [vmem:[%s11 + $0x8] sm:$0xff]
    %v618 = vld [vmem:[%s11 + $0x10] sm:$0xff]
    %v619 = vld [vmem:[%s11 + $0x18] sm:$0xff]
    %v620 = vld [vmem:[%s12] sm:$0xff]
    %v621 = vld [vmem:[%s12 + $0x8] sm:$0xff]
    %v622 = vld [vmem:[%s12 + $0x10] sm:$0xff]
    %v623 = vld [vmem:[%s12 + $0x18] sm:$0xff]
    %v624 = vadd.f32 %v608, %v610
    %v625 = vadd.f32 %v624, %v612
    %v626 = vadd.f32 %v625, %v614
    %v627 = vrot.slane %v626, 4
    %v628 = vadd.f32 %v626, %v627
    %v629 = vrot.slane %v628, 2
    %v630 = vadd.f32 %v628, %v629
    %v631 = vrot.slane %v630, 1
    %v632 = vadd.f32 %v630, %v631
    %v633 = vadd.f32 %v609, %v611
    %v634 = vadd.f32 %v633, %v613
    %v635 = vadd.f32 %v634, %v615
    %v636 = vrot.slane %v635, 4
    %v637 = vadd.f32 %v635, %v636
    %v638 = vrot.slane %v637, 2
    %v639 = vadd.f32 %v637, %v638
    %v640 = vrot.slane %v639, 1
    %v641 = vadd.f32 %v639, %v640
    %v642 = vrcp.pop 32.0
    %v643 = vmul.f32 %v632, %v642
    %v644 = vmul.f32 %v641, %v642
    %v645 = vsub.f32 %v608, %v643
    %v646 = vsub.f32 %v609, %v644
    %v647 = vsub.f32 %v610, %v643
    %v648 = vsub.f32 %v611, %v644
    %v649 = vsub.f32 %v612, %v643
    %v650 = vsub.f32 %v613, %v644
    %v651 = vsub.f32 %v614, %v643
    %v652 = vsub.f32 %v615, %v644
    %v653 = vmul.f32 %v645, %v645
    %v654 = vmul.f32 %v646, %v646
    %v655 = vmul.f32 %v647, %v647
    %v656 = vmul.f32 %v648, %v648
    %v657 = vmul.f32 %v649, %v649
    %v658 = vmul.f32 %v650, %v650
    %v659 = vmul.f32 %v651, %v651
    %v660 = vmul.f32 %v652, %v652
    %v661 = vadd.f32 %v653, %v655
    %v662 = vadd.f32 %v661, %v657
    %v663 = vadd.f32 %v662, %v659
    %v664 = vrot.slane %v663, 4
    %v665 = vadd.f32 %v663, %v664
    %v666 = vrot.slane %v665, 2
    %v667 = vadd.f32 %v665, %v666
    %v668 = vrot.slane %v667, 1
    %v669 = vadd.f32 %v667, %v668
    %v670 = vadd.f32 %v654, %v656
    %v671 = vadd.f32 %v670, %v658
    %v672 = vadd.f32 %v671, %v660
    %v673 = vrot.slane %v672, 4
    %v674 = vadd.f32 %v672, %v673
    %v675 = vrot.slane %v674, 2
    %v676 = vadd.f32 %v674, %v675
    %v677 = vrot.slane %v676, 1
    %v678 = vadd.f32 %v676, %v677
    %v679 = vmul.f32 %v669, %v642
    %v680 = vmul.f32 %v678, %v642
    %v681 = vadd.f32 %v679, 1e-05
    %v682 = vadd.f32 %v680, 1e-05
    %v683 = vrsqrt.pop %v681
    %v684 = vrsqrt.pop %v682
    %v685 = vmul.f32 %v645, %v683
    %v686 = vmul.f32 %v646, %v684
    %v687 = vmul.f32 %v647, %v683
    %v688 = vmul.f32 %v648, %v684
    %v689 = vmul.f32 %v649, %v683
    %v690 = vmul.f32 %v650, %v684
    %v691 = vmul.f32 %v651, %v683
    %v692 = vmul.f32 %v652, %v684
    %694 = vset.pattern.permute.xlu0 0
    %695 = vperm.xlu0 %694, %v616
    %v696 = vpop.permute.xlu0 %695
    %699 = vset.pattern.permute.xlu0 0
    %700 = vperm.xlu0 %699, %v617
    %v701 = vpop.permute.xlu0 %700
    %704 = vset.pattern.permute.xlu0 0
    %705 = vperm.xlu0 %704, %v618
    %v706 = vpop.permute.xlu0 %705
    %709 = vset.pattern.permute.xlu0 0
    %710 = vperm.xlu0 %709, %v619
    %v711 = vpop.permute.xlu0 %710
    %v713 = vmul.f32 %v685, %v696
    %v714 = vmul.f32 %v686, %v696
    %v715 = vmul.f32 %v687, %v701
    %v716 = vmul.f32 %v688, %v701
    %v717 = vmul.f32 %v689, %v706
    %v718 = vmul.f32 %v690, %v706
    %v719 = vmul.f32 %v691, %v711
    %v720 = vmul.f32 %v692, %v711
    %722 = vset.pattern.permute.xlu0 0
    %723 = vperm.xlu0 %722, %v620
    %v724 = vpop.permute.xlu0 %723
    %727 = vset.pattern.permute.xlu0 0
    %728 = vperm.xlu0 %727, %v621
    %v729 = vpop.permute.xlu0 %728
    %732 = vset.pattern.permute.xlu0 0
    %733 = vperm.xlu0 %732, %v622
    %v734 = vpop.permute.xlu0 %733
    %737 = vset.pattern.permute.xlu0 0
    %738 = vperm.xlu0 %737, %v623
    %v739 = vpop.permute.xlu0 %738
    %v741 = vadd.f32 %v713, %v724
    %v742 = vadd.f32 %v714, %v724
    %v743 = vadd.f32 %v715, %v729
    %v744 = vadd.f32 %v716, %v729
    %v745 = vadd.f32 %v717, %v734
    %v746 = vadd.f32 %v718, %v734
    %v747 = vadd.f32 %v719, %v739
    %v748 = vadd.f32 %v720, %v739
    %v749 = vpack.c.bf16 %v743, %v741
    %v750 = vpack.c.bf16 %v744, %v742
    %v751 = vpack.c.bf16 %v747, %v745
    %v752 = vpack.c.bf16 %v748, %v746
    %v757 = vunpack.c.l.b16 %v749
    %v758 = vunpack.c.l.b16 %v750
    %v759 = vunpack.c.h.b16 %v749
    %v760 = vunpack.c.h.b16 %v750
    %v761 = vunpack.c.l.b16 %v751
    %v762 = vunpack.c.l.b16 %v752
    %v763 = vunpack.c.h.b16 %v751
    %v764 = vunpack.c.h.b16 %v752
    %v765 = vpack.c.b16 %v758, %v757
    %v766 = vpack.c.b16 %v760, %v759
    %v767 = vpack.c.b16 %v762, %v761
    %v768 = vpack.c.b16 %v764, %v763
    %773 = vst [vmem:[%s13] sm:$0xff] %v765
    %774 = vst [vmem:[%s13 + $0x8] sm:$0xff] %v766
    %775 = vst [vmem:[%s13 + $0x10] sm:$0xff] %v767
    %776 = vst [vmem:[%s13 + $0x18] sm:$0xff] %v768
    %v777 = vld [vmem:[%s5] sm:$0xff]
    %v779 = vsel %vm114, %v777, 0
    %781 = vmatprep.subr.mxu0 %v742
    %782 = vmatpush1.msra.mxu0 %v741
    %783 = vmatprep.subr.mxu0 %v744
    %784 = vmatpush1.msra.mxu0 %v743
    %785 = vmatprep.subr.mxu0 %v746
    %786 = vmatpush1.msra.mxu0 %v745
    %787 = vmatprep.subr.mxu0 %v748
    %788 = vmatpush1.msra.mxu0 %v747
    %789 = vmatprep.subr.mxu0 0.0
    %790 = vmatpush1.msra.mxu0 0.0
    %791 = vmatprep.subr.mxu0 0.0
    %792 = vmatpush1.msra.mxu0 0.0
    %793 = vmatprep.subr.mxu0 0.0
    %794 = vmatpush1.msra.mxu0 0.0
    %795 = vmatprep.subr.mxu0 0.0
    %796 = vmatpush1.msra.mxu0 0.0
    %797 = vmatprep.subr.mxu0 0.0
    %798 = vmatpush1.msra.mxu0 0.0
    %799 = vmatprep.subr.mxu0 0.0
    %800 = vmatpush1.msra.mxu0 0.0
    %801 = vmatprep.subr.mxu0 0.0
    %802 = vmatpush1.msra.mxu0 0.0
    %803 = vmatprep.subr.mxu0 0.0
    %804 = vmatpush1.msra.mxu0 0.0
    %805 = vmatprep.subr.mxu0 0.0
    %806 = vmatpush1.msra.mxu0 0.0
    %807 = vmatprep.subr.mxu0 0.0
    %808 = vmatpush1.msra.mxu0 0.0
    %809 = vmatprep.subr.mxu0 0.0
    %810 = vmatpush1.msra.mxu0 0.0
    %811 = vmatprep.subr.mxu0 0.0
    %812 = vmatpush1.msra.mxu0 0.0
    %813 = vmatprep.subr.mxu0 0.0
    %814 = vmatpush1.msra.mxu0 0.0
    %815 = vmatprep.subr.mxu0 0.0
    %816 = vmatpush1.msra.mxu0 0.0
    %817 = vmatprep.subr.mxu0 0.0
    %818 = vmatpush1.msra.mxu0 0.0
    %819 = vmatprep.subr.mxu0 0.0
    %820 = vmatpush1.msra.mxu0 0.0
    %821 = vmatprep.subr.mxu0 0.0
    %822 = vmatpush1.msra.mxu0 0.0
    %823 = vmatprep.subr.mxu0 0.0
    %824 = vmatpush1.msra.mxu0 0.0
    %825 = vmatprep.subr.mxu0 0.0
    %826 = vmatpush1.msra.mxu0 0.0
    %827 = vmatprep.subr.mxu0 0.0
    %828 = vmatpush1.msra.mxu0 0.0
    %829 = vmatprep.subr.mxu0 0.0
    %830 = vmatpush1.msra.mxu0 0.0
    %831 = vmatprep.subr.mxu0 0.0
    %832 = vmatpush1.msra.mxu0 0.0
    %833 = vmatprep.subr.mxu0 0.0
    %834 = vmatpush1.msra.mxu0 0.0
    %835 = vmatprep.subr.mxu0 0.0
    %836 = vmatpush1.msra.mxu0 0.0
    %837 = vmatprep.subr.mxu0 0.0
    %838 = vmatpush1.msra.mxu0 0.0
    %839 = vmatprep.subr.mxu0 0.0
    %840 = vmatpush1.msra.mxu0 0.0
    %841 = vmatprep.subr.mxu0 0.0
    %842 = vmatpush1.msra.mxu0 0.0
    %843 = vmatprep.subr.mxu0 0.0
    %844 = vmatpush1.msra.mxu0 0.0
    %845 = vmatprep.mubr.f32.mxu0 0.0
    %846 = vmatmul.mubr.f32.gmra.mrb[0].mxu0 %v779
    %v847 = vpop.f32.mrb[0].mxu0
    %v848 = vadd.f32 0.0, %v847
    %v849 = vpop.f32.mrb[0].mxu0
    %v850 = vadd.f32 0.0, %v849
    %851 = vdwg.mxu0
    %v852 = vsub.f32 0.0, %v848
    %v853 = vsub.f32 0.0, %v850
    %v854 = vmul.f32 %v852, 1.442695
    %v855 = vpow.pop %v854
    %v856 = vmul.f32 %v853, 1.442695
    %v857 = vpow.pop %v856
    %v858 = vadd.f32 %v855, 1.0
    %v859 = vadd.f32 %v857, 1.0
    %v860 = vrcp.pop %v858
    %v861 = vrcp.pop %v859
    %v862 = vmin.f32 %v860, 1.0
    %v863 = vmin.f32 %v861, 1.0
    %v864 = vpack.c.bf16 %v862, %v862
    %v865 = vpack.c.bf16 %v863, %v863
    %v868 = vunpack.c.l.b16 %v864
    %v869 = vunpack.c.l.b16 %v865
    %v870 = vpack.c.b16 %v869, %v868
    %872 = vst [vmem:[%s14] sm:$0xff] %v870
    %v873 = vld [vmem:[%s2] sm:$0x3]
    %vm874 = vcmp.ge.s32.totalorder %v873, 0
    %vm875 = vcmp.ge.f32.partialorder %v862, 0.5
    %vm876 = vcmp.ge.f32.partialorder %v863, 0.5
    %v877 = vsel %vm874, 1, 0
    %v878 = vlaneseq
    %v879 = vshrl.u32 %v878, 7
    %v880 = vsub.s32 0, %v879
    %v881 = vrot.slane %v877, %v880
    %v882 = vlaneseq
    %v883 = vshrl.u32 %v882, 7
    %v884 = vsub.s32 1, %v883
    %v885 = vrot.slane %v877, %v884
    %vm886 = vcmp.eq.s32.totalorder %v881, 1
    %vm887 = vcmp.eq.s32.totalorder %v885, 1
    %vm888 = vmand %vm875, %vm886
    %vm889 = vmand %vm876, %vm887
    %v890 = vsel %vm888, 1.0, 0.0
    %v891 = vsel %vm889, 1.0, 0.0
    %v892 = vld [vmem:[#allocation2] sm:$0xff]
    %v893 = vmax.f32 %v890, %v891
    %894 = vmax.xlane.f32.xlu0 %v893
    %v895 = vpop.xlane.xlu0 %894
    %v896 = vmax.f32 %v892, %v895
    %vm897 = vcmask 7168
    %898 = vst.msk [vmem:[#allocation2] sm:$0xff] %vm897, %v896
    // Predicated region
    $region58: #{_lambda_.11} parent=1 // pred_check
      _
    $region59: #{_lambda_.11} parent=1 // pred_check_branch
      %900 = sbr.rel (0) target = $region61
    $region60: #{_lambda_.11} parent=1 // pred_region
      _
    $region61: #{_lambda_.11} parent=1 // pred_fallthru
      _
    // Predicated region
    $region62: #{_lambda_.11} parent=1 // pred_check
      _
    $region63: #{_lambda_.11} parent=1 // pred_check_branch
      %902 = sbr.rel (0) target = $region65
    $region64: #{_lambda_.11} parent=1 // pred_region
      _
    $region65: #{_lambda_.11} parent=1 // pred_fallthru
      _
    // Predicated region
    $region66: #{_lambda_.11} parent=1 // pred_check
      _
    $region67: #{_lambda_.11} parent=1 // pred_check_branch
      %904 = sbr.rel (0) target = $region69
    $region68: #{_lambda_.11} parent=1 // pred_region
      %s906 = ssub.s32 128, 128
      %907 = vsyncadd [#allocation3], %s906
      %s909 = sshll.u32 [#allocation2], 4
      %s910 = int_to_ptr.vmem [resolvable:$true] %s909
      %912 = dma.vmem_to_hbm [thread:$0]  %s910, 128, %s15, [#allocation3]
    $region69: #{_lambda_.11} parent=1 // pred_fallthru
      _
    // Predicated region
    $region70: #{_lambda_.11} parent=1 // pred_check
      _
    $region71: #{_lambda_.11} parent=1 // pred_check_branch
      %914 = sbr.rel (0) target = $region73
    $region72: #{_lambda_.11} parent=1 // pred_region
      _
    $region73: #{_lambda_.11} parent=1 // pred_fallthru
      _
    // Predicated region
    $region74: #{_lambda_.11} parent=1 // pred_check
      _
    $region75: #{_lambda_.11} parent=1 // pred_check_branch
      %916 = sbr.rel (0) target = $region77
    $region76: #{_lambda_.11} parent=1 // pred_region
      _
    $region77: #{_lambda_.11} parent=1 // pred_fallthru
      _
    // Predicated region
    $region78: #{_lambda_.11} parent=1 // pred_check
      _
    $region79: #{_lambda_.11} parent=1 // pred_check_branch
      %918 = sbr.rel (0) target = $region81
    $region80: #{_lambda_.11} parent=1 // pred_region
      %919 = dma.done [#allocation3], 128
    $region81: #{_lambda_.11} parent=1 // pred_fallthru
      _
    %920 = vsyncpa [#allocation3], 1

// kernel: _lambda_.10
$region0: #{_lambda_.10}
  #allocation0 [shape = 'u32[]', space=smem, size = 0x4, offset = 0x4, fixed_abs, tag = 'smem constant byte address 0x4 - core index']
  #allocation1 [shape = 'u32[144,128]{1,0:T(1,128)}', space=vmem, size = 0x12000, scoped, tag = 'internal scratch']
  #allocation2 [shape = 'f32[8,32]{1,0:T(8,128)}', space=vmem, size = 0x1000, scoped, tag = 'scratch operand']
  #allocation3 [shape = 'f32[8,32]{1,0:T(8,128)}', space=vmem, size = 0x1000, scoped, tag = 'scratch operand']
  #allocation4 [shape = 'f32[8,1]{1,0:T(8,128)}', space=vmem, size = 0x1000, scoped, tag = 'scratch operand']
  #allocation5 [shape = 'f32[8,1]{1,0:T(8,128)}', space=vmem, size = 0x1000, scoped, tag = 'scratch operand']
  #allocation6 [shape = 'f32[8,32]{1,0:T(8,128)}', space=vmem, size = 0x1000, scoped, tag = 'scratch operand']
  %s0 = inlined_call_operand.smem [shape: u32[54], index: -1, kind: input, shape index: {}]
  %s1 = sld [smem:[%s0]]
  %s2 = scalar_lea.smem %s0, 1
  %s3 = sld [smem:[%s2]]
  %s4 = scalar_lea.smem %s0, 2
  %s5 = sld [smem:[%s4]]
  %s6 = scalar_lea.smem %s0, 3
  %s7 = sld [smem:[%s6]]
  %s8 = scalar_lea.smem %s0, 4
  %s9 = sld [smem:[%s8]]
  %s10 = scalar_lea.smem %s0, 5
  %s11 = sld [smem:[%s10]]
  %s12 = scalar_lea.smem %s0, 6
  %s13 = sld [smem:[%s12]]
  %s14 = scalar_lea.smem %s0, 7
  %s15 = sld [smem:[%s14]]
  %s16 = scalar_lea.smem %s0, 8
  %s17 = sld [smem:[%s16]]
  %s18 = scalar_lea.smem %s0, 9
  %s19 = sld [smem:[%s18]]
  %s20 = scalar_lea.smem %s0, 10
  %s21 = sld [smem:[%s20]]
  %s22 = scalar_lea.smem %s0, 11
  %s23 = sld [smem:[%s22]]
  %s24 = scalar_lea.smem %s0, 12
  %s25 = sld [smem:[%s24]]
  %s26 = scalar_lea.smem %s0, 13
  %s27 = sld [smem:[%s26]]
  %s28 = scalar_lea.smem %s0, 14
  %s29 = sld [smem:[%s28]]
  %s30 = scalar_lea.smem %s0, 15
  %s31 = sld [smem:[%s30]]
  %s32 = scalar_lea.smem %s0, 16
  %s33 = sld [smem:[%s32]]
  %s34 = scalar_lea.smem %s0, 17
  %s35 = sld [smem:[%s34]]
  %s36 = scalar_lea.smem %s0, 18
  %s37 = sld [smem:[%s36]]
  %s38 = scalar_lea.smem %s0, 19
  %s39 = sld [smem:[%s38]]
  %s40 = scalar_lea.smem %s0, 20
  %s41 = sld [smem:[%s40]]
  %s42 = scalar_lea.smem %s0, 21
  %s43 = sld [smem:[%s42]]
  %s44 = scalar_lea.smem %s0, 22
  %s45 = sld [smem:[%s44]]
  %s46 = scalar_lea.smem %s0, 23
  %s47 = sld [smem:[%s46]]
  %s48 = scalar_lea.smem %s0, 24
  %s49 = sld [smem:[%s48]]
  %s50 = scalar_lea.smem %s0, 25
  %s51 = sld [smem:[%s50]]
  %s52 = scalar_lea.smem %s0, 26
  %s53 = sld [smem:[%s52]]
  %s54 = scalar_lea.smem %s0, 27
  %s55 = sld [smem:[%s54]]
  %s56 = scalar_lea.smem %s0, 28
  %s57 = sld [smem:[%s56]]
  %s58 = scalar_lea.smem %s0, 29
  %s59 = sld [smem:[%s58]]
  %s60 = scalar_lea.smem %s0, 30
  %s61 = sld [smem:[%s60]]
  %s62 = scalar_lea.smem %s0, 31
  %s63 = sld [smem:[%s62]]
  %s64 = scalar_lea.smem %s0, 32
  %s65 = sld [smem:[%s64]]
  %s66 = scalar_lea.smem %s0, 33
  %s67 = sld [smem:[%s66]]
  %s68 = scalar_lea.smem %s0, 34
  %s69 = sld [smem:[%s68]]
  %s70 = scalar_lea.smem %s0, 35
  %s71 = sld [smem:[%s70]]
  %s72 = scalar_lea.smem %s0, 36
  %s73 = sld [smem:[%s72]]
  %s74 = scalar_lea.smem %s0, 37
  %s75 = sld [smem:[%s74]]
  %s76 = scalar_lea.smem %s0, 38
  %s77 = sld [smem:[%s76]]
  %s78 = scalar_lea.smem %s0, 39
  %s79 = sld [smem:[%s78]]
  %s80 = scalar_lea.smem %s0, 40
  %s81 = sld [smem:[%s80]]
  %s82 = scalar_lea.smem %s0, 41
  %s83 = sld [smem:[%s82]]
  %s84 = scalar_lea.smem %s0, 42
  %s85 = sld [smem:[%s84]]
  %s86 = scalar_lea.smem %s0, 43
  %s87 = sld [smem:[%s86]]
  %s88 = scalar_lea.smem %s0, 44
  %s89 = sld [smem:[%s88]]
  %s90 = scalar_lea.smem %s0, 45
  %s91 = sld [smem:[%s90]]
  %s92 = scalar_lea.smem %s0, 46
  %s93 = sld [smem:[%s92]]
  %s94 = scalar_lea.smem %s0, 47
  %s95 = sld [smem:[%s94]]
  %s96 = scalar_lea.smem %s0, 48
  %s97 = sld [smem:[%s96]]
  %s98 = scalar_lea.smem %s0, 49
  %s99 = sld [smem:[%s98]]
  %s100 = scalar_lea.smem %s0, 50
  %s101 = sld [smem:[%s100]]
  %s102 = scalar_lea.smem %s0, 51
  %s103 = sld [smem:[%s102]]
  %s104 = scalar_lea.smem %s0, 52
  %s105 = sld [smem:[%s104]]
  %s106 = scalar_lea.smem %s0, 53
  %s107 = sld [smem:[%s106]]
  %108 = xla_tuple %s99, %s101, %s103, %s105, %s107
  %s109 = sld [smem:[#allocation0]]
  $region246: #{_lambda_.10} parent=0
    _
  %s111 = ssub.s32 1, %s109
  %s112 = scalar_select 0, %s111, %s109
  $region1: #{_lambda_.10} parent=0
    #allocation7 [shape = 'u8[4096]{0}', space=vmem, size = 0x1000, scoped, tag = 'output window, operand 0, single buffered']
    #allocation8 [shape = 's32[1]{0}', space=sflag, size = 0x4, scoped, tag = 'scoped memory for _lambda_.10']
    #allocation9 [shape = 'u8[4096]{0}', space=vmem, size = 0x1000, scoped, tag = 'output window, operand 1, single buffered']
    #allocation10 [shape = 's32[1]{0}', space=sflag, size = 0x4, scoped, tag = 'scoped memory for _lambda_.10']
    %113 = vsyncpa [#allocation8], 0
    %114 = vsyncpa [#allocation10], 0
    // Predicated region
    $region2: #{_lambda_.10} parent=1 // pred_check
      _
    $region3: #{_lambda_.10} parent=1 // pred_check_branch
      %116 = sbr.rel (0) target = $region5
    $region4: #{_lambda_.10} parent=1 // pred_region
      _
    $region5: #{_lambda_.10} parent=1 // pred_fallthru
      _
    // Predicated region
    $region6: #{_lambda_.10} parent=1 // pred_check
      _
    $region7: #{_lambda_.10} parent=1 // pred_check_branch
      %118 = sbr.rel (0) target = $region9
    $region8: #{_lambda_.10} parent=1 // pred_region
      _
    $region9: #{_lambda_.10} parent=1 // pred_fallthru
      _
    // Predicated region
    $region10: #{_lambda_.10} parent=1 // pred_check
      _
    $region11: #{_lambda_.10} parent=1 // pred_check_branch
      %120 = sbr.rel (0) target = $region13
    $region12: #{_lambda_.10} parent=1 // pred_region
      _
    $region13: #{_lambda_.10} parent=1 // pred_fallthru
      _
    // Predicated region
    $region14: #{_lambda_.10} parent=1 // pred_check
      _
    $region15: #{_lambda_.10} parent=1 // pred_check_branch
      %122 = sbr.rel (0) target = $region17
    $region16: #{_lambda_.10} parent=1 // pred_region
      _
    $region17: #{_lambda_.10} parent=1 // pred_fallthru
      _
    // Predicated region
    $region18: #{_lambda_.10} parent=1 // pred_check
      _
    $region19: #{_lambda_.10} parent=1 // pred_check_branch
      %124 = sbr.rel (0) target = $region21
    $region20: #{_lambda_.10} parent=1 // pred_region
      _
    $region21: #{_lambda_.10} parent=1 // pred_fallthru
      _
    // Predicated region
    $region22: #{_lambda_.10} parent=1 // pred_check
      _
    $region23: #{_lambda_.10} parent=1 // pred_check_branch
      %126 = sbr.rel (0) target = $region25
    $region24: #{_lambda_.10} parent=1 // pred_region
      _
    $region25: #{_lambda_.10} parent=1 // pred_fallthru
      _
    // Predicated region
    $region26: #{_lambda_.10} parent=1 // pred_check
      _
    $region27: #{_lambda_.10} parent=1 // pred_check_branch
      %128 = sbr.rel (0) target = $region29
    $region28: #{_lambda_.10} parent=1 // pred_region
      _
    $region29: #{_lambda_.10} parent=1 // pred_fallthru
      _
    // Predicated region
    $region30: #{_lambda_.10} parent=1 // pred_check
      _
    $region31: #{_lambda_.10} parent=1 // pred_check_branch
      %130 = sbr.rel (0) target = $region33
    $region32: #{_lambda_.10} parent=1 // pred_region
      _
    $region33: #{_lambda_.10} parent=1 // pred_fallthru
      _
    // Predicated region
    $region34: #{_lambda_.10} parent=1 // pred_check
      _
    $region35: #{_lambda_.10} parent=1 // pred_check_branch
      %132 = sbr.rel (0) target = $region37
    $region36: #{_lambda_.10} parent=1 // pred_region
      _
    $region37: #{_lambda_.10} parent=1 // pred_fallthru
      _
    // Predicated region
    $region38: #{_lambda_.10} parent=1 // pred_check
      _
    $region39: #{_lambda_.10} parent=1 // pred_check_branch
      %134 = sbr.rel (0) target = $region41
    $region40: #{_lambda_.10} parent=1 // pred_region
      _
    $region41: #{_lambda_.10} parent=1 // pred_fallthru
      _
    // Predicated region
    $region42: #{_lambda_.10} parent=1 // pred_check
      _
    $region43: #{_lambda_.10} parent=1 // pred_check_branch
      %136 = sbr.rel (0) target = $region45
    $region44: #{_lambda_.10} parent=1 // pred_region
      _
    $region45: #{_lambda_.10} parent=1 // pred_fallthru
      _
    // Predicated region
    $region46: #{_lambda_.10} parent=1 // pred_check
      _
    $region47: #{_lambda_.10} parent=1 // pred_check_branch
      %138 = sbr.rel (0) target = $region49
    $region48: #{_lambda_.10} parent=1 // pred_region
      _
    $region49: #{_lambda_.10} parent=1 // pred_fallthru
      _
    // Predicated region
    $region50: #{_lambda_.10} parent=1 // pred_check
      _
    $region51: #{_lambda_.10} parent=1 // pred_check_branch
      %140 = sbr.rel (0) target = $region53
    $region52: #{_lambda_.10} parent=1 // pred_region
      _
    $region53: #{_lambda_.10} parent=1 // pred_fallthru
      _
    // Predicated region
    $region54: #{_lambda_.10} parent=1 // pred_check
      _
    $region55: #{_lambda_.10} parent=1 // pred_check_branch
      %142 = sbr.rel (0) target = $region57
    $region56: #{_lambda_.10} parent=1 // pred_region
      _
    $region57: #{_lambda_.10} parent=1 // pred_fallthru
      _
    // Predicated region
    $region58: #{_lambda_.10} parent=1 // pred_check
      _
    $region59: #{_lambda_.10} parent=1 // pred_check_branch
      %144 = sbr.rel (0) target = $region61
    $region60: #{_lambda_.10} parent=1 // pred_region
      _
    $region61: #{_lambda_.10} parent=1 // pred_fallthru
      _
    // Predicated region
    $region62: #{_lambda_.10} parent=1 // pred_check
      _
    $region63: #{_lambda_.10} parent=1 // pred_check_branch
      %146 = sbr.rel (0) target = $region65
    $region64: #{_lambda_.10} parent=1 // pred_region
      _
    $region65: #{_lambda_.10} parent=1 // pred_fallthru
      _
    // Predicated region
    $region66: #{_lambda_.10} parent=1 // pred_check
      _
    $region67: #{_lambda_.10} parent=1 // pred_check_branch
      %148 = sbr.rel (0) target = $region69
    $region68: #{_lambda_.10} parent=1 // pred_region
      _
    $region69: #{_lambda_.10} parent=1 // pred_fallthru
      _
    // Predicated region
    $region70: #{_lambda_.10} parent=1 // pred_check
      _
    $region71: #{_lambda_.10} parent=1 // pred_check_branch
      %150 = sbr.rel (0) target = $region73
    $region72: #{_lambda_.10} parent=1 // pred_region
      _
    $region73: #{_lambda_.10} parent=1 // pred_fallthru
      _
    // Predicated region
    $region74: #{_lambda_.10} parent=1 // pred_check
      _
    $region75: #{_lambda_.10} parent=1 // pred_check_branch
      %152 = sbr.rel (0) target = $region77
    $region76: #{_lambda_.10} parent=1 // pred_region
      _
    $region77: #{_lambda_.10} parent=1 // pred_fallthru
      _
    // Predicated region
    $region78: #{_lambda_.10} parent=1 // pred_check
      _
    $region79: #{_lambda_.10} parent=1 // pred_check_branch
      %154 = sbr.rel (0) target = $region81
    $region80: #{_lambda_.10} parent=1 // pred_region
      _
    $region81: #{_lambda_.10} parent=1 // pred_fallthru
      _
    // Predicated region
    $region82: #{_lambda_.10} parent=1 // pred_check
      _
    $region83: #{_lambda_.10} parent=1 // pred_check_branch
      %156 = sbr.rel (0) target = $region85
    $region84: #{_lambda_.10} parent=1 // pred_region
      _
    $region85: #{_lambda_.10} parent=1 // pred_fallthru
      _
    // Predicated region
    $region86: #{_lambda_.10} parent=1 // pred_check
      _
    $region87: #{_lambda_.10} parent=1 // pred_check_branch
      %158 = sbr.rel (0) target = $region89
    $region88: #{_lambda_.10} parent=1 // pred_region
      _
    $region89: #{_lambda_.10} parent=1 // pred_fallthru
      _
    // Predicated region
    $region90: #{_lambda_.10} parent=1 // pred_check
      _
    $region91: #{_lambda_.10} parent=1 // pred_check_branch
      %160 = sbr.rel (0) target = $region93
    $region92: #{_lambda_.10} parent=1 // pred_region
      _
    $region93: #{_lambda_.10} parent=1 // pred_fallthru
      _
    // Predicated region
    $region94: #{_lambda_.10} parent=1 // pred_check
      _
    $region95: #{_lambda_.10} parent=1 // pred_check_branch
      %162 = sbr.rel (0) target = $region97
    $region96: #{_lambda_.10} parent=1 // pred_region
      _
    $region97: #{_lambda_.10} parent=1 // pred_fallthru
      _
    // Predicated region
    $region98: #{_lambda_.10} parent=1 // pred_check
      _
    $region99: #{_lambda_.10} parent=1 // pred_check_branch
      %164 = sbr.rel (0) target = $region101
    $region100: #{_lambda_.10} parent=1 // pred_region
      _
    $region101: #{_lambda_.10} parent=1 // pred_fallthru
      _
    // Predicated region
    $region102: #{_lambda_.10} parent=1 // pred_check
      _
    $region103: #{_lambda_.10} parent=1 // pred_check_branch
      %166 = sbr.rel (0) target = $region105
    $region104: #{_lambda_.10} parent=1 // pred_region
      _
    $region105: #{_lambda_.10} parent=1 // pred_fallthru
      _
    // Predicated region
    $region106: #{_lambda_.10} parent=1 // pred_check
      _
    $region107: #{_lambda_.10} parent=1 // pred_check_branch
      %168 = sbr.rel (0) target = $region109
    $region108: #{_lambda_.10} parent=1 // pred_region
      _
    $region109: #{_lambda_.10} parent=1 // pred_fallthru
      _
    // Predicated region
    $region110: #{_lambda_.10} parent=1 // pred_check
      _
    $region111: #{_lambda_.10} parent=1 // pred_check_branch
      %170 = sbr.rel (0) target = $region113
    $region112: #{_lambda_.10} parent=1 // pred_region
      _
    $region113: #{_lambda_.10} parent=1 // pred_fallthru
      _
    // Predicated region
    $region114: #{_lambda_.10} parent=1 // pred_check
      _
    $region115: #{_lambda_.10} parent=1 // pred_check_branch
      %172 = sbr.rel (0) target = $region117
    $region116: #{_lambda_.10} parent=1 // pred_region
      _
    $region117: #{_lambda_.10} parent=1 // pred_fallthru
      _
    // Predicated region
    $region118: #{_lambda_.10} parent=1 // pred_check
      _
    $region119: #{_lambda_.10} parent=1 // pred_check_branch
      %174 = sbr.rel (0) target = $region121
    $region120: #{_lambda_.10} parent=1 // pred_region
      _
    $region121: #{_lambda_.10} parent=1 // pred_fallthru
      _
    // Predicated region
    $region122: #{_lambda_.10} parent=1 // pred_check
      _
    $region123: #{_lambda_.10} parent=1 // pred_check_branch
      %176 = sbr.rel (0) target = $region125
    $region124: #{_lambda_.10} parent=1 // pred_region
      _
    $region125: #{_lambda_.10} parent=1 // pred_fallthru
      _
    // Predicated region
    $region126: #{_lambda_.10} parent=1 // pred_check
      _
    $region127: #{_lambda_.10} parent=1 // pred_check_branch
      %178 = sbr.rel (0) target = $region129
    $region128: #{_lambda_.10} parent=1 // pred_region
      _
    $region129: #{_lambda_.10} parent=1 // pred_fallthru
      _
    // Predicated region
    $region130: #{_lambda_.10} parent=1 // pred_check
      _
    $region131: #{_lambda_.10} parent=1 // pred_check_branch
      %180 = sbr.rel (0) target = $region133
    $region132: #{_lambda_.10} parent=1 // pred_region
      _
    $region133: #{_lambda_.10} parent=1 // pred_fallthru
      _
    // Predicated region
    $region134: #{_lambda_.10} parent=1 // pred_check
      _
    $region135: #{_lambda_.10} parent=1 // pred_check_branch
      %182 = sbr.rel (0) target = $region137
    $region136: #{_lambda_.10} parent=1 // pred_region
      _
    $region137: #{_lambda_.10} parent=1 // pred_fallthru
      _
    // Predicated region
    $region138: #{_lambda_.10} parent=1 // pred_check
      _
    $region139: #{_lambda_.10} parent=1 // pred_check_branch
      %184 = sbr.rel (0) target = $region141
    $region140: #{_lambda_.10} parent=1 // pred_region
      _
    $region141: #{_lambda_.10} parent=1 // pred_fallthru
      _
    // Predicated region
    $region142: #{_lambda_.10} parent=1 // pred_check
      _
    $region143: #{_lambda_.10} parent=1 // pred_check_branch
      %186 = sbr.rel (0) target = $region145
    $region144: #{_lambda_.10} parent=1 // pred_region
      _
    $region145: #{_lambda_.10} parent=1 // pred_fallthru
      _
    // Predicated region
    $region146: #{_lambda_.10} parent=1 // pred_check
      _
    $region147: #{_lambda_.10} parent=1 // pred_check_branch
      %188 = sbr.rel (0) target = $region149
    $region148: #{_lambda_.10} parent=1 // pred_region
      _
    $region149: #{_lambda_.10} parent=1 // pred_fallthru
      _
    // Predicated region
    $region150: #{_lambda_.10} parent=1 // pred_check
      _
    $region151: #{_lambda_.10} parent=1 // pred_check_branch
      %190 = sbr.rel (0) target = $region153
    $region152: #{_lambda_.10} parent=1 // pred_region
      _
    $region153: #{_lambda_.10} parent=1 // pred_fallthru
      _
    // Predicated region
    $region154: #{_lambda_.10} parent=1 // pred_check
      _
    $region155: #{_lambda_.10} parent=1 // pred_check_branch
      %192 = sbr.rel (0) target = $region157
    $region156: #{_lambda_.10} parent=1 // pred_region
      _
    $region157: #{_lambda_.10} parent=1 // pred_fallthru
      _
    // Predicated region
    $region158: #{_lambda_.10} parent=1 // pred_check
      _
    $region159: #{_lambda_.10} parent=1 // pred_check_branch
      %194 = sbr.rel (0) target = $region161
    $region160: #{_lambda_.10} parent=1 // pred_region
      _
    $region161: #{_lambda_.10} parent=1 // pred_fallthru
      _
    // Predicated region
    $region162: #{_lambda_.10} parent=1 // pred_check
      _
    $region163: #{_lambda_.10} parent=1 // pred_check_branch
      %196 = sbr.rel (0) target = $region165
    $region164: #{_lambda_.10} parent=1 // pred_region
      _
    $region165: #{_lambda_.10} parent=1 // pred_fallthru
      _
    // Predicated region
    $region166: #{_lambda_.10} parent=1 // pred_check
      _
    $region167: #{_lambda_.10} parent=1 // pred_check_branch
      %198 = sbr.rel (0) target = $region169
    $region168: #{_lambda_.10} parent=1 // pred_region
      _
    $region169: #{_lambda_.10} parent=1 // pred_fallthru
      _
    // Predicated region
    $region170: #{_lambda_.10} parent=1 // pred_check
      _
    $region171: #{_lambda_.10} parent=1 // pred_check_branch
      %200 = sbr.rel (0) target = $region173
    $region172: #{_lambda_.10} parent=1 // pred_region
      _
    $region173: #{_lambda_.10} parent=1 // pred_fallthru
      _
    // Predicated region
    $region174: #{_lambda_.10} parent=1 // pred_check
      _
    $region175: #{_lambda_.10} parent=1 // pred_check_branch
      %202 = sbr.rel (0) target = $region177
    $region176: #{_lambda_.10} parent=1 // pred_region
      _
    $region177: #{_lambda_.10} parent=1 // pred_fallthru
      _
    // Predicated region
    $region178: #{_lambda_.10} parent=1 // pred_check
      _
    $region179: #{_lambda_.10} parent=1 // pred_check_branch
      %204 = sbr.rel (0) target = $region181
    $region180: #{_lambda_.10} parent=1 // pred_region
      _
    $region181: #{_lambda_.10} parent=1 // pred_fallthru
      _
    // Predicated region
    $region182: #{_lambda_.10} parent=1 // pred_check
      _
    $region183: #{_lambda_.10} parent=1 // pred_check_branch
      %206 = sbr.rel (0) target = $region185
    $region184: #{_lambda_.10} parent=1 // pred_region
      _
    $region185: #{_lambda_.10} parent=1 // pred_fallthru
      _
    // Predicated region
    $region186: #{_lambda_.10} parent=1 // pred_check
      _
    $region187: #{_lambda_.10} parent=1 // pred_check_branch
      %208 = sbr.rel (0) target = $region189
    $region188: #{_lambda_.10} parent=1 // pred_region
      _
    $region189: #{_lambda_.10} parent=1 // pred_fallthru
      _
    // Predicated region
    $region190: #{_lambda_.10} parent=1 // pred_check
      _
    $region191: #{_lambda_.10} parent=1 // pred_check_branch
      %210 = sbr.rel (0) target = $region193
    $region192: #{_lambda_.10} parent=1 // pred_region
      _
    $region193: #{_lambda_.10} parent=1 // pred_fallthru
      _
    // Predicated region
    $region194: #{_lambda_.10} parent=1 // pred_check
      _
    $region195: #{_lambda_.10} parent=1 // pred_check_branch
      %212 = sbr.rel (0) target = $region197
    $region196: #{_lambda_.10} parent=1 // pred_region
      _
    $region197: #{_lambda_.10} parent=1 // pred_fallthru
      _
    %p213 = scmp.eq.s32.totalorder 0, 0
    // Predicated region
    $region198: #{_lambda_.10} parent=1 // pred_check
      %p214 = pneg %p213
    $region199: #{_lambda_.10} parent=1 // pred_check_branch
      %216 = sbr.rel (%p214) target = $region201
    $region200: #{_lambda_.10} parent=1 // pred_region
      %v217 = vld [vmem:[%s11] sm:$0xff]
      %v218 = vld [vmem:[%s13] sm:$0xff]
      %v219 = vadd.f32 %v217, %v218
      %v220 = vld [vmem:[%s19] sm:$0xff]
      %v221 = vld [vmem:[%s19 + $0x8] sm:$0xff]
      %v222 = vld [vmem:[%s19 + $0x10] sm:$0xff]
      %v223 = vld [vmem:[%s19 + $0x18] sm:$0xff]
      %v224 = vld [vmem:[%s21] sm:$0x1]
      %v226 = vlaneseq
      %v227 = vshrl.u32 %v226, 7
      %v228 = vsub.s32 0, %v227
      %v229 = vrot.slane %v224, %v228
      %vm231 = vcmask 261120
      %v233 = vsel %vm231, %v219, 0
      %235 = vmatprep.subr.mxu0 0.0
      %236 = vmatpush1.msra.mxu0 %v220
      %237 = vmatprep.subr.mxu0 0.0
      %238 = vmatpush1.msra.mxu0 %v221
      %239 = vmatprep.subr.mxu0 0.0
      %240 = vmatpush1.msra.mxu0 %v222
      %241 = vmatprep.subr.mxu0 0.0
      %242 = vmatpush1.msra.mxu0 %v223
      %243 = vmatprep.subr.mxu0 0.0
      %244 = vmatpush1.msra.mxu0 0.0
      %245 = vmatprep.subr.mxu0 0.0
      %246 = vmatpush1.msra.mxu0 0.0
      %247 = vmatprep.subr.mxu0 0.0
      %248 = vmatpush1.msra.mxu0 0.0
      %249 = vmatprep.subr.mxu0 0.0
      %250 = vmatpush1.msra.mxu0 0.0
      %251 = vmatprep.subr.mxu0 0.0
      %252 = vmatpush1.msra.mxu0 0.0
      %253 = vmatprep.subr.mxu0 0.0
      %254 = vmatpush1.msra.mxu0 0.0
      %255 = vmatprep.subr.mxu0 0.0
      %256 = vmatpush1.msra.mxu0 0.0
      %257 = vmatprep.subr.mxu0 0.0
      %258 = vmatpush1.msra.mxu0 0.0
      %259 = vmatprep.subr.mxu0 0.0
      %260 = vmatpush1.msra.mxu0 0.0
      %261 = vmatprep.subr.mxu0 0.0
      %262 = vmatpush1.msra.mxu0 0.0
      %263 = vmatprep.subr.mxu0 0.0
      %264 = vmatpush1.msra.mxu0 0.0
      %265 = vmatprep.subr.mxu0 0.0
      %266 = vmatpush1.msra.mxu0 0.0
      %267 = vmatprep.subr.mxu0 0.0
      %268 = vmatpush1.msra.mxu0 0.0
      %269 = vmatprep.subr.mxu0 0.0
      %270 = vmatpush1.msra.mxu0 0.0
      %271 = vmatprep.subr.mxu0 0.0
      %272 = vmatpush1.msra.mxu0 0.0
      %273 = vmatprep.subr.mxu0 0.0
      %274 = vmatpush1.msra.mxu0 0.0
      %275 = vmatprep.subr.mxu0 0.0
      %276 = vmatpush1.msra.mxu0 0.0
      %277 = vmatprep.subr.mxu0 0.0
      %278 = vmatpush1.msra.mxu0 0.0
      %279 = vmatprep.subr.mxu0 0.0
      %280 = vmatpush1.msra.mxu0 0.0
      %281 = vmatprep.subr.mxu0 0.0
      %282 = vmatpush1.msra.mxu0 0.0
      %283 = vmatprep.subr.mxu0 0.0
      %284 = vmatpush1.msra.mxu0 0.0
      %285 = vmatprep.subr.mxu0 0.0
      %286 = vmatpush1.msra.mxu0 0.0
      %287 = vmatprep.subr.mxu0 0.0
      %288 = vmatpush1.msra.mxu0 0.0
      %289 = vmatprep.subr.mxu0 0.0
      %290 = vmatpush1.msra.mxu0 0.0
      %291 = vmatprep.subr.mxu0 0.0
      %292 = vmatpush1.msra.mxu0 0.0
      %293 = vmatprep.subr.mxu0 0.0
      %294 = vmatpush1.msra.mxu0 0.0
      %295 = vmatprep.subr.mxu0 0.0
      %296 = vmatpush1.msra.mxu0 0.0
      %297 = vmatprep.subr.mxu0 0.0
      %298 = vmatpush1.msra.mxu0 0.0
      %299 = vmatprep.mubr.f32.mxu0 0.0
      %300 = vmatmul.mubr.f32.gmra.mrb[0].mxu0 %v233
      %v301 = vpop.f32.mrb[0].mxu0
      %v302 = vadd.f32 %v229, %v301
      %v303 = vpop.f32.mrb[0].mxu0
      %304 = vdwg.mxu0
      %v305 = vld [vmem:[%s23] sm:$0xff]
      %v306 = vld [vmem:[%s23 + $0x8] sm:$0xff]
      %v307 = vld [vmem:[%s23 + $0x10] sm:$0xff]
      %v308 = vld [vmem:[%s23 + $0x18] sm:$0xff]
      %v309 = vld [vmem:[%s25] sm:$0x1]
      %v311 = vlaneseq
      %v312 = vshrl.u32 %v311, 7
      %v313 = vsub.s32 0, %v312
      %v314 = vrot.slane %v309, %v313
      %316 = vmatprep.subr.mxu0 0.0
      %317 = vmatpush1.msra.mxu0 %v305
      %318 = vmatprep.subr.mxu0 0.0
      %319 = vmatpush1.msra.mxu0 %v306
      %320 = vmatprep.subr.mxu0 0.0
      %321 = vmatpush1.msra.mxu0 %v307
      %322 = vmatprep.subr.mxu0 0.0
      %323 = vmatpush1.msra.mxu0 %v308
      %324 = vmatprep.subr.mxu0 0.0
      %325 = vmatpush1.msra.mxu0 0.0
      %326 = vmatprep.subr.mxu0 0.0
      %327 = vmatpush1.msra.mxu0 0.0
      %328 = vmatprep.subr.mxu0 0.0
      %329 = vmatpush1.msra.mxu0 0.0
      %330 = vmatprep.subr.mxu0 0.0
      %331 = vmatpush1.msra.mxu0 0.0
      %332 = vmatprep.subr.mxu0 0.0
      %333 = vmatpush1.msra.mxu0 0.0
      %334 = vmatprep.subr.mxu0 0.0
      %335 = vmatpush1.msra.mxu0 0.0
      %336 = vmatprep.subr.mxu0 0.0
      %337 = vmatpush1.msra.mxu0 0.0
      %338 = vmatprep.subr.mxu0 0.0
      %339 = vmatpush1.msra.mxu0 0.0
      %340 = vmatprep.subr.mxu0 0.0
      %341 = vmatpush1.msra.mxu0 0.0
      %342 = vmatprep.subr.mxu0 0.0
      %343 = vmatpush1.msra.mxu0 0.0
      %344 = vmatprep.subr.mxu0 0.0
      %345 = vmatpush1.msra.mxu0 0.0
      %346 = vmatprep.subr.mxu0 0.0
      %347 = vmatpush1.msra.mxu0 0.0
      %348 = vmatprep.subr.mxu0 0.0
      %349 = vmatpush1.msra.mxu0 0.0
      %350 = vmatprep.subr.mxu0 0.0
      %351 = vmatpush1.msra.mxu0 0.0
      %352 = vmatprep.subr.mxu0 0.0
      %353 = vmatpush1.msra.mxu0 0.0
      %354 = vmatprep.subr.mxu0 0.0
      %355 = vmatpush1.msra.mxu0 0.0
      %356 = vmatprep.subr.mxu0 0.0
      %357 = vmatpush1.msra.mxu0 0.0
      %358 = vmatprep.subr.mxu0 0.0
      %359 = vmatpush1.msra.mxu0 0.0
      %360 = vmatprep.subr.mxu0 0.0
      %361 = vmatpush1.msra.mxu0 0.0
      %362 = vmatprep.subr.mxu0 0.0
      %363 = vmatpush1.msra.mxu0 0.0
      %364 = vmatprep.subr.mxu0 0.0
      %365 = vmatpush1.msra.mxu0 0.0
      %366 = vmatprep.subr.mxu0 0.0
      %367 = vmatpush1.msra.mxu0 0.0
      %368 = vmatprep.subr.mxu0 0.0
      %369 = vmatpush1.msra.mxu0 0.0
      %370 = vmatprep.subr.mxu0 0.0
      %371 = vmatpush1.msra.mxu0 0.0
      %372 = vmatprep.subr.mxu0 0.0
      %373 = vmatpush1.msra.mxu0 0.0
      %374 = vmatprep.subr.mxu0 0.0
      %375 = vmatpush1.msra.mxu0 0.0
      %376 = vmatprep.subr.mxu0 0.0
      %377 = vmatpush1.msra.mxu0 0.0
      %378 = vmatprep.subr.mxu0 0.0
      %379 = vmatpush1.msra.mxu0 0.0
      %380 = vmatprep.mubr.f32.mxu0 0.0
      %381 = vmatmul.mubr.f32.gmra.mrb[0].mxu0 %v233
      %v382 = vpop.f32.mrb[0].mxu0
      %v383 = vadd.f32 %v314, %v382
      %v384 = vpop.f32.mrb[0].mxu0
      %385 = vdwg.mxu0
      %v386 = vld [vmem:[%s27] sm:$0xff]
      %v387 = vld [vmem:[%s27 + $0x8] sm:$0xff]
      %v388 = vld [vmem:[%s27 + $0x10] sm:$0xff]
      %v389 = vld [vmem:[%s27 + $0x18] sm:$0xff]
      %v390 = vld [vmem:[%s29] sm:$0x1]
      %v392 = vlaneseq
      %v393 = vshrl.u32 %v392, 7
      %v394 = vsub.s32 0, %v393
      %v395 = vrot.slane %v390, %v394
      %v398 = vsel %vm231, %v217, 0
      %400 = vmatprep.subr.mxu0 0.0
      %401 = vmatpush1.msra.mxu0 %v386
      %402 = vmatprep.subr.mxu0 0.0
      %403 = vmatpush1.msra.mxu0 %v387
      %404 = vmatprep.subr.mxu0 0.0
      %405 = vmatpush1.msra.mxu0 %v388
      %406 = vmatprep.subr.mxu0 0.0
      %407 = vmatpush1.msra.mxu0 %v389
      %408 = vmatprep.subr.mxu0 0.0
      %409 = vmatpush1.msra.mxu0 0.0
      %410 = vmatprep.subr.mxu0 0.0
      %411 = vmatpush1.msra.mxu0 0.0
      %412 = vmatprep.subr.mxu0 0.0
      %413 = vmatpush1.msra.mxu0 0.0
      %414 = vmatprep.subr.mxu0 0.0
      %415 = vmatpush1.msra.mxu0 0.0
      %416 = vmatprep.subr.mxu0 0.0
      %417 = vmatpush1.msra.mxu0 0.0
      %418 = vmatprep.subr.mxu0 0.0
      %419 = vmatpush1.msra.mxu0 0.0
      %420 = vmatprep.subr.mxu0 0.0
      %421 = vmatpush1.msra.mxu0 0.0
      %422 = vmatprep.subr.mxu0 0.0
      %423 = vmatpush1.msra.mxu0 0.0
      %424 = vmatprep.subr.mxu0 0.0
      %425 = vmatpush1.msra.mxu0 0.0
      %426 = vmatprep.subr.mxu0 0.0
      %427 = vmatpush1.msra.mxu0 0.0
      %428 = vmatprep.subr.mxu0 0.0
      %429 = vmatpush1.msra.mxu0 0.0
      %430 = vmatprep.subr.mxu0 0.0
      %431 = vmatpush1.msra.mxu0 0.0
      %432 = vmatprep.subr.mxu0 0.0
      %433 = vmatpush1.msra.mxu0 0.0
      %434 = vmatprep.subr.mxu0 0.0
      %435 = vmatpush1.msra.mxu0 0.0
      %436 = vmatprep.subr.mxu0 0.0
      %437 = vmatpush1.msra.mxu0 0.0
      %438 = vmatprep.subr.mxu0 0.0
      %439 = vmatpush1.msra.mxu0 0.0
      %440 = vmatprep.subr.mxu0 0.0
      %441 = vmatpush1.msra.mxu0 0.0
      %442 = vmatprep.subr.mxu0 0.0
      %443 = vmatpush1.msra.mxu0 0.0
      %444 = vmatprep.subr.mxu0 0.0
      %445 = vmatpush1.msra.mxu0 0.0
      %446 = vmatprep.subr.mxu0 0.0
      %447 = vmatpush1.msra.mxu0 0.0
      %448 = vmatprep.subr.mxu0 0.0
      %449 = vmatpush1.msra.mxu0 0.0
      %450 = vmatprep.subr.mxu0 0.0
      %451 = vmatpush1.msra.mxu0 0.0
      %452 = vmatprep.subr.mxu0 0.0
      %453 = vmatpush1.msra.mxu0 0.0
      %454 = vmatprep.subr.mxu0 0.0
      %455 = vmatpush1.msra.mxu0 0.0
      %456 = vmatprep.subr.mxu0 0.0
      %457 = vmatpush1.msra.mxu0 0.0
      %458 = vmatprep.subr.mxu0 0.0
      %459 = vmatpush1.msra.mxu0 0.0
      %460 = vmatprep.subr.mxu0 0.0
      %461 = vmatpush1.msra.mxu0 0.0
      %462 = vmatprep.subr.mxu0 0.0
      %463 = vmatpush1.msra.mxu0 0.0
      %464 = vmatprep.mubr.f32.mxu0 0.0
      %465 = vmatmul.mubr.f32.gmra.mrb[0].mxu0 %v398
      %v466 = vpop.f32.mrb[0].mxu0
      %v467 = vadd.f32 %v395, %v466
      %v468 = vpop.f32.mrb[0].mxu0
      %469 = vdwg.mxu0
      %v471 = vsel %vm231, %v302, 0
      %v474 = vsel %vm231, %v383, 0
      %476 = vmatprep.subr.mxu0 0.0
      %477 = vmatpush1.xpose.msra.mxu0 %v474
      %478 = vmatprep.subr.mxu0 0.0
      %479 = vmatpush1.xpose.msra.mxu0 0.0
      %480 = vmatprep.subr.mxu0 0.0
      %481 = vmatpush1.xpose.msra.mxu0 0.0
      %482 = vmatprep.subr.mxu0 0.0
      %483 = vmatpush1.xpose.msra.mxu0 0.0
      %484 = vmatprep.subr.mxu0 0.0
      %485 = vmatpush1.xpose.msra.mxu0 0.0
      %486 = vmatprep.subr.mxu0 0.0
      %487 = vmatpush1.xpose.msra.mxu0 0.0
      %488 = vmatprep.subr.mxu0 0.0
      %489 = vmatpush1.xpose.msra.mxu0 0.0
      %490 = vmatprep.subr.mxu0 0.0
      %491 = vmatpush1.xpose.msra.mxu0 0.0
      %492 = vmatprep.subr.mxu0 0.0
      %493 = vmatpush1.xpose.msra.mxu0 0.0
      %494 = vmatprep.subr.mxu0 0.0
      %495 = vmatpush1.xpose.msra.mxu0 0.0
      %496 = vmatprep.subr.mxu0 0.0
      %497 = vmatpush1.xpose.msra.mxu0 0.0
      %498 = vmatprep.subr.mxu0 0.0
      %499 = vmatpush1.xpose.msra.mxu0 0.0
      %500 = vmatprep.subr.mxu0 0.0
      %501 = vmatpush1.xpose.msra.mxu0 0.0
      %502 = vmatprep.subr.mxu0 0.0
      %503 = vmatpush1.xpose.msra.mxu0 0.0
      %504 = vmatprep.subr.mxu0 0.0
      %505 = vmatpush1.xpose.msra.mxu0 0.0
      %506 = vmatprep.subr.mxu0 0.0
      %507 = vmatpush1.xpose.msra.mxu0 0.0
      %508 = vmatprep.subr.mxu0 0.0
      %509 = vmatpush1.xpose.msra.mxu0 0.0
      %510 = vmatprep.subr.mxu0 0.0
      %511 = vmatpush1.xpose.msra.mxu0 0.0
      %512 = vmatprep.subr.mxu0 0.0
      %513 = vmatpush1.xpose.msra.mxu0 0.0
      %514 = vmatprep.subr.mxu0 0.0
      %515 = vmatpush1.xpose.msra.mxu0 0.0
      %516 = vmatprep.subr.mxu0 0.0
      %517 = vmatpush1.xpose.msra.mxu0 0.0
      %518 = vmatprep.subr.mxu0 0.0
      %519 = vmatpush1.xpose.msra.mxu0 0.0
      %520 = vmatprep.subr.mxu0 0.0
      %521 = vmatpush1.xpose.msra.mxu0 0.0
      %522 = vmatprep.subr.mxu0 0.0
      %523 = vmatpush1.xpose.msra.mxu0 0.0
      %524 = vmatprep.subr.mxu0 0.0
      %525 = vmatpush1.xpose.msra.mxu0 0.0
      %526 = vmatprep.subr.mxu0 0.0
      %527 = vmatpush1.xpose.msra.mxu0 0.0
      %528 = vmatprep.subr.mxu0 0.0
      %529 = vmatpush1.xpose.msra.mxu0 0.0
      %530 = vmatprep.subr.mxu0 0.0
      %531 = vmatpush1.xpose.msra.mxu0 0.0
      %532 = vmatprep.subr.mxu0 0.0
      %533 = vmatpush1.xpose.msra.mxu0 0.0
      %534 = vmatprep.subr.mxu0 0.0
      %535 = vmatpush1.xpose.msra.mxu0 0.0
      %536 = vmatprep.subr.mxu0 0.0
      %537 = vmatpush1.xpose.msra.mxu0 0.0
      %538 = vmatprep.subr.mxu0 0.0
      %539 = vmatpush1.xpose.msra.mxu0 0.0
      %540 = vmatprep.mubr.f32.mxu0 0.0
      %541 = vmatmul.mubr.f32.gmra.mrb[0].mxu0 %v471
      %v542 = vpop.f32.mrb[0].mxu0
      %v543 = vadd.f32 0.0, %v542
      %v544 = vpop.f32.mrb[0].mxu0
      %545 = vdwg.mxu0
      %v546 = vmul.f32 %v543, 0.17677669
      %v547 = vld [vmem:[%s15] sm:$0xff]
      %v548 = vld [vmem:[%s17] sm:$0x1]
      %549 = vset.pattern.permute.xlu0 0
      %550 = vperm.xlu0 %549, %v547
      %v551 = vpop.permute.xlu0 %550
      %v552 = vlaneseq
      %v553 = vshrl.u32 %v552, 7
      %v554 = vsub.s32 0, %v553
      %v555 = vrot.slane %v548, %v554
      %vm556 = vcmp.eq.s32.totalorder %v551, %v555
      %v557 = vsel %vm556, %v546, -1e+09
      %vm558 = vcmask 64512
      %v559 = vsel %vm558, %v557, -inf
      %560 = vmax.xlane.f32.xlu0 %v559
      %v561 = vpop.xlane.xlu0 %560
      %v562 = vsub.f32 %v557, %v561
      %v563 = vmul.f32 %v562, 1.442695
      %v564 = vpow.pop %v563
      %v565 = vsel %vm558, %v564, 0.0
      %566 = vadd.xlane.f32.xlu0 %v565
      %v567 = vpop.xlane.xlu0 %566
      %v568 = vrcp.pop %v567
      %v569 = vmul.f32 %v564, %v568
      %v571 = vsel %vm558, %v569, 0
      %573 = vmatprep.subr.mxu0 0.0
      %574 = vmatpush1.msra.mxu0 %v467
      %575 = vmatprep.subr.mxu0 0.0
      %576 = vmatpush1.msra.mxu0 0.0
      %577 = vmatprep.subr.mxu0 0.0
      %578 = vmatpush1.msra.mxu0 0.0
      %579 = vmatprep.subr.mxu0 0.0
      %580 = vmatpush1.msra.mxu0 0.0
      %581 = vmatprep.subr.mxu0 0.0
      %582 = vmatpush1.msra.mxu0 0.0
      %583 = vmatprep.subr.mxu0 0.0
      %584 = vmatpush1.msra.mxu0 0.0
      %585 = vmatprep.subr.mxu0 0.0
      %586 = vmatpush1.msra.mxu0 0.0
      %587 = vmatprep.subr.mxu0 0.0
      %588 = vmatpush1.msra.mxu0 0.0
      %589 = vmatprep.subr.mxu0 0.0
      %590 = vmatpush1.msra.mxu0 0.0
      %591 = vmatprep.subr.mxu0 0.0
      %592 = vmatpush1.msra.mxu0 0.0
      %593 = vmatprep.subr.mxu0 0.0
      %594 = vmatpush1.msra.mxu0 0.0
      %595 = vmatprep.subr.mxu0 0.0
      %596 = vmatpush1.msra.mxu0 0.0
      %597 = vmatprep.subr.mxu0 0.0
      %598 = vmatpush1.msra.mxu0 0.0
      %599 = vmatprep.subr.mxu0 0.0
      %600 = vmatpush1.msra.mxu0 0.0
      %601 = vmatprep.subr.mxu0 0.0
      %602 = vmatpush1.msra.mxu0 0.0
      %603 = vmatprep.subr.mxu0 0.0
      %604 = vmatpush1.msra.mxu0 0.0
      %605 = vmatprep.subr.mxu0 0.0
      %606 = vmatpush1.msra.mxu0 0.0
      %607 = vmatprep.subr.mxu0 0.0
      %608 = vmatpush1.msra.mxu0 0.0
      %609 = vmatprep.subr.mxu0 0.0
      %610 = vmatpush1.msra.mxu0 0.0
      %611 = vmatprep.subr.mxu0 0.0
      %612 = vmatpush1.msra.mxu0 0.0
      %613 = vmatprep.subr.mxu0 0.0
      %614 = vmatpush1.msra.mxu0 0.0
      %615 = vmatprep.subr.mxu0 0.0
      %616 = vmatpush1.msra.mxu0 0.0
      %617 = vmatprep.subr.mxu0 0.0
      %618 = vmatpush1.msra.mxu0 0.0
      %619 = vmatprep.subr.mxu0 0.0
      %620 = vmatpush1.msra.mxu0 0.0
      %621 = vmatprep.subr.mxu0 0.0
      %622 = vmatpush1.msra.mxu0 0.0
      %623 = vmatprep.subr.mxu0 0.0
      %624 = vmatpush1.msra.mxu0 0.0
      %625 = vmatprep.subr.mxu0 0.0
      %626 = vmatpush1.msra.mxu0 0.0
      %627 = vmatprep.subr.mxu0 0.0
      %628 = vmatpush1.msra.mxu0 0.0
      %629 = vmatprep.subr.mxu0 0.0
      %630 = vmatpush1.msra.mxu0 0.0
      %631 = vmatprep.subr.mxu0 0.0
      %632 = vmatpush1.msra.mxu0 0.0
      %633 = vmatprep.subr.mxu0 0.0
      %634 = vmatpush1.msra.mxu0 0.0
      %635 = vmatprep.subr.mxu0 0.0
      %636 = vmatpush1.msra.mxu0 0.0
      %637 = vmatprep.mubr.f32.mxu0 0.0
      %638 = vmatmul.mubr.f32.gmra.mrb[0].mxu0 %v571
      %v639 = vpop.f32.mrb[0].mxu0
      %v640 = vadd.f32 0.0, %v639
      %v641 = vpop.f32.mrb[0].mxu0
      %642 = vdwg.mxu0
      %v643 = vld [vmem:[%s31] sm:$0xff]
      %v644 = vld [vmem:[%s31 + $0x8] sm:$0xff]
      %v645 = vld [vmem:[%s31 + $0x10] sm:$0xff]
      %v646 = vld [vmem:[%s31 + $0x18] sm:$0xff]
      %v647 = vld [vmem:[%s33] sm:$0x1]
      %v649 = vlaneseq
      %v650 = vshrl.u32 %v649, 7
      %v651 = vsub.s32 0, %v650
      %v652 = vrot.slane %v647, %v651
      %v655 = vsel %vm231, %v640, 0
      %657 = vmatprep.subr.mxu0 0.0
      %658 = vmatpush1.msra.mxu0 %v643
      %659 = vmatprep.subr.mxu0 0.0
      %660 = vmatpush1.msra.mxu0 %v644
      %661 = vmatprep.subr.mxu0 0.0
      %662 = vmatpush1.msra.mxu0 %v645
      %663 = vmatprep.subr.mxu0 0.0
      %664 = vmatpush1.msra.mxu0 %v646
      %665 = vmatprep.subr.mxu0 0.0
      %666 = vmatpush1.msra.mxu0 0.0
      %667 = vmatprep.subr.mxu0 0.0
      %668 = vmatpush1.msra.mxu0 0.0
      %669 = vmatprep.subr.mxu0 0.0
      %670 = vmatpush1.msra.mxu0 0.0
      %671 = vmatprep.subr.mxu0 0.0
      %672 = vmatpush1.msra.mxu0 0.0
      %673 = vmatprep.subr.mxu0 0.0
      %674 = vmatpush1.msra.mxu0 0.0
      %675 = vmatprep.subr.mxu0 0.0
      %676 = vmatpush1.msra.mxu0 0.0
      %677 = vmatprep.subr.mxu0 0.0
      %678 = vmatpush1.msra.mxu0 0.0
      %679 = vmatprep.subr.mxu0 0.0
      %680 = vmatpush1.msra.mxu0 0.0
      %681 = vmatprep.subr.mxu0 0.0
      %682 = vmatpush1.msra.mxu0 0.0
      %683 = vmatprep.subr.mxu0 0.0
      %684 = vmatpush1.msra.mxu0 0.0
      %685 = vmatprep.subr.mxu0 0.0
      %686 = vmatpush1.msra.mxu0 0.0
      %687 = vmatprep.subr.mxu0 0.0
      %688 = vmatpush1.msra.mxu0 0.0
      %689 = vmatprep.subr.mxu0 0.0
      %690 = vmatpush1.msra.mxu0 0.0
      %691 = vmatprep.subr.mxu0 0.0
      %692 = vmatpush1.msra.mxu0 0.0
      %693 = vmatprep.subr.mxu0 0.0
      %694 = vmatpush1.msra.mxu0 0.0
      %695 = vmatprep.subr.mxu0 0.0
      %696 = vmatpush1.msra.mxu0 0.0
      %697 = vmatprep.subr.mxu0 0.0
      %698 = vmatpush1.msra.mxu0 0.0
      %699 = vmatprep.subr.mxu0 0.0
      %700 = vmatpush1.msra.mxu0 0.0
      %701 = vmatprep.subr.mxu0 0.0
      %702 = vmatpush1.msra.mxu0 0.0
      %703 = vmatprep.subr.mxu0 0.0
      %704 = vmatpush1.msra.mxu0 0.0
      %705 = vmatprep.subr.mxu0 0.0
      %706 = vmatpush1.msra.mxu0 0.0
      %707 = vmatprep.subr.mxu0 0.0
      %708 = vmatpush1.msra.mxu0 0.0
      %709 = vmatprep.subr.mxu0 0.0
      %710 = vmatpush1.msra.mxu0 0.0
      %711 = vmatprep.subr.mxu0 0.0
      %712 = vmatpush1.msra.mxu0 0.0
      %713 = vmatprep.subr.mxu0 0.0
      %714 = vmatpush1.msra.mxu0 0.0
      %715 = vmatprep.subr.mxu0 0.0
      %716 = vmatpush1.msra.mxu0 0.0
      %717 = vmatprep.subr.mxu0 0.0
      %718 = vmatpush1.msra.mxu0 0.0
      %719 = vmatprep.subr.mxu0 0.0
      %720 = vmatpush1.msra.mxu0 0.0
      %721 = vmatprep.mubr.f32.mxu0 0.0
      %722 = vmatmul.mubr.f32.gmra.mrb[0].mxu0 %v655
      %v723 = vpop.f32.mrb[0].mxu0
      %v724 = vadd.f32 %v652, %v723
      %v725 = vpop.f32.mrb[0].mxu0
      %726 = vdwg.mxu0
      %v727 = vadd.f32 %v217, %v724
      %v728 = vld [vmem:[%s35] sm:$0x1]
      %v729 = vld [vmem:[%s37] sm:$0x1]
      %v730 = vsel %vm231, %v727, 0.0
      %731 = vadd.xlane.f32.xlu0 %v730
      %v732 = vpop.xlane.xlu0 %731
      %v733 = vrcp.pop 32.0
      %v734 = vmul.f32 %v732, %v733
      %v735 = vsub.f32 %v727, %v734
      %v736 = vmul.f32 %v735, %v735
      %v737 = vsel %vm231, %v736, 0.0
      %738 = vadd.xlane.f32.xlu0 %v737
      %v739 = vpop.xlane.xlu0 %738
      %v740 = vmul.f32 %v739, %v733
      %v741 = vadd.f32 %v740, 1e-05
      %v742 = vrsqrt.pop %v741
      %v743 = vmul.f32 %v735, %v742
      %v745 = vlaneseq
      %v746 = vshrl.u32 %v745, 7
      %v747 = vsub.s32 0, %v746
      %v748 = vrot.slane %v728, %v747
      %v750 = vmul.f32 %v743, %v748
      %v752 = vlaneseq
      %v753 = vshrl.u32 %v752, 7
      %v754 = vsub.s32 0, %v753
      %v755 = vrot.slane %v729, %v754
      %v757 = vadd.f32 %v750, %v755
      %758 = vst.msk [vmem:[#allocation2] sm:$0xff] %vm231, %v757
      %v759 = vld [vmem:[%s13] sm:$0xff]
      %v760 = vadd.f32 %v757, %v759
      %v761 = vld [vmem:[%s39] sm:$0xff]
      %v762 = vld [vmem:[%s39 + $0x8] sm:$0xff]
      %v763 = vld [vmem:[%s39 + $0x10] sm:$0xff]
      %v764 = vld [vmem:[%s39 + $0x18] sm:$0xff]
      %v765 = vld [vmem:[%s41] sm:$0x1]
      %v767 = vlaneseq
      %v768 = vshrl.u32 %v767, 7
      %v769 = vsub.s32 0, %v768
      %v770 = vrot.slane %v765, %v769
      %v773 = vsel %vm231, %v760, 0
      %775 = vmatprep.subr.mxu0 0.0
      %776 = vmatpush1.msra.mxu0 %v761
      %777 = vmatprep.subr.mxu0 0.0
      %778 = vmatpush1.msra.mxu0 %v762
      %779 = vmatprep.subr.mxu0 0.0
      %780 = vmatpush1.msra.mxu0 %v763
      %781 = vmatprep.subr.mxu0 0.0
      %782 = vmatpush1.msra.mxu0 %v764
      %783 = vmatprep.subr.mxu0 0.0
      %784 = vmatpush1.msra.mxu0 0.0
      %785 = vmatprep.subr.mxu0 0.0
      %786 = vmatpush1.msra.mxu0 0.0
      %787 = vmatprep.subr.mxu0 0.0
      %788 = vmatpush1.msra.mxu0 0.0
      %789 = vmatprep.subr.mxu0 0.0
      %790 = vmatpush1.msra.mxu0 0.0
      %791 = vmatprep.subr.mxu0 0.0
      %792 = vmatpush1.msra.mxu0 0.0
      %793 = vmatprep.subr.mxu0 0.0
      %794 = vmatpush1.msra.mxu0 0.0
      %795 = vmatprep.subr.mxu0 0.0
      %796 = vmatpush1.msra.mxu0 0.0
      %797 = vmatprep.subr.mxu0 0.0
      %798 = vmatpush1.msra.mxu0 0.0
      %799 = vmatprep.subr.mxu0 0.0
      %800 = vmatpush1.msra.mxu0 0.0
      %801 = vmatprep.subr.mxu0 0.0
      %802 = vmatpush1.msra.mxu0 0.0
      %803 = vmatprep.subr.mxu0 0.0
      %804 = vmatpush1.msra.mxu0 0.0
      %805 = vmatprep.subr.mxu0 0.0
      %806 = vmatpush1.msra.mxu0 0.0
      %807 = vmatprep.subr.mxu0 0.0
      %808 = vmatpush1.msra.mxu0 0.0
      %809 = vmatprep.subr.mxu0 0.0
      %810 = vmatpush1.msra.mxu0 0.0
      %811 = vmatprep.subr.mxu0 0.0
      %812 = vmatpush1.msra.mxu0 0.0
      %813 = vmatprep.subr.mxu0 0.0
      %814 = vmatpush1.msra.mxu0 0.0
      %815 = vmatprep.subr.mxu0 0.0
      %816 = vmatpush1.msra.mxu0 0.0
      %817 = vmatprep.subr.mxu0 0.0
      %818 = vmatpush1.msra.mxu0 0.0
      %819 = vmatprep.subr.mxu0 0.0
      %820 = vmatpush1.msra.mxu0 0.0
      %821 = vmatprep.subr.mxu0 0.0
      %822 = vmatpush1.msra.mxu0 0.0
      %823 = vmatprep.subr.mxu0 0.0
      %824 = vmatpush1.msra.mxu0 0.0
      %825 = vmatprep.subr.mxu0 0.0
      %826 = vmatpush1.msra.mxu0 0.0
      %827 = vmatprep.subr.mxu0 0.0
      %828 = vmatpush1.msra.mxu0 0.0
      %829 = vmatprep.subr.mxu0 0.0
      %830 = vmatpush1.msra.mxu0 0.0
      %831 = vmatprep.subr.mxu0 0.0
      %832 = vmatpush1.msra.mxu0 0.0
      %833 = vmatprep.subr.mxu0 0.0
      %834 = vmatpush1.msra.mxu0 0.0
      %835 = vmatprep.subr.mxu0 0.0
      %836 = vmatpush1.msra.mxu0 0.0
      %837 = vmatprep.subr.mxu0 0.0
      %838 = vmatpush1.msra.mxu0 0.0
      %839 = vmatprep.mubr.f32.mxu0 0.0
      %840 = vmatmul.mubr.f32.gmra.mrb[0].mxu0 %v773
      %v841 = vpop.f32.mrb[0].mxu0
      %v842 = vadd.f32 %v770, %v841
      %v843 = vpop.f32.mrb[0].mxu0
      %844 = vdwg.mxu0
      %845 = vst.msk [vmem:[#allocation3] sm:$0xff] %vm231, %v842
      %vm846 = vcmask 7168
      %847 = vst.msk [vmem:[#allocation4] sm:$0xff] %vm846, -1e+30
      %848 = vst.msk [vmem:[#allocation5] sm:$0xff] %vm846, 0.0
      %849 = vst.msk [vmem:[#allocation6] sm:$0xff] %vm231, 0.0
    $region201: #{_lambda_.10} parent=1 // pred_fallthru
      _
    %v850 = vld [vmem:[%s1] sm:$0xff]
    %v851 = vld [vmem:[%s1 + $0x8] sm:$0xff]
    %v852 = vld [vmem:[%s1 + $0x10] sm:$0xff]
    %v853 = vld [vmem:[%s1 + $0x18] sm:$0xff]
    %v854 = vunpack.c.l.bf16 %v850
    %v855 = vunpack.c.h.bf16 %v850
    %v856 = vunpack.c.l.bf16 %v851
    %v857 = vunpack.c.h.bf16 %v851
    %v858 = vunpack.c.l.bf16 %v852
    %v859 = vunpack.c.h.bf16 %v852
    %v860 = vunpack.c.l.bf16 %v853
    %v861 = vunpack.c.h.bf16 %v853
    %v862 = vld [vmem:[%s3] sm:$0xff]
    %v863 = vld [vmem:[%s3 + $0x8] sm:$0xff]
    %v864 = vld [vmem:[%s3 + $0x10] sm:$0xff]
    %v865 = vld [vmem:[%s3 + $0x18] sm:$0xff]
    %v866 = vunpack.c.l.bf16 %v862
    %v867 = vunpack.c.h.bf16 %v862
    %v868 = vunpack.c.l.bf16 %v863
    %v869 = vunpack.c.h.bf16 %v863
    %v870 = vunpack.c.l.bf16 %v864
    %v871 = vunpack.c.h.bf16 %v864
    %v872 = vunpack.c.l.bf16 %v865
    %v873 = vunpack.c.h.bf16 %v865
    %v874 = vadd.f32 %v854, %v866
    %v875 = vadd.f32 %v855, %v867
    %v876 = vadd.f32 %v856, %v868
    %v877 = vadd.f32 %v857, %v869
    %v878 = vadd.f32 %v858, %v870
    %v879 = vadd.f32 %v859, %v871
    %v880 = vadd.f32 %v860, %v872
    %v881 = vadd.f32 %v861, %v873
    %v882 = vld [vmem:[%s43] sm:$0xff]
    %v883 = vld [vmem:[%s43 + $0x8] sm:$0xff]
    %v884 = vld [vmem:[%s43 + $0x10] sm:$0xff]
    %v885 = vld [vmem:[%s43 + $0x18] sm:$0xff]
    %v886 = vld [vmem:[%s45] sm:$0xff]
    %v887 = vld [vmem:[%s45 + $0x8] sm:$0xff]
    %v888 = vld [vmem:[%s45 + $0x10] sm:$0xff]
    %v889 = vld [vmem:[%s45 + $0x18] sm:$0xff]
    %891 = vset.pattern.permute.xlu0 0
    %892 = vperm.xlu0 %891, %v886
    %v893 = vpop.permute.xlu0 %892
    %896 = vset.pattern.permute.xlu0 0
    %897 = vperm.xlu0 %896, %v887
    %v898 = vpop.permute.xlu0 %897
    %901 = vset.pattern.permute.xlu0 0
    %902 = vperm.xlu0 %901, %v888
    %v903 = vpop.permute.xlu0 %902
    %906 = vset.pattern.permute.xlu0 0
    %907 = vperm.xlu0 %906, %v889
    %v908 = vpop.permute.xlu0 %907
    %vm910 = vcmask 261120
    %v912 = vsel %vm910, %v882, 0
    %v915 = vsel %vm910, %v883, 0
    %v918 = vsel %vm910, %v884, 0
    %v921 = vsel %vm910, %v885, 0
    %923 = vmatprep.subr.mxu0 %v875
    %924 = vmatpush1.msra.mxu0 %v874
    %925 = vmatprep.subr.mxu0 %v877
    %926 = vmatpush1.msra.mxu0 %v876
    %927 = vmatprep.subr.mxu0 %v879
    %928 = vmatpush1.msra.mxu0 %v878
    %929 = vmatprep.subr.mxu0 %v881
    %930 = vmatpush1.msra.mxu0 %v880
    %931 = vmatprep.subr.mxu0 0.0
    %932 = vmatpush1.msra.mxu0 0.0
    %933 = vmatprep.subr.mxu0 0.0
    %934 = vmatpush1.msra.mxu0 0.0
    %935 = vmatprep.subr.mxu0 0.0
    %936 = vmatpush1.msra.mxu0 0.0
    %937 = vmatprep.subr.mxu0 0.0
    %938 = vmatpush1.msra.mxu0 0.0
    %939 = vmatprep.subr.mxu0 0.0
    %940 = vmatpush1.msra.mxu0 0.0
    %941 = vmatprep.subr.mxu0 0.0
    %942 = vmatpush1.msra.mxu0 0.0
    %943 = vmatprep.subr.mxu0 0.0
    %944 = vmatpush1.msra.mxu0 0.0
    %945 = vmatprep.subr.mxu0 0.0
    %946 = vmatpush1.msra.mxu0 0.0
    %947 = vmatprep.subr.mxu0 0.0
    %948 = vmatpush1.msra.mxu0 0.0
    %949 = vmatprep.subr.mxu0 0.0
    %950 = vmatpush1.msra.mxu0 0.0
    %951 = vmatprep.subr.mxu0 0.0
    %952 = vmatpush1.msra.mxu0 0.0
    %953 = vmatprep.subr.mxu0 0.0
    %954 = vmatpush1.msra.mxu0 0.0
    %955 = vmatprep.subr.mxu0 0.0
    %956 = vmatpush1.msra.mxu0 0.0
    %957 = vmatprep.subr.mxu0 0.0
    %958 = vmatpush1.msra.mxu0 0.0
    %959 = vmatprep.subr.mxu0 0.0
    %960 = vmatpush1.msra.mxu0 0.0
    %961 = vmatprep.subr.mxu0 0.0
    %962 = vmatpush1.msra.mxu0 0.0
    %963 = vmatprep.subr.mxu0 0.0
    %964 = vmatpush1.msra.mxu0 0.0
    %965 = vmatprep.subr.mxu0 0.0
    %966 = vmatpush1.msra.mxu0 0.0
    %967 = vmatprep.subr.mxu0 0.0
    %968 = vmatpush1.msra.mxu0 0.0
    %969 = vmatprep.subr.mxu0 0.0
    %970 = vmatpush1.msra.mxu0 0.0
    %971 = vmatprep.subr.mxu0 0.0
    %972 = vmatpush1.msra.mxu0 0.0
    %973 = vmatprep.subr.mxu0 0.0
    %974 = vmatpush1.msra.mxu0 0.0
    %975 = vmatprep.subr.mxu0 0.0
    %976 = vmatpush1.msra.mxu0 0.0
    %977 = vmatprep.subr.mxu0 0.0
    %978 = vmatpush1.msra.mxu0 0.0
    %979 = vmatprep.subr.mxu0 0.0
    %980 = vmatpush1.msra.mxu0 0.0
    %981 = vmatprep.subr.mxu0 0.0
    %982 = vmatpush1.msra.mxu0 0.0
    %983 = vmatprep.subr.mxu0 0.0
    %984 = vmatpush1.msra.mxu0 0.0
    %985 = vmatprep.subr.mxu0 0.0
    %986 = vmatpush1.msra.mxu0 0.0
    %987 = vmatprep.mubr.f32.mxu0 0.0
    %988 = vmatmul.mubr.f32.gmra.mrb[0].mxu0 %v912
    %v989 = vpop.f32.mrb[0].mxu0
    %v990 = vadd.f32 %v893, %v989
    %v991 = vpop.f32.mrb[0].mxu0
    %v992 = vadd.f32 %v893, %v991
    %993 = vmatprep.mubr.f32.mxu0 0.0
    %994 = vmatmul.mubr.f32.gmra.mrb[0].mxu0 %v915
    %v995 = vpop.f32.mrb[0].mxu0
    %v996 = vadd.f32 %v898, %v995
    %v997 = vpop.f32.mrb[0].mxu0
    %v998 = vadd.f32 %v898, %v997
    %999 = vmatprep.mubr.f32.mxu0 0.0
    %1000 = vmatmul.mubr.f32.gmra.mrb[0].mxu0 %v918
    %v1001 = vpop.f32.mrb[0].mxu0
    %v1002 = vadd.f32 %v903, %v1001
    %v1003 = vpop.f32.mrb[0].mxu0
    %v1004 = vadd.f32 %v903, %v1003
    %1005 = vmatprep.mubr.f32.mxu0 0.0
    %1006 = vmatmul.mubr.f32.gmra.mrb[0].mxu0 %v921
    %v1007 = vpop.f32.mrb[0].mxu0
    %v1008 = vadd.f32 %v908, %v1007
    %v1009 = vpop.f32.mrb[0].mxu0
    %v1010 = vadd.f32 %v908, %v1009
    %1011 = vdwg.mxu0
    %v1012 = vld [vmem:[%s47] sm:$0xff]
    %v1013 = vld [vmem:[%s47 + $0x8] sm:$0xff]
    %v1014 = vld [vmem:[%s47 + $0x10] sm:$0xff]
    %v1015 = vld [vmem:[%s47 + $0x18] sm:$0xff]
    %v1016 = vld [vmem:[%s49] sm:$0xff]
    %v1017 = vld [vmem:[%s49 + $0x8] sm:$0xff]
    %v1018 = vld [vmem:[%s49 + $0x10] sm:$0xff]
    %v1019 = vld [vmem:[%s49 + $0x18] sm:$0xff]
    %1021 = vset.pattern.permute.xlu0 0
    %1022 = vperm.xlu0 %1021, %v1016
    %v1023 = vpop.permute.xlu0 %1022
    %1026 = vset.pattern.permute.xlu0 0
    %1027 = vperm.xlu0 %1026, %v1017
    %v1028 = vpop.permute.xlu0 %1027
    %1031 = vset.pattern.permute.xlu0 0
    %1032 = vperm.xlu0 %1031, %v1018
    %v1033 = vpop.permute.xlu0 %1032
    %1036 = vset.pattern.permute.xlu0 0
    %1037 = vperm.xlu0 %1036, %v1019
    %v1038 = vpop.permute.xlu0 %1037
    %v1041 = vsel %vm910, %v1012, 0
    %v1044 = vsel %vm910, %v1013, 0
    %v1047 = vsel %vm910, %v1014, 0
    %v1050 = vsel %vm910, %v1015, 0
    %1052 = vmatprep.subr.mxu0 %v855
    %1053 = vmatpush1.msra.mxu0 %v854
    %1054 = vmatprep.subr.mxu0 %v857
    %1055 = vmatpush1.msra.mxu0 %v856
    %1056 = vmatprep.subr.mxu0 %v859
    %1057 = vmatpush1.msra.mxu0 %v858
    %1058 = vmatprep.subr.mxu0 %v861
    %1059 = vmatpush1.msra.mxu0 %v860
    %1060 = vmatprep.subr.mxu0 0.0
    %1061 = vmatpush1.msra.mxu0 0.0
    %1062 = vmatprep.subr.mxu0 0.0
    %1063 = vmatpush1.msra.mxu0 0.0
    %1064 = vmatprep.subr.mxu0 0.0
    %1065 = vmatpush1.msra.mxu0 0.0
    %1066 = vmatprep.subr.mxu0 0.0
    %1067 = vmatpush1.msra.mxu0 0.0
    %1068 = vmatprep.subr.mxu0 0.0
    %1069 = vmatpush1.msra.mxu0 0.0
    %1070 = vmatprep.subr.mxu0 0.0
    %1071 = vmatpush1.msra.mxu0 0.0
    %1072 = vmatprep.subr.mxu0 0.0
    %1073 = vmatpush1.msra.mxu0 0.0
    %1074 = vmatprep.subr.mxu0 0.0
    %1075 = vmatpush1.msra.mxu0 0.0
    %1076 = vmatprep.subr.mxu0 0.0
    %1077 = vmatpush1.msra.mxu0 0.0
    %1078 = vmatprep.subr.mxu0 0.0
    %1079 = vmatpush1.msra.mxu0 0.0
    %1080 = vmatprep.subr.mxu0 0.0
    %1081 = vmatpush1.msra.mxu0 0.0
    %1082 = vmatprep.subr.mxu0 0.0
    %1083 = vmatpush1.msra.mxu0 0.0
    %1084 = vmatprep.subr.mxu0 0.0
    %1085 = vmatpush1.msra.mxu0 0.0
    %1086 = vmatprep.subr.mxu0 0.0
    %1087 = vmatpush1.msra.mxu0 0.0
    %1088 = vmatprep.subr.mxu0 0.0
    %1089 = vmatpush1.msra.mxu0 0.0
    %1090 = vmatprep.subr.mxu0 0.0
    %1091 = vmatpush1.msra.mxu0 0.0
    %1092 = vmatprep.subr.mxu0 0.0
    %1093 = vmatpush1.msra.mxu0 0.0
    %1094 = vmatprep.subr.mxu0 0.0
    %1095 = vmatpush1.msra.mxu0 0.0
    %1096 = vmatprep.subr.mxu0 0.0
    %1097 = vmatpush1.msra.mxu0 0.0
    %1098 = vmatprep.subr.mxu0 0.0
    %1099 = vmatpush1.msra.mxu0 0.0
    %1100 = vmatprep.subr.mxu0 0.0
    %1101 = vmatpush1.msra.mxu0 0.0
    %1102 = vmatprep.subr.mxu0 0.0
    %1103 = vmatpush1.msra.mxu0 0.0
    %1104 = vmatprep.subr.mxu0 0.0
    %1105 = vmatpush1.msra.mxu0 0.0
    %1106 = vmatprep.subr.mxu0 0.0
    %1107 = vmatpush1.msra.mxu0 0.0
    %1108 = vmatprep.subr.mxu0 0.0
    %1109 = vmatpush1.msra.mxu0 0.0
    %1110 = vmatprep.subr.mxu0 0.0
    %1111 = vmatpush1.msra.mxu0 0.0
    %1112 = vmatprep.subr.mxu0 0.0
    %1113 = vmatpush1.msra.mxu0 0.0
    %1114 = vmatprep.subr.mxu0 0.0
    %1115 = vmatpush1.msra.mxu0 0.0
    %1116 = vmatprep.mubr.f32.mxu0 0.0
    %1117 = vmatmul.mubr.f32.gmra.mrb[0].mxu0 %v1041
    %v1118 = vpop.f32.mrb[0].mxu0
    %v1119 = vadd.f32 %v1023, %v1118
    %v1120 = vpop.f32.mrb[0].mxu0
    %v1121 = vadd.f32 %v1023, %v1120
    %1122 = vmatprep.mubr.f32.mxu0 0.0
    %1123 = vmatmul.mubr.f32.gmra.mrb[0].mxu0 %v1044
    %v1124 = vpop.f32.mrb[0].mxu0
    %v1125 = vadd.f32 %v1028, %v1124
    %v1126 = vpop.f32.mrb[0].mxu0
    %v1127 = vadd.f32 %v1028, %v1126
    %1128 = vmatprep.mubr.f32.mxu0 0.0
    %1129 = vmatmul.mubr.f32.gmra.mrb[0].mxu0 %v1047
    %v1130 = vpop.f32.mrb[0].mxu0
    %v1131 = vadd.f32 %v1033, %v1130
    %v1132 = vpop.f32.mrb[0].mxu0
    %v1133 = vadd.f32 %v1033, %v1132
    %1134 = vmatprep.mubr.f32.mxu0 0.0
    %1135 = vmatmul.mubr.f32.gmra.mrb[0].mxu0 %v1050
    %v1136 = vpop.f32.mrb[0].mxu0
    %v1137 = vadd.f32 %v1038, %v1136
    %v1138 = vpop.f32.mrb[0].mxu0
    %v1139 = vadd.f32 %v1038, %v1138
    %1140 = vdwg.mxu0
    %v1141 = vld [vmem:[#allocation3] sm:$0xff]
    %v1143 = vsel %vm910, %v1141, 0
    %1145 = vmatprep.subr.mxu0 %v992
    %1146 = vmatpush1.msra.mxu0 %v990
    %1147 = vmatprep.subr.mxu0 %v998
    %1148 = vmatpush1.msra.mxu0 %v996
    %1149 = vmatprep.subr.mxu0 %v1004
    %1150 = vmatpush1.msra.mxu0 %v1002
    %1151 = vmatprep.subr.mxu0 %v1010
    %1152 = vmatpush1.msra.mxu0 %v1008
    %1153 = vmatprep.subr.mxu0 0.0
    %1154 = vmatpush1.msra.mxu0 0.0
    %1155 = vmatprep.subr.mxu0 0.0
    %1156 = vmatpush1.msra.mxu0 0.0
    %1157 = vmatprep.subr.mxu0 0.0
    %1158 = vmatpush1.msra.mxu0 0.0
    %1159 = vmatprep.subr.mxu0 0.0
    %1160 = vmatpush1.msra.mxu0 0.0
    %1161 = vmatprep.subr.mxu0 0.0
    %1162 = vmatpush1.msra.mxu0 0.0
    %1163 = vmatprep.subr.mxu0 0.0
    %1164 = vmatpush1.msra.mxu0 0.0
    %1165 = vmatprep.subr.mxu0 0.0
    %1166 = vmatpush1.msra.mxu0 0.0
    %1167 = vmatprep.subr.mxu0 0.0
    %1168 = vmatpush1.msra.mxu0 0.0
    %1169 = vmatprep.subr.mxu0 0.0
    %1170 = vmatpush1.msra.mxu0 0.0
    %1171 = vmatprep.subr.mxu0 0.0
    %1172 = vmatpush1.msra.mxu0 0.0
    %1173 = vmatprep.subr.mxu0 0.0
    %1174 = vmatpush1.msra.mxu0 0.0
    %1175 = vmatprep.subr.mxu0 0.0
    %1176 = vmatpush1.msra.mxu0 0.0
    %1177 = vmatprep.subr.mxu0 0.0
    %1178 = vmatpush1.msra.mxu0 0.0
    %1179 = vmatprep.subr.mxu0 0.0
    %1180 = vmatpush1.msra.mxu0 0.0
    %1181 = vmatprep.subr.mxu0 0.0
    %1182 = vmatpush1.msra.mxu0 0.0
    %1183 = vmatprep.subr.mxu0 0.0
    %1184 = vmatpush1.msra.mxu0 0.0
    %1185 = vmatprep.subr.mxu0 0.0
    %1186 = vmatpush1.msra.mxu0 0.0
    %1187 = vmatprep.subr.mxu0 0.0
    %1188 = vmatpush1.msra.mxu0 0.0
    %1189 = vmatprep.subr.mxu0 0.0
    %1190 = vmatpush1.msra.mxu0 0.0
    %1191 = vmatprep.subr.mxu0 0.0
    %1192 = vmatpush1.msra.mxu0 0.0
    %1193 = vmatprep.subr.mxu0 0.0
    %1194 = vmatpush1.msra.mxu0 0.0
    %1195 = vmatprep.subr.mxu0 0.0
    %1196 = vmatpush1.msra.mxu0 0.0
    %1197 = vmatprep.subr.mxu0 0.0
    %1198 = vmatpush1.msra.mxu0 0.0
    %1199 = vmatprep.subr.mxu0 0.0
    %1200 = vmatpush1.msra.mxu0 0.0
    %1201 = vmatprep.subr.mxu0 0.0
    %1202 = vmatpush1.msra.mxu0 0.0
    %1203 = vmatprep.subr.mxu0 0.0
    %1204 = vmatpush1.msra.mxu0 0.0
    %1205 = vmatprep.subr.mxu0 0.0
    %1206 = vmatpush1.msra.mxu0 0.0
    %1207 = vmatprep.subr.mxu0 0.0
    %1208 = vmatpush1.msra.mxu0 0.0
    %1209 = vmatprep.mubr.f32.mxu0 0.0
    %1210 = vmatmul.mubr.f32.gmra.mrb[0].mxu0 %v1143
    %v1211 = vpop.f32.mrb[0].mxu0
    %v1212 = vadd.f32 0.0, %v1211
    %v1213 = vpop.f32.mrb[0].mxu0
    %v1214 = vadd.f32 0.0, %v1213
    %1215 = vdwg.mxu0
    %v1216 = vmul.f32 %v1212, 0.17677669
    %v1217 = vmul.f32 %v1214, 0.17677669
    %v1218 = vld [vmem:[%s15] sm:$0xff]
    %v1219 = vld [vmem:[%s5] sm:$0x3]
    %1220 = vset.pattern.permute.xlu0 0
    %1221 = vperm.xlu0 %1220, %v1218
    %v1222 = vpop.permute.xlu0 %1221
    %v1223 = vlaneseq
    %v1224 = vshrl.u32 %v1223, 7
    %v1225 = vsub.s32 0, %v1224
    %v1226 = vrot.slane %v1219, %v1225
    %v1227 = vlaneseq
    %v1228 = vshrl.u32 %v1227, 7
    %v1229 = vsub.s32 1, %v1228
    %v1230 = vrot.slane %v1219, %v1229
    %vm1231 = vcmp.eq.s32.totalorder %v1222, %v1226
    %vm1232 = vcmp.eq.s32.totalorder %v1222, %v1230
    %v1233 = vld [vmem:[%s7] sm:$0xff]
    %v1234 = vunpack.c.l.bf16 %v1233
    %v1235 = vunpack.c.h.bf16 %v1233
    %vm1236 = vcmp.lt.f32.partialorder %v1234, 0.5
    %vm1237 = vcmp.lt.f32.partialorder %v1235, 0.5
    %v1238 = vld [vmem:[%s9] sm:$0xff]
    %vm1239 = vcmp.gt.f32.partialorder %v1238, 0.0
    %v1240 = vsel %vm1239, 1, 0
    %1241 = vset.pattern.permute.xlu0 0
    %1242 = vperm.xlu0 %1241, %v1240
    %v1243 = vpop.permute.xlu0 %1242
    %vm1244 = vcmp.eq.s32.totalorder %v1243, 1
    %vm1245 = vmand %vm1236, %vm1244
    %vm1246 = vmand %vm1237, %vm1244
    %vm1247 = vmxor %vm1245, 1
    %vm1248 = vmxor %vm1246, 1
    %vm1249 = vmand %vm1231, %vm1247
    %vm1250 = vmand %vm1232, %vm1248
    %v1251 = vsel %vm1249, %v1216, -1e+09
    %v1252 = vsel %vm1250, %v1217, -1e+09
    %v1253 = vld [vmem:[#allocation4] sm:$0xff]
    %v1254 = vmax.f32 %v1251, %v1252
    %1255 = vmax.xlane.f32.xlu0 %v1254
    %v1256 = vpop.xlane.xlu0 %1255
    %v1257 = vmax.f32 %v1253, %v1256
    %v1258 = vsub.f32 %v1253, %v1257
    %v1259 = vmul.f32 %v1258, 1.442695
    %v1260 = vpow.pop %v1259
    %1262 = vset.pattern.permute.xlu0 0
    %1263 = vperm.xlu0 %1262, %v1257
    %v1264 = vpop.permute.xlu0 %1263
    %v1266 = vsub.f32 %v1251, %v1264
    %v1267 = vsub.f32 %v1252, %v1264
    %v1268 = vmul.f32 %v1266, 1.442695
    %v1269 = vpow.pop %v1268
    %v1270 = vmul.f32 %v1267, 1.442695
    %v1271 = vpow.pop %v1270
    %v1272 = vld [vmem:[#allocation5] sm:$0xff]
    %v1273 = vmul.f32 %v1260, %v1272
    %v1274 = vadd.f32 %v1269, %v1271
    %1275 = vadd.xlane.f32.xlu0 %v1274
    %v1276 = vpop.xlane.xlu0 %1275
    %v1277 = vadd.f32 %v1273, %v1276
    %vm1278 = vcmask 7168
    %1279 = vst.msk [vmem:[#allocation5] sm:$0xff] %vm1278, %v1277
    %v1280 = vld [vmem:[#allocation6] sm:$0xff]
    %1282 = vset.pattern.permute.xlu0 0
    %1283 = vperm.xlu0 %1282, %v1260
    %v1284 = vpop.permute.xlu0 %1283
    %v1286 = vmul.f32 %v1284, %v1280
    %1287 = vmatprep.subr.mxu0 %v1121
    %1288 = vmatpush1.xpose.msra.mxu0 %v1119
    %1289 = vmatprep.subr.mxu0 %v1127
    %1290 = vmatpush1.xpose.msra.mxu0 %v1125
    %1291 = vmatprep.subr.mxu0 %v1133
    %1292 = vmatpush1.xpose.msra.mxu0 %v1131
    %1293 = vmatprep.subr.mxu0 %v1139
    %1294 = vmatpush1.xpose.msra.mxu0 %v1137
    %1295 = vmatprep.subr.mxu0 0.0
    %1296 = vmatpush1.xpose.msra.mxu0 0.0
    %1297 = vmatprep.subr.mxu0 0.0
    %1298 = vmatpush1.xpose.msra.mxu0 0.0
    %1299 = vmatprep.subr.mxu0 0.0
    %1300 = vmatpush1.xpose.msra.mxu0 0.0
    %1301 = vmatprep.subr.mxu0 0.0
    %1302 = vmatpush1.xpose.msra.mxu0 0.0
    %1303 = vmatprep.subr.mxu0 0.0
    %1304 = vmatpush1.xpose.msra.mxu0 0.0
    %1305 = vmatprep.subr.mxu0 0.0
    %1306 = vmatpush1.xpose.msra.mxu0 0.0
    %1307 = vmatprep.subr.mxu0 0.0
    %1308 = vmatpush1.xpose.msra.mxu0 0.0
    %1309 = vmatprep.subr.mxu0 0.0
    %1310 = vmatpush1.xpose.msra.mxu0 0.0
    %1311 = vmatprep.subr.mxu0 0.0
    %1312 = vmatpush1.xpose.msra.mxu0 0.0
    %1313 = vmatprep.subr.mxu0 0.0
    %1314 = vmatpush1.xpose.msra.mxu0 0.0
    %1315 = vmatprep.subr.mxu0 0.0
    %1316 = vmatpush1.xpose.msra.mxu0 0.0
    %1317 = vmatprep.subr.mxu0 0.0
    %1318 = vmatpush1.xpose.msra.mxu0 0.0
    %1319 = vmatprep.subr.mxu0 0.0
    %1320 = vmatpush1.xpose.msra.mxu0 0.0
    %1321 = vmatprep.subr.mxu0 0.0
    %1322 = vmatpush1.xpose.msra.mxu0 0.0
    %1323 = vmatprep.subr.mxu0 0.0
    %1324 = vmatpush1.xpose.msra.mxu0 0.0
    %1325 = vmatprep.subr.mxu0 0.0
    %1326 = vmatpush1.xpose.msra.mxu0 0.0
    %1327 = vmatprep.subr.mxu0 0.0
    %1328 = vmatpush1.xpose.msra.mxu0 0.0
    %1329 = vmatprep.subr.mxu0 0.0
    %1330 = vmatpush1.xpose.msra.mxu0 0.0
    %1331 = vmatprep.subr.mxu0 0.0
    %1332 = vmatpush1.xpose.msra.mxu0 0.0
    %1333 = vmatprep.subr.mxu0 0.0
    %1334 = vmatpush1.xpose.msra.mxu0 0.0
    %1335 = vmatprep.subr.mxu0 0.0
    %1336 = vmatpush1.xpose.msra.mxu0 0.0
    %1337 = vmatprep.subr.mxu0 0.0
    %1338 = vmatpush1.xpose.msra.mxu0 0.0
    %1339 = vmatprep.subr.mxu0 0.0
    %1340 = vmatpush1.xpose.msra.mxu0 0.0
    %1341 = vmatprep.subr.mxu0 0.0
    %1342 = vmatpush1.xpose.msra.mxu0 0.0
    %1343 = vmatprep.subr.mxu0 0.0
    %1344 = vmatpush1.xpose.msra.mxu0 0.0
    %1345 = vmatprep.subr.mxu0 0.0
    %1346 = vmatpush1.xpose.msra.mxu0 0.0
    %1347 = vmatprep.subr.mxu0 0.0
    %1348 = vmatpush1.xpose.msra.mxu0 0.0
    %1349 = vmatprep.subr.mxu0 0.0
    %1350 = vmatpush1.xpose.msra.mxu0 0.0
    %1351 = vmatprep.mubr.f32.mxu0 %v1271
    %1352 = vmatmul.mubr.f32.gmra.mrb[0].mxu0 %v1269
    %v1353 = vpop.f32.mrb[0].mxu0
    %v1354 = vadd.f32 0.0, %v1353
    %v1355 = vpop.f32.mrb[0].mxu0
    %1356 = vdwg.mxu0
    %v1357 = vadd.f32 %v1286, %v1354
    %1358 = vst.msk [vmem:[#allocation6] sm:$0xff] %vm910, %v1357
    %1359 = vst.msk [vmem:[#allocation4] sm:$0xff] %vm1278, %v1257
    // Predicated region
    $region202: #{_lambda_.10} parent=1 // pred_check
      %p1360 = pneg %p213
    $region203: #{_lambda_.10} parent=1 // pred_check_branch
      %1362 = sbr.rel (%p1360) target = $region205
    $region204: #{_lambda_.10} parent=1 // pred_region
      %v1363 = vld [vmem:[#allocation6] sm:$0xff]
      %v1364 = vld [vmem:[#allocation5] sm:$0xff]
      %v1365 = vrcp.pop %v1364
      %1367 = vset.pattern.permute.xlu0 0
      %1368 = vperm.xlu0 %1367, %v1365
      %v1369 = vpop.permute.xlu0 %1368
      %v1371 = vmul.f32 %v1363, %v1369
      %v1372 = vld [vmem:[%s51] sm:$0xff]
      %v1373 = vld [vmem:[%s51 + $0x8] sm:$0xff]
      %v1374 = vld [vmem:[%s51 + $0x10] sm:$0xff]
      %v1375 = vld [vmem:[%s51 + $0x18] sm:$0xff]
      %v1376 = vld [vmem:[%s53] sm:$0x1]
      %v1378 = vlaneseq
      %v1379 = vshrl.u32 %v1378, 7
      %v1380 = vsub.s32 0, %v1379
      %v1381 = vrot.slane %v1376, %v1380
      %v1384 = vsel %vm910, %v1371, 0
      %1386 = vmatprep.subr.mxu0 0.0
      %1387 = vmatpush1.msra.mxu0 %v1372
      %1388 = vmatprep.subr.mxu0 0.0
      %1389 = vmatpush1.msra.mxu0 %v1373
      %1390 = vmatprep.subr.mxu0 0.0
      %1391 = vmatpush1.msra.mxu0 %v1374
      %1392 = vmatprep.subr.mxu0 0.0
      %1393 = vmatpush1.msra.mxu0 %v1375
      %1394 = vmatprep.subr.mxu0 0.0
      %1395 = vmatpush1.msra.mxu0 0.0
      %1396 = vmatprep.subr.mxu0 0.0
      %1397 = vmatpush1.msra.mxu0 0.0
      %1398 = vmatprep.subr.mxu0 0.0
      %1399 = vmatpush1.msra.mxu0 0.0
      %1400 = vmatprep.subr.mxu0 0.0
      %1401 = vmatpush1.msra.mxu0 0.0
      %1402 = vmatprep.subr.mxu0 0.0
      %1403 = vmatpush1.msra.mxu0 0.0
      %1404 = vmatprep.subr.mxu0 0.0
      %1405 = vmatpush1.msra.mxu0 0.0
      %1406 = vmatprep.subr.mxu0 0.0
      %1407 = vmatpush1.msra.mxu0 0.0
      %1408 = vmatprep.subr.mxu0 0.0
      %1409 = vmatpush1.msra.mxu0 0.0
      %1410 = vmatprep.subr.mxu0 0.0
      %1411 = vmatpush1.msra.mxu0 0.0
      %1412 = vmatprep.subr.mxu0 0.0
      %1413 = vmatpush1.msra.mxu0 0.0
      %1414 = vmatprep.subr.mxu0 0.0
      %1415 = vmatpush1.msra.mxu0 0.0
      %1416 = vmatprep.subr.mxu0 0.0
      %1417 = vmatpush1.msra.mxu0 0.0
      %1418 = vmatprep.subr.mxu0 0.0
      %1419 = vmatpush1.msra.mxu0 0.0
      %1420 = vmatprep.subr.mxu0 0.0
      %1421 = vmatpush1.msra.mxu0 0.0
      %1422 = vmatprep.subr.mxu0 0.0
      %1423 = vmatpush1.msra.mxu0 0.0
      %1424 = vmatprep.subr.mxu0 0.0
      %1425 = vmatpush1.msra.mxu0 0.0
      %1426 = vmatprep.subr.mxu0 0.0
      %1427 = vmatpush1.msra.mxu0 0.0
      %1428 = vmatprep.subr.mxu0 0.0
      %1429 = vmatpush1.msra.mxu0 0.0
      %1430 = vmatprep.subr.mxu0 0.0
      %1431 = vmatpush1.msra.mxu0 0.0
      %1432 = vmatprep.subr.mxu0 0.0
      %1433 = vmatpush1.msra.mxu0 0.0
      %1434 = vmatprep.subr.mxu0 0.0
      %1435 = vmatpush1.msra.mxu0 0.0
      %1436 = vmatprep.subr.mxu0 0.0
      %1437 = vmatpush1.msra.mxu0 0.0
      %1438 = vmatprep.subr.mxu0 0.0
      %1439 = vmatpush1.msra.mxu0 0.0
      %1440 = vmatprep.subr.mxu0 0.0
      %1441 = vmatpush1.msra.mxu0 0.0
      %1442 = vmatprep.subr.mxu0 0.0
      %1443 = vmatpush1.msra.mxu0 0.0
      %1444 = vmatprep.subr.mxu0 0.0
      %1445 = vmatpush1.msra.mxu0 0.0
      %1446 = vmatprep.subr.mxu0 0.0
      %1447 = vmatpush1.msra.mxu0 0.0
      %1448 = vmatprep.subr.mxu0 0.0
      %1449 = vmatpush1.msra.mxu0 0.0
      %1450 = vmatprep.mubr.f32.mxu0 0.0
      %1451 = vmatmul.mubr.f32.gmra.mrb[0].mxu0 %v1384
      %v1452 = vpop.f32.mrb[0].mxu0
      %v1453 = vadd.f32 %v1381, %v1452
      %v1454 = vpop.f32.mrb[0].mxu0
      %1455 = vdwg.mxu0
      %v1456 = vld [vmem:[#allocation2] sm:$0xff]
      %v1457 = vadd.f32 %v1456, %v1453
      %v1458 = vld [vmem:[%s55] sm:$0x1]
      %v1459 = vld [vmem:[%s57] sm:$0x1]
      %v1460 = vsel %vm910, %v1457, 0.0
      %1461 = vadd.xlane.f32.xlu0 %v1460
      %v1462 = vpop.xlane.xlu0 %1461
      %v1463 = vrcp.pop 32.0
      %v1464 = vmul.f32 %v1462, %v1463
      %v1465 = vsub.f32 %v1457, %v1464
      %v1466 = vmul.f32 %v1465, %v1465
      %v1467 = vsel %vm910, %v1466, 0.0
      %1468 = vadd.xlane.f32.xlu0 %v1467
      %v1469 = vpop.xlane.xlu0 %1468
      %v1470 = vmul.f32 %v1469, %v1463
      %v1471 = vadd.f32 %v1470, 1e-05
      %v1472 = vrsqrt.pop %v1471
      %v1473 = vmul.f32 %v1465, %v1472
      %v1475 = vlaneseq
      %v1476 = vshrl.u32 %v1475, 7
      %v1477 = vsub.s32 0, %v1476
      %v1478 = vrot.slane %v1458, %v1477
      %v1480 = vmul.f32 %v1473, %v1478
      %v1482 = vlaneseq
      %v1483 = vshrl.u32 %v1482, 7
      %v1484 = vsub.s32 0, %v1483
      %v1485 = vrot.slane %v1459, %v1484
      %v1487 = vadd.f32 %v1480, %v1485
      %v1488 = vld [vmem:[%s59] sm:$0xff]
      %v1489 = vld [vmem:[%s59 + $0x8] sm:$0xff]
      %v1490 = vld [vmem:[%s59 + $0x10] sm:$0xff]
      %v1491 = vld [vmem:[%s59 + $0x18] sm:$0xff]
      %v1492 = vld [vmem:[%s61] sm:$0x1]
      %v1494 = vlaneseq
      %v1495 = vshrl.u32 %v1494, 7
      %v1496 = vsub.s32 0, %v1495
      %v1497 = vrot.slane %v1492, %v1496
      %v1500 = vsel %vm910, %v1487, 0
      %1502 = vmatprep.subr.mxu0 0.0
      %1503 = vmatpush1.msra.mxu0 %v1488
      %1504 = vmatprep.subr.mxu0 0.0
      %1505 = vmatpush1.msra.mxu0 %v1489
      %1506 = vmatprep.subr.mxu0 0.0
      %1507 = vmatpush1.msra.mxu0 %v1490
      %1508 = vmatprep.subr.mxu0 0.0
      %1509 = vmatpush1.msra.mxu0 %v1491
      %1510 = vmatprep.subr.mxu0 0.0
      %1511 = vmatpush1.msra.mxu0 0.0
      %1512 = vmatprep.subr.mxu0 0.0
      %1513 = vmatpush1.msra.mxu0 0.0
      %1514 = vmatprep.subr.mxu0 0.0
      %1515 = vmatpush1.msra.mxu0 0.0
      %1516 = vmatprep.subr.mxu0 0.0
      %1517 = vmatpush1.msra.mxu0 0.0
      %1518 = vmatprep.subr.mxu0 0.0
      %1519 = vmatpush1.msra.mxu0 0.0
      %1520 = vmatprep.subr.mxu0 0.0
      %1521 = vmatpush1.msra.mxu0 0.0
      %1522 = vmatprep.subr.mxu0 0.0
      %1523 = vmatpush1.msra.mxu0 0.0
      %1524 = vmatprep.subr.mxu0 0.0
      %1525 = vmatpush1.msra.mxu0 0.0
      %1526 = vmatprep.subr.mxu0 0.0
      %1527 = vmatpush1.msra.mxu0 0.0
      %1528 = vmatprep.subr.mxu0 0.0
      %1529 = vmatpush1.msra.mxu0 0.0
      %1530 = vmatprep.subr.mxu0 0.0
      %1531 = vmatpush1.msra.mxu0 0.0
      %1532 = vmatprep.subr.mxu0 0.0
      %1533 = vmatpush1.msra.mxu0 0.0
      %1534 = vmatprep.subr.mxu0 0.0
      %1535 = vmatpush1.msra.mxu0 0.0
      %1536 = vmatprep.subr.mxu0 0.0
      %1537 = vmatpush1.msra.mxu0 0.0
      %1538 = vmatprep.subr.mxu0 0.0
      %1539 = vmatpush1.msra.mxu0 0.0
      %1540 = vmatprep.subr.mxu0 0.0
      %1541 = vmatpush1.msra.mxu0 0.0
      %1542 = vmatprep.subr.mxu0 0.0
      %1543 = vmatpush1.msra.mxu0 0.0
      %1544 = vmatprep.subr.mxu0 0.0
      %1545 = vmatpush1.msra.mxu0 0.0
      %1546 = vmatprep.subr.mxu0 0.0
      %1547 = vmatpush1.msra.mxu0 0.0
      %1548 = vmatprep.subr.mxu0 0.0
      %1549 = vmatpush1.msra.mxu0 0.0
      %1550 = vmatprep.subr.mxu0 0.0
      %1551 = vmatpush1.msra.mxu0 0.0
      %1552 = vmatprep.subr.mxu0 0.0
      %1553 = vmatpush1.msra.mxu0 0.0
      %1554 = vmatprep.subr.mxu0 0.0
      %1555 = vmatpush1.msra.mxu0 0.0
      %1556 = vmatprep.subr.mxu0 0.0
      %1557 = vmatpush1.msra.mxu0 0.0
      %1558 = vmatprep.subr.mxu0 0.0
      %1559 = vmatpush1.msra.mxu0 0.0
      %1560 = vmatprep.subr.mxu0 0.0
      %1561 = vmatpush1.msra.mxu0 0.0
      %1562 = vmatprep.subr.mxu0 0.0
      %1563 = vmatpush1.msra.mxu0 0.0
      %1564 = vmatprep.subr.mxu0 0.0
      %1565 = vmatpush1.msra.mxu0 0.0
      %1566 = vmatprep.mubr.f32.mxu0 0.0
      %1567 = vmatmul.mubr.f32.gmra.mrb[0].mxu0 %v1500
      %v1568 = vpop.f32.mrb[0].mxu0
      %v1569 = vadd.f32 %v1497, %v1568
      %v1570 = vpop.f32.mrb[0].mxu0
      %1571 = vdwg.mxu0
      %v1572 = vmax.f32 %v1569, 0.0
      %v1573 = vld [vmem:[%s63] sm:$0xff]
      %v1574 = vld [vmem:[%s63 + $0x8] sm:$0xff]
      %v1575 = vld [vmem:[%s63 + $0x10] sm:$0xff]
      %v1576 = vld [vmem:[%s63 + $0x18] sm:$0xff]
      %v1577 = vld [vmem:[%s63 + $0x20] sm:$0xff]
      %v1578 = vld [vmem:[%s63 + $0x28] sm:$0xff]
      %v1579 = vld [vmem:[%s63 + $0x30] sm:$0xff]
      %v1580 = vld [vmem:[%s63 + $0x38] sm:$0xff]
      %vm1581 = vcmask 523264
      %v1583 = vsel %vm1581, %v1572, 0
      %1585 = vmatprep.subr.mxu0 0.0
      %1586 = vmatpush1.msra.mxu0 %v1573
      %1587 = vmatprep.subr.mxu0 0.0
      %1588 = vmatpush1.msra.mxu0 %v1574
      %1589 = vmatprep.subr.mxu0 0.0
      %1590 = vmatpush1.msra.mxu0 %v1575
      %1591 = vmatprep.subr.mxu0 0.0
      %1592 = vmatpush1.msra.mxu0 %v1576
      %1593 = vmatprep.subr.mxu0 0.0
      %1594 = vmatpush1.msra.mxu0 %v1577
      %1595 = vmatprep.subr.mxu0 0.0
      %1596 = vmatpush1.msra.mxu0 %v1578
      %1597 = vmatprep.subr.mxu0 0.0
      %1598 = vmatpush1.msra.mxu0 %v1579
      %1599 = vmatprep.subr.mxu0 0.0
      %1600 = vmatpush1.msra.mxu0 %v1580
      %1601 = vmatprep.subr.mxu0 0.0
      %1602 = vmatpush1.msra.mxu0 0.0
      %1603 = vmatprep.subr.mxu0 0.0
      %1604 = vmatpush1.msra.mxu0 0.0
      %1605 = vmatprep.subr.mxu0 0.0
      %1606 = vmatpush1.msra.mxu0 0.0
      %1607 = vmatprep.subr.mxu0 0.0
      %1608 = vmatpush1.msra.mxu0 0.0
      %1609 = vmatprep.subr.mxu0 0.0
      %1610 = vmatpush1.msra.mxu0 0.0
      %1611 = vmatprep.subr.mxu0 0.0
      %1612 = vmatpush1.msra.mxu0 0.0
      %1613 = vmatprep.subr.mxu0 0.0
      %1614 = vmatpush1.msra.mxu0 0.0
      %1615 = vmatprep.subr.mxu0 0.0
      %1616 = vmatpush1.msra.mxu0 0.0
      %1617 = vmatprep.subr.mxu0 0.0
      %1618 = vmatpush1.msra.mxu0 0.0
      %1619 = vmatprep.subr.mxu0 0.0
      %1620 = vmatpush1.msra.mxu0 0.0
      %1621 = vmatprep.subr.mxu0 0.0
      %1622 = vmatpush1.msra.mxu0 0.0
      %1623 = vmatprep.subr.mxu0 0.0
      %1624 = vmatpush1.msra.mxu0 0.0
      %1625 = vmatprep.subr.mxu0 0.0
      %1626 = vmatpush1.msra.mxu0 0.0
      %1627 = vmatprep.subr.mxu0 0.0
      %1628 = vmatpush1.msra.mxu0 0.0
      %1629 = vmatprep.subr.mxu0 0.0
      %1630 = vmatpush1.msra.mxu0 0.0
      %1631 = vmatprep.subr.mxu0 0.0
      %1632 = vmatpush1.msra.mxu0 0.0
      %1633 = vmatprep.subr.mxu0 0.0
      %1634 = vmatpush1.msra.mxu0 0.0
      %1635 = vmatprep.subr.mxu0 0.0
      %1636 = vmatpush1.msra.mxu0 0.0
      %1637 = vmatprep.subr.mxu0 0.0
      %1638 = vmatpush1.msra.mxu0 0.0
      %1639 = vmatprep.subr.mxu0 0.0
      %1640 = vmatpush1.msra.mxu0 0.0
      %1641 = vmatprep.subr.mxu0 0.0
      %1642 = vmatpush1.msra.mxu0 0.0
      %1643 = vmatprep.subr.mxu0 0.0
      %1644 = vmatpush1.msra.mxu0 0.0
      %1645 = vmatprep.subr.mxu0 0.0
      %1646 = vmatpush1.msra.mxu0 0.0
      %1647 = vmatprep.subr.mxu0 0.0
      %1648 = vmatpush1.msra.mxu0 0.0
      %1649 = vmatprep.mubr.f32.mxu0 0.0
      %1650 = vmatmul.mubr.f32.gmra.mrb[0].mxu0 %v1583
      %v1651 = vpop.f32.mrb[0].mxu0
      %v1652 = vadd.f32 0.0, %v1651
      %v1653 = vpop.f32.mrb[0].mxu0
      %1654 = vdwg.mxu0
      %v1655 = vadd.f32 %v1487, %v1652
      %v1656 = vld [vmem:[%s65] sm:$0x1]
      %v1658 = vlaneseq
      %v1659 = vshrl.u32 %v1658, 7
      %v1660 = vsub.s32 0, %v1659
      %v1661 = vrot.slane %v1656, %v1660
      %v1663 = vadd.f32 %v1655, %v1661
      %v1664 = vld [vmem:[%s67] sm:$0x1]
      %v1665 = vld [vmem:[%s69] sm:$0x1]
      %v1666 = vsel %vm910, %v1663, 0.0
      %1667 = vadd.xlane.f32.xlu0 %v1666
      %v1668 = vpop.xlane.xlu0 %1667
      %v1669 = vmul.f32 %v1668, %v1463
      %v1670 = vsub.f32 %v1663, %v1669
      %v1671 = vmul.f32 %v1670, %v1670
      %v1672 = vsel %vm910, %v1671, 0.0
      %1673 = vadd.xlane.f32.xlu0 %v1672
      %v1674 = vpop.xlane.xlu0 %1673
      %v1675 = vmul.f32 %v1674, %v1463
      %v1676 = vadd.f32 %v1675, 1e-05
      %v1677 = vrsqrt.pop %v1676
      %v1678 = vmul.f32 %v1670, %v1677
      %v1680 = vlaneseq
      %v1681 = vshrl.u32 %v1680, 7
      %v1682 = vsub.s32 0, %v1681
      %v1683 = vrot.slane %v1664, %v1682
      %v1685 = vmul.f32 %v1678, %v1683
      %v1687 = vlaneseq
      %v1688 = vshrl.u32 %v1687, 7
      %v1689 = vsub.s32 0, %v1688
      %v1690 = vrot.slane %v1665, %v1689
      %v1692 = vadd.f32 %v1685, %v1690
      %1693 = vst.msk [vmem:[#allocation7] sm:$0xff] %vm910, %v1692
      %v1694 = vld [vmem:[%s71] sm:$0x1]
      %v1695 = vld [vmem:[%s73] sm:$0x1]
      %v1696 = vsel %vm910, %v1692, 0.0
      %1697 = vadd.xlane.f32.xlu0 %v1696
      %v1698 = vpop.xlane.xlu0 %1697
      %v1699 = vmul.f32 %v1698, %v1463
      %v1700 = vsub.f32 %v1692, %v1699
      %v1701 = vmul.f32 %v1700, %v1700
      %v1702 = vsel %vm910, %v1701, 0.0
      %1703 = vadd.xlane.f32.xlu0 %v1702
      %v1704 = vpop.xlane.xlu0 %1703
      %v1705 = vmul.f32 %v1704, %v1463
      %v1706 = vadd.f32 %v1705, 1e-05
      %v1707 = vrsqrt.pop %v1706
      %v1708 = vmul.f32 %v1700, %v1707
      %v1710 = vlaneseq
      %v1711 = vshrl.u32 %v1710, 7
      %v1712 = vsub.s32 0, %v1711
      %v1713 = vrot.slane %v1694, %v1712
      %v1715 = vmul.f32 %v1708, %v1713
      %v1717 = vlaneseq
      %v1718 = vshrl.u32 %v1717, 7
      %v1719 = vsub.s32 0, %v1718
      %v1720 = vrot.slane %v1695, %v1719
      %v1722 = vadd.f32 %v1715, %v1720
      %v1723 = vld [vmem:[%s75] sm:$0xff]
      %v1724 = vld [vmem:[%s75 + $0x8] sm:$0xff]
      %v1725 = vld [vmem:[%s75 + $0x10] sm:$0xff]
      %v1726 = vld [vmem:[%s75 + $0x18] sm:$0xff]
      %v1727 = vld [vmem:[%s77] sm:$0x1]
      %v1729 = vlaneseq
      %v1730 = vshrl.u32 %v1729, 7
      %v1731 = vsub.s32 0, %v1730
      %v1732 = vrot.slane %v1727, %v1731
      %v1735 = vsel %vm910, %v1722, 0
      %1737 = vmatprep.subr.mxu0 0.0
      %1738 = vmatpush1.msra.mxu0 %v1723
      %1739 = vmatprep.subr.mxu0 0.0
      %1740 = vmatpush1.msra.mxu0 %v1724
      %1741 = vmatprep.subr.mxu0 0.0
      %1742 = vmatpush1.msra.mxu0 %v1725
      %1743 = vmatprep.subr.mxu0 0.0
      %1744 = vmatpush1.msra.mxu0 %v1726
      %1745 = vmatprep.subr.mxu0 0.0
      %1746 = vmatpush1.msra.mxu0 0.0
      %1747 = vmatprep.subr.mxu0 0.0
      %1748 = vmatpush1.msra.mxu0 0.0
      %1749 = vmatprep.subr.mxu0 0.0
      %1750 = vmatpush1.msra.mxu0 0.0
      %1751 = vmatprep.subr.mxu0 0.0
      %1752 = vmatpush1.msra.mxu0 0.0
      %1753 = vmatprep.subr.mxu0 0.0
      %1754 = vmatpush1.msra.mxu0 0.0
      %1755 = vmatprep.subr.mxu0 0.0
      %1756 = vmatpush1.msra.mxu0 0.0
      %1757 = vmatprep.subr.mxu0 0.0
      %1758 = vmatpush1.msra.mxu0 0.0
      %1759 = vmatprep.subr.mxu0 0.0
      %1760 = vmatpush1.msra.mxu0 0.0
      %1761 = vmatprep.subr.mxu0 0.0
      %1762 = vmatpush1.msra.mxu0 0.0
      %1763 = vmatprep.subr.mxu0 0.0
      %1764 = vmatpush1.msra.mxu0 0.0
      %1765 = vmatprep.subr.mxu0 0.0
      %1766 = vmatpush1.msra.mxu0 0.0
      %1767 = vmatprep.subr.mxu0 0.0
      %1768 = vmatpush1.msra.mxu0 0.0
      %1769 = vmatprep.subr.mxu0 0.0
      %1770 = vmatpush1.msra.mxu0 0.0
      %1771 = vmatprep.subr.mxu0 0.0
      %1772 = vmatpush1.msra.mxu0 0.0
      %1773 = vmatprep.subr.mxu0 0.0
      %1774 = vmatpush1.msra.mxu0 0.0
      %1775 = vmatprep.subr.mxu0 0.0
      %1776 = vmatpush1.msra.mxu0 0.0
      %1777 = vmatprep.subr.mxu0 0.0
      %1778 = vmatpush1.msra.mxu0 0.0
      %1779 = vmatprep.subr.mxu0 0.0
      %1780 = vmatpush1.msra.mxu0 0.0
      %1781 = vmatprep.subr.mxu0 0.0
      %1782 = vmatpush1.msra.mxu0 0.0
      %1783 = vmatprep.subr.mxu0 0.0
      %1784 = vmatpush1.msra.mxu0 0.0
      %1785 = vmatprep.subr.mxu0 0.0
      %1786 = vmatpush1.msra.mxu0 0.0
      %1787 = vmatprep.subr.mxu0 0.0
      %1788 = vmatpush1.msra.mxu0 0.0
      %1789 = vmatprep.subr.mxu0 0.0
      %1790 = vmatpush1.msra.mxu0 0.0
      %1791 = vmatprep.subr.mxu0 0.0
      %1792 = vmatpush1.msra.mxu0 0.0
      %1793 = vmatprep.subr.mxu0 0.0
      %1794 = vmatpush1.msra.mxu0 0.0
      %1795 = vmatprep.subr.mxu0 0.0
      %1796 = vmatpush1.msra.mxu0 0.0
      %1797 = vmatprep.subr.mxu0 0.0
      %1798 = vmatpush1.msra.mxu0 0.0
      %1799 = vmatprep.subr.mxu0 0.0
      %1800 = vmatpush1.msra.mxu0 0.0
      %1801 = vmatprep.mubr.f32.mxu0 0.0
      %1802 = vmatmul.mubr.f32.gmra.mrb[0].mxu0 %v1735
      %v1803 = vpop.f32.mrb[0].mxu0
      %v1804 = vadd.f32 %v1732, %v1803
      %v1805 = vpop.f32.mrb[0].mxu0
      %1806 = vdwg.mxu0
      %v1807 = vmax.f32 %v1804, 0.0
      %v1808 = vld [vmem:[%s79] sm:$0xff]
      %v1809 = vld [vmem:[%s79 + $0x8] sm:$0xff]
      %v1810 = vld [vmem:[%s79 + $0x10] sm:$0xff]
      %v1811 = vld [vmem:[%s79 + $0x18] sm:$0xff]
      %v1812 = vld [vmem:[%s81] sm:$0x1]
      %v1814 = vlaneseq
      %v1815 = vshrl.u32 %v1814, 7
      %v1816 = vsub.s32 0, %v1815
      %v1817 = vrot.slane %v1812, %v1816
      %v1820 = vsel %vm910, %v1807, 0
      %1822 = vmatprep.subr.mxu0 0.0
      %1823 = vmatpush1.msra.mxu0 %v1808
      %1824 = vmatprep.subr.mxu0 0.0
      %1825 = vmatpush1.msra.mxu0 %v1809
      %1826 = vmatprep.subr.mxu0 0.0
      %1827 = vmatpush1.msra.mxu0 %v1810
      %1828 = vmatprep.subr.mxu0 0.0
      %1829 = vmatpush1.msra.mxu0 %v1811
      %1830 = vmatprep.subr.mxu0 0.0
      %1831 = vmatpush1.msra.mxu0 0.0
      %1832 = vmatprep.subr.mxu0 0.0
      %1833 = vmatpush1.msra.mxu0 0.0
      %1834 = vmatprep.subr.mxu0 0.0
      %1835 = vmatpush1.msra.mxu0 0.0
      %1836 = vmatprep.subr.mxu0 0.0
      %1837 = vmatpush1.msra.mxu0 0.0
      %1838 = vmatprep.subr.mxu0 0.0
      %1839 = vmatpush1.msra.mxu0 0.0
      %1840 = vmatprep.subr.mxu0 0.0
      %1841 = vmatpush1.msra.mxu0 0.0
      %1842 = vmatprep.subr.mxu0 0.0
      %1843 = vmatpush1.msra.mxu0 0.0
      %1844 = vmatprep.subr.mxu0 0.0
      %1845 = vmatpush1.msra.mxu0 0.0
      %1846 = vmatprep.subr.mxu0 0.0
      %1847 = vmatpush1.msra.mxu0 0.0
      %1848 = vmatprep.subr.mxu0 0.0
      %1849 = vmatpush1.msra.mxu0 0.0
      %1850 = vmatprep.subr.mxu0 0.0
      %1851 = vmatpush1.msra.mxu0 0.0
      %1852 = vmatprep.subr.mxu0 0.0
      %1853 = vmatpush1.msra.mxu0 0.0
      %1854 = vmatprep.subr.mxu0 0.0
      %1855 = vmatpush1.msra.mxu0 0.0
      %1856 = vmatprep.subr.mxu0 0.0
      %1857 = vmatpush1.msra.mxu0 0.0
      %1858 = vmatprep.subr.mxu0 0.0
      %1859 = vmatpush1.msra.mxu0 0.0
      %1860 = vmatprep.subr.mxu0 0.0
      %1861 = vmatpush1.msra.mxu0 0.0
      %1862 = vmatprep.subr.mxu0 0.0
      %1863 = vmatpush1.msra.mxu0 0.0
      %1864 = vmatprep.subr.mxu0 0.0
      %1865 = vmatpush1.msra.mxu0 0.0
      %1866 = vmatprep.subr.mxu0 0.0
      %1867 = vmatpush1.msra.mxu0 0.0
      %1868 = vmatprep.subr.mxu0 0.0
      %1869 = vmatpush1.msra.mxu0 0.0
      %1870 = vmatprep.subr.mxu0 0.0
      %1871 = vmatpush1.msra.mxu0 0.0
      %1872 = vmatprep.subr.mxu0 0.0
      %1873 = vmatpush1.msra.mxu0 0.0
      %1874 = vmatprep.subr.mxu0 0.0
      %1875 = vmatpush1.msra.mxu0 0.0
      %1876 = vmatprep.subr.mxu0 0.0
      %1877 = vmatpush1.msra.mxu0 0.0
      %1878 = vmatprep.subr.mxu0 0.0
      %1879 = vmatpush1.msra.mxu0 0.0
      %1880 = vmatprep.subr.mxu0 0.0
      %1881 = vmatpush1.msra.mxu0 0.0
      %1882 = vmatprep.subr.mxu0 0.0
      %1883 = vmatpush1.msra.mxu0 0.0
      %1884 = vmatprep.subr.mxu0 0.0
      %1885 = vmatpush1.msra.mxu0 0.0
      %1886 = vmatprep.mubr.f32.mxu0 0.0
      %1887 = vmatmul.mubr.f32.gmra.mrb[0].mxu0 %v1820
      %v1888 = vpop.f32.mrb[0].mxu0
      %v1889 = vadd.f32 %v1817, %v1888
      %v1890 = vpop.f32.mrb[0].mxu0
      %1891 = vdwg.mxu0
      %1892 = vst.msk [vmem:[%s107] sm:$0xff] %vm910, %v1889
      %v1893 = vld [vmem:[%s83] sm:$0xff]
      %v1894 = vld [vmem:[%s83 + $0x8] sm:$0xff]
      %v1895 = vld [vmem:[%s83 + $0x10] sm:$0xff]
      %v1896 = vld [vmem:[%s83 + $0x18] sm:$0xff]
      %v1897 = vld [vmem:[%s85] sm:$0x1]
      %v1899 = vlaneseq
      %v1900 = vshrl.u32 %v1899, 7
      %v1901 = vsub.s32 0, %v1900
      %v1902 = vrot.slane %v1897, %v1901
      %1904 = vmatprep.subr.mxu0 0.0
      %1905 = vmatpush1.msra.mxu0 %v1893
      %1906 = vmatprep.subr.mxu0 0.0
      %1907 = vmatpush1.msra.mxu0 %v1894
      %1908 = vmatprep.subr.mxu0 0.0
      %1909 = vmatpush1.msra.mxu0 %v1895
      %1910 = vmatprep.subr.mxu0 0.0
      %1911 = vmatpush1.msra.mxu0 %v1896
      %1912 = vmatprep.subr.mxu0 0.0
      %1913 = vmatpush1.msra.mxu0 0.0
      %1914 = vmatprep.subr.mxu0 0.0
      %1915 = vmatpush1.msra.mxu0 0.0
      %1916 = vmatprep.subr.mxu0 0.0
      %1917 = vmatpush1.msra.mxu0 0.0
      %1918 = vmatprep.subr.mxu0 0.0
      %1919 = vmatpush1.msra.mxu0 0.0
      %1920 = vmatprep.subr.mxu0 0.0
      %1921 = vmatpush1.msra.mxu0 0.0
      %1922 = vmatprep.subr.mxu0 0.0
      %1923 = vmatpush1.msra.mxu0 0.0
      %1924 = vmatprep.subr.mxu0 0.0
      %1925 = vmatpush1.msra.mxu0 0.0
      %1926 = vmatprep.subr.mxu0 0.0
      %1927 = vmatpush1.msra.mxu0 0.0
      %1928 = vmatprep.subr.mxu0 0.0
      %1929 = vmatpush1.msra.mxu0 0.0
      %1930 = vmatprep.subr.mxu0 0.0
      %1931 = vmatpush1.msra.mxu0 0.0
      %1932 = vmatprep.subr.mxu0 0.0
      %1933 = vmatpush1.msra.mxu0 0.0
      %1934 = vmatprep.subr.mxu0 0.0
      %1935 = vmatpush1.msra.mxu0 0.0
      %1936 = vmatprep.subr.mxu0 0.0
      %1937 = vmatpush1.msra.mxu0 0.0
      %1938 = vmatprep.subr.mxu0 0.0
      %1939 = vmatpush1.msra.mxu0 0.0
      %1940 = vmatprep.subr.mxu0 0.0
      %1941 = vmatpush1.msra.mxu0 0.0
      %1942 = vmatprep.subr.mxu0 0.0
      %1943 = vmatpush1.msra.mxu0 0.0
      %1944 = vmatprep.subr.mxu0 0.0
      %1945 = vmatpush1.msra.mxu0 0.0
      %1946 = vmatprep.subr.mxu0 0.0
      %1947 = vmatpush1.msra.mxu0 0.0
      %1948 = vmatprep.subr.mxu0 0.0
      %1949 = vmatpush1.msra.mxu0 0.0
      %1950 = vmatprep.subr.mxu0 0.0
      %1951 = vmatpush1.msra.mxu0 0.0
      %1952 = vmatprep.subr.mxu0 0.0
      %1953 = vmatpush1.msra.mxu0 0.0
      %1954 = vmatprep.subr.mxu0 0.0
      %1955 = vmatpush1.msra.mxu0 0.0
      %1956 = vmatprep.subr.mxu0 0.0
      %1957 = vmatpush1.msra.mxu0 0.0
      %1958 = vmatprep.subr.mxu0 0.0
      %1959 = vmatpush1.msra.mxu0 0.0
      %1960 = vmatprep.subr.mxu0 0.0
      %1961 = vmatpush1.msra.mxu0 0.0
      %1962 = vmatprep.subr.mxu0 0.0
      %1963 = vmatpush1.msra.mxu0 0.0
      %1964 = vmatprep.subr.mxu0 0.0
      %1965 = vmatpush1.msra.mxu0 0.0
      %1966 = vmatprep.subr.mxu0 0.0
      %1967 = vmatpush1.msra.mxu0 0.0
      %1968 = vmatprep.mubr.f32.mxu0 0.0
      %1969 = vmatmul.mubr.f32.gmra.mrb[0].mxu0 %v1735
      %v1970 = vpop.f32.mrb[0].mxu0
      %v1971 = vadd.f32 %v1902, %v1970
      %v1972 = vpop.f32.mrb[0].mxu0
      %1973 = vdwg.mxu0
      %v1974 = vmax.f32 %v1971, 0.0
      %v1975 = vld [vmem:[%s87] sm:$0xff]
      %v1976 = vld [vmem:[%s87 + $0x8] sm:$0xff]
      %v1977 = vld [vmem:[%s87 + $0x10] sm:$0xff]
      %v1978 = vld [vmem:[%s87 + $0x18] sm:$0xff]
      %v1979 = vld [vmem:[%s89] sm:$0x1]
      %v1981 = vlaneseq
      %v1982 = vshrl.u32 %v1981, 7
      %v1983 = vsub.s32 0, %v1982
      %v1984 = vrot.slane %v1979, %v1983
      %v1987 = vsel %vm910, %v1974, 0
      %1989 = vmatprep.subr.mxu0 0.0
      %1990 = vmatpush1.msra.mxu0 %v1975
      %1991 = vmatprep.subr.mxu0 0.0
      %1992 = vmatpush1.msra.mxu0 %v1976
      %1993 = vmatprep.subr.mxu0 0.0
      %1994 = vmatpush1.msra.mxu0 %v1977
      %1995 = vmatprep.subr.mxu0 0.0
      %1996 = vmatpush1.msra.mxu0 %v1978
      %1997 = vmatprep.subr.mxu0 0.0
      %1998 = vmatpush1.msra.mxu0 0.0
      %1999 = vmatprep.subr.mxu0 0.0
      %2000 = vmatpush1.msra.mxu0 0.0
      %2001 = vmatprep.subr.mxu0 0.0
      %2002 = vmatpush1.msra.mxu0 0.0
      %2003 = vmatprep.subr.mxu0 0.0
      %2004 = vmatpush1.msra.mxu0 0.0
      %2005 = vmatprep.subr.mxu0 0.0
      %2006 = vmatpush1.msra.mxu0 0.0
      %2007 = vmatprep.subr.mxu0 0.0
      %2008 = vmatpush1.msra.mxu0 0.0
      %2009 = vmatprep.subr.mxu0 0.0
      %2010 = vmatpush1.msra.mxu0 0.0
      %2011 = vmatprep.subr.mxu0 0.0
      %2012 = vmatpush1.msra.mxu0 0.0
      %2013 = vmatprep.subr.mxu0 0.0
      %2014 = vmatpush1.msra.mxu0 0.0
      %2015 = vmatprep.subr.mxu0 0.0
      %2016 = vmatpush1.msra.mxu0 0.0
      %2017 = vmatprep.subr.mxu0 0.0
      %2018 = vmatpush1.msra.mxu0 0.0
      %2019 = vmatprep.subr.mxu0 0.0
      %2020 = vmatpush1.msra.mxu0 0.0
      %2021 = vmatprep.subr.mxu0 0.0
      %2022 = vmatpush1.msra.mxu0 0.0
      %2023 = vmatprep.subr.mxu0 0.0
      %2024 = vmatpush1.msra.mxu0 0.0
      %2025 = vmatprep.subr.mxu0 0.0
      %2026 = vmatpush1.msra.mxu0 0.0
      %2027 = vmatprep.subr.mxu0 0.0
      %2028 = vmatpush1.msra.mxu0 0.0
      %2029 = vmatprep.subr.mxu0 0.0
      %2030 = vmatpush1.msra.mxu0 0.0
      %2031 = vmatprep.subr.mxu0 0.0
      %2032 = vmatpush1.msra.mxu0 0.0
      %2033 = vmatprep.subr.mxu0 0.0
      %2034 = vmatpush1.msra.mxu0 0.0
      %2035 = vmatprep.subr.mxu0 0.0
      %2036 = vmatpush1.msra.mxu0 0.0
      %2037 = vmatprep.subr.mxu0 0.0
      %2038 = vmatpush1.msra.mxu0 0.0
      %2039 = vmatprep.subr.mxu0 0.0
      %2040 = vmatpush1.msra.mxu0 0.0
      %2041 = vmatprep.subr.mxu0 0.0
      %2042 = vmatpush1.msra.mxu0 0.0
      %2043 = vmatprep.subr.mxu0 0.0
      %2044 = vmatpush1.msra.mxu0 0.0
      %2045 = vmatprep.subr.mxu0 0.0
      %2046 = vmatpush1.msra.mxu0 0.0
      %2047 = vmatprep.subr.mxu0 0.0
      %2048 = vmatpush1.msra.mxu0 0.0
      %2049 = vmatprep.subr.mxu0 0.0
      %2050 = vmatpush1.msra.mxu0 0.0
      %2051 = vmatprep.subr.mxu0 0.0
      %2052 = vmatpush1.msra.mxu0 0.0
      %2053 = vmatprep.mubr.f32.mxu0 0.0
      %2054 = vmatmul.mubr.f32.gmra.mrb[0].mxu0 %v1987
      %v2055 = vpop.f32.mrb[0].mxu0
      %v2056 = vadd.f32 %v1984, %v2055
      %v2057 = vpop.f32.mrb[0].mxu0
      %2058 = vdwg.mxu0
      %vm2059 = vcmask 64512
      %2060 = vst.msk [vmem:[#allocation9] sm:$0xff] %vm2059, %v2056
      %v2061 = vld [vmem:[%s13] sm:$0xff]
      %v2062 = vadd.f32 %v1692, %v2061
      %v2063 = vld [vmem:[%s91] sm:$0xff]
      %v2064 = vld [vmem:[%s91 + $0x8] sm:$0xff]
      %v2065 = vld [vmem:[%s91 + $0x10] sm:$0xff]
      %v2066 = vld [vmem:[%s91 + $0x18] sm:$0xff]
      %v2067 = vld [vmem:[%s93] sm:$0x1]
      %v2069 = vlaneseq
      %v2070 = vshrl.u32 %v2069, 7
      %v2071 = vsub.s32 0, %v2070
      %v2072 = vrot.slane %v2067, %v2071
      %v2075 = vsel %vm910, %v2062, 0
      %2077 = vmatprep.subr.mxu0 0.0
      %2078 = vmatpush1.msra.mxu0 %v2063
      %2079 = vmatprep.subr.mxu0 0.0
      %2080 = vmatpush1.msra.mxu0 %v2064
      %2081 = vmatprep.subr.mxu0 0.0
      %2082 = vmatpush1.msra.mxu0 %v2065
      %2083 = vmatprep.subr.mxu0 0.0
      %2084 = vmatpush1.msra.mxu0 %v2066
      %2085 = vmatprep.subr.mxu0 0.0
      %2086 = vmatpush1.msra.mxu0 0.0
      %2087 = vmatprep.subr.mxu0 0.0
      %2088 = vmatpush1.msra.mxu0 0.0
      %2089 = vmatprep.subr.mxu0 0.0
      %2090 = vmatpush1.msra.mxu0 0.0
      %2091 = vmatprep.subr.mxu0 0.0
      %2092 = vmatpush1.msra.mxu0 0.0
      %2093 = vmatprep.subr.mxu0 0.0
      %2094 = vmatpush1.msra.mxu0 0.0
      %2095 = vmatprep.subr.mxu0 0.0
      %2096 = vmatpush1.msra.mxu0 0.0
      %2097 = vmatprep.subr.mxu0 0.0
      %2098 = vmatpush1.msra.mxu0 0.0
      %2099 = vmatprep.subr.mxu0 0.0
      %2100 = vmatpush1.msra.mxu0 0.0
      %2101 = vmatprep.subr.mxu0 0.0
      %2102 = vmatpush1.msra.mxu0 0.0
      %2103 = vmatprep.subr.mxu0 0.0
      %2104 = vmatpush1.msra.mxu0 0.0
      %2105 = vmatprep.subr.mxu0 0.0
      %2106 = vmatpush1.msra.mxu0 0.0
      %2107 = vmatprep.subr.mxu0 0.0
      %2108 = vmatpush1.msra.mxu0 0.0
      %2109 = vmatprep.subr.mxu0 0.0
      %2110 = vmatpush1.msra.mxu0 0.0
      %2111 = vmatprep.subr.mxu0 0.0
      %2112 = vmatpush1.msra.mxu0 0.0
      %2113 = vmatprep.subr.mxu0 0.0
      %2114 = vmatpush1.msra.mxu0 0.0
      %2115 = vmatprep.subr.mxu0 0.0
      %2116 = vmatpush1.msra.mxu0 0.0
      %2117 = vmatprep.subr.mxu0 0.0
      %2118 = vmatpush1.msra.mxu0 0.0
      %2119 = vmatprep.subr.mxu0 0.0
      %2120 = vmatpush1.msra.mxu0 0.0
      %2121 = vmatprep.subr.mxu0 0.0
      %2122 = vmatpush1.msra.mxu0 0.0
      %2123 = vmatprep.subr.mxu0 0.0
      %2124 = vmatpush1.msra.mxu0 0.0
      %2125 = vmatprep.subr.mxu0 0.0
      %2126 = vmatpush1.msra.mxu0 0.0
      %2127 = vmatprep.subr.mxu0 0.0
      %2128 = vmatpush1.msra.mxu0 0.0
      %2129 = vmatprep.subr.mxu0 0.0
      %2130 = vmatpush1.msra.mxu0 0.0
      %2131 = vmatprep.subr.mxu0 0.0
      %2132 = vmatpush1.msra.mxu0 0.0
      %2133 = vmatprep.subr.mxu0 0.0
      %2134 = vmatpush1.msra.mxu0 0.0
      %2135 = vmatprep.subr.mxu0 0.0
      %2136 = vmatpush1.msra.mxu0 0.0
      %2137 = vmatprep.subr.mxu0 0.0
      %2138 = vmatpush1.msra.mxu0 0.0
      %2139 = vmatprep.subr.mxu0 0.0
      %2140 = vmatpush1.msra.mxu0 0.0
      %2141 = vmatprep.mubr.f32.mxu0 0.0
      %2142 = vmatmul.mubr.f32.gmra.mrb[0].mxu0 %v2075
      %v2143 = vpop.f32.mrb[0].mxu0
      %v2144 = vadd.f32 %v2072, %v2143
      %v2145 = vpop.f32.mrb[0].mxu0
      %2146 = vdwg.mxu0
      %2147 = vst.msk [vmem:[%s103] sm:$0xff] %vm910, %v2144
      %v2148 = vld [vmem:[%s95] sm:$0xff]
      %v2149 = vld [vmem:[%s95 + $0x8] sm:$0xff]
      %v2150 = vld [vmem:[%s95 + $0x10] sm:$0xff]
      %v2151 = vld [vmem:[%s95 + $0x18] sm:$0xff]
      %v2152 = vld [vmem:[%s97] sm:$0x1]
      %v2154 = vlaneseq
      %v2155 = vshrl.u32 %v2154, 7
      %v2156 = vsub.s32 0, %v2155
      %v2157 = vrot.slane %v2152, %v2156
      %v2160 = vsel %vm910, %v1692, 0
      %2162 = vmatprep.subr.mxu0 0.0
      %2163 = vmatpush1.msra.mxu0 %v2148
      %2164 = vmatprep.subr.mxu0 0.0
      %2165 = vmatpush1.msra.mxu0 %v2149
      %2166 = vmatprep.subr.mxu0 0.0
      %2167 = vmatpush1.msra.mxu0 %v2150
      %2168 = vmatprep.subr.mxu0 0.0
      %2169 = vmatpush1.msra.mxu0 %v2151
      %2170 = vmatprep.subr.mxu0 0.0
      %2171 = vmatpush1.msra.mxu0 0.0
      %2172 = vmatprep.subr.mxu0 0.0
      %2173 = vmatpush1.msra.mxu0 0.0
      %2174 = vmatprep.subr.mxu0 0.0
      %2175 = vmatpush1.msra.mxu0 0.0
      %2176 = vmatprep.subr.mxu0 0.0
      %2177 = vmatpush1.msra.mxu0 0.0
      %2178 = vmatprep.subr.mxu0 0.0
      %2179 = vmatpush1.msra.mxu0 0.0
      %2180 = vmatprep.subr.mxu0 0.0
      %2181 = vmatpush1.msra.mxu0 0.0
      %2182 = vmatprep.subr.mxu0 0.0
      %2183 = vmatpush1.msra.mxu0 0.0
      %2184 = vmatprep.subr.mxu0 0.0
      %2185 = vmatpush1.msra.mxu0 0.0
      %2186 = vmatprep.subr.mxu0 0.0
      %2187 = vmatpush1.msra.mxu0 0.0
      %2188 = vmatprep.subr.mxu0 0.0
      %2189 = vmatpush1.msra.mxu0 0.0
      %2190 = vmatprep.subr.mxu0 0.0
      %2191 = vmatpush1.msra.mxu0 0.0
      %2192 = vmatprep.subr.mxu0 0.0
      %2193 = vmatpush1.msra.mxu0 0.0
      %2194 = vmatprep.subr.mxu0 0.0
      %2195 = vmatpush1.msra.mxu0 0.0
      %2196 = vmatprep.subr.mxu0 0.0
      %2197 = vmatpush1.msra.mxu0 0.0
      %2198 = vmatprep.subr.mxu0 0.0
      %2199 = vmatpush1.msra.mxu0 0.0
      %2200 = vmatprep.subr.mxu0 0.0
      %2201 = vmatpush1.msra.mxu0 0.0
      %2202 = vmatprep.subr.mxu0 0.0
      %2203 = vmatpush1.msra.mxu0 0.0
      %2204 = vmatprep.subr.mxu0 0.0
      %2205 = vmatpush1.msra.mxu0 0.0
      %2206 = vmatprep.subr.mxu0 0.0
      %2207 = vmatpush1.msra.mxu0 0.0
      %2208 = vmatprep.subr.mxu0 0.0
      %2209 = vmatpush1.msra.mxu0 0.0
      %2210 = vmatprep.subr.mxu0 0.0
      %2211 = vmatpush1.msra.mxu0 0.0
      %2212 = vmatprep.subr.mxu0 0.0
      %2213 = vmatpush1.msra.mxu0 0.0
      %2214 = vmatprep.subr.mxu0 0.0
      %2215 = vmatpush1.msra.mxu0 0.0
      %2216 = vmatprep.subr.mxu0 0.0
      %2217 = vmatpush1.msra.mxu0 0.0
      %2218 = vmatprep.subr.mxu0 0.0
      %2219 = vmatpush1.msra.mxu0 0.0
      %2220 = vmatprep.subr.mxu0 0.0
      %2221 = vmatpush1.msra.mxu0 0.0
      %2222 = vmatprep.subr.mxu0 0.0
      %2223 = vmatpush1.msra.mxu0 0.0
      %2224 = vmatprep.subr.mxu0 0.0
      %2225 = vmatpush1.msra.mxu0 0.0
      %2226 = vmatprep.mubr.f32.mxu0 0.0
      %2227 = vmatmul.mubr.f32.gmra.mrb[0].mxu0 %v2160
      %v2228 = vpop.f32.mrb[0].mxu0
      %v2229 = vadd.f32 %v2157, %v2228
      %v2230 = vpop.f32.mrb[0].mxu0
      %2231 = vdwg.mxu0
      %2232 = vst.msk [vmem:[%s105] sm:$0xff] %vm910, %v2229
    $region205: #{_lambda_.10} parent=1 // pred_fallthru
      _
    // Predicated region
    $region206: #{_lambda_.10} parent=1 // pred_check
      _
    $region207: #{_lambda_.10} parent=1 // pred_check_branch
      %2234 = sbr.rel (0) target = $region209
    $region208: #{_lambda_.10} parent=1 // pred_region
      %s2236 = ssub.s32 128, 128
      %2237 = vsyncadd [#allocation8], %s2236
      %s2239 = sshll.u32 [#allocation7], 4
      %s2240 = int_to_ptr.vmem [resolvable:$true] %s2239
      %2242 = dma.vmem_to_hbm [thread:$0]  %s2240, 128, %s99, [#allocation8]
    $region209: #{_lambda_.10} parent=1 // pred_fallthru
      _
    // Predicated region
    $region210: #{_lambda_.10} parent=1 // pred_check
      _
    $region211: #{_lambda_.10} parent=1 // pred_check_branch
      %2244 = sbr.rel (0) target = $region213
    $region212: #{_lambda_.10} parent=1 // pred_region
      %s2246 = ssub.s32 128, 128
      %2247 = vsyncadd [#allocation10], %s2246
      %s2249 = sshll.u32 [#allocation9], 4
      %s2250 = int_to_ptr.vmem [resolvable:$true] %s2249
      %2252 = dma.vmem_to_hbm [thread:$0]  %s2250, 128, %s101, [#allocation10]
    $region213: #{_lambda_.10} parent=1 // pred_fallthru
      _
    // Predicated region
    $region214: #{_lambda_.10} parent=1 // pred_check
      _
    $region215: #{_lambda_.10} parent=1 // pred_check_branch
      %2254 = sbr.rel (0) target = $region217
    $region216: #{_lambda_.10} parent=1 // pred_region
      _
    $region217: #{_lambda_.10} parent=1 // pred_fallthru
      _
    // Predicated region
    $region218: #{_lambda_.10} parent=1 // pred_check
      _
    $region219: #{_lambda_.10} parent=1 // pred_check_branch
      %2256 = sbr.rel (0) target = $region221
    $region220: #{_lambda_.10} parent=1 // pred_region
      _
    $region221: #{_lambda_.10} parent=1 // pred_fallthru
      _
    // Predicated region
    $region222: #{_lambda_.10} parent=1 // pred_check
      _
    $region223: #{_lambda_.10} parent=1 // pred_check_branch
      %2258 = sbr.rel (0) target = $region225
    $region224: #{_lambda_.10} parent=1 // pred_region
      _
    $region225: #{_lambda_.10} parent=1 // pred_fallthru
      _
    // Predicated region
    $region226: #{_lambda_.10} parent=1 // pred_check
      _
    $region227: #{_lambda_.10} parent=1 // pred_check_branch
      %2260 = sbr.rel (0) target = $region229
    $region228: #{_lambda_.10} parent=1 // pred_region
      %2261 = dma.done [#allocation8], 128
    $region229: #{_lambda_.10} parent=1 // pred_fallthru
      _
    // Predicated region
    $region230: #{_lambda_.10} parent=1 // pred_check
      _
    $region231: #{_lambda_.10} parent=1 // pred_check_branch
      %2263 = sbr.rel (0) target = $region233
    $region232: #{_lambda_.10} parent=1 // pred_region
      %2264 = dma.done [#allocation10], 128
    $region233: #{_lambda_.10} parent=1 // pred_fallthru
      _
    // Predicated region
    $region234: #{_lambda_.10} parent=1 // pred_check
      _
    $region235: #{_lambda_.10} parent=1 // pred_check_branch
      %2266 = sbr.rel (0) target = $region237
    $region236: #{_lambda_.10} parent=1 // pred_region
      _
    $region237: #{_lambda_.10} parent=1 // pred_fallthru
      _
    // Predicated region
    $region238: #{_lambda_.10} parent=1 // pred_check
      _
    $region239: #{_lambda_.10} parent=1 // pred_check_branch
      %2268 = sbr.rel (0) target = $region241
    $region240: #{_lambda_.10} parent=1 // pred_region
      _
    $region241: #{_lambda_.10} parent=1 // pred_fallthru
      _
    // Predicated region
    $region242: #{_lambda_.10} parent=1 // pred_check
      _
    $region243: #{_lambda_.10} parent=1 // pred_check_branch
      %2270 = sbr.rel (0) target = $region245
    $region244: #{_lambda_.10} parent=1 // pred_region
      _
    $region245: #{_lambda_.10} parent=1 // pred_fallthru
      _
    %2271 = vsyncpa [#allocation8], 1
    %2272 = vsyncpa [#allocation10], 1

</llo_original>
